<compile_context>
chip_gen: v5e
topology: v5e:2x2
jax: 0.10.0
libtpu: 0.0.40
codegen_flags: <defaults>
</compile_context>

<pallas_src>
import math

import jax
import jax.numpy as jnp
from jax.experimental import pallas as pl
from jax.experimental.pallas import tpu as pltpu

# --- small, module-consistent sizes (d_model divisible by h) ---
D_MODEL = 64
N_HEADS = 4
D_K = D_MODEL // N_HEADS
FF_HIDDEN = 128
N_LAYERS = 2
LN_EPS = 1e-5
_NEG_INF = -1e30

# ---- packed column layout (shared prefix between weight slab and vec slab) ----
_OFF_QKV1 = 0                      # self-attn fused Wq|Wk|Wv   (3*D)
_OFF_O1 = 3 * D_MODEL              # self-attn out proj         (D)
_OFF_Q2 = 4 * D_MODEL              # cross-attn Wq              (D)
_OFF_KV2 = 5 * D_MODEL             # cross-attn fused Wk|Wv     (2*D)
_OFF_O2 = 7 * D_MODEL              # cross-attn out proj        (D)
_OFF_F1 = 8 * D_MODEL              # FFN first matmul           (FF)
W_COLS = 8 * D_MODEL + FF_HIDDEN   # 640
# vec-only tail: bf2 + LayerNorm gamma/beta x3
_OFF_BF2 = W_COLS
_OFF_G1 = _OFF_BF2 + D_MODEL
_OFF_BE1 = _OFF_G1 + D_MODEL
_OFF_G2 = _OFF_BE1 + D_MODEL
_OFF_BE2 = _OFF_G2 + D_MODEL
_OFF_G3 = _OFF_BE2 + D_MODEL
_OFF_BE3 = _OFF_G3 + D_MODEL
VEC_COLS = _OFF_BE3 + D_MODEL      # 1088


# ----------------------------- kernel helpers -------------------------------
def _layer_norm(v, g, b):
    mu = jnp.mean(v, axis=-1, keepdims=True)
    var = jnp.mean((v - mu) ** 2, axis=-1, keepdims=True)
    return (v - mu) * jax.lax.rsqrt(var + LN_EPS) * g + b


def _mha_heads(q_src, q_base, kv_src, k_base, v_base, mask_add, bt, q_len):
    """Multi-head attention core (projections already done, scale folded in W_Q).

    q_src : (bt, q_len, *) with queries at lane offset q_base
    kv_src: (bt, kv_len, *) with keys at k_base and values at v_base
    mask_add: (bt, q_len, kv_len) additive f32 mask or None
    Returns concatenated context (bt*q_len, D_MODEL).
    """
    heads = []
    for h in range(N_HEADS):
        qh = q_src[:, :, q_base + h * D_K: q_base + (h + 1) * D_K]
        kh = kv_src[:, :, k_base + h * D_K: k_base + (h + 1) * D_K]
        vh = kv_src[:, :, v_base + h * D_K: v_base + (h + 1) * D_K]
        s = jnp.einsum('bld,bsd->bls', qh, kh,
                       preferred_element_type=jnp.float32)
        if mask_add is not None:
            s = s + mask_add
        s = s - jnp.max(s, axis=-1, keepdims=True)
        p = jnp.exp(s)
        p = p * pl.reciprocal(jnp.sum(p, axis=-1, keepdims=True), approx=True)
        heads.append(jnp.einsum('bls,bsd->bld', p, vh,
                                preferred_element_type=jnp.float32))
    ctx = jnp.concatenate(heads, axis=-1)              # (bt, q_len, D)
    return ctx.reshape(bt * q_len, D_MODEL)


# --------------------------- parameters / packing ----------------------------
def init_layer_params(key):
    """Raw per-layer params, weights stored (in, out) so y = x@W + b."""
    ks = jax.random.split(key, 20)
    m = lambda k, s: jax.random.normal(k, s, jnp.float32) * 0.05
    wq1, wk1, wv1, wo1 = [m(ks[i], (D_MODEL, D_MODEL)) for i in range(4)]
    bq1, bk1, bv1, bo1 = [m(ks[4 + i], (D_MODEL,)) for i in range(4)]
    wq2, wk2, wv2, wo2 = [m(ks[8 + i], (D_MODEL, D_MODEL)) for i in range(4)]
    bq2, bk2, bv2, bo2 = [m(ks[12 + i], (D_MODEL,)) for i in range(4)]
    wf1, bf1 = m(ks[16], (D_MODEL, FF_HIDDEN)), m(ks[17], (FF_HIDDEN,))
    wf2, bf2 = m(ks[18], (FF_HIDDEN, D_MODEL)), m(ks[19], (D_MODEL,))
    ones = jnp.ones((D_MODEL,), jnp.float32)
    zeros = jnp.zeros((D_MODEL,), jnp.float32)
    return (wq1, wk1, wv1, wo1, bq1, bk1, bv1, bo1, ones, zeros,
            wq2, wk2, wv2, wo2, bq2, bk2, bv2, bo2, ones, zeros,
            wf1, bf1, wf2, bf2, ones, zeros)


def pack_params(per_layer):
    """Pack all layers into 3 stacked slabs: w_d, w_ff2, vec."""
    scale = 1.0 / math.sqrt(D_K)   # folded into W_Q / b_Q (kernel skips score scale)
    wds, wff2s, vecs = [], [], []
    for p in per_layer:
        (wq1, wk1, wv1, wo1, bq1, bk1, bv1, bo1, g1, be1,
         wq2, wk2, wv2, wo2, bq2, bk2, bv2, bo2, g2, be2,
         wf1, bf1, wf2, bf2, g3, be3) = p
        wd = jnp.concatenate(
            [wq1 * scale, wk1, wv1, wo1, wq2 * scale, wk2, wv2, wo2, wf1],
            axis=1)                                           # (D, W_COLS)
        vec = jnp.concatenate(
            [bq1 * scale, bk1, bv1, bo1, bq2 * scale, bk2, bv2, bo2, bf1, bf2,
             g1, be1, g2, be2, g3, be3], axis=0)[None, :]     # (1, VEC_COLS)
        wds.append(wd)
        wff2s.append(wf2)
        vecs.append(vec)
    return (jnp.stack(wds), jnp.stack(wff2s), jnp.stack(vecs))


def _default_batch_block(B):
    """bt=B on single-TensorCore chips (v5e/v6e); 2-way split on v7x (2 TCs)."""
    try:
        kind = jax.devices()[0].device_kind.lower()
    except Exception:
        kind = ""
    if ("v7" in kind or "7x" in kind) and B % 2 == 0:
        return B // 2
    return B


# --------------------------------- wrapper -----------------------------------
def decoder(x, enc, mask, packed_params, *, batch_block=None):
    w_d, w_ff2, vec = packed_params
    B, L, D = x.shape
    S = enc.shape[1]
    n_layers = w_d.shape[0]
    bt = batch_block if batch_block is not None else _default_batch_block(B)
    assert B % bt == 0, "batch must be divisible by the batch block"

    # additive mask: 0 = attend, -1e30 = masked (replaces int cmp+select in-kernel)
    if mask is None:
        mask_add = jnp.zeros((B, L, L), jnp.float32)
    else:
        mask_add = jnp.where(mask != 0, 0.0, _NEG_INF).astype(jnp.float32)

    def kernel(x_ref, enc_ref, mask_ref, w_d_ref, w_ff2_ref, vec_ref, out_ref):
        xi = x_ref[...].reshape(bt * L, D).astype(jnp.float32)
        enc2d = enc_ref[...].reshape(bt * S, D).astype(jnp.float32)
        madd = mask_ref[...]                                   # (bt, L, L) f32

        for l in range(n_layers):                              # static unroll
            # ---- self-attention: fused QKV projection (one MXU matmul) ----
            qkv = jnp.dot(xi, w_d_ref[l, :, _OFF_QKV1:_OFF_O1],
                          preferred_element_type=jnp.float32) \
                + vec_ref[l, :, _OFF_QKV1:_OFF_O1]
            qkv3 = qkv.reshape(bt, L, 3 * D)
            ctx = _mha_heads(qkv3, 0, qkv3, D, 2 * D, madd, bt, L)
            sa = jnp.dot(ctx, w_d_ref[l, :, _OFF_O1:_OFF_Q2],
                         preferred_element_type=jnp.float32) \
                + vec_ref[l, :, _OFF_O1:_OFF_Q2]
            xi = _layer_norm(xi + sa,
                             vec_ref[l, :, _OFF_G1:_OFF_BE1],
                             vec_ref[l, :, _OFF_BE1:_OFF_G2])

            # ---- cross-attention: fused KV projection of encoder output ----
            q = jnp.dot(xi, w_d_ref[l, :, _OFF_Q2:_OFF_KV2],
                        preferred_element_type=jnp.float32) \
                + vec_ref[l, :, _OFF_Q2:_OFF_KV2]
            kv = jnp.dot(enc2d, w_d_ref[l, :, _OFF_KV2:_OFF_O2],
                         preferred_element_type=jnp.float32) \
                + vec_ref[l, :, _OFF_KV2:_OFF_O2]
            q3 = q.reshape(bt, L, D)
            kv3 = kv.reshape(bt, S, 2 * D)
            ctx = _mha_heads(q3, 0, kv3, 0, D, None, bt, L)
            ca = jnp.dot(ctx, w_d_ref[l, :, _OFF_O2:_OFF_F1],
                         preferred_element_type=jnp.float32) \
                + vec_ref[l, :, _OFF_O2:_OFF_F1]
            xi = _layer_norm(xi + ca,
                             vec_ref[l, :, _OFF_G2:_OFF_BE2],
                             vec_ref[l, :, _OFF_BE2:_OFF_G3])

            # ---- position-wise FFN ----
            hdn = jnp.maximum(
                jnp.dot(xi, w_d_ref[l, :, _OFF_F1:W_COLS],
                        preferred_element_type=jnp.float32)
                + vec_ref[l, :, _OFF_F1:W_COLS], 0.0)
            ff = jnp.dot(hdn, w_ff2_ref[l],
                         preferred_element_type=jnp.float32) \
                + vec_ref[l, :, _OFF_BF2:_OFF_G1]
            xi = _layer_norm(xi + ff,
                             vec_ref[l, :, _OFF_G3:_OFF_BE3],
                             vec_ref[l, :, _OFF_BE3:VEC_COLS])

        out_ref[...] = xi.reshape(bt, L, D).astype(out_ref.dtype)

    in_specs = [
        pl.BlockSpec((bt, L, D), lambda b: (b, 0, 0)),
        pl.BlockSpec((bt, S, D), lambda b: (b, 0, 0)),
        pl.BlockSpec((bt, L, L), lambda b: (b, 0, 0)),
        # all-layer packed weights, fully resident (constant index map -> one DMA)
        pl.BlockSpec((n_layers, D, W_COLS), lambda b: (0, 0, 0)),
        pl.BlockSpec((n_layers, FF_HIDDEN, D), lambda b: (0, 0, 0)),
        pl.BlockSpec((n_layers, 1, VEC_COLS), lambda b: (0, 0, 0)),
    ]

    return pl.pallas_call(
        kernel,
        out_shape=jax.ShapeDtypeStruct((B, L, D), x.dtype),
        grid_spec=pltpu.PrefetchScalarGridSpec(
            num_scalar_prefetch=0,
            grid=(B // bt,),
            in_specs=in_specs,
            out_specs=pl.BlockSpec((bt, L, D), lambda b: (b, 0, 0)),
        ),
        compiler_params=pltpu.CompilerParams(
            dimension_semantics=("parallel",)),
    )(x, enc, mask_add, w_d, w_ff2, vec)


# ------------------------------ pure-JAX reference ---------------------------
def ref_decoder_layer(x, enc, mask, params):
    (wq1, wk1, wv1, wo1, bq1, bk1, bv1, bo1, g1, be1,
     wq2, wk2, wv2, wo2, bq2, bk2, bv2, bo2, g2, be2,
     wf1, bf1, wf2, bf2, g3, be3) = params

    def mha(xq, xkv, wq, bq, wk, bk, wv, bv, wo, bo, m):
        Bb, Lq, _ = xq.shape
        Sk = xkv.shape[1]
        Q = (xq @ wq + bq).reshape(Bb, Lq, N_HEADS, D_K).transpose(0, 2, 1, 3)
        K = (xkv @ wk + bk).reshape(Bb, Sk, N_HEADS, D_K).transpose(0, 2, 1, 3)
        V = (xkv @ wv + bv).reshape(Bb, Sk, N_HEADS, D_K).transpose(0, 2, 1, 3)
        s = Q @ jnp.swapaxes(K, -1, -2) / math.sqrt(D_K)
        if m is not None:
            s = jnp.where(m[:, None] == 0, -jnp.inf, s)
        p = jax.nn.softmax(s, axis=-1)
        o = (p @ V).transpose(0, 2, 1, 3).reshape(Bb, Lq, D_MODEL)
        return o @ wo + bo

    def ln(v, g, b):
        mu = v.mean(-1, keepdims=True)
        var = ((v - mu) ** 2).mean(-1, keepdims=True)
        return (v - mu) * jax.lax.rsqrt(var + LN_EPS) * g + b

    x = ln(x + mha(x, x, wq1, bq1, wk1, bk1, wv1, bv1, wo1, bo1, mask), g1, be1)
    x = ln(x + mha(x, enc, wq2, bq2, wk2, bk2, wv2, bv2, wo2, bo2, None), g2, be2)
    h = jnp.maximum(x @ wf1 + bf1, 0.0)
    x = ln(x + (h @ wf2 + bf2), g3, be3)
    return x


def ref_decoder(x, enc, mask, all_params):
    for params in all_params:
        x = ref_decoder_layer(x, enc, mask, params)
    return x


# ---------------------------------- main -------------------------------------
if __name__ == "__main__":
    B, L, S = 4, 8, 16

    key = jax.random.PRNGKey(0)
    key, *layer_keys = jax.random.split(key, N_LAYERS + 1)
    per_layer_params = [init_layer_params(k) for k in layer_keys]
    packed_params = pack_params(per_layer_params)

    key, kx, ke = jax.random.split(key, 3)
    x = jax.random.normal(kx, (B, L, D_MODEL), jnp.float32)
    enc_output = jax.random.normal(ke, (B, S, D_MODEL), jnp.float32)
    # causal target mask: 1 = attend, 0 = masked (torch masked_fill(mask==0,-inf))
    tgt_mask = jnp.broadcast_to(
        jnp.tril(jnp.ones((L, L), jnp.int32)), (B, L, L)).astype(jnp.int32)

    out = jax.block_until_ready(decoder(x, enc_output, tgt_mask, packed_params))

    ref = ref_decoder(x, enc_output, tgt_mask, per_layer_params)
    max_err = float(jnp.max(jnp.abs(out - ref)))
    assert max_err < 2e-3, f"mismatch vs reference: {max_err}"

    print("KERNEL_OK")
</pallas_src>

<mosaic_0001>
module attributes {stable_mosaic.version = 11 : i64} {
  func.func @kernel(%arg0: i32, %arg1: memref<4x8x64xf32, #tpu.memory_space<vmem>>, %arg2: memref<4x16x64xf32, #tpu.memory_space<vmem>>, %arg3: memref<4x8x8xf32, #tpu.memory_space<vmem>>, %arg4: memref<2x64x640xf32, #tpu.memory_space<vmem>>, %arg5: memref<2x128x64xf32, #tpu.memory_space<vmem>>, %arg6: memref<2x1x1088xf32, #tpu.memory_space<vmem>>, %arg7: memref<4x8x64xf32, #tpu.memory_space<vmem>>) attributes {dimension_semantics = [#tpu.dimension_semantics<parallel>], iteration_bounds = array<i64: 1>, scalar_prefetch = 0 : i64, scratch_operands = 0 : i64, tpu.core_type = #tpu.core_type<tc>, window_params = [{transform_indices = @transform_0, window_bounds = array<i64: 4, 8, 64>}, {transform_indices = @transform_1, window_bounds = array<i64: 4, 16, 64>}, {transform_indices = @transform_2, window_bounds = array<i64: 4, 8, 8>}, {pipeline_mode = #tpu.pipeline_mode<synchronous>, transform_indices = @transform_3, window_bounds = array<i64: 2, 64, 640>}, {pipeline_mode = #tpu.pipeline_mode<synchronous>, transform_indices = @transform_4, window_bounds = array<i64: 2, 128, 64>}, {pipeline_mode = #tpu.pipeline_mode<synchronous>, transform_indices = @transform_5, window_bounds = array<i64: 2, 1, 1088>}, {transform_indices = @transform_6, window_bounds = array<i64: 4, 8, 64>}]} {
    %c0 = arith.constant 0 : index
    %c0_0 = arith.constant 0 : index
    %c0_1 = arith.constant 0 : index
    %0 = vector.load %arg1[%c0, %c0_0, %c0_1] : memref<4x8x64xf32, #tpu.memory_space<vmem>>, vector<4x8x64xf32>
    %1 = vector.shape_cast %0 : vector<4x8x64xf32> to vector<32x64xf32>
    %c0_2 = arith.constant 0 : index
    %c0_3 = arith.constant 0 : index
    %c0_4 = arith.constant 0 : index
    %2 = vector.load %arg2[%c0_2, %c0_3, %c0_4] : memref<4x16x64xf32, #tpu.memory_space<vmem>>, vector<4x16x64xf32>
    %3 = vector.shape_cast %2 : vector<4x16x64xf32> to vector<64x64xf32>
    %c0_5 = arith.constant 0 : index
    %c0_6 = arith.constant 0 : index
    %c0_7 = arith.constant 0 : index
    %4 = vector.load %arg3[%c0_5, %c0_6, %c0_7] : memref<4x8x8xf32, #tpu.memory_space<vmem>>, vector<4x8x8xf32>
    %c0_8 = arith.constant 0 : index
    %c0_9 = arith.constant 0 : index
    %c0_10 = arith.constant 0 : index
    %5 = vector.load %arg4[%c0_8, %c0_9, %c0_10] : memref<2x64x640xf32, #tpu.memory_space<vmem>>, vector<1x64x192xf32>
    %6 = vector.shape_cast %5 : vector<1x64x192xf32> to vector<64x192xf32>
    %cst = arith.constant dense<0.000000e+00> : vector<32x192xf32>
    %7 = tpu.matmul %1, %6, %cst {dimension_numbers = #tpu.dot_dimension_numbers<[1], [0], [0], [1], [0, 0, 1, 1], [], []>} : vector<32x64xf32>, vector<64x192xf32>, vector<32x192xf32> -> vector<32x192xf32>
    %c0_11 = arith.constant 0 : index
    %c0_12 = arith.constant 0 : index
    %c0_13 = arith.constant 0 : index
    %8 = vector.load %arg6[%c0_11, %c0_12, %c0_13] : memref<2x1x1088xf32, #tpu.memory_space<vmem>>, vector<1x1x192xf32>
    %9 = vector.shape_cast %8 : vector<1x1x192xf32> to vector<1x192xf32>
    %10 = vector.broadcast %9 : vector<1x192xf32> to vector<32x192xf32>
    %11 = arith.addf %7, %10 : vector<32x192xf32>
    %12 = vector.shape_cast %11 : vector<32x192xf32> to vector<4x8x192xf32>
    %13 = vector.extract_strided_slice %12 {offsets = [0, 0, 0], sizes = [4, 8, 16], strides = [1, 1, 1]} : vector<4x8x192xf32> to vector<4x8x16xf32>
    %14 = vector.extract_strided_slice %12 {offsets = [0, 0, 64], sizes = [4, 8, 16], strides = [1, 1, 1]} : vector<4x8x192xf32> to vector<4x8x16xf32>
    %15 = vector.extract_strided_slice %12 {offsets = [0, 0, 128], sizes = [4, 8, 16], strides = [1, 1, 1]} : vector<4x8x192xf32> to vector<4x8x16xf32>
    "tpu.trace_start"() <{level = 10 : i32, message = "bld,bsd->bls"}> : () -> ()
    %cst_14 = arith.constant dense<0.000000e+00> : vector<4x8x8xf32>
    %16 = tpu.matmul %13, %14, %cst_14 {dimension_numbers = #tpu.dot_dimension_numbers<[2], [2], [1], [1], [0, 0, 0, 1, 1, 1], [0], [0]>} : vector<4x8x16xf32>, vector<4x8x16xf32>, vector<4x8x8xf32> -> vector<4x8x8xf32>
    "tpu.trace_stop"() : () -> ()
    %17 = arith.addf %16, %4 : vector<4x8x8xf32>
    %cst_15 = arith.constant dense<0xFF800000> : vector<4x8xf32>
    %18 = vector.multi_reduction <maximumf>, %17, %cst_15 [2] : vector<4x8x8xf32> to vector<4x8xf32>
    %19 = vector.shape_cast %18 : vector<4x8xf32> to vector<4x8x1xf32>
    %20 = vector.broadcast %19 : vector<4x8x1xf32> to vector<4x8x8xf32>
    %21 = arith.subf %17, %20 : vector<4x8x8xf32>
    %22 = math.exp %21 : vector<4x8x8xf32>
    %cst_16 = arith.constant dense<0.000000e+00> : vector<4x8xf32>
    %23 = vector.multi_reduction <add>, %22, %cst_16 [2] : vector<4x8x8xf32> to vector<4x8xf32>
    %24 = vector.shape_cast %23 : vector<4x8xf32> to vector<4x8x1xf32>
    %25 = tpu.reciprocal %24 {approx = true} : vector<4x8x1xf32> -> vector<4x8x1xf32>
    %26 = vector.broadcast %25 : vector<4x8x1xf32> to vector<4x8x8xf32>
    %27 = arith.mulf %22, %26 : vector<4x8x8xf32>
    "tpu.trace_start"() <{level = 10 : i32, message = "bls,bsd->bld"}> : () -> ()
    %cst_17 = arith.constant dense<0.000000e+00> : vector<4x8x16xf32>
    %28 = tpu.matmul %27, %15, %cst_17 {dimension_numbers = #tpu.dot_dimension_numbers<[2], [1], [1], [2], [0, 0, 0, 1, 1, 2], [0], [0]>} : vector<4x8x8xf32>, vector<4x8x16xf32>, vector<4x8x16xf32> -> vector<4x8x16xf32>
    "tpu.trace_stop"() : () -> ()
    %29 = vector.extract_strided_slice %12 {offsets = [0, 0, 16], sizes = [4, 8, 16], strides = [1, 1, 1]} : vector<4x8x192xf32> to vector<4x8x16xf32>
    %30 = vector.extract_strided_slice %12 {offsets = [0, 0, 80], sizes = [4, 8, 16], strides = [1, 1, 1]} : vector<4x8x192xf32> to vector<4x8x16xf32>
    %31 = vector.extract_strided_slice %12 {offsets = [0, 0, 144], sizes = [4, 8, 16], strides = [1, 1, 1]} : vector<4x8x192xf32> to vector<4x8x16xf32>
    "tpu.trace_start"() <{level = 10 : i32, message = "bld,bsd->bls"}> : () -> ()
    %cst_18 = arith.constant dense<0.000000e+00> : vector<4x8x8xf32>
    %32 = tpu.matmul %29, %30, %cst_18 {dimension_numbers = #tpu.dot_dimension_numbers<[2], [2], [1], [1], [0, 0, 0, 1, 1, 1], [0], [0]>} : vector<4x8x16xf32>, vector<4x8x16xf32>, vector<4x8x8xf32> -> vector<4x8x8xf32>
    "tpu.trace_stop"() : () -> ()
    %33 = arith.addf %32, %4 : vector<4x8x8xf32>
    %cst_19 = arith.constant dense<0xFF800000> : vector<4x8xf32>
    %34 = vector.multi_reduction <maximumf>, %33, %cst_19 [2] : vector<4x8x8xf32> to vector<4x8xf32>
    %35 = vector.shape_cast %34 : vector<4x8xf32> to vector<4x8x1xf32>
    %36 = vector.broadcast %35 : vector<4x8x1xf32> to vector<4x8x8xf32>
    %37 = arith.subf %33, %36 : vector<4x8x8xf32>
    %38 = math.exp %37 : vector<4x8x8xf32>
    %cst_20 = arith.constant dense<0.000000e+00> : vector<4x8xf32>
    %39 = vector.multi_reduction <add>, %38, %cst_20 [2] : vector<4x8x8xf32> to vector<4x8xf32>
    %40 = vector.shape_cast %39 : vector<4x8xf32> to vector<4x8x1xf32>
    %41 = tpu.reciprocal %40 {approx = true} : vector<4x8x1xf32> -> vector<4x8x1xf32>
    %42 = vector.broadcast %41 : vector<4x8x1xf32> to vector<4x8x8xf32>
    %43 = arith.mulf %38, %42 : vector<4x8x8xf32>
    "tpu.trace_start"() <{level = 10 : i32, message = "bls,bsd->bld"}> : () -> ()
    %cst_21 = arith.constant dense<0.000000e+00> : vector<4x8x16xf32>
    %44 = tpu.matmul %43, %31, %cst_21 {dimension_numbers = #tpu.dot_dimension_numbers<[2], [1], [1], [2], [0, 0, 0, 1, 1, 2], [0], [0]>} : vector<4x8x8xf32>, vector<4x8x16xf32>, vector<4x8x16xf32> -> vector<4x8x16xf32>
    "tpu.trace_stop"() : () -> ()
    %45 = vector.extract_strided_slice %12 {offsets = [0, 0, 32], sizes = [4, 8, 16], strides = [1, 1, 1]} : vector<4x8x192xf32> to vector<4x8x16xf32>
    %46 = vector.extract_strided_slice %12 {offsets = [0, 0, 96], sizes = [4, 8, 16], strides = [1, 1, 1]} : vector<4x8x192xf32> to vector<4x8x16xf32>
    %47 = vector.extract_strided_slice %12 {offsets = [0, 0, 160], sizes = [4, 8, 16], strides = [1, 1, 1]} : vector<4x8x192xf32> to vector<4x8x16xf32>
    "tpu.trace_start"() <{level = 10 : i32, message = "bld,bsd->bls"}> : () -> ()
    %cst_22 = arith.constant dense<0.000000e+00> : vector<4x8x8xf32>
    %48 = tpu.matmul %45, %46, %cst_22 {dimension_numbers = #tpu.dot_dimension_numbers<[2], [2], [1], [1], [0, 0, 0, 1, 1, 1], [0], [0]>} : vector<4x8x16xf32>, vector<4x8x16xf32>, vector<4x8x8xf32> -> vector<4x8x8xf32>
    "tpu.trace_stop"() : () -> ()
    %49 = arith.addf %48, %4 : vector<4x8x8xf32>
    %cst_23 = arith.constant dense<0xFF800000> : vector<4x8xf32>
    %50 = vector.multi_reduction <maximumf>, %49, %cst_23 [2] : vector<4x8x8xf32> to vector<4x8xf32>
    %51 = vector.shape_cast %50 : vector<4x8xf32> to vector<4x8x1xf32>
    %52 = vector.broadcast %51 : vector<4x8x1xf32> to vector<4x8x8xf32>
    %53 = arith.subf %49, %52 : vector<4x8x8xf32>
    %54 = math.exp %53 : vector<4x8x8xf32>
    %cst_24 = arith.constant dense<0.000000e+00> : vector<4x8xf32>
    %55 = vector.multi_reduction <add>, %54, %cst_24 [2] : vector<4x8x8xf32> to vector<4x8xf32>
    %56 = vector.shape_cast %55 : vector<4x8xf32> to vector<4x8x1xf32>
    %57 = tpu.reciprocal %56 {approx = true} : vector<4x8x1xf32> -> vector<4x8x1xf32>
    %58 = vector.broadcast %57 : vector<4x8x1xf32> to vector<4x8x8xf32>
    %59 = arith.mulf %54, %58 : vector<4x8x8xf32>
    "tpu.trace_start"() <{level = 10 : i32, message = "bls,bsd->bld"}> : () -> ()
    %cst_25 = arith.constant dense<0.000000e+00> : vector<4x8x16xf32>
    %60 = tpu.matmul %59, %47, %cst_25 {dimension_numbers = #tpu.dot_dimension_numbers<[2], [1], [1], [2], [0, 0, 0, 1, 1, 2], [0], [0]>} : vector<4x8x8xf32>, vector<4x8x16xf32>, vector<4x8x16xf32> -> vector<4x8x16xf32>
    "tpu.trace_stop"() : () -> ()
    %61 = vector.extract_strided_slice %12 {offsets = [0, 0, 48], sizes = [4, 8, 16], strides = [1, 1, 1]} : vector<4x8x192xf32> to vector<4x8x16xf32>
    %62 = vector.extract_strided_slice %12 {offsets = [0, 0, 112], sizes = [4, 8, 16], strides = [1, 1, 1]} : vector<4x8x192xf32> to vector<4x8x16xf32>
    %63 = vector.extract_strided_slice %12 {offsets = [0, 0, 176], sizes = [4, 8, 16], strides = [1, 1, 1]} : vector<4x8x192xf32> to vector<4x8x16xf32>
    "tpu.trace_start"() <{level = 10 : i32, message = "bld,bsd->bls"}> : () -> ()
    %cst_26 = arith.constant dense<0.000000e+00> : vector<4x8x8xf32>
    %64 = tpu.matmul %61, %62, %cst_26 {dimension_numbers = #tpu.dot_dimension_numbers<[2], [2], [1], [1], [0, 0, 0, 1, 1, 1], [0], [0]>} : vector<4x8x16xf32>, vector<4x8x16xf32>, vector<4x8x8xf32> -> vector<4x8x8xf32>
    "tpu.trace_stop"() : () -> ()
    %65 = arith.addf %64, %4 : vector<4x8x8xf32>
    %cst_27 = arith.constant dense<0xFF800000> : vector<4x8xf32>
    %66 = vector.multi_reduction <maximumf>, %65, %cst_27 [2] : vector<4x8x8xf32> to vector<4x8xf32>
    %67 = vector.shape_cast %66 : vector<4x8xf32> to vector<4x8x1xf32>
    %68 = vector.broadcast %67 : vector<4x8x1xf32> to vector<4x8x8xf32>
    %69 = arith.subf %65, %68 : vector<4x8x8xf32>
    %70 = math.exp %69 : vector<4x8x8xf32>
    %cst_28 = arith.constant dense<0.000000e+00> : vector<4x8xf32>
    %71 = vector.multi_reduction <add>, %70, %cst_28 [2] : vector<4x8x8xf32> to vector<4x8xf32>
    %72 = vector.shape_cast %71 : vector<4x8xf32> to vector<4x8x1xf32>
    %73 = tpu.reciprocal %72 {approx = true} : vector<4x8x1xf32> -> vector<4x8x1xf32>
    %74 = vector.broadcast %73 : vector<4x8x1xf32> to vector<4x8x8xf32>
    %75 = arith.mulf %70, %74 : vector<4x8x8xf32>
    "tpu.trace_start"() <{level = 10 : i32, message = "bls,bsd->bld"}> : () -> ()
    %cst_29 = arith.constant dense<0.000000e+00> : vector<4x8x16xf32>
    %76 = tpu.matmul %75, %63, %cst_29 {dimension_numbers = #tpu.dot_dimension_numbers<[2], [1], [1], [2], [0, 0, 0, 1, 1, 2], [0], [0]>} : vector<4x8x8xf32>, vector<4x8x16xf32>, vector<4x8x16xf32> -> vector<4x8x16xf32>
    "tpu.trace_stop"() : () -> ()
    %77 = tpu.concatenate %28, %44, %60, %76 in 2 : vector<4x8x16xf32>, vector<4x8x16xf32>, vector<4x8x16xf32>, vector<4x8x16xf32> -> vector<4x8x64xf32>
    %78 = vector.shape_cast %77 : vector<4x8x64xf32> to vector<32x64xf32>
    %c0_30 = arith.constant 0 : index
    %c0_31 = arith.constant 0 : index
    %c192 = arith.constant 192 : index
    %79 = vector.load %arg4[%c0_30, %c0_31, %c192] : memref<2x64x640xf32, #tpu.memory_space<vmem>>, vector<1x64x64xf32>
    %80 = vector.shape_cast %79 : vector<1x64x64xf32> to vector<64x64xf32>
    %cst_32 = arith.constant dense<0.000000e+00> : vector<32x64xf32>
    %81 = tpu.matmul %78, %80, %cst_32 {dimension_numbers = #tpu.dot_dimension_numbers<[1], [0], [0], [1], [0, 0, 1, 1], [], []>} : vector<32x64xf32>, vector<64x64xf32>, vector<32x64xf32> -> vector<32x64xf32>
    %c0_33 = arith.constant 0 : index
    %c0_34 = arith.constant 0 : index
    %c192_35 = arith.constant 192 : index
    %82 = vector.load %arg6[%c0_33, %c0_34, %c192_35] : memref<2x1x1088xf32, #tpu.memory_space<vmem>>, vector<1x1x64xf32>
    %83 = vector.shape_cast %82 : vector<1x1x64xf32> to vector<1x64xf32>
    %84 = vector.broadcast %83 : vector<1x64xf32> to vector<32x64xf32>
    %85 = arith.addf %81, %84 : vector<32x64xf32>
    %86 = arith.addf %1, %85 : vector<32x64xf32>
    %c0_36 = arith.constant 0 : index
    %c0_37 = arith.constant 0 : index
    %c704 = arith.constant 704 : index
    %87 = vector.load %arg6[%c0_36, %c0_37, %c704] : memref<2x1x1088xf32, #tpu.memory_space<vmem>>, vector<1x1x64xf32>
    %88 = vector.shape_cast %87 : vector<1x1x64xf32> to vector<1x64xf32>
    %c0_38 = arith.constant 0 : index
    %c0_39 = arith.constant 0 : index
    %c768 = arith.constant 768 : index
    %89 = vector.load %arg6[%c0_38, %c0_39, %c768] : memref<2x1x1088xf32, #tpu.memory_space<vmem>>, vector<1x1x64xf32>
    %90 = vector.shape_cast %89 : vector<1x1x64xf32> to vector<1x64xf32>
    %cst_40 = arith.constant dense<0.000000e+00> : vector<32xf32>
    %91 = vector.multi_reduction <add>, %86, %cst_40 [1] : vector<32x64xf32> to vector<32xf32>
    %92 = vector.shape_cast %91 : vector<32xf32> to vector<32x1xf32>
    %cst_41 = arith.constant 6.400000e+01 : f32
    %93 = vector.broadcast %cst_41 : f32 to vector<32x1xf32>
    %94 = arith.divf %92, %93 : vector<32x1xf32>
    %95 = vector.broadcast %94 : vector<32x1xf32> to vector<32x64xf32>
    %96 = arith.subf %86, %95 : vector<32x64xf32>
    %97 = arith.mulf %96, %96 : vector<32x64xf32>
    %cst_42 = arith.constant dense<0.000000e+00> : vector<32xf32>
    %98 = vector.multi_reduction <add>, %97, %cst_42 [1] : vector<32x64xf32> to vector<32xf32>
    %99 = vector.shape_cast %98 : vector<32xf32> to vector<32x1xf32>
    %cst_43 = arith.constant 6.400000e+01 : f32
    %100 = vector.broadcast %cst_43 : f32 to vector<32x1xf32>
    %101 = arith.divf %99, %100 : vector<32x1xf32>
    %102 = vector.broadcast %94 : vector<32x1xf32> to vector<32x64xf32>
    %103 = arith.subf %86, %102 : vector<32x64xf32>
    %cst_44 = arith.constant 9.99999974E-6 : f32
    %104 = vector.broadcast %cst_44 : f32 to vector<32x1xf32>
    %105 = arith.addf %101, %104 : vector<32x1xf32>
    %106 = math.rsqrt %105 : vector<32x1xf32>
    %107 = vector.broadcast %106 : vector<32x1xf32> to vector<32x64xf32>
    %108 = arith.mulf %103, %107 : vector<32x64xf32>
    %109 = vector.broadcast %88 : vector<1x64xf32> to vector<32x64xf32>
    %110 = arith.mulf %108, %109 : vector<32x64xf32>
    %111 = vector.broadcast %90 : vector<1x64xf32> to vector<32x64xf32>
    %112 = arith.addf %110, %111 : vector<32x64xf32>
    %c0_45 = arith.constant 0 : index
    %c0_46 = arith.constant 0 : index
    %c256 = arith.constant 256 : index
    %113 = vector.load %arg4[%c0_45, %c0_46, %c256] : memref<2x64x640xf32, #tpu.memory_space<vmem>>, vector<1x64x64xf32>
    %114 = vector.shape_cast %113 : vector<1x64x64xf32> to vector<64x64xf32>
    %cst_47 = arith.constant dense<0.000000e+00> : vector<32x64xf32>
    %115 = tpu.matmul %112, %114, %cst_47 {dimension_numbers = #tpu.dot_dimension_numbers<[1], [0], [0], [1], [0, 0, 1, 1], [], []>} : vector<32x64xf32>, vector<64x64xf32>, vector<32x64xf32> -> vector<32x64xf32>
    %c0_48 = arith.constant 0 : index
    %c0_49 = arith.constant 0 : index
    %c256_50 = arith.constant 256 : index
    %116 = vector.load %arg6[%c0_48, %c0_49, %c256_50] : memref<2x1x1088xf32, #tpu.memory_space<vmem>>, vector<1x1x64xf32>
    %117 = vector.shape_cast %116 : vector<1x1x64xf32> to vector<1x64xf32>
    %118 = vector.broadcast %117 : vector<1x64xf32> to vector<32x64xf32>
    %119 = arith.addf %115, %118 : vector<32x64xf32>
    %c0_51 = arith.constant 0 : index
    %c0_52 = arith.constant 0 : index
    %c320 = arith.constant 320 : index
    %120 = vector.load %arg4[%c0_51, %c0_52, %c320] : memref<2x64x640xf32, #tpu.memory_space<vmem>>, vector<1x64x128xf32>
    %121 = vector.shape_cast %120 : vector<1x64x128xf32> to vector<64x128xf32>
    %cst_53 = arith.constant dense<0.000000e+00> : vector<64x128xf32>
    %122 = tpu.matmul %3, %121, %cst_53 {dimension_numbers = #tpu.dot_dimension_numbers<[1], [0], [0], [1], [0, 0, 1, 1], [], []>} : vector<64x64xf32>, vector<64x128xf32>, vector<64x128xf32> -> vector<64x128xf32>
    %c0_54 = arith.constant 0 : index
    %c0_55 = arith.constant 0 : index
    %c320_56 = arith.constant 320 : index
    %123 = vector.load %arg6[%c0_54, %c0_55, %c320_56] : memref<2x1x1088xf32, #tpu.memory_space<vmem>>, vector<1x1x128xf32>
    %124 = vector.shape_cast %123 : vector<1x1x128xf32> to vector<1x128xf32>
    %125 = vector.broadcast %124 : vector<1x128xf32> to vector<64x128xf32>
    %126 = arith.addf %122, %125 : vector<64x128xf32>
    %127 = vector.shape_cast %119 : vector<32x64xf32> to vector<4x8x64xf32>
    %128 = vector.shape_cast %126 : vector<64x128xf32> to vector<4x16x128xf32>
    %129 = vector.extract_strided_slice %127 {offsets = [0, 0, 0], sizes = [4, 8, 16], strides = [1, 1, 1]} : vector<4x8x64xf32> to vector<4x8x16xf32>
    %130 = vector.extract_strided_slice %128 {offsets = [0, 0, 0], sizes = [4, 16, 16], strides = [1, 1, 1]} : vector<4x16x128xf32> to vector<4x16x16xf32>
    %131 = vector.extract_strided_slice %128 {offsets = [0, 0, 64], sizes = [4, 16, 16], strides = [1, 1, 1]} : vector<4x16x128xf32> to vector<4x16x16xf32>
    "tpu.trace_start"() <{level = 10 : i32, message = "bld,bsd->bls"}> : () -> ()
    %cst_57 = arith.constant dense<0.000000e+00> : vector<4x8x16xf32>
    %132 = tpu.matmul %129, %130, %cst_57 {dimension_numbers = #tpu.dot_dimension_numbers<[2], [2], [1], [1], [0, 0, 0, 1, 1, 1], [0], [0]>} : vector<4x8x16xf32>, vector<4x16x16xf32>, vector<4x8x16xf32> -> vector<4x8x16xf32>
    "tpu.trace_stop"() : () -> ()
    %cst_58 = arith.constant dense<0xFF800000> : vector<4x8xf32>
    %133 = vector.multi_reduction <maximumf>, %132, %cst_58 [2] : vector<4x8x16xf32> to vector<4x8xf32>
    %134 = vector.shape_cast %133 : vector<4x8xf32> to vector<4x8x1xf32>
    %135 = vector.broadcast %134 : vector<4x8x1xf32> to vector<4x8x16xf32>
    %136 = arith.subf %132, %135 : vector<4x8x16xf32>
    %137 = math.exp %136 : vector<4x8x16xf32>
    %cst_59 = arith.constant dense<0.000000e+00> : vector<4x8xf32>
    %138 = vector.multi_reduction <add>, %137, %cst_59 [2] : vector<4x8x16xf32> to vector<4x8xf32>
    %139 = vector.shape_cast %138 : vector<4x8xf32> to vector<4x8x1xf32>
    %140 = tpu.reciprocal %139 {approx = true} : vector<4x8x1xf32> -> vector<4x8x1xf32>
    %141 = vector.broadcast %140 : vector<4x8x1xf32> to vector<4x8x16xf32>
    %142 = arith.mulf %137, %141 : vector<4x8x16xf32>
    "tpu.trace_start"() <{level = 10 : i32, message = "bls,bsd->bld"}> : () -> ()
    %cst_60 = arith.constant dense<0.000000e+00> : vector<4x8x16xf32>
    %143 = tpu.matmul %142, %131, %cst_60 {dimension_numbers = #tpu.dot_dimension_numbers<[2], [1], [1], [2], [0, 0, 0, 1, 1, 2], [0], [0]>} : vector<4x8x16xf32>, vector<4x16x16xf32>, vector<4x8x16xf32> -> vector<4x8x16xf32>
    "tpu.trace_stop"() : () -> ()
    %144 = vector.extract_strided_slice %127 {offsets = [0, 0, 16], sizes = [4, 8, 16], strides = [1, 1, 1]} : vector<4x8x64xf32> to vector<4x8x16xf32>
    %145 = vector.extract_strided_slice %128 {offsets = [0, 0, 16], sizes = [4, 16, 16], strides = [1, 1, 1]} : vector<4x16x128xf32> to vector<4x16x16xf32>
    %146 = vector.extract_strided_slice %128 {offsets = [0, 0, 80], sizes = [4, 16, 16], strides = [1, 1, 1]} : vector<4x16x128xf32> to vector<4x16x16xf32>
    "tpu.trace_start"() <{level = 10 : i32, message = "bld,bsd->bls"}> : () -> ()
    %cst_61 = arith.constant dense<0.000000e+00> : vector<4x8x16xf32>
    %147 = tpu.matmul %144, %145, %cst_61 {dimension_numbers = #tpu.dot_dimension_numbers<[2], [2], [1], [1], [0, 0, 0, 1, 1, 1], [0], [0]>} : vector<4x8x16xf32>, vector<4x16x16xf32>, vector<4x8x16xf32> -> vector<4x8x16xf32>
    "tpu.trace_stop"() : () -> ()
    %cst_62 = arith.constant dense<0xFF800000> : vector<4x8xf32>
    %148 = vector.multi_reduction <maximumf>, %147, %cst_62 [2] : vector<4x8x16xf32> to vector<4x8xf32>
    %149 = vector.shape_cast %148 : vector<4x8xf32> to vector<4x8x1xf32>
    %150 = vector.broadcast %149 : vector<4x8x1xf32> to vector<4x8x16xf32>
    %151 = arith.subf %147, %150 : vector<4x8x16xf32>
    %152 = math.exp %151 : vector<4x8x16xf32>
    %cst_63 = arith.constant dense<0.000000e+00> : vector<4x8xf32>
    %153 = vector.multi_reduction <add>, %152, %cst_63 [2] : vector<4x8x16xf32> to vector<4x8xf32>
    %154 = vector.shape_cast %153 : vector<4x8xf32> to vector<4x8x1xf32>
    %155 = tpu.reciprocal %154 {approx = true} : vector<4x8x1xf32> -> vector<4x8x1xf32>
    %156 = vector.broadcast %155 : vector<4x8x1xf32> to vector<4x8x16xf32>
    %157 = arith.mulf %152, %156 : vector<4x8x16xf32>
    "tpu.trace_start"() <{level = 10 : i32, message = "bls,bsd->bld"}> : () -> ()
    %cst_64 = arith.constant dense<0.000000e+00> : vector<4x8x16xf32>
    %158 = tpu.matmul %157, %146, %cst_64 {dimension_numbers = #tpu.dot_dimension_numbers<[2], [1], [1], [2], [0, 0, 0, 1, 1, 2], [0], [0]>} : vector<4x8x16xf32>, vector<4x16x16xf32>, vector<4x8x16xf32> -> vector<4x8x16xf32>
    "tpu.trace_stop"() : () -> ()
    %159 = vector.extract_strided_slice %127 {offsets = [0, 0, 32], sizes = [4, 8, 16], strides = [1, 1, 1]} : vector<4x8x64xf32> to vector<4x8x16xf32>
    %160 = vector.extract_strided_slice %128 {offsets = [0, 0, 32], sizes = [4, 16, 16], strides = [1, 1, 1]} : vector<4x16x128xf32> to vector<4x16x16xf32>
    %161 = vector.extract_strided_slice %128 {offsets = [0, 0, 96], sizes = [4, 16, 16], strides = [1, 1, 1]} : vector<4x16x128xf32> to vector<4x16x16xf32>
    "tpu.trace_start"() <{level = 10 : i32, message = "bld,bsd->bls"}> : () -> ()
    %cst_65 = arith.constant dense<0.000000e+00> : vector<4x8x16xf32>
    %162 = tpu.matmul %159, %160, %cst_65 {dimension_numbers = #tpu.dot_dimension_numbers<[2], [2], [1], [1], [0, 0, 0, 1, 1, 1], [0], [0]>} : vector<4x8x16xf32>, vector<4x16x16xf32>, vector<4x8x16xf32> -> vector<4x8x16xf32>
    "tpu.trace_stop"() : () -> ()
    %cst_66 = arith.constant dense<0xFF800000> : vector<4x8xf32>
    %163 = vector.multi_reduction <maximumf>, %162, %cst_66 [2] : vector<4x8x16xf32> to vector<4x8xf32>
    %164 = vector.shape_cast %163 : vector<4x8xf32> to vector<4x8x1xf32>
    %165 = vector.broadcast %164 : vector<4x8x1xf32> to vector<4x8x16xf32>
    %166 = arith.subf %162, %165 : vector<4x8x16xf32>
    %167 = math.exp %166 : vector<4x8x16xf32>
    %cst_67 = arith.constant dense<0.000000e+00> : vector<4x8xf32>
    %168 = vector.multi_reduction <add>, %167, %cst_67 [2] : vector<4x8x16xf32> to vector<4x8xf32>
    %169 = vector.shape_cast %168 : vector<4x8xf32> to vector<4x8x1xf32>
    %170 = tpu.reciprocal %169 {approx = true} : vector<4x8x1xf32> -> vector<4x8x1xf32>
    %171 = vector.broadcast %170 : vector<4x8x1xf32> to vector<4x8x16xf32>
    %172 = arith.mulf %167, %171 : vector<4x8x16xf32>
    "tpu.trace_start"() <{level = 10 : i32, message = "bls,bsd->bld"}> : () -> ()
    %cst_68 = arith.constant dense<0.000000e+00> : vector<4x8x16xf32>
    %173 = tpu.matmul %172, %161, %cst_68 {dimension_numbers = #tpu.dot_dimension_numbers<[2], [1], [1], [2], [0, 0, 0, 1, 1, 2], [0], [0]>} : vector<4x8x16xf32>, vector<4x16x16xf32>, vector<4x8x16xf32> -> vector<4x8x16xf32>
    "tpu.trace_stop"() : () -> ()
    %174 = vector.extract_strided_slice %127 {offsets = [0, 0, 48], sizes = [4, 8, 16], strides = [1, 1, 1]} : vector<4x8x64xf32> to vector<4x8x16xf32>
    %175 = vector.extract_strided_slice %128 {offsets = [0, 0, 48], sizes = [4, 16, 16], strides = [1, 1, 1]} : vector<4x16x128xf32> to vector<4x16x16xf32>
    %176 = vector.extract_strided_slice %128 {offsets = [0, 0, 112], sizes = [4, 16, 16], strides = [1, 1, 1]} : vector<4x16x128xf32> to vector<4x16x16xf32>
    "tpu.trace_start"() <{level = 10 : i32, message = "bld,bsd->bls"}> : () -> ()
    %cst_69 = arith.constant dense<0.000000e+00> : vector<4x8x16xf32>
    %177 = tpu.matmul %174, %175, %cst_69 {dimension_numbers = #tpu.dot_dimension_numbers<[2], [2], [1], [1], [0, 0, 0, 1, 1, 1], [0], [0]>} : vector<4x8x16xf32>, vector<4x16x16xf32>, vector<4x8x16xf32> -> vector<4x8x16xf32>
    "tpu.trace_stop"() : () -> ()
    %cst_70 = arith.constant dense<0xFF800000> : vector<4x8xf32>
    %178 = vector.multi_reduction <maximumf>, %177, %cst_70 [2] : vector<4x8x16xf32> to vector<4x8xf32>
    %179 = vector.shape_cast %178 : vector<4x8xf32> to vector<4x8x1xf32>
    %180 = vector.broadcast %179 : vector<4x8x1xf32> to vector<4x8x16xf32>
    %181 = arith.subf %177, %180 : vector<4x8x16xf32>
    %182 = math.exp %181 : vector<4x8x16xf32>
    %cst_71 = arith.constant dense<0.000000e+00> : vector<4x8xf32>
    %183 = vector.multi_reduction <add>, %182, %cst_71 [2] : vector<4x8x16xf32> to vector<4x8xf32>
    %184 = vector.shape_cast %183 : vector<4x8xf32> to vector<4x8x1xf32>
    %185 = tpu.reciprocal %184 {approx = true} : vector<4x8x1xf32> -> vector<4x8x1xf32>
    %186 = vector.broadcast %185 : vector<4x8x1xf32> to vector<4x8x16xf32>
    %187 = arith.mulf %182, %186 : vector<4x8x16xf32>
    "tpu.trace_start"() <{level = 10 : i32, message = "bls,bsd->bld"}> : () -> ()
    %cst_72 = arith.constant dense<0.000000e+00> : vector<4x8x16xf32>
    %188 = tpu.matmul %187, %176, %cst_72 {dimension_numbers = #tpu.dot_dimension_numbers<[2], [1], [1], [2], [0, 0, 0, 1, 1, 2], [0], [0]>} : vector<4x8x16xf32>, vector<4x16x16xf32>, vector<4x8x16xf32> -> vector<4x8x16xf32>
    "tpu.trace_stop"() : () -> ()
    %189 = tpu.concatenate %143, %158, %173, %188 in 2 : vector<4x8x16xf32>, vector<4x8x16xf32>, vector<4x8x16xf32>, vector<4x8x16xf32> -> vector<4x8x64xf32>
    %190 = vector.shape_cast %189 : vector<4x8x64xf32> to vector<32x64xf32>
    %c0_73 = arith.constant 0 : index
    %c0_74 = arith.constant 0 : index
    %c448 = arith.constant 448 : index
    %191 = vector.load %arg4[%c0_73, %c0_74, %c448] : memref<2x64x640xf32, #tpu.memory_space<vmem>>, vector<1x64x64xf32>
    %192 = vector.shape_cast %191 : vector<1x64x64xf32> to vector<64x64xf32>
    %cst_75 = arith.constant dense<0.000000e+00> : vector<32x64xf32>
    %193 = tpu.matmul %190, %192, %cst_75 {dimension_numbers = #tpu.dot_dimension_numbers<[1], [0], [0], [1], [0, 0, 1, 1], [], []>} : vector<32x64xf32>, vector<64x64xf32>, vector<32x64xf32> -> vector<32x64xf32>
    %c0_76 = arith.constant 0 : index
    %c0_77 = arith.constant 0 : index
    %c448_78 = arith.constant 448 : index
    %194 = vector.load %arg6[%c0_76, %c0_77, %c448_78] : memref<2x1x1088xf32, #tpu.memory_space<vmem>>, vector<1x1x64xf32>
    %195 = vector.shape_cast %194 : vector<1x1x64xf32> to vector<1x64xf32>
    %196 = vector.broadcast %195 : vector<1x64xf32> to vector<32x64xf32>
    %197 = arith.addf %193, %196 : vector<32x64xf32>
    %198 = arith.addf %112, %197 : vector<32x64xf32>
    %c0_79 = arith.constant 0 : index
    %c0_80 = arith.constant 0 : index
    %c832 = arith.constant 832 : index
    %199 = vector.load %arg6[%c0_79, %c0_80, %c832] : memref<2x1x1088xf32, #tpu.memory_space<vmem>>, vector<1x1x64xf32>
    %200 = vector.shape_cast %199 : vector<1x1x64xf32> to vector<1x64xf32>
    %c0_81 = arith.constant 0 : index
    %c0_82 = arith.constant 0 : index
    %c896 = arith.constant 896 : index
    %201 = vector.load %arg6[%c0_81, %c0_82, %c896] : memref<2x1x1088xf32, #tpu.memory_space<vmem>>, vector<1x1x64xf32>
    %202 = vector.shape_cast %201 : vector<1x1x64xf32> to vector<1x64xf32>
    %cst_83 = arith.constant dense<0.000000e+00> : vector<32xf32>
    %203 = vector.multi_reduction <add>, %198, %cst_83 [1] : vector<32x64xf32> to vector<32xf32>
    %204 = vector.shape_cast %203 : vector<32xf32> to vector<32x1xf32>
    %cst_84 = arith.constant 6.400000e+01 : f32
    %205 = vector.broadcast %cst_84 : f32 to vector<32x1xf32>
    %206 = arith.divf %204, %205 : vector<32x1xf32>
    %207 = vector.broadcast %206 : vector<32x1xf32> to vector<32x64xf32>
    %208 = arith.subf %198, %207 : vector<32x64xf32>
    %209 = arith.mulf %208, %208 : vector<32x64xf32>
    %cst_85 = arith.constant dense<0.000000e+00> : vector<32xf32>
    %210 = vector.multi_reduction <add>, %209, %cst_85 [1] : vector<32x64xf32> to vector<32xf32>
    %211 = vector.shape_cast %210 : vector<32xf32> to vector<32x1xf32>
    %cst_86 = arith.constant 6.400000e+01 : f32
    %212 = vector.broadcast %cst_86 : f32 to vector<32x1xf32>
    %213 = arith.divf %211, %212 : vector<32x1xf32>
    %214 = vector.broadcast %206 : vector<32x1xf32> to vector<32x64xf32>
    %215 = arith.subf %198, %214 : vector<32x64xf32>
    %cst_87 = arith.constant 9.99999974E-6 : f32
    %216 = vector.broadcast %cst_87 : f32 to vector<32x1xf32>
    %217 = arith.addf %213, %216 : vector<32x1xf32>
    %218 = math.rsqrt %217 : vector<32x1xf32>
    %219 = vector.broadcast %218 : vector<32x1xf32> to vector<32x64xf32>
    %220 = arith.mulf %215, %219 : vector<32x64xf32>
    %221 = vector.broadcast %200 : vector<1x64xf32> to vector<32x64xf32>
    %222 = arith.mulf %220, %221 : vector<32x64xf32>
    %223 = vector.broadcast %202 : vector<1x64xf32> to vector<32x64xf32>
    %224 = arith.addf %222, %223 : vector<32x64xf32>
    %c0_88 = arith.constant 0 : index
    %c0_89 = arith.constant 0 : index
    %c512 = arith.constant 512 : index
    %225 = vector.load %arg4[%c0_88, %c0_89, %c512] : memref<2x64x640xf32, #tpu.memory_space<vmem>>, vector<1x64x128xf32>
    %226 = vector.shape_cast %225 : vector<1x64x128xf32> to vector<64x128xf32>
    %cst_90 = arith.constant dense<0.000000e+00> : vector<32x128xf32>
    %227 = tpu.matmul %224, %226, %cst_90 {dimension_numbers = #tpu.dot_dimension_numbers<[1], [0], [0], [1], [0, 0, 1, 1], [], []>} : vector<32x64xf32>, vector<64x128xf32>, vector<32x128xf32> -> vector<32x128xf32>
    %c0_91 = arith.constant 0 : index
    %c0_92 = arith.constant 0 : index
    %c512_93 = arith.constant 512 : index
    %228 = vector.load %arg6[%c0_91, %c0_92, %c512_93] : memref<2x1x1088xf32, #tpu.memory_space<vmem>>, vector<1x1x128xf32>
    %229 = vector.shape_cast %228 : vector<1x1x128xf32> to vector<1x128xf32>
    %230 = vector.broadcast %229 : vector<1x128xf32> to vector<32x128xf32>
    %231 = arith.addf %227, %230 : vector<32x128xf32>
    %cst_94 = arith.constant 0.000000e+00 : f32
    %232 = vector.broadcast %cst_94 : f32 to vector<32x128xf32>
    %233 = arith.maximumf %231, %232 : vector<32x128xf32>
    %c0_95 = arith.constant 0 : index
    %c0_96 = arith.constant 0 : index
    %c0_97 = arith.constant 0 : index
    %234 = vector.load %arg5[%c0_95, %c0_96, %c0_97] : memref<2x128x64xf32, #tpu.memory_space<vmem>>, vector<1x128x64xf32>
    %235 = vector.shape_cast %234 : vector<1x128x64xf32> to vector<128x64xf32>
    %cst_98 = arith.constant dense<0.000000e+00> : vector<32x64xf32>
    %236 = tpu.matmul %233, %235, %cst_98 {dimension_numbers = #tpu.dot_dimension_numbers<[1], [0], [0], [1], [0, 0, 1, 1], [], []>} : vector<32x128xf32>, vector<128x64xf32>, vector<32x64xf32> -> vector<32x64xf32>
    %c0_99 = arith.constant 0 : index
    %c0_100 = arith.constant 0 : index
    %c640 = arith.constant 640 : index
    %237 = vector.load %arg6[%c0_99, %c0_100, %c640] : memref<2x1x1088xf32, #tpu.memory_space<vmem>>, vector<1x1x64xf32>
    %238 = vector.shape_cast %237 : vector<1x1x64xf32> to vector<1x64xf32>
    %239 = vector.broadcast %238 : vector<1x64xf32> to vector<32x64xf32>
    %240 = arith.addf %236, %239 : vector<32x64xf32>
    %241 = arith.addf %224, %240 : vector<32x64xf32>
    %c0_101 = arith.constant 0 : index
    %c0_102 = arith.constant 0 : index
    %c960 = arith.constant 960 : index
    %242 = vector.load %arg6[%c0_101, %c0_102, %c960] : memref<2x1x1088xf32, #tpu.memory_space<vmem>>, vector<1x1x64xf32>
    %243 = vector.shape_cast %242 : vector<1x1x64xf32> to vector<1x64xf32>
    %c0_103 = arith.constant 0 : index
    %c0_104 = arith.constant 0 : index
    %c1024 = arith.constant 1024 : index
    %244 = vector.load %arg6[%c0_103, %c0_104, %c1024] : memref<2x1x1088xf32, #tpu.memory_space<vmem>>, vector<1x1x64xf32>
    %245 = vector.shape_cast %244 : vector<1x1x64xf32> to vector<1x64xf32>
    %cst_105 = arith.constant dense<0.000000e+00> : vector<32xf32>
    %246 = vector.multi_reduction <add>, %241, %cst_105 [1] : vector<32x64xf32> to vector<32xf32>
    %247 = vector.shape_cast %246 : vector<32xf32> to vector<32x1xf32>
    %cst_106 = arith.constant 6.400000e+01 : f32
    %248 = vector.broadcast %cst_106 : f32 to vector<32x1xf32>
    %249 = arith.divf %247, %248 : vector<32x1xf32>
    %250 = vector.broadcast %249 : vector<32x1xf32> to vector<32x64xf32>
    %251 = arith.subf %241, %250 : vector<32x64xf32>
    %252 = arith.mulf %251, %251 : vector<32x64xf32>
    %cst_107 = arith.constant dense<0.000000e+00> : vector<32xf32>
    %253 = vector.multi_reduction <add>, %252, %cst_107 [1] : vector<32x64xf32> to vector<32xf32>
    %254 = vector.shape_cast %253 : vector<32xf32> to vector<32x1xf32>
    %cst_108 = arith.constant 6.400000e+01 : f32
    %255 = vector.broadcast %cst_108 : f32 to vector<32x1xf32>
    %256 = arith.divf %254, %255 : vector<32x1xf32>
    %257 = vector.broadcast %249 : vector<32x1xf32> to vector<32x64xf32>
    %258 = arith.subf %241, %257 : vector<32x64xf32>
    %cst_109 = arith.constant 9.99999974E-6 : f32
    %259 = vector.broadcast %cst_109 : f32 to vector<32x1xf32>
    %260 = arith.addf %256, %259 : vector<32x1xf32>
    %261 = math.rsqrt %260 : vector<32x1xf32>
    %262 = vector.broadcast %261 : vector<32x1xf32> to vector<32x64xf32>
    %263 = arith.mulf %258, %262 : vector<32x64xf32>
    %264 = vector.broadcast %243 : vector<1x64xf32> to vector<32x64xf32>
    %265 = arith.mulf %263, %264 : vector<32x64xf32>
    %266 = vector.broadcast %245 : vector<1x64xf32> to vector<32x64xf32>
    %267 = arith.addf %265, %266 : vector<32x64xf32>
    %c1 = arith.constant 1 : index
    %c0_110 = arith.constant 0 : index
    %c0_111 = arith.constant 0 : index
    %268 = vector.load %arg4[%c1, %c0_110, %c0_111] : memref<2x64x640xf32, #tpu.memory_space<vmem>>, vector<1x64x192xf32>
    %269 = vector.shape_cast %268 : vector<1x64x192xf32> to vector<64x192xf32>
    %cst_112 = arith.constant dense<0.000000e+00> : vector<32x192xf32>
    %270 = tpu.matmul %267, %269, %cst_112 {dimension_numbers = #tpu.dot_dimension_numbers<[1], [0], [0], [1], [0, 0, 1, 1], [], []>} : vector<32x64xf32>, vector<64x192xf32>, vector<32x192xf32> -> vector<32x192xf32>
    %c1_113 = arith.constant 1 : index
    %c0_114 = arith.constant 0 : index
    %c0_115 = arith.constant 0 : index
    %271 = vector.load %arg6[%c1_113, %c0_114, %c0_115] : memref<2x1x1088xf32, #tpu.memory_space<vmem>>, vector<1x1x192xf32>
    %272 = vector.shape_cast %271 : vector<1x1x192xf32> to vector<1x192xf32>
    %273 = vector.broadcast %272 : vector<1x192xf32> to vector<32x192xf32>
    %274 = arith.addf %270, %273 : vector<32x192xf32>
    %275 = vector.shape_cast %274 : vector<32x192xf32> to vector<4x8x192xf32>
    %276 = vector.extract_strided_slice %275 {offsets = [0, 0, 0], sizes = [4, 8, 16], strides = [1, 1, 1]} : vector<4x8x192xf32> to vector<4x8x16xf32>
    %277 = vector.extract_strided_slice %275 {offsets = [0, 0, 64], sizes = [4, 8, 16], strides = [1, 1, 1]} : vector<4x8x192xf32> to vector<4x8x16xf32>
    %278 = vector.extract_strided_slice %275 {offsets = [0, 0, 128], sizes = [4, 8, 16], strides = [1, 1, 1]} : vector<4x8x192xf32> to vector<4x8x16xf32>
    "tpu.trace_start"() <{level = 10 : i32, message = "bld,bsd->bls"}> : () -> ()
    %cst_116 = arith.constant dense<0.000000e+00> : vector<4x8x8xf32>
    %279 = tpu.matmul %276, %277, %cst_116 {dimension_numbers = #tpu.dot_dimension_numbers<[2], [2], [1], [1], [0, 0, 0, 1, 1, 1], [0], [0]>} : vector<4x8x16xf32>, vector<4x8x16xf32>, vector<4x8x8xf32> -> vector<4x8x8xf32>
    "tpu.trace_stop"() : () -> ()
    %280 = arith.addf %279, %4 : vector<4x8x8xf32>
    %cst_117 = arith.constant dense<0xFF800000> : vector<4x8xf32>
    %281 = vector.multi_reduction <maximumf>, %280, %cst_117 [2] : vector<4x8x8xf32> to vector<4x8xf32>
    %282 = vector.shape_cast %281 : vector<4x8xf32> to vector<4x8x1xf32>
    %283 = vector.broadcast %282 : vector<4x8x1xf32> to vector<4x8x8xf32>
    %284 = arith.subf %280, %283 : vector<4x8x8xf32>
    %285 = math.exp %284 : vector<4x8x8xf32>
    %cst_118 = arith.constant dense<0.000000e+00> : vector<4x8xf32>
    %286 = vector.multi_reduction <add>, %285, %cst_118 [2] : vector<4x8x8xf32> to vector<4x8xf32>
    %287 = vector.shape_cast %286 : vector<4x8xf32> to vector<4x8x1xf32>
    %288 = tpu.reciprocal %287 {approx = true} : vector<4x8x1xf32> -> vector<4x8x1xf32>
    %289 = vector.broadcast %288 : vector<4x8x1xf32> to vector<4x8x8xf32>
    %290 = arith.mulf %285, %289 : vector<4x8x8xf32>
    "tpu.trace_start"() <{level = 10 : i32, message = "bls,bsd->bld"}> : () -> ()
    %cst_119 = arith.constant dense<0.000000e+00> : vector<4x8x16xf32>
    %291 = tpu.matmul %290, %278, %cst_119 {dimension_numbers = #tpu.dot_dimension_numbers<[2], [1], [1], [2], [0, 0, 0, 1, 1, 2], [0], [0]>} : vector<4x8x8xf32>, vector<4x8x16xf32>, vector<4x8x16xf32> -> vector<4x8x16xf32>
    "tpu.trace_stop"() : () -> ()
    %292 = vector.extract_strided_slice %275 {offsets = [0, 0, 16], sizes = [4, 8, 16], strides = [1, 1, 1]} : vector<4x8x192xf32> to vector<4x8x16xf32>
    %293 = vector.extract_strided_slice %275 {offsets = [0, 0, 80], sizes = [4, 8, 16], strides = [1, 1, 1]} : vector<4x8x192xf32> to vector<4x8x16xf32>
    %294 = vector.extract_strided_slice %275 {offsets = [0, 0, 144], sizes = [4, 8, 16], strides = [1, 1, 1]} : vector<4x8x192xf32> to vector<4x8x16xf32>
    "tpu.trace_start"() <{level = 10 : i32, message = "bld,bsd->bls"}> : () -> ()
    %cst_120 = arith.constant dense<0.000000e+00> : vector<4x8x8xf32>
    %295 = tpu.matmul %292, %293, %cst_120 {dimension_numbers = #tpu.dot_dimension_numbers<[2], [2], [1], [1], [0, 0, 0, 1, 1, 1], [0], [0]>} : vector<4x8x16xf32>, vector<4x8x16xf32>, vector<4x8x8xf32> -> vector<4x8x8xf32>
    "tpu.trace_stop"() : () -> ()
    %296 = arith.addf %295, %4 : vector<4x8x8xf32>
    %cst_121 = arith.constant dense<0xFF800000> : vector<4x8xf32>
    %297 = vector.multi_reduction <maximumf>, %296, %cst_121 [2] : vector<4x8x8xf32> to vector<4x8xf32>
    %298 = vector.shape_cast %297 : vector<4x8xf32> to vector<4x8x1xf32>
    %299 = vector.broadcast %298 : vector<4x8x1xf32> to vector<4x8x8xf32>
    %300 = arith.subf %296, %299 : vector<4x8x8xf32>
    %301 = math.exp %300 : vector<4x8x8xf32>
    %cst_122 = arith.constant dense<0.000000e+00> : vector<4x8xf32>
    %302 = vector.multi_reduction <add>, %301, %cst_122 [2] : vector<4x8x8xf32> to vector<4x8xf32>
    %303 = vector.shape_cast %302 : vector<4x8xf32> to vector<4x8x1xf32>
    %304 = tpu.reciprocal %303 {approx = true} : vector<4x8x1xf32> -> vector<4x8x1xf32>
    %305 = vector.broadcast %304 : vector<4x8x1xf32> to vector<4x8x8xf32>
    %306 = arith.mulf %301, %305 : vector<4x8x8xf32>
    "tpu.trace_start"() <{level = 10 : i32, message = "bls,bsd->bld"}> : () -> ()
    %cst_123 = arith.constant dense<0.000000e+00> : vector<4x8x16xf32>
    %307 = tpu.matmul %306, %294, %cst_123 {dimension_numbers = #tpu.dot_dimension_numbers<[2], [1], [1], [2], [0, 0, 0, 1, 1, 2], [0], [0]>} : vector<4x8x8xf32>, vector<4x8x16xf32>, vector<4x8x16xf32> -> vector<4x8x16xf32>
    "tpu.trace_stop"() : () -> ()
    %308 = vector.extract_strided_slice %275 {offsets = [0, 0, 32], sizes = [4, 8, 16], strides = [1, 1, 1]} : vector<4x8x192xf32> to vector<4x8x16xf32>
    %309 = vector.extract_strided_slice %275 {offsets = [0, 0, 96], sizes = [4, 8, 16], strides = [1, 1, 1]} : vector<4x8x192xf32> to vector<4x8x16xf32>
    %310 = vector.extract_strided_slice %275 {offsets = [0, 0, 160], sizes = [4, 8, 16], strides = [1, 1, 1]} : vector<4x8x192xf32> to vector<4x8x16xf32>
    "tpu.trace_start"() <{level = 10 : i32, message = "bld,bsd->bls"}> : () -> ()
    %cst_124 = arith.constant dense<0.000000e+00> : vector<4x8x8xf32>
    %311 = tpu.matmul %308, %309, %cst_124 {dimension_numbers = #tpu.dot_dimension_numbers<[2], [2], [1], [1], [0, 0, 0, 1, 1, 1], [0], [0]>} : vector<4x8x16xf32>, vector<4x8x16xf32>, vector<4x8x8xf32> -> vector<4x8x8xf32>
    "tpu.trace_stop"() : () -> ()
    %312 = arith.addf %311, %4 : vector<4x8x8xf32>
    %cst_125 = arith.constant dense<0xFF800000> : vector<4x8xf32>
    %313 = vector.multi_reduction <maximumf>, %312, %cst_125 [2] : vector<4x8x8xf32> to vector<4x8xf32>
    %314 = vector.shape_cast %313 : vector<4x8xf32> to vector<4x8x1xf32>
    %315 = vector.broadcast %314 : vector<4x8x1xf32> to vector<4x8x8xf32>
    %316 = arith.subf %312, %315 : vector<4x8x8xf32>
    %317 = math.exp %316 : vector<4x8x8xf32>
    %cst_126 = arith.constant dense<0.000000e+00> : vector<4x8xf32>
    %318 = vector.multi_reduction <add>, %317, %cst_126 [2] : vector<4x8x8xf32> to vector<4x8xf32>
    %319 = vector.shape_cast %318 : vector<4x8xf32> to vector<4x8x1xf32>
    %320 = tpu.reciprocal %319 {approx = true} : vector<4x8x1xf32> -> vector<4x8x1xf32>
    %321 = vector.broadcast %320 : vector<4x8x1xf32> to vector<4x8x8xf32>
    %322 = arith.mulf %317, %321 : vector<4x8x8xf32>
    "tpu.trace_start"() <{level = 10 : i32, message = "bls,bsd->bld"}> : () -> ()
    %cst_127 = arith.constant dense<0.000000e+00> : vector<4x8x16xf32>
    %323 = tpu.matmul %322, %310, %cst_127 {dimension_numbers = #tpu.dot_dimension_numbers<[2], [1], [1], [2], [0, 0, 0, 1, 1, 2], [0], [0]>} : vector<4x8x8xf32>, vector<4x8x16xf32>, vector<4x8x16xf32> -> vector<4x8x16xf32>
    "tpu.trace_stop"() : () -> ()
    %324 = vector.extract_strided_slice %275 {offsets = [0, 0, 48], sizes = [4, 8, 16], strides = [1, 1, 1]} : vector<4x8x192xf32> to vector<4x8x16xf32>
    %325 = vector.extract_strided_slice %275 {offsets = [0, 0, 112], sizes = [4, 8, 16], strides = [1, 1, 1]} : vector<4x8x192xf32> to vector<4x8x16xf32>
    %326 = vector.extract_strided_slice %275 {offsets = [0, 0, 176], sizes = [4, 8, 16], strides = [1, 1, 1]} : vector<4x8x192xf32> to vector<4x8x16xf32>
    "tpu.trace_start"() <{level = 10 : i32, message = "bld,bsd->bls"}> : () -> ()
    %cst_128 = arith.constant dense<0.000000e+00> : vector<4x8x8xf32>
    %327 = tpu.matmul %324, %325, %cst_128 {dimension_numbers = #tpu.dot_dimension_numbers<[2], [2], [1], [1], [0, 0, 0, 1, 1, 1], [0], [0]>} : vector<4x8x16xf32>, vector<4x8x16xf32>, vector<4x8x8xf32> -> vector<4x8x8xf32>
    "tpu.trace_stop"() : () -> ()
    %328 = arith.addf %327, %4 : vector<4x8x8xf32>
    %cst_129 = arith.constant dense<0xFF800000> : vector<4x8xf32>
    %329 = vector.multi_reduction <maximumf>, %328, %cst_129 [2] : vector<4x8x8xf32> to vector<4x8xf32>
    %330 = vector.shape_cast %329 : vector<4x8xf32> to vector<4x8x1xf32>
    %331 = vector.broadcast %330 : vector<4x8x1xf32> to vector<4x8x8xf32>
    %332 = arith.subf %328, %331 : vector<4x8x8xf32>
    %333 = math.exp %332 : vector<4x8x8xf32>
    %cst_130 = arith.constant dense<0.000000e+00> : vector<4x8xf32>
    %334 = vector.multi_reduction <add>, %333, %cst_130 [2] : vector<4x8x8xf32> to vector<4x8xf32>
    %335 = vector.shape_cast %334 : vector<4x8xf32> to vector<4x8x1xf32>
    %336 = tpu.reciprocal %335 {approx = true} : vector<4x8x1xf32> -> vector<4x8x1xf32>
    %337 = vector.broadcast %336 : vector<4x8x1xf32> to vector<4x8x8xf32>
    %338 = arith.mulf %333, %337 : vector<4x8x8xf32>
    "tpu.trace_start"() <{level = 10 : i32, message = "bls,bsd->bld"}> : () -> ()
    %cst_131 = arith.constant dense<0.000000e+00> : vector<4x8x16xf32>
    %339 = tpu.matmul %338, %326, %cst_131 {dimension_numbers = #tpu.dot_dimension_numbers<[2], [1], [1], [2], [0, 0, 0, 1, 1, 2], [0], [0]>} : vector<4x8x8xf32>, vector<4x8x16xf32>, vector<4x8x16xf32> -> vector<4x8x16xf32>
    "tpu.trace_stop"() : () -> ()
    %340 = tpu.concatenate %291, %307, %323, %339 in 2 : vector<4x8x16xf32>, vector<4x8x16xf32>, vector<4x8x16xf32>, vector<4x8x16xf32> -> vector<4x8x64xf32>
    %341 = vector.shape_cast %340 : vector<4x8x64xf32> to vector<32x64xf32>
    %c1_132 = arith.constant 1 : index
    %c0_133 = arith.constant 0 : index
    %c192_134 = arith.constant 192 : index
    %342 = vector.load %arg4[%c1_132, %c0_133, %c192_134] : memref<2x64x640xf32, #tpu.memory_space<vmem>>, vector<1x64x64xf32>
    %343 = vector.shape_cast %342 : vector<1x64x64xf32> to vector<64x64xf32>
    %cst_135 = arith.constant dense<0.000000e+00> : vector<32x64xf32>
    %344 = tpu.matmul %341, %343, %cst_135 {dimension_numbers = #tpu.dot_dimension_numbers<[1], [0], [0], [1], [0, 0, 1, 1], [], []>} : vector<32x64xf32>, vector<64x64xf32>, vector<32x64xf32> -> vector<32x64xf32>
    %c1_136 = arith.constant 1 : index
    %c0_137 = arith.constant 0 : index
    %c192_138 = arith.constant 192 : index
    %345 = vector.load %arg6[%c1_136, %c0_137, %c192_138] : memref<2x1x1088xf32, #tpu.memory_space<vmem>>, vector<1x1x64xf32>
    %346 = vector.shape_cast %345 : vector<1x1x64xf32> to vector<1x64xf32>
    %347 = vector.broadcast %346 : vector<1x64xf32> to vector<32x64xf32>
    %348 = arith.addf %344, %347 : vector<32x64xf32>
    %349 = arith.addf %267, %348 : vector<32x64xf32>
    %c1_139 = arith.constant 1 : index
    %c0_140 = arith.constant 0 : index
    %c704_141 = arith.constant 704 : index
    %350 = vector.load %arg6[%c1_139, %c0_140, %c704_141] : memref<2x1x1088xf32, #tpu.memory_space<vmem>>, vector<1x1x64xf32>
    %351 = vector.shape_cast %350 : vector<1x1x64xf32> to vector<1x64xf32>
    %c1_142 = arith.constant 1 : index
    %c0_143 = arith.constant 0 : index
    %c768_144 = arith.constant 768 : index
    %352 = vector.load %arg6[%c1_142, %c0_143, %c768_144] : memref<2x1x1088xf32, #tpu.memory_space<vmem>>, vector<1x1x64xf32>
    %353 = vector.shape_cast %352 : vector<1x1x64xf32> to vector<1x64xf32>
    %cst_145 = arith.constant dense<0.000000e+00> : vector<32xf32>
    %354 = vector.multi_reduction <add>, %349, %cst_145 [1] : vector<32x64xf32> to vector<32xf32>
    %355 = vector.shape_cast %354 : vector<32xf32> to vector<32x1xf32>
    %cst_146 = arith.constant 6.400000e+01 : f32
    %356 = vector.broadcast %cst_146 : f32 to vector<32x1xf32>
    %357 = arith.divf %355, %356 : vector<32x1xf32>
    %358 = vector.broadcast %357 : vector<32x1xf32> to vector<32x64xf32>
    %359 = arith.subf %349, %358 : vector<32x64xf32>
    %360 = arith.mulf %359, %359 : vector<32x64xf32>
    %cst_147 = arith.constant dense<0.000000e+00> : vector<32xf32>
    %361 = vector.multi_reduction <add>, %360, %cst_147 [1] : vector<32x64xf32> to vector<32xf32>
    %362 = vector.shape_cast %361 : vector<32xf32> to vector<32x1xf32>
    %cst_148 = arith.constant 6.400000e+01 : f32
    %363 = vector.broadcast %cst_148 : f32 to vector<32x1xf32>
    %364 = arith.divf %362, %363 : vector<32x1xf32>
    %365 = vector.broadcast %357 : vector<32x1xf32> to vector<32x64xf32>
    %366 = arith.subf %349, %365 : vector<32x64xf32>
    %cst_149 = arith.constant 9.99999974E-6 : f32
    %367 = vector.broadcast %cst_149 : f32 to vector<32x1xf32>
    %368 = arith.addf %364, %367 : vector<32x1xf32>
    %369 = math.rsqrt %368 : vector<32x1xf32>
    %370 = vector.broadcast %369 : vector<32x1xf32> to vector<32x64xf32>
    %371 = arith.mulf %366, %370 : vector<32x64xf32>
    %372 = vector.broadcast %351 : vector<1x64xf32> to vector<32x64xf32>
    %373 = arith.mulf %371, %372 : vector<32x64xf32>
    %374 = vector.broadcast %353 : vector<1x64xf32> to vector<32x64xf32>
    %375 = arith.addf %373, %374 : vector<32x64xf32>
    %c1_150 = arith.constant 1 : index
    %c0_151 = arith.constant 0 : index
    %c256_152 = arith.constant 256 : index
    %376 = vector.load %arg4[%c1_150, %c0_151, %c256_152] : memref<2x64x640xf32, #tpu.memory_space<vmem>>, vector<1x64x64xf32>
    %377 = vector.shape_cast %376 : vector<1x64x64xf32> to vector<64x64xf32>
    %cst_153 = arith.constant dense<0.000000e+00> : vector<32x64xf32>
    %378 = tpu.matmul %375, %377, %cst_153 {dimension_numbers = #tpu.dot_dimension_numbers<[1], [0], [0], [1], [0, 0, 1, 1], [], []>} : vector<32x64xf32>, vector<64x64xf32>, vector<32x64xf32> -> vector<32x64xf32>
    %c1_154 = arith.constant 1 : index
    %c0_155 = arith.constant 0 : index
    %c256_156 = arith.constant 256 : index
    %379 = vector.load %arg6[%c1_154, %c0_155, %c256_156] : memref<2x1x1088xf32, #tpu.memory_space<vmem>>, vector<1x1x64xf32>
    %380 = vector.shape_cast %379 : vector<1x1x64xf32> to vector<1x64xf32>
    %381 = vector.broadcast %380 : vector<1x64xf32> to vector<32x64xf32>
    %382 = arith.addf %378, %381 : vector<32x64xf32>
    %c1_157 = arith.constant 1 : index
    %c0_158 = arith.constant 0 : index
    %c320_159 = arith.constant 320 : index
    %383 = vector.load %arg4[%c1_157, %c0_158, %c320_159] : memref<2x64x640xf32, #tpu.memory_space<vmem>>, vector<1x64x128xf32>
    %384 = vector.shape_cast %383 : vector<1x64x128xf32> to vector<64x128xf32>
    %cst_160 = arith.constant dense<0.000000e+00> : vector<64x128xf32>
    %385 = tpu.matmul %3, %384, %cst_160 {dimension_numbers = #tpu.dot_dimension_numbers<[1], [0], [0], [1], [0, 0, 1, 1], [], []>} : vector<64x64xf32>, vector<64x128xf32>, vector<64x128xf32> -> vector<64x128xf32>
    %c1_161 = arith.constant 1 : index
    %c0_162 = arith.constant 0 : index
    %c320_163 = arith.constant 320 : index
    %386 = vector.load %arg6[%c1_161, %c0_162, %c320_163] : memref<2x1x1088xf32, #tpu.memory_space<vmem>>, vector<1x1x128xf32>
    %387 = vector.shape_cast %386 : vector<1x1x128xf32> to vector<1x128xf32>
    %388 = vector.broadcast %387 : vector<1x128xf32> to vector<64x128xf32>
    %389 = arith.addf %385, %388 : vector<64x128xf32>
    %390 = vector.shape_cast %382 : vector<32x64xf32> to vector<4x8x64xf32>
    %391 = vector.shape_cast %389 : vector<64x128xf32> to vector<4x16x128xf32>
    %392 = vector.extract_strided_slice %390 {offsets = [0, 0, 0], sizes = [4, 8, 16], strides = [1, 1, 1]} : vector<4x8x64xf32> to vector<4x8x16xf32>
    %393 = vector.extract_strided_slice %391 {offsets = [0, 0, 0], sizes = [4, 16, 16], strides = [1, 1, 1]} : vector<4x16x128xf32> to vector<4x16x16xf32>
    %394 = vector.extract_strided_slice %391 {offsets = [0, 0, 64], sizes = [4, 16, 16], strides = [1, 1, 1]} : vector<4x16x128xf32> to vector<4x16x16xf32>
    "tpu.trace_start"() <{level = 10 : i32, message = "bld,bsd->bls"}> : () -> ()
    %cst_164 = arith.constant dense<0.000000e+00> : vector<4x8x16xf32>
    %395 = tpu.matmul %392, %393, %cst_164 {dimension_numbers = #tpu.dot_dimension_numbers<[2], [2], [1], [1], [0, 0, 0, 1, 1, 1], [0], [0]>} : vector<4x8x16xf32>, vector<4x16x16xf32>, vector<4x8x16xf32> -> vector<4x8x16xf32>
    "tpu.trace_stop"() : () -> ()
    %cst_165 = arith.constant dense<0xFF800000> : vector<4x8xf32>
    %396 = vector.multi_reduction <maximumf>, %395, %cst_165 [2] : vector<4x8x16xf32> to vector<4x8xf32>
    %397 = vector.shape_cast %396 : vector<4x8xf32> to vector<4x8x1xf32>
    %398 = vector.broadcast %397 : vector<4x8x1xf32> to vector<4x8x16xf32>
    %399 = arith.subf %395, %398 : vector<4x8x16xf32>
    %400 = math.exp %399 : vector<4x8x16xf32>
    %cst_166 = arith.constant dense<0.000000e+00> : vector<4x8xf32>
    %401 = vector.multi_reduction <add>, %400, %cst_166 [2] : vector<4x8x16xf32> to vector<4x8xf32>
    %402 = vector.shape_cast %401 : vector<4x8xf32> to vector<4x8x1xf32>
    %403 = tpu.reciprocal %402 {approx = true} : vector<4x8x1xf32> -> vector<4x8x1xf32>
    %404 = vector.broadcast %403 : vector<4x8x1xf32> to vector<4x8x16xf32>
    %405 = arith.mulf %400, %404 : vector<4x8x16xf32>
    "tpu.trace_start"() <{level = 10 : i32, message = "bls,bsd->bld"}> : () -> ()
    %cst_167 = arith.constant dense<0.000000e+00> : vector<4x8x16xf32>
    %406 = tpu.matmul %405, %394, %cst_167 {dimension_numbers = #tpu.dot_dimension_numbers<[2], [1], [1], [2], [0, 0, 0, 1, 1, 2], [0], [0]>} : vector<4x8x16xf32>, vector<4x16x16xf32>, vector<4x8x16xf32> -> vector<4x8x16xf32>
    "tpu.trace_stop"() : () -> ()
    %407 = vector.extract_strided_slice %390 {offsets = [0, 0, 16], sizes = [4, 8, 16], strides = [1, 1, 1]} : vector<4x8x64xf32> to vector<4x8x16xf32>
    %408 = vector.extract_strided_slice %391 {offsets = [0, 0, 16], sizes = [4, 16, 16], strides = [1, 1, 1]} : vector<4x16x128xf32> to vector<4x16x16xf32>
    %409 = vector.extract_strided_slice %391 {offsets = [0, 0, 80], sizes = [4, 16, 16], strides = [1, 1, 1]} : vector<4x16x128xf32> to vector<4x16x16xf32>
    "tpu.trace_start"() <{level = 10 : i32, message = "bld,bsd->bls"}> : () -> ()
    %cst_168 = arith.constant dense<0.000000e+00> : vector<4x8x16xf32>
    %410 = tpu.matmul %407, %408, %cst_168 {dimension_numbers = #tpu.dot_dimension_numbers<[2], [2], [1], [1], [0, 0, 0, 1, 1, 1], [0], [0]>} : vector<4x8x16xf32>, vector<4x16x16xf32>, vector<4x8x16xf32> -> vector<4x8x16xf32>
    "tpu.trace_stop"() : () -> ()
    %cst_169 = arith.constant dense<0xFF800000> : vector<4x8xf32>
    %411 = vector.multi_reduction <maximumf>, %410, %cst_169 [2] : vector<4x8x16xf32> to vector<4x8xf32>
    %412 = vector.shape_cast %411 : vector<4x8xf32> to vector<4x8x1xf32>
    %413 = vector.broadcast %412 : vector<4x8x1xf32> to vector<4x8x16xf32>
    %414 = arith.subf %410, %413 : vector<4x8x16xf32>
    %415 = math.exp %414 : vector<4x8x16xf32>
    %cst_170 = arith.constant dense<0.000000e+00> : vector<4x8xf32>
    %416 = vector.multi_reduction <add>, %415, %cst_170 [2] : vector<4x8x16xf32> to vector<4x8xf32>
    %417 = vector.shape_cast %416 : vector<4x8xf32> to vector<4x8x1xf32>
    %418 = tpu.reciprocal %417 {approx = true} : vector<4x8x1xf32> -> vector<4x8x1xf32>
    %419 = vector.broadcast %418 : vector<4x8x1xf32> to vector<4x8x16xf32>
    %420 = arith.mulf %415, %419 : vector<4x8x16xf32>
    "tpu.trace_start"() <{level = 10 : i32, message = "bls,bsd->bld"}> : () -> ()
    %cst_171 = arith.constant dense<0.000000e+00> : vector<4x8x16xf32>
    %421 = tpu.matmul %420, %409, %cst_171 {dimension_numbers = #tpu.dot_dimension_numbers<[2], [1], [1], [2], [0, 0, 0, 1, 1, 2], [0], [0]>} : vector<4x8x16xf32>, vector<4x16x16xf32>, vector<4x8x16xf32> -> vector<4x8x16xf32>
    "tpu.trace_stop"() : () -> ()
    %422 = vector.extract_strided_slice %390 {offsets = [0, 0, 32], sizes = [4, 8, 16], strides = [1, 1, 1]} : vector<4x8x64xf32> to vector<4x8x16xf32>
    %423 = vector.extract_strided_slice %391 {offsets = [0, 0, 32], sizes = [4, 16, 16], strides = [1, 1, 1]} : vector<4x16x128xf32> to vector<4x16x16xf32>
    %424 = vector.extract_strided_slice %391 {offsets = [0, 0, 96], sizes = [4, 16, 16], strides = [1, 1, 1]} : vector<4x16x128xf32> to vector<4x16x16xf32>
    "tpu.trace_start"() <{level = 10 : i32, message = "bld,bsd->bls"}> : () -> ()
    %cst_172 = arith.constant dense<0.000000e+00> : vector<4x8x16xf32>
    %425 = tpu.matmul %422, %423, %cst_172 {dimension_numbers = #tpu.dot_dimension_numbers<[2], [2], [1], [1], [0, 0, 0, 1, 1, 1], [0], [0]>} : vector<4x8x16xf32>, vector<4x16x16xf32>, vector<4x8x16xf32> -> vector<4x8x16xf32>
    "tpu.trace_stop"() : () -> ()
    %cst_173 = arith.constant dense<0xFF800000> : vector<4x8xf32>
    %426 = vector.multi_reduction <maximumf>, %425, %cst_173 [2] : vector<4x8x16xf32> to vector<4x8xf32>
    %427 = vector.shape_cast %426 : vector<4x8xf32> to vector<4x8x1xf32>
    %428 = vector.broadcast %427 : vector<4x8x1xf32> to vector<4x8x16xf32>
    %429 = arith.subf %425, %428 : vector<4x8x16xf32>
    %430 = math.exp %429 : vector<4x8x16xf32>
    %cst_174 = arith.constant dense<0.000000e+00> : vector<4x8xf32>
    %431 = vector.multi_reduction <add>, %430, %cst_174 [2] : vector<4x8x16xf32> to vector<4x8xf32>
    %432 = vector.shape_cast %431 : vector<4x8xf32> to vector<4x8x1xf32>
    %433 = tpu.reciprocal %432 {approx = true} : vector<4x8x1xf32> -> vector<4x8x1xf32>
    %434 = vector.broadcast %433 : vector<4x8x1xf32> to vector<4x8x16xf32>
    %435 = arith.mulf %430, %434 : vector<4x8x16xf32>
    "tpu.trace_start"() <{level = 10 : i32, message = "bls,bsd->bld"}> : () -> ()
    %cst_175 = arith.constant dense<0.000000e+00> : vector<4x8x16xf32>
    %436 = tpu.matmul %435, %424, %cst_175 {dimension_numbers = #tpu.dot_dimension_numbers<[2], [1], [1], [2], [0, 0, 0, 1, 1, 2], [0], [0]>} : vector<4x8x16xf32>, vector<4x16x16xf32>, vector<4x8x16xf32> -> vector<4x8x16xf32>
    "tpu.trace_stop"() : () -> ()
    %437 = vector.extract_strided_slice %390 {offsets = [0, 0, 48], sizes = [4, 8, 16], strides = [1, 1, 1]} : vector<4x8x64xf32> to vector<4x8x16xf32>
    %438 = vector.extract_strided_slice %391 {offsets = [0, 0, 48], sizes = [4, 16, 16], strides = [1, 1, 1]} : vector<4x16x128xf32> to vector<4x16x16xf32>
    %439 = vector.extract_strided_slice %391 {offsets = [0, 0, 112], sizes = [4, 16, 16], strides = [1, 1, 1]} : vector<4x16x128xf32> to vector<4x16x16xf32>
    "tpu.trace_start"() <{level = 10 : i32, message = "bld,bsd->bls"}> : () -> ()
    %cst_176 = arith.constant dense<0.000000e+00> : vector<4x8x16xf32>
    %440 = tpu.matmul %437, %438, %cst_176 {dimension_numbers = #tpu.dot_dimension_numbers<[2], [2], [1], [1], [0, 0, 0, 1, 1, 1], [0], [0]>} : vector<4x8x16xf32>, vector<4x16x16xf32>, vector<4x8x16xf32> -> vector<4x8x16xf32>
    "tpu.trace_stop"() : () -> ()
    %cst_177 = arith.constant dense<0xFF800000> : vector<4x8xf32>
    %441 = vector.multi_reduction <maximumf>, %440, %cst_177 [2] : vector<4x8x16xf32> to vector<4x8xf32>
    %442 = vector.shape_cast %441 : vector<4x8xf32> to vector<4x8x1xf32>
    %443 = vector.broadcast %442 : vector<4x8x1xf32> to vector<4x8x16xf32>
    %444 = arith.subf %440, %443 : vector<4x8x16xf32>
    %445 = math.exp %444 : vector<4x8x16xf32>
    %cst_178 = arith.constant dense<0.000000e+00> : vector<4x8xf32>
    %446 = vector.multi_reduction <add>, %445, %cst_178 [2] : vector<4x8x16xf32> to vector<4x8xf32>
    %447 = vector.shape_cast %446 : vector<4x8xf32> to vector<4x8x1xf32>
    %448 = tpu.reciprocal %447 {approx = true} : vector<4x8x1xf32> -> vector<4x8x1xf32>
    %449 = vector.broadcast %448 : vector<4x8x1xf32> to vector<4x8x16xf32>
    %450 = arith.mulf %445, %449 : vector<4x8x16xf32>
    "tpu.trace_start"() <{level = 10 : i32, message = "bls,bsd->bld"}> : () -> ()
    %cst_179 = arith.constant dense<0.000000e+00> : vector<4x8x16xf32>
    %451 = tpu.matmul %450, %439, %cst_179 {dimension_numbers = #tpu.dot_dimension_numbers<[2], [1], [1], [2], [0, 0, 0, 1, 1, 2], [0], [0]>} : vector<4x8x16xf32>, vector<4x16x16xf32>, vector<4x8x16xf32> -> vector<4x8x16xf32>
    "tpu.trace_stop"() : () -> ()
    %452 = tpu.concatenate %406, %421, %436, %451 in 2 : vector<4x8x16xf32>, vector<4x8x16xf32>, vector<4x8x16xf32>, vector<4x8x16xf32> -> vector<4x8x64xf32>
    %453 = vector.shape_cast %452 : vector<4x8x64xf32> to vector<32x64xf32>
    %c1_180 = arith.constant 1 : index
    %c0_181 = arith.constant 0 : index
    %c448_182 = arith.constant 448 : index
    %454 = vector.load %arg4[%c1_180, %c0_181, %c448_182] : memref<2x64x640xf32, #tpu.memory_space<vmem>>, vector<1x64x64xf32>
    %455 = vector.shape_cast %454 : vector<1x64x64xf32> to vector<64x64xf32>
    %cst_183 = arith.constant dense<0.000000e+00> : vector<32x64xf32>
    %456 = tpu.matmul %453, %455, %cst_183 {dimension_numbers = #tpu.dot_dimension_numbers<[1], [0], [0], [1], [0, 0, 1, 1], [], []>} : vector<32x64xf32>, vector<64x64xf32>, vector<32x64xf32> -> vector<32x64xf32>
    %c1_184 = arith.constant 1 : index
    %c0_185 = arith.constant 0 : index
    %c448_186 = arith.constant 448 : index
    %457 = vector.load %arg6[%c1_184, %c0_185, %c448_186] : memref<2x1x1088xf32, #tpu.memory_space<vmem>>, vector<1x1x64xf32>
    %458 = vector.shape_cast %457 : vector<1x1x64xf32> to vector<1x64xf32>
    %459 = vector.broadcast %458 : vector<1x64xf32> to vector<32x64xf32>
    %460 = arith.addf %456, %459 : vector<32x64xf32>
    %461 = arith.addf %375, %460 : vector<32x64xf32>
    %c1_187 = arith.constant 1 : index
    %c0_188 = arith.constant 0 : index
    %c832_189 = arith.constant 832 : index
    %462 = vector.load %arg6[%c1_187, %c0_188, %c832_189] : memref<2x1x1088xf32, #tpu.memory_space<vmem>>, vector<1x1x64xf32>
    %463 = vector.shape_cast %462 : vector<1x1x64xf32> to vector<1x64xf32>
    %c1_190 = arith.constant 1 : index
    %c0_191 = arith.constant 0 : index
    %c896_192 = arith.constant 896 : index
    %464 = vector.load %arg6[%c1_190, %c0_191, %c896_192] : memref<2x1x1088xf32, #tpu.memory_space<vmem>>, vector<1x1x64xf32>
    %465 = vector.shape_cast %464 : vector<1x1x64xf32> to vector<1x64xf32>
    %cst_193 = arith.constant dense<0.000000e+00> : vector<32xf32>
    %466 = vector.multi_reduction <add>, %461, %cst_193 [1] : vector<32x64xf32> to vector<32xf32>
    %467 = vector.shape_cast %466 : vector<32xf32> to vector<32x1xf32>
    %cst_194 = arith.constant 6.400000e+01 : f32
    %468 = vector.broadcast %cst_194 : f32 to vector<32x1xf32>
    %469 = arith.divf %467, %468 : vector<32x1xf32>
    %470 = vector.broadcast %469 : vector<32x1xf32> to vector<32x64xf32>
    %471 = arith.subf %461, %470 : vector<32x64xf32>
    %472 = arith.mulf %471, %471 : vector<32x64xf32>
    %cst_195 = arith.constant dense<0.000000e+00> : vector<32xf32>
    %473 = vector.multi_reduction <add>, %472, %cst_195 [1] : vector<32x64xf32> to vector<32xf32>
    %474 = vector.shape_cast %473 : vector<32xf32> to vector<32x1xf32>
    %cst_196 = arith.constant 6.400000e+01 : f32
    %475 = vector.broadcast %cst_196 : f32 to vector<32x1xf32>
    %476 = arith.divf %474, %475 : vector<32x1xf32>
    %477 = vector.broadcast %469 : vector<32x1xf32> to vector<32x64xf32>
    %478 = arith.subf %461, %477 : vector<32x64xf32>
    %cst_197 = arith.constant 9.99999974E-6 : f32
    %479 = vector.broadcast %cst_197 : f32 to vector<32x1xf32>
    %480 = arith.addf %476, %479 : vector<32x1xf32>
    %481 = math.rsqrt %480 : vector<32x1xf32>
    %482 = vector.broadcast %481 : vector<32x1xf32> to vector<32x64xf32>
    %483 = arith.mulf %478, %482 : vector<32x64xf32>
    %484 = vector.broadcast %463 : vector<1x64xf32> to vector<32x64xf32>
    %485 = arith.mulf %483, %484 : vector<32x64xf32>
    %486 = vector.broadcast %465 : vector<1x64xf32> to vector<32x64xf32>
    %487 = arith.addf %485, %486 : vector<32x64xf32>
    %c1_198 = arith.constant 1 : index
    %c0_199 = arith.constant 0 : index
    %c512_200 = arith.constant 512 : index
    %488 = vector.load %arg4[%c1_198, %c0_199, %c512_200] : memref<2x64x640xf32, #tpu.memory_space<vmem>>, vector<1x64x128xf32>
    %489 = vector.shape_cast %488 : vector<1x64x128xf32> to vector<64x128xf32>
    %cst_201 = arith.constant dense<0.000000e+00> : vector<32x128xf32>
    %490 = tpu.matmul %487, %489, %cst_201 {dimension_numbers = #tpu.dot_dimension_numbers<[1], [0], [0], [1], [0, 0, 1, 1], [], []>} : vector<32x64xf32>, vector<64x128xf32>, vector<32x128xf32> -> vector<32x128xf32>
    %c1_202 = arith.constant 1 : index
    %c0_203 = arith.constant 0 : index
    %c512_204 = arith.constant 512 : index
    %491 = vector.load %arg6[%c1_202, %c0_203, %c512_204] : memref<2x1x1088xf32, #tpu.memory_space<vmem>>, vector<1x1x128xf32>
    %492 = vector.shape_cast %491 : vector<1x1x128xf32> to vector<1x128xf32>
    %493 = vector.broadcast %492 : vector<1x128xf32> to vector<32x128xf32>
    %494 = arith.addf %490, %493 : vector<32x128xf32>
    %cst_205 = arith.constant 0.000000e+00 : f32
    %495 = vector.broadcast %cst_205 : f32 to vector<32x128xf32>
    %496 = arith.maximumf %494, %495 : vector<32x128xf32>
    %c1_206 = arith.constant 1 : index
    %c0_207 = arith.constant 0 : index
    %c0_208 = arith.constant 0 : index
    %497 = vector.load %arg5[%c1_206, %c0_207, %c0_208] : memref<2x128x64xf32, #tpu.memory_space<vmem>>, vector<1x128x64xf32>
    %498 = vector.shape_cast %497 : vector<1x128x64xf32> to vector<128x64xf32>
    %cst_209 = arith.constant dense<0.000000e+00> : vector<32x64xf32>
    %499 = tpu.matmul %496, %498, %cst_209 {dimension_numbers = #tpu.dot_dimension_numbers<[1], [0], [0], [1], [0, 0, 1, 1], [], []>} : vector<32x128xf32>, vector<128x64xf32>, vector<32x64xf32> -> vector<32x64xf32>
    %c1_210 = arith.constant 1 : index
    %c0_211 = arith.constant 0 : index
    %c640_212 = arith.constant 640 : index
    %500 = vector.load %arg6[%c1_210, %c0_211, %c640_212] : memref<2x1x1088xf32, #tpu.memory_space<vmem>>, vector<1x1x64xf32>
    %501 = vector.shape_cast %500 : vector<1x1x64xf32> to vector<1x64xf32>
    %502 = vector.broadcast %501 : vector<1x64xf32> to vector<32x64xf32>
    %503 = arith.addf %499, %502 : vector<32x64xf32>
    %504 = arith.addf %487, %503 : vector<32x64xf32>
    %c1_213 = arith.constant 1 : index
    %c0_214 = arith.constant 0 : index
    %c960_215 = arith.constant 960 : index
    %505 = vector.load %arg6[%c1_213, %c0_214, %c960_215] : memref<2x1x1088xf32, #tpu.memory_space<vmem>>, vector<1x1x64xf32>
    %506 = vector.shape_cast %505 : vector<1x1x64xf32> to vector<1x64xf32>
    %c1_216 = arith.constant 1 : index
    %c0_217 = arith.constant 0 : index
    %c1024_218 = arith.constant 1024 : index
    %507 = vector.load %arg6[%c1_216, %c0_217, %c1024_218] : memref<2x1x1088xf32, #tpu.memory_space<vmem>>, vector<1x1x64xf32>
    %508 = vector.shape_cast %507 : vector<1x1x64xf32> to vector<1x64xf32>
    %cst_219 = arith.constant dense<0.000000e+00> : vector<32xf32>
    %509 = vector.multi_reduction <add>, %504, %cst_219 [1] : vector<32x64xf32> to vector<32xf32>
    %510 = vector.shape_cast %509 : vector<32xf32> to vector<32x1xf32>
    %cst_220 = arith.constant 6.400000e+01 : f32
    %511 = vector.broadcast %cst_220 : f32 to vector<32x1xf32>
    %512 = arith.divf %510, %511 : vector<32x1xf32>
    %513 = vector.broadcast %512 : vector<32x1xf32> to vector<32x64xf32>
    %514 = arith.subf %504, %513 : vector<32x64xf32>
    %515 = arith.mulf %514, %514 : vector<32x64xf32>
    %cst_221 = arith.constant dense<0.000000e+00> : vector<32xf32>
    %516 = vector.multi_reduction <add>, %515, %cst_221 [1] : vector<32x64xf32> to vector<32xf32>
    %517 = vector.shape_cast %516 : vector<32xf32> to vector<32x1xf32>
    %cst_222 = arith.constant 6.400000e+01 : f32
    %518 = vector.broadcast %cst_222 : f32 to vector<32x1xf32>
    %519 = arith.divf %517, %518 : vector<32x1xf32>
    %520 = vector.broadcast %512 : vector<32x1xf32> to vector<32x64xf32>
    %521 = arith.subf %504, %520 : vector<32x64xf32>
    %cst_223 = arith.constant 9.99999974E-6 : f32
    %522 = vector.broadcast %cst_223 : f32 to vector<32x1xf32>
    %523 = arith.addf %519, %522 : vector<32x1xf32>
    %524 = math.rsqrt %523 : vector<32x1xf32>
    %525 = vector.broadcast %524 : vector<32x1xf32> to vector<32x64xf32>
    %526 = arith.mulf %521, %525 : vector<32x64xf32>
    %527 = vector.broadcast %506 : vector<1x64xf32> to vector<32x64xf32>
    %528 = arith.mulf %526, %527 : vector<32x64xf32>
    %529 = vector.broadcast %508 : vector<1x64xf32> to vector<32x64xf32>
    %530 = arith.addf %528, %529 : vector<32x64xf32>
    %531 = vector.shape_cast %530 : vector<32x64xf32> to vector<4x8x64xf32>
    %c0_224 = arith.constant 0 : index
    %c0_225 = arith.constant 0 : index
    %c0_226 = arith.constant 0 : index
    %532 = vector.load %arg7[%c0_224, %c0_225, %c0_226] : memref<4x8x64xf32, #tpu.memory_space<vmem>>, vector<4x8x64xf32>
    tpu.vector_store %arg7[%c0_224, %c0_225, %c0_226], %531 {strides = array<i32>} : memref<4x8x64xf32, #tpu.memory_space<vmem>>, vector<4x8x64xf32>,
    return
  }
  func.func @transform_0(%arg0: i32) -> (i32, i32, i32) {
    %c0_i32 = arith.constant 0 : i32
    %c0_i32_0 = arith.constant 0 : i32
    %c0_i32_1 = arith.constant 0 : i32
    return %arg0, %c0_i32, %c0_i32_0 : i32, i32, i32
  }
  func.func @transform_1(%arg0: i32) -> (i32, i32, i32) {
    %c0_i32 = arith.constant 0 : i32
    %c0_i32_0 = arith.constant 0 : i32
    %c0_i32_1 = arith.constant 0 : i32
    return %arg0, %c0_i32, %c0_i32_0 : i32, i32, i32
  }
  func.func @transform_2(%arg0: i32) -> (i32, i32, i32) {
    %c0_i32 = arith.constant 0 : i32
    %c0_i32_0 = arith.constant 0 : i32
    %c0_i32_1 = arith.constant 0 : i32
    return %arg0, %c0_i32, %c0_i32_0 : i32, i32, i32
  }
  func.func @transform_3(%arg0: i32) -> (i32, i32, i32) {
    %c0_i32 = arith.constant 0 : i32
    %c0_i32_0 = arith.constant 0 : i32
    %c0_i32_1 = arith.constant 0 : i32
    %c0_i32_2 = arith.constant 0 : i32
    return %c0_i32, %c0_i32_0, %c0_i32_1 : i32, i32, i32
  }
  func.func @transform_4(%arg0: i32) -> (i32, i32, i32) {
    %c0_i32 = arith.constant 0 : i32
    %c0_i32_0 = arith.constant 0 : i32
    %c0_i32_1 = arith.constant 0 : i32
    %c0_i32_2 = arith.constant 0 : i32
    return %c0_i32, %c0_i32_0, %c0_i32_1 : i32, i32, i32
  }
  func.func @transform_5(%arg0: i32) -> (i32, i32, i32) {
    %c0_i32 = arith.constant 0 : i32
    %c0_i32_0 = arith.constant 0 : i32
    %c0_i32_1 = arith.constant 0 : i32
    %c0_i32_2 = arith.constant 0 : i32
    return %c0_i32, %c0_i32_0, %c0_i32_1 : i32, i32, i32
  }
  func.func @transform_6(%arg0: i32) -> (i32, i32, i32) {
    %c0_i32 = arith.constant 0 : i32
    %c0_i32_0 = arith.constant 0 : i32
    %c0_i32_1 = arith.constant 0 : i32
    return %arg0, %c0_i32, %c0_i32_0 : i32, i32, i32
  }
}

</mosaic_0001>

<llo_original>
// kernel: tpu_custom_call.1
$region0: #{tpu_custom_call.1}
  #allocation0 [shape = 'u32[]', space=smem, size = 0x4, offset = 0x4, fixed_abs, tag = 'smem constant byte address 0x4 - core index']
  #allocation1 [shape = 'u32[72,128]{1,0:T(1,128)}', space=vmem, size = 0x9000, scoped, tag = 'internal scratch']
  %s0 = inlined_call_operand.vmem [shape: f32[4,8,64], index: 0, kind: input, shape index: {}]
  %s1 = inlined_call_operand.vmem [shape: f32[4,16,64], index: 1, kind: input, shape index: {}]
  %s2 = inlined_call_operand.vmem [shape: f32[4,8,8], index: 2, kind: input, shape index: {}]
  %s3 = inlined_call_operand.hbm [shape: f32[2,64,640], index: 3, kind: input, shape index: {}]
  %s4 = inlined_call_operand.vmem [shape: f32[2,128,64], index: 4, kind: input, shape index: {}]
  %s5 = inlined_call_operand.vmem [shape: f32[2,1,1088], index: 5, kind: input, shape index: {}]
  %s6 = inlined_call_operand.hbm [shape: f32[4,8,64], index: 6, kind: output, shape index: {}]
  %s7 = sld [smem:[#allocation0]]
  $region38: #{tpu_custom_call.1} parent=0
    _
  %s9 = ssub.s32 1, %s7
  %s10 = scalar_select 0, %s9, %s7
  $region1: #{tpu_custom_call.1} parent=0
    #allocation2 [shape = 'u8[327680]{0}', space=vmem, size = 0x50000, scoped, tag = 'input window, operand 3, single buffered']
    #allocation3 [shape = 's32[1]{0}', space=sflag, size = 0x4, scoped, tag = 'scoped memory for tpu_custom_call.1']
    #allocation4 [shape = 's32[1]{0}', space=sflag, size = 0x4, scoped, tag = 'scoped memory for tpu_custom_call.1']
    #allocation5 [shape = 'u8[16384]{0}', space=vmem, size = 0x4000, scoped, tag = 'output window, operand 0, single buffered']
    %11 = vsyncpa [#allocation3], 0
    %12 = vsyncpa [#allocation4], 0
    // Predicated region
    $region2: #{tpu_custom_call.1} parent=1 // pred_check
      _
    $region3: #{tpu_custom_call.1} parent=1 // pred_check_branch
      %14 = sbr.rel (0) target = $region5
    $region4: #{tpu_custom_call.1} parent=1 // pred_region
      _
    $region5: #{tpu_custom_call.1} parent=1 // pred_fallthru
      _
    // Predicated region
    $region6: #{tpu_custom_call.1} parent=1 // pred_check
      _
    $region7: #{tpu_custom_call.1} parent=1 // pred_check_branch
      %16 = sbr.rel (0) target = $region9
    $region8: #{tpu_custom_call.1} parent=1 // pred_region
      _
    $region9: #{tpu_custom_call.1} parent=1 // pred_fallthru
      _
    // Predicated region
    $region10: #{tpu_custom_call.1} parent=1 // pred_check
      _
    $region11: #{tpu_custom_call.1} parent=1 // pred_check_branch
      %18 = sbr.rel (0) target = $region13
    $region12: #{tpu_custom_call.1} parent=1 // pred_region
      _
    $region13: #{tpu_custom_call.1} parent=1 // pred_fallthru
      _
    // Predicated region
    $region14: #{tpu_custom_call.1} parent=1 // pred_check
      _
    $region15: #{tpu_custom_call.1} parent=1 // pred_check_branch
      %20 = sbr.rel (0) target = $region17
    $region16: #{tpu_custom_call.1} parent=1 // pred_region
      %22 = vsyncadd [#allocation3], 0
      %s23 = sshll.u32 %s3, 4
      %s24 = int_to_ptr.hbm [resolvable:$true] %s23
      %s25 = sshll.u32 [#allocation2], 4
      %s26 = int_to_ptr.vmem [resolvable:$true] %s25
      %31 = dma.hbm_to_vmem [thread:$0]  %s24, 10240, %s26, [#allocation3], 640, 640, 40
    $region17: #{tpu_custom_call.1} parent=1 // pred_fallthru
      _
    // Predicated region
    $region18: #{tpu_custom_call.1} parent=1 // pred_check
      _
    $region19: #{tpu_custom_call.1} parent=1 // pred_check_branch
      %33 = sbr.rel (0) target = $region21
    $region20: #{tpu_custom_call.1} parent=1 // pred_region
      _
    $region21: #{tpu_custom_call.1} parent=1 // pred_fallthru
      _
    // Predicated region
    $region22: #{tpu_custom_call.1} parent=1 // pred_check
      _
    $region23: #{tpu_custom_call.1} parent=1 // pred_check_branch
      %35 = sbr.rel (0) target = $region25
    $region24: #{tpu_custom_call.1} parent=1 // pred_region
      _
    $region25: #{tpu_custom_call.1} parent=1 // pred_fallthru
      _
    // Predicated region
    $region26: #{tpu_custom_call.1} parent=1 // pred_check
      _
    $region27: #{tpu_custom_call.1} parent=1 // pred_check_branch
      %37 = sbr.rel (0) target = $region29
    $region28: #{tpu_custom_call.1} parent=1 // pred_region
      %39 = dma.done [#allocation3], 10240
    $region29: #{tpu_custom_call.1} parent=1 // pred_fallthru
      _
    %v40 = vld [vmem:[%s0] sm:$0xff]
    %v41 = vld [vmem:[%s0 + $0x8] sm:$0xff]
    %v42 = vld [vmem:[%s0 + $0x10] sm:$0xff]
    %v43 = vld [vmem:[%s0 + $0x18] sm:$0xff]
    %v44 = vld [vmem:[%s1] sm:$0xff]
    %v45 = vld [vmem:[%s1 + $0x8] sm:$0xff]
    %v46 = vld [vmem:[%s1 + $0x10] sm:$0xff]
    %v47 = vld [vmem:[%s1 + $0x18] sm:$0xff]
    %v48 = vld [vmem:[%s1 + $0x20] sm:$0xff]
    %v49 = vld [vmem:[%s1 + $0x28] sm:$0xff]
    %v50 = vld [vmem:[%s1 + $0x30] sm:$0xff]
    %v51 = vld [vmem:[%s1 + $0x38] sm:$0xff]
    %v52 = vld [vmem:[%s2] sm:$0xff]
    %v53 = vld [vmem:[%s2 + $0x8] sm:$0xff]
    %v54 = vld [vmem:[%s2 + $0x10] sm:$0xff]
    %v55 = vld [vmem:[%s2 + $0x18] sm:$0xff]
    %v56 = vld [vmem:[#allocation2] sm:$0xff]
    %v57 = vld [vmem:[#allocation2 + $0x8] sm:$0xff]
    %v58 = vld [vmem:[#allocation2 + $0x28] sm:$0xff]
    %v59 = vld [vmem:[#allocation2 + $0x30] sm:$0xff]
    %v60 = vld [vmem:[#allocation2 + $0x50] sm:$0xff]
    %v61 = vld [vmem:[#allocation2 + $0x58] sm:$0xff]
    %v62 = vld [vmem:[#allocation2 + $0x78] sm:$0xff]
    %v63 = vld [vmem:[#allocation2 + $0x80] sm:$0xff]
    %v64 = vld [vmem:[#allocation2 + $0xa0] sm:$0xff]
    %v65 = vld [vmem:[#allocation2 + $0xa8] sm:$0xff]
    %v66 = vld [vmem:[#allocation2 + $0xc8] sm:$0xff]
    %v67 = vld [vmem:[#allocation2 + $0xd0] sm:$0xff]
    %v68 = vld [vmem:[#allocation2 + $0xf0] sm:$0xff]
    %v69 = vld [vmem:[#allocation2 + $0xf8] sm:$0xff]
    %v70 = vld [vmem:[#allocation2 + $0x118] sm:$0xff]
    %v71 = vld [vmem:[#allocation2 + $0x120] sm:$0xff]
    %v72 = vld [vmem:[%s5] sm:$0x3]
    %v74 = vperm.slane %v72, 0
    %v75 = vperm.slane %v72, 1
    %vm78 = vcmask 523264
    %v80 = vsel %vm78, %v40, 0
    %v83 = vsel %vm78, %v41, 0
    %v86 = vsel %vm78, %v42, 0
    %v89 = vsel %vm78, %v43, 0
    %91 = vmatpush.msra.mxu0 0.0
    %92 = vmatpush.msra.mxu0 0.0
    %93 = vmatpush.msra.mxu0 0.0
    %94 = vmatpush.msra.mxu0 0.0
    %95 = vmatpush.msra.mxu0 0.0
    %96 = vmatpush.msra.mxu0 0.0
    %97 = vmatpush.msra.mxu0 0.0
    %98 = vmatpush.msra.mxu0 0.0
    %99 = vmatpush.msra.mxu0 %v70
    %100 = vmatpush.msra.mxu0 %v68
    %101 = vmatpush.msra.mxu0 %v66
    %102 = vmatpush.msra.mxu0 %v64
    %103 = vmatpush.msra.mxu0 %v62
    %104 = vmatpush.msra.mxu0 %v60
    %105 = vmatpush.msra.mxu0 %v58
    %106 = vmatpush.msra.mxu0 %v56
    %107 = vmatmul.f32.gmra.mxu0 %v80
    %v108 = vpop.f32.mrf.mxu0
    %v109 = vadd.f32 %v74, %v108
    %110 = vmatmul.f32.gmra.mxu0 %v83
    %v111 = vpop.f32.mrf.mxu0
    %v112 = vadd.f32 %v74, %v111
    %113 = vmatmul.f32.gmra.mxu0 %v86
    %v114 = vpop.f32.mrf.mxu0
    %v115 = vadd.f32 %v74, %v114
    %116 = vmatmul.f32.gmra.mxu0 %v89
    %v117 = vpop.f32.mrf.mxu0
    %v118 = vadd.f32 %v74, %v117
    %119 = vdwg.mxu0
    %120 = vmatpush.msra.mxu0 0.0
    %121 = vmatpush.msra.mxu0 0.0
    %122 = vmatpush.msra.mxu0 0.0
    %123 = vmatpush.msra.mxu0 0.0
    %124 = vmatpush.msra.mxu0 0.0
    %125 = vmatpush.msra.mxu0 0.0
    %126 = vmatpush.msra.mxu0 0.0
    %127 = vmatpush.msra.mxu0 0.0
    %128 = vmatpush.msra.mxu0 %v71
    %129 = vmatpush.msra.mxu0 %v69
    %130 = vmatpush.msra.mxu0 %v67
    %131 = vmatpush.msra.mxu0 %v65
    %132 = vmatpush.msra.mxu0 %v63
    %133 = vmatpush.msra.mxu0 %v61
    %134 = vmatpush.msra.mxu0 %v59
    %135 = vmatpush.msra.mxu0 %v57
    %136 = vmatmul.f32.gmra.mxu0 %v80
    %v137 = vpop.f32.mrf.mxu0
    %v138 = vadd.f32 %v75, %v137
    %139 = vmatmul.f32.gmra.mxu0 %v83
    %v140 = vpop.f32.mrf.mxu0
    %v141 = vadd.f32 %v75, %v140
    %142 = vmatmul.f32.gmra.mxu0 %v86
    %v143 = vpop.f32.mrf.mxu0
    %v144 = vadd.f32 %v75, %v143
    %145 = vmatmul.f32.gmra.mxu0 %v89
    %v146 = vpop.f32.mrf.mxu0
    %v147 = vadd.f32 %v75, %v146
    %148 = vdwg.mxu0
    %150 = vrot.lane.b32.xlu0 %v109, 64
    %v151 = vpop.permute.xlu0 %150
    %vm152 = vcmask 130048
    %v153 = vsel %vm152, %v109, 0
    %v155 = vsel %vm152, %v151, 0
    %157 = vmatpush.xpose.msra.mxu0 0.0
    %158 = vmatpush.xpose.msra.mxu0 0.0
    %159 = vmatpush.xpose.msra.mxu0 0.0
    %160 = vmatpush.xpose.msra.mxu0 0.0
    %161 = vmatpush.xpose.msra.mxu0 0.0
    %162 = vmatpush.xpose.msra.mxu0 0.0
    %163 = vmatpush.xpose.msra.mxu0 0.0
    %164 = vmatpush.xpose.msra.mxu0 0.0
    %165 = vmatpush.xpose.msra.mxu0 0.0
    %166 = vmatpush.xpose.msra.mxu0 0.0
    %167 = vmatpush.xpose.msra.mxu0 0.0
    %168 = vmatpush.xpose.msra.mxu0 0.0
    %169 = vmatpush.xpose.msra.mxu0 0.0
    %170 = vmatpush.xpose.msra.mxu0 0.0
    %171 = vmatpush.xpose.msra.mxu0 0.0
    %172 = vmatpush.xpose.msra.mxu0 %v155
    %173 = vmatmul.f32.gmra.mxu0 %v153
    %v174 = vpop.f32.mrf.mxu0
    %v175 = vadd.f32 %v52, %v174
    %176 = vdwg.mxu0
    %178 = vrot.lane.b32.xlu0 %v112, 64
    %v179 = vpop.permute.xlu0 %178
    %v180 = vsel %vm152, %v112, 0
    %v182 = vsel %vm152, %v179, 0
    %184 = vmatpush.xpose.msra.mxu0 0.0
    %185 = vmatpush.xpose.msra.mxu0 0.0
    %186 = vmatpush.xpose.msra.mxu0 0.0
    %187 = vmatpush.xpose.msra.mxu0 0.0
    %188 = vmatpush.xpose.msra.mxu0 0.0
    %189 = vmatpush.xpose.msra.mxu0 0.0
    %190 = vmatpush.xpose.msra.mxu0 0.0
    %191 = vmatpush.xpose.msra.mxu0 0.0
    %192 = vmatpush.xpose.msra.mxu0 0.0
    %193 = vmatpush.xpose.msra.mxu0 0.0
    %194 = vmatpush.xpose.msra.mxu0 0.0
    %195 = vmatpush.xpose.msra.mxu0 0.0
    %196 = vmatpush.xpose.msra.mxu0 0.0
    %197 = vmatpush.xpose.msra.mxu0 0.0
    %198 = vmatpush.xpose.msra.mxu0 0.0
    %199 = vmatpush.xpose.msra.mxu0 %v182
    %200 = vmatmul.f32.gmra.mxu0 %v180
    %v201 = vpop.f32.mrf.mxu0
    %v202 = vadd.f32 %v53, %v201
    %203 = vdwg.mxu0
    %205 = vrot.lane.b32.xlu0 %v115, 64
    %v206 = vpop.permute.xlu0 %205
    %v207 = vsel %vm152, %v115, 0
    %v209 = vsel %vm152, %v206, 0
    %211 = vmatpush.xpose.msra.mxu0 0.0
    %212 = vmatpush.xpose.msra.mxu0 0.0
    %213 = vmatpush.xpose.msra.mxu0 0.0
    %214 = vmatpush.xpose.msra.mxu0 0.0
    %215 = vmatpush.xpose.msra.mxu0 0.0
    %216 = vmatpush.xpose.msra.mxu0 0.0
    %217 = vmatpush.xpose.msra.mxu0 0.0
    %218 = vmatpush.xpose.msra.mxu0 0.0
    %219 = vmatpush.xpose.msra.mxu0 0.0
    %220 = vmatpush.xpose.msra.mxu0 0.0
    %221 = vmatpush.xpose.msra.mxu0 0.0
    %222 = vmatpush.xpose.msra.mxu0 0.0
    %223 = vmatpush.xpose.msra.mxu0 0.0
    %224 = vmatpush.xpose.msra.mxu0 0.0
    %225 = vmatpush.xpose.msra.mxu0 0.0
    %226 = vmatpush.xpose.msra.mxu0 %v209
    %227 = vmatmul.f32.gmra.mxu0 %v207
    %v228 = vpop.f32.mrf.mxu0
    %v229 = vadd.f32 %v54, %v228
    %230 = vdwg.mxu0
    %232 = vrot.lane.b32.xlu0 %v118, 64
    %v233 = vpop.permute.xlu0 %232
    %v234 = vsel %vm152, %v118, 0
    %v236 = vsel %vm152, %v233, 0
    %238 = vmatpush.xpose.msra.mxu0 0.0
    %239 = vmatpush.xpose.msra.mxu0 0.0
    %240 = vmatpush.xpose.msra.mxu0 0.0
    %241 = vmatpush.xpose.msra.mxu0 0.0
    %242 = vmatpush.xpose.msra.mxu0 0.0
    %243 = vmatpush.xpose.msra.mxu0 0.0
    %244 = vmatpush.xpose.msra.mxu0 0.0
    %245 = vmatpush.xpose.msra.mxu0 0.0
    %246 = vmatpush.xpose.msra.mxu0 0.0
    %247 = vmatpush.xpose.msra.mxu0 0.0
    %248 = vmatpush.xpose.msra.mxu0 0.0
    %249 = vmatpush.xpose.msra.mxu0 0.0
    %250 = vmatpush.xpose.msra.mxu0 0.0
    %251 = vmatpush.xpose.msra.mxu0 0.0
    %252 = vmatpush.xpose.msra.mxu0 0.0
    %253 = vmatpush.xpose.msra.mxu0 %v236
    %254 = vmatmul.f32.gmra.mxu0 %v234
    %v255 = vpop.f32.mrf.mxu0
    %v256 = vadd.f32 %v55, %v255
    %257 = vdwg.mxu0
    %vm258 = vcmask 64512
    %v259 = vsel %vm258, %v175, -inf
    %260 = vmax.xlane.f32.xlu0 %v259
    %v261 = vpop.xlane.xlu0 %260
    %v262 = vsel %vm258, %v202, -inf
    %263 = vmax.xlane.f32.xlu0 %v262
    %v264 = vpop.xlane.xlu0 %263
    %v265 = vsel %vm258, %v229, -inf
    %266 = vmax.xlane.f32.xlu0 %v265
    %v267 = vpop.xlane.xlu0 %266
    %v268 = vsel %vm258, %v256, -inf
    %269 = vmax.xlane.f32.xlu0 %v268
    %v270 = vpop.xlane.xlu0 %269
    %v271 = vsub.f32 %v175, %v261
    %v272 = vsub.f32 %v202, %v264
    %v273 = vsub.f32 %v229, %v267
    %v274 = vsub.f32 %v256, %v270
    %v275 = vmul.f32 %v271, 1.442695
    %v276 = vpow.pop %v275
    %v277 = vmul.f32 %v272, 1.442695
    %v278 = vpow.pop %v277
    %v279 = vmul.f32 %v273, 1.442695
    %v280 = vpow.pop %v279
    %v281 = vmul.f32 %v274, 1.442695
    %v282 = vpow.pop %v281
    %v283 = vsel %vm258, %v276, 0.0
    %284 = vadd.xlane.f32.xlu0 %v283
    %v285 = vpop.xlane.xlu0 %284
    %v286 = vsel %vm258, %v278, 0.0
    %287 = vadd.xlane.f32.xlu0 %v286
    %v288 = vpop.xlane.xlu0 %287
    %v289 = vsel %vm258, %v280, 0.0
    %290 = vadd.xlane.f32.xlu0 %v289
    %v291 = vpop.xlane.xlu0 %290
    %v292 = vsel %vm258, %v282, 0.0
    %293 = vadd.xlane.f32.xlu0 %v292
    %v294 = vpop.xlane.xlu0 %293
    %v295 = vrcp.pop %v285
    %v296 = vrcp.pop %v288
    %v297 = vrcp.pop %v291
    %v298 = vrcp.pop %v294
    %v299 = vmul.f32 %v276, %v295
    %v300 = vmul.f32 %v278, %v296
    %v301 = vmul.f32 %v280, %v297
    %v302 = vmul.f32 %v282, %v298
    %v304 = vsel %vm258, %v299, 0
    %306 = vmatpush.msra.mxu0 0.0
    %307 = vmatpush.msra.mxu0 0.0
    %308 = vmatpush.msra.mxu0 0.0
    %309 = vmatpush.msra.mxu0 0.0
    %310 = vmatpush.msra.mxu0 0.0
    %311 = vmatpush.msra.mxu0 0.0
    %312 = vmatpush.msra.mxu0 0.0
    %313 = vmatpush.msra.mxu0 0.0
    %314 = vmatpush.msra.mxu0 0.0
    %315 = vmatpush.msra.mxu0 0.0
    %316 = vmatpush.msra.mxu0 0.0
    %317 = vmatpush.msra.mxu0 0.0
    %318 = vmatpush.msra.mxu0 0.0
    %319 = vmatpush.msra.mxu0 0.0
    %320 = vmatpush.msra.mxu0 0.0
    %321 = vmatpush.msra.mxu0 %v138
    %322 = vmatmul.f32.gmra.mxu0 %v304
    %v323 = vpop.f32.mrf.mxu0
    %v324 = vadd.f32 0.0, %v323
    %325 = vdwg.mxu0
    %v327 = vsel %vm258, %v300, 0
    %329 = vmatpush.msra.mxu0 0.0
    %330 = vmatpush.msra.mxu0 0.0
    %331 = vmatpush.msra.mxu0 0.0
    %332 = vmatpush.msra.mxu0 0.0
    %333 = vmatpush.msra.mxu0 0.0
    %334 = vmatpush.msra.mxu0 0.0
    %335 = vmatpush.msra.mxu0 0.0
    %336 = vmatpush.msra.mxu0 0.0
    %337 = vmatpush.msra.mxu0 0.0
    %338 = vmatpush.msra.mxu0 0.0
    %339 = vmatpush.msra.mxu0 0.0
    %340 = vmatpush.msra.mxu0 0.0
    %341 = vmatpush.msra.mxu0 0.0
    %342 = vmatpush.msra.mxu0 0.0
    %343 = vmatpush.msra.mxu0 0.0
    %344 = vmatpush.msra.mxu0 %v141
    %345 = vmatmul.f32.gmra.mxu0 %v327
    %v346 = vpop.f32.mrf.mxu0
    %v347 = vadd.f32 0.0, %v346
    %348 = vdwg.mxu0
    %v350 = vsel %vm258, %v301, 0
    %352 = vmatpush.msra.mxu0 0.0
    %353 = vmatpush.msra.mxu0 0.0
    %354 = vmatpush.msra.mxu0 0.0
    %355 = vmatpush.msra.mxu0 0.0
    %356 = vmatpush.msra.mxu0 0.0
    %357 = vmatpush.msra.mxu0 0.0
    %358 = vmatpush.msra.mxu0 0.0
    %359 = vmatpush.msra.mxu0 0.0
    %360 = vmatpush.msra.mxu0 0.0
    %361 = vmatpush.msra.mxu0 0.0
    %362 = vmatpush.msra.mxu0 0.0
    %363 = vmatpush.msra.mxu0 0.0
    %364 = vmatpush.msra.mxu0 0.0
    %365 = vmatpush.msra.mxu0 0.0
    %366 = vmatpush.msra.mxu0 0.0
    %367 = vmatpush.msra.mxu0 %v144
    %368 = vmatmul.f32.gmra.mxu0 %v350
    %v369 = vpop.f32.mrf.mxu0
    %v370 = vadd.f32 0.0, %v369
    %371 = vdwg.mxu0
    %v373 = vsel %vm258, %v302, 0
    %375 = vmatpush.msra.mxu0 0.0
    %376 = vmatpush.msra.mxu0 0.0
    %377 = vmatpush.msra.mxu0 0.0
    %378 = vmatpush.msra.mxu0 0.0
    %379 = vmatpush.msra.mxu0 0.0
    %380 = vmatpush.msra.mxu0 0.0
    %381 = vmatpush.msra.mxu0 0.0
    %382 = vmatpush.msra.mxu0 0.0
    %383 = vmatpush.msra.mxu0 0.0
    %384 = vmatpush.msra.mxu0 0.0
    %385 = vmatpush.msra.mxu0 0.0
    %386 = vmatpush.msra.mxu0 0.0
    %387 = vmatpush.msra.mxu0 0.0
    %388 = vmatpush.msra.mxu0 0.0
    %389 = vmatpush.msra.mxu0 0.0
    %390 = vmatpush.msra.mxu0 %v147
    %391 = vmatmul.f32.gmra.mxu0 %v373
    %v392 = vpop.f32.mrf.mxu0
    %v393 = vadd.f32 0.0, %v392
    %394 = vdwg.mxu0
    %395 = vrot.lane.b32.xlu0 %v109, 112
    %v396 = vpop.permute.xlu0 %395
    %397 = vrot.lane.b32.xlu0 %v109, 48
    %v398 = vpop.permute.xlu0 %397
    %v399 = vsel %vm152, %v396, 0
    %v401 = vsel %vm152, %v398, 0
    %403 = vmatpush.xpose.msra.mxu0 0.0
    %404 = vmatpush.xpose.msra.mxu0 0.0
    %405 = vmatpush.xpose.msra.mxu0 0.0
    %406 = vmatpush.xpose.msra.mxu0 0.0
    %407 = vmatpush.xpose.msra.mxu0 0.0
    %408 = vmatpush.xpose.msra.mxu0 0.0
    %409 = vmatpush.xpose.msra.mxu0 0.0
    %410 = vmatpush.xpose.msra.mxu0 0.0
    %411 = vmatpush.xpose.msra.mxu0 0.0
    %412 = vmatpush.xpose.msra.mxu0 0.0
    %413 = vmatpush.xpose.msra.mxu0 0.0
    %414 = vmatpush.xpose.msra.mxu0 0.0
    %415 = vmatpush.xpose.msra.mxu0 0.0
    %416 = vmatpush.xpose.msra.mxu0 0.0
    %417 = vmatpush.xpose.msra.mxu0 0.0
    %418 = vmatpush.xpose.msra.mxu0 %v401
    %419 = vmatmul.f32.gmra.mxu0 %v399
    %v420 = vpop.f32.mrf.mxu0
    %v421 = vadd.f32 %v52, %v420
    %422 = vdwg.mxu0
    %423 = vrot.lane.b32.xlu0 %v112, 112
    %v424 = vpop.permute.xlu0 %423
    %425 = vrot.lane.b32.xlu0 %v112, 48
    %v426 = vpop.permute.xlu0 %425
    %v427 = vsel %vm152, %v424, 0
    %v429 = vsel %vm152, %v426, 0
    %431 = vmatpush.xpose.msra.mxu0 0.0
    %432 = vmatpush.xpose.msra.mxu0 0.0
    %433 = vmatpush.xpose.msra.mxu0 0.0
    %434 = vmatpush.xpose.msra.mxu0 0.0
    %435 = vmatpush.xpose.msra.mxu0 0.0
    %436 = vmatpush.xpose.msra.mxu0 0.0
    %437 = vmatpush.xpose.msra.mxu0 0.0
    %438 = vmatpush.xpose.msra.mxu0 0.0
    %439 = vmatpush.xpose.msra.mxu0 0.0
    %440 = vmatpush.xpose.msra.mxu0 0.0
    %441 = vmatpush.xpose.msra.mxu0 0.0
    %442 = vmatpush.xpose.msra.mxu0 0.0
    %443 = vmatpush.xpose.msra.mxu0 0.0
    %444 = vmatpush.xpose.msra.mxu0 0.0
    %445 = vmatpush.xpose.msra.mxu0 0.0
    %446 = vmatpush.xpose.msra.mxu0 %v429
    %447 = vmatmul.f32.gmra.mxu0 %v427
    %v448 = vpop.f32.mrf.mxu0
    %v449 = vadd.f32 %v53, %v448
    %450 = vdwg.mxu0
    %451 = vrot.lane.b32.xlu0 %v115, 112
    %v452 = vpop.permute.xlu0 %451
    %453 = vrot.lane.b32.xlu0 %v115, 48
    %v454 = vpop.permute.xlu0 %453
    %v455 = vsel %vm152, %v452, 0
    %v457 = vsel %vm152, %v454, 0
    %459 = vmatpush.xpose.msra.mxu0 0.0
    %460 = vmatpush.xpose.msra.mxu0 0.0
    %461 = vmatpush.xpose.msra.mxu0 0.0
    %462 = vmatpush.xpose.msra.mxu0 0.0
    %463 = vmatpush.xpose.msra.mxu0 0.0
    %464 = vmatpush.xpose.msra.mxu0 0.0
    %465 = vmatpush.xpose.msra.mxu0 0.0
    %466 = vmatpush.xpose.msra.mxu0 0.0
    %467 = vmatpush.xpose.msra.mxu0 0.0
    %468 = vmatpush.xpose.msra.mxu0 0.0
    %469 = vmatpush.xpose.msra.mxu0 0.0
    %470 = vmatpush.xpose.msra.mxu0 0.0
    %471 = vmatpush.xpose.msra.mxu0 0.0
    %472 = vmatpush.xpose.msra.mxu0 0.0
    %473 = vmatpush.xpose.msra.mxu0 0.0
    %474 = vmatpush.xpose.msra.mxu0 %v457
    %475 = vmatmul.f32.gmra.mxu0 %v455
    %v476 = vpop.f32.mrf.mxu0
    %v477 = vadd.f32 %v54, %v476
    %478 = vdwg.mxu0
    %479 = vrot.lane.b32.xlu0 %v118, 112
    %v480 = vpop.permute.xlu0 %479
    %481 = vrot.lane.b32.xlu0 %v118, 48
    %v482 = vpop.permute.xlu0 %481
    %v483 = vsel %vm152, %v480, 0
    %v485 = vsel %vm152, %v482, 0
    %487 = vmatpush.xpose.msra.mxu0 0.0
    %488 = vmatpush.xpose.msra.mxu0 0.0
    %489 = vmatpush.xpose.msra.mxu0 0.0
    %490 = vmatpush.xpose.msra.mxu0 0.0
    %491 = vmatpush.xpose.msra.mxu0 0.0
    %492 = vmatpush.xpose.msra.mxu0 0.0
    %493 = vmatpush.xpose.msra.mxu0 0.0
    %494 = vmatpush.xpose.msra.mxu0 0.0
    %495 = vmatpush.xpose.msra.mxu0 0.0
    %496 = vmatpush.xpose.msra.mxu0 0.0
    %497 = vmatpush.xpose.msra.mxu0 0.0
    %498 = vmatpush.xpose.msra.mxu0 0.0
    %499 = vmatpush.xpose.msra.mxu0 0.0
    %500 = vmatpush.xpose.msra.mxu0 0.0
    %501 = vmatpush.xpose.msra.mxu0 0.0
    %502 = vmatpush.xpose.msra.mxu0 %v485
    %503 = vmatmul.f32.gmra.mxu0 %v483
    %v504 = vpop.f32.mrf.mxu0
    %v505 = vadd.f32 %v55, %v504
    %506 = vdwg.mxu0
    %v507 = vsel %vm258, %v421, -inf
    %508 = vmax.xlane.f32.xlu0 %v507
    %v509 = vpop.xlane.xlu0 %508
    %v510 = vsel %vm258, %v449, -inf
    %511 = vmax.xlane.f32.xlu0 %v510
    %v512 = vpop.xlane.xlu0 %511
    %v513 = vsel %vm258, %v477, -inf
    %514 = vmax.xlane.f32.xlu0 %v513
    %v515 = vpop.xlane.xlu0 %514
    %v516 = vsel %vm258, %v505, -inf
    %517 = vmax.xlane.f32.xlu0 %v516
    %v518 = vpop.xlane.xlu0 %517
    %v519 = vsub.f32 %v421, %v509
    %v520 = vsub.f32 %v449, %v512
    %v521 = vsub.f32 %v477, %v515
    %v522 = vsub.f32 %v505, %v518
    %v523 = vmul.f32 %v519, 1.442695
    %v524 = vpow.pop %v523
    %v525 = vmul.f32 %v520, 1.442695
    %v526 = vpow.pop %v525
    %v527 = vmul.f32 %v521, 1.442695
    %v528 = vpow.pop %v527
    %v529 = vmul.f32 %v522, 1.442695
    %v530 = vpow.pop %v529
    %v531 = vsel %vm258, %v524, 0.0
    %532 = vadd.xlane.f32.xlu0 %v531
    %v533 = vpop.xlane.xlu0 %532
    %v534 = vsel %vm258, %v526, 0.0
    %535 = vadd.xlane.f32.xlu0 %v534
    %v536 = vpop.xlane.xlu0 %535
    %v537 = vsel %vm258, %v528, 0.0
    %538 = vadd.xlane.f32.xlu0 %v537
    %v539 = vpop.xlane.xlu0 %538
    %v540 = vsel %vm258, %v530, 0.0
    %541 = vadd.xlane.f32.xlu0 %v540
    %v542 = vpop.xlane.xlu0 %541
    %v543 = vrcp.pop %v533
    %v544 = vrcp.pop %v536
    %v545 = vrcp.pop %v539
    %v546 = vrcp.pop %v542
    %v547 = vmul.f32 %v524, %v543
    %v548 = vmul.f32 %v526, %v544
    %v549 = vmul.f32 %v528, %v545
    %v550 = vmul.f32 %v530, %v546
    %552 = vrot.lane.b32.xlu0 %v138, 112
    %v553 = vpop.permute.xlu0 %552
    %v556 = vsel %vm258, %v547, 0
    %558 = vmatpush.msra.mxu0 0.0
    %559 = vmatpush.msra.mxu0 0.0
    %560 = vmatpush.msra.mxu0 0.0
    %561 = vmatpush.msra.mxu0 0.0
    %562 = vmatpush.msra.mxu0 0.0
    %563 = vmatpush.msra.mxu0 0.0
    %564 = vmatpush.msra.mxu0 0.0
    %565 = vmatpush.msra.mxu0 0.0
    %566 = vmatpush.msra.mxu0 0.0
    %567 = vmatpush.msra.mxu0 0.0
    %568 = vmatpush.msra.mxu0 0.0
    %569 = vmatpush.msra.mxu0 0.0
    %570 = vmatpush.msra.mxu0 0.0
    %571 = vmatpush.msra.mxu0 0.0
    %572 = vmatpush.msra.mxu0 0.0
    %573 = vmatpush.msra.mxu0 %v553
    %574 = vmatmul.f32.gmra.mxu0 %v556
    %v575 = vpop.f32.mrf.mxu0
    %v576 = vadd.f32 0.0, %v575
    %577 = vdwg.mxu0
    %579 = vrot.lane.b32.xlu0 %v141, 112
    %v580 = vpop.permute.xlu0 %579
    %v583 = vsel %vm258, %v548, 0
    %585 = vmatpush.msra.mxu0 0.0
    %586 = vmatpush.msra.mxu0 0.0
    %587 = vmatpush.msra.mxu0 0.0
    %588 = vmatpush.msra.mxu0 0.0
    %589 = vmatpush.msra.mxu0 0.0
    %590 = vmatpush.msra.mxu0 0.0
    %591 = vmatpush.msra.mxu0 0.0
    %592 = vmatpush.msra.mxu0 0.0
    %593 = vmatpush.msra.mxu0 0.0
    %594 = vmatpush.msra.mxu0 0.0
    %595 = vmatpush.msra.mxu0 0.0
    %596 = vmatpush.msra.mxu0 0.0
    %597 = vmatpush.msra.mxu0 0.0
    %598 = vmatpush.msra.mxu0 0.0
    %599 = vmatpush.msra.mxu0 0.0
    %600 = vmatpush.msra.mxu0 %v580
    %601 = vmatmul.f32.gmra.mxu0 %v583
    %v602 = vpop.f32.mrf.mxu0
    %v603 = vadd.f32 0.0, %v602
    %604 = vdwg.mxu0
    %606 = vrot.lane.b32.xlu0 %v144, 112
    %v607 = vpop.permute.xlu0 %606
    %v610 = vsel %vm258, %v549, 0
    %612 = vmatpush.msra.mxu0 0.0
    %613 = vmatpush.msra.mxu0 0.0
    %614 = vmatpush.msra.mxu0 0.0
    %615 = vmatpush.msra.mxu0 0.0
    %616 = vmatpush.msra.mxu0 0.0
    %617 = vmatpush.msra.mxu0 0.0
    %618 = vmatpush.msra.mxu0 0.0
    %619 = vmatpush.msra.mxu0 0.0
    %620 = vmatpush.msra.mxu0 0.0
    %621 = vmatpush.msra.mxu0 0.0
    %622 = vmatpush.msra.mxu0 0.0
    %623 = vmatpush.msra.mxu0 0.0
    %624 = vmatpush.msra.mxu0 0.0
    %625 = vmatpush.msra.mxu0 0.0
    %626 = vmatpush.msra.mxu0 0.0
    %627 = vmatpush.msra.mxu0 %v607
    %628 = vmatmul.f32.gmra.mxu0 %v610
    %v629 = vpop.f32.mrf.mxu0
    %v630 = vadd.f32 0.0, %v629
    %631 = vdwg.mxu0
    %633 = vrot.lane.b32.xlu0 %v147, 112
    %v634 = vpop.permute.xlu0 %633
    %v637 = vsel %vm258, %v550, 0
    %639 = vmatpush.msra.mxu0 0.0
    %640 = vmatpush.msra.mxu0 0.0
    %641 = vmatpush.msra.mxu0 0.0
    %642 = vmatpush.msra.mxu0 0.0
    %643 = vmatpush.msra.mxu0 0.0
    %644 = vmatpush.msra.mxu0 0.0
    %645 = vmatpush.msra.mxu0 0.0
    %646 = vmatpush.msra.mxu0 0.0
    %647 = vmatpush.msra.mxu0 0.0
    %648 = vmatpush.msra.mxu0 0.0
    %649 = vmatpush.msra.mxu0 0.0
    %650 = vmatpush.msra.mxu0 0.0
    %651 = vmatpush.msra.mxu0 0.0
    %652 = vmatpush.msra.mxu0 0.0
    %653 = vmatpush.msra.mxu0 0.0
    %654 = vmatpush.msra.mxu0 %v634
    %655 = vmatmul.f32.gmra.mxu0 %v637
    %v656 = vpop.f32.mrf.mxu0
    %v657 = vadd.f32 0.0, %v656
    %658 = vdwg.mxu0
    %659 = vrot.lane.b32.xlu0 %v109, 96
    %v660 = vpop.permute.xlu0 %659
    %661 = vrot.lane.b32.xlu0 %v109, 32
    %v662 = vpop.permute.xlu0 %661
    %v663 = vsel %vm152, %v660, 0
    %v665 = vsel %vm152, %v662, 0
    %667 = vmatpush.xpose.msra.mxu0 0.0
    %668 = vmatpush.xpose.msra.mxu0 0.0
    %669 = vmatpush.xpose.msra.mxu0 0.0
    %670 = vmatpush.xpose.msra.mxu0 0.0
    %671 = vmatpush.xpose.msra.mxu0 0.0
    %672 = vmatpush.xpose.msra.mxu0 0.0
    %673 = vmatpush.xpose.msra.mxu0 0.0
    %674 = vmatpush.xpose.msra.mxu0 0.0
    %675 = vmatpush.xpose.msra.mxu0 0.0
    %676 = vmatpush.xpose.msra.mxu0 0.0
    %677 = vmatpush.xpose.msra.mxu0 0.0
    %678 = vmatpush.xpose.msra.mxu0 0.0
    %679 = vmatpush.xpose.msra.mxu0 0.0
    %680 = vmatpush.xpose.msra.mxu0 0.0
    %681 = vmatpush.xpose.msra.mxu0 0.0
    %682 = vmatpush.xpose.msra.mxu0 %v665
    %683 = vmatmul.f32.gmra.mxu0 %v663
    %v684 = vpop.f32.mrf.mxu0
    %v685 = vadd.f32 %v52, %v684
    %686 = vdwg.mxu0
    %687 = vrot.lane.b32.xlu0 %v112, 96
    %v688 = vpop.permute.xlu0 %687
    %689 = vrot.lane.b32.xlu0 %v112, 32
    %v690 = vpop.permute.xlu0 %689
    %v691 = vsel %vm152, %v688, 0
    %v693 = vsel %vm152, %v690, 0
    %695 = vmatpush.xpose.msra.mxu0 0.0
    %696 = vmatpush.xpose.msra.mxu0 0.0
    %697 = vmatpush.xpose.msra.mxu0 0.0
    %698 = vmatpush.xpose.msra.mxu0 0.0
    %699 = vmatpush.xpose.msra.mxu0 0.0
    %700 = vmatpush.xpose.msra.mxu0 0.0
    %701 = vmatpush.xpose.msra.mxu0 0.0
    %702 = vmatpush.xpose.msra.mxu0 0.0
    %703 = vmatpush.xpose.msra.mxu0 0.0
    %704 = vmatpush.xpose.msra.mxu0 0.0
    %705 = vmatpush.xpose.msra.mxu0 0.0
    %706 = vmatpush.xpose.msra.mxu0 0.0
    %707 = vmatpush.xpose.msra.mxu0 0.0
    %708 = vmatpush.xpose.msra.mxu0 0.0
    %709 = vmatpush.xpose.msra.mxu0 0.0
    %710 = vmatpush.xpose.msra.mxu0 %v693
    %711 = vmatmul.f32.gmra.mxu0 %v691
    %v712 = vpop.f32.mrf.mxu0
    %v713 = vadd.f32 %v53, %v712
    %714 = vdwg.mxu0
    %715 = vrot.lane.b32.xlu0 %v115, 96
    %v716 = vpop.permute.xlu0 %715
    %717 = vrot.lane.b32.xlu0 %v115, 32
    %v718 = vpop.permute.xlu0 %717
    %v719 = vsel %vm152, %v716, 0
    %v721 = vsel %vm152, %v718, 0
    %723 = vmatpush.xpose.msra.mxu0 0.0
    %724 = vmatpush.xpose.msra.mxu0 0.0
    %725 = vmatpush.xpose.msra.mxu0 0.0
    %726 = vmatpush.xpose.msra.mxu0 0.0
    %727 = vmatpush.xpose.msra.mxu0 0.0
    %728 = vmatpush.xpose.msra.mxu0 0.0
    %729 = vmatpush.xpose.msra.mxu0 0.0
    %730 = vmatpush.xpose.msra.mxu0 0.0
    %731 = vmatpush.xpose.msra.mxu0 0.0
    %732 = vmatpush.xpose.msra.mxu0 0.0
    %733 = vmatpush.xpose.msra.mxu0 0.0
    %734 = vmatpush.xpose.msra.mxu0 0.0
    %735 = vmatpush.xpose.msra.mxu0 0.0
    %736 = vmatpush.xpose.msra.mxu0 0.0
    %737 = vmatpush.xpose.msra.mxu0 0.0
    %738 = vmatpush.xpose.msra.mxu0 %v721
    %739 = vmatmul.f32.gmra.mxu0 %v719
    %v740 = vpop.f32.mrf.mxu0
    %v741 = vadd.f32 %v54, %v740
    %742 = vdwg.mxu0
    %743 = vrot.lane.b32.xlu0 %v118, 96
    %v744 = vpop.permute.xlu0 %743
    %745 = vrot.lane.b32.xlu0 %v118, 32
    %v746 = vpop.permute.xlu0 %745
    %v747 = vsel %vm152, %v744, 0
    %v749 = vsel %vm152, %v746, 0
    %751 = vmatpush.xpose.msra.mxu0 0.0
    %752 = vmatpush.xpose.msra.mxu0 0.0
    %753 = vmatpush.xpose.msra.mxu0 0.0
    %754 = vmatpush.xpose.msra.mxu0 0.0
    %755 = vmatpush.xpose.msra.mxu0 0.0
    %756 = vmatpush.xpose.msra.mxu0 0.0
    %757 = vmatpush.xpose.msra.mxu0 0.0
    %758 = vmatpush.xpose.msra.mxu0 0.0
    %759 = vmatpush.xpose.msra.mxu0 0.0
    %760 = vmatpush.xpose.msra.mxu0 0.0
    %761 = vmatpush.xpose.msra.mxu0 0.0
    %762 = vmatpush.xpose.msra.mxu0 0.0
    %763 = vmatpush.xpose.msra.mxu0 0.0
    %764 = vmatpush.xpose.msra.mxu0 0.0
    %765 = vmatpush.xpose.msra.mxu0 0.0
    %766 = vmatpush.xpose.msra.mxu0 %v749
    %767 = vmatmul.f32.gmra.mxu0 %v747
    %v768 = vpop.f32.mrf.mxu0
    %v769 = vadd.f32 %v55, %v768
    %770 = vdwg.mxu0
    %v771 = vsel %vm258, %v685, -inf
    %772 = vmax.xlane.f32.xlu0 %v771
    %v773 = vpop.xlane.xlu0 %772
    %v774 = vsel %vm258, %v713, -inf
    %775 = vmax.xlane.f32.xlu0 %v774
    %v776 = vpop.xlane.xlu0 %775
    %v777 = vsel %vm258, %v741, -inf
    %778 = vmax.xlane.f32.xlu0 %v777
    %v779 = vpop.xlane.xlu0 %778
    %v780 = vsel %vm258, %v769, -inf
    %781 = vmax.xlane.f32.xlu0 %v780
    %v782 = vpop.xlane.xlu0 %781
    %v783 = vsub.f32 %v685, %v773
    %v784 = vsub.f32 %v713, %v776
    %v785 = vsub.f32 %v741, %v779
    %v786 = vsub.f32 %v769, %v782
    %v787 = vmul.f32 %v783, 1.442695
    %v788 = vpow.pop %v787
    %v789 = vmul.f32 %v784, 1.442695
    %v790 = vpow.pop %v789
    %v791 = vmul.f32 %v785, 1.442695
    %v792 = vpow.pop %v791
    %v793 = vmul.f32 %v786, 1.442695
    %v794 = vpow.pop %v793
    %v795 = vsel %vm258, %v788, 0.0
    %796 = vadd.xlane.f32.xlu0 %v795
    %v797 = vpop.xlane.xlu0 %796
    %v798 = vsel %vm258, %v790, 0.0
    %799 = vadd.xlane.f32.xlu0 %v798
    %v800 = vpop.xlane.xlu0 %799
    %v801 = vsel %vm258, %v792, 0.0
    %802 = vadd.xlane.f32.xlu0 %v801
    %v803 = vpop.xlane.xlu0 %802
    %v804 = vsel %vm258, %v794, 0.0
    %805 = vadd.xlane.f32.xlu0 %v804
    %v806 = vpop.xlane.xlu0 %805
    %v807 = vrcp.pop %v797
    %v808 = vrcp.pop %v800
    %v809 = vrcp.pop %v803
    %v810 = vrcp.pop %v806
    %v811 = vmul.f32 %v788, %v807
    %v812 = vmul.f32 %v790, %v808
    %v813 = vmul.f32 %v792, %v809
    %v814 = vmul.f32 %v794, %v810
    %815 = vrot.lane.b32.xlu0 %v138, 96
    %v816 = vpop.permute.xlu0 %815
    %v819 = vsel %vm258, %v811, 0
    %821 = vmatpush.msra.mxu0 0.0
    %822 = vmatpush.msra.mxu0 0.0
    %823 = vmatpush.msra.mxu0 0.0
    %824 = vmatpush.msra.mxu0 0.0
    %825 = vmatpush.msra.mxu0 0.0
    %826 = vmatpush.msra.mxu0 0.0
    %827 = vmatpush.msra.mxu0 0.0
    %828 = vmatpush.msra.mxu0 0.0
    %829 = vmatpush.msra.mxu0 0.0
    %830 = vmatpush.msra.mxu0 0.0
    %831 = vmatpush.msra.mxu0 0.0
    %832 = vmatpush.msra.mxu0 0.0
    %833 = vmatpush.msra.mxu0 0.0
    %834 = vmatpush.msra.mxu0 0.0
    %835 = vmatpush.msra.mxu0 0.0
    %836 = vmatpush.msra.mxu0 %v816
    %837 = vmatmul.f32.gmra.mxu0 %v819
    %v838 = vpop.f32.mrf.mxu0
    %v839 = vadd.f32 0.0, %v838
    %840 = vdwg.mxu0
    %841 = vrot.lane.b32.xlu0 %v141, 96
    %v842 = vpop.permute.xlu0 %841
    %v845 = vsel %vm258, %v812, 0
    %847 = vmatpush.msra.mxu0 0.0
    %848 = vmatpush.msra.mxu0 0.0
    %849 = vmatpush.msra.mxu0 0.0
    %850 = vmatpush.msra.mxu0 0.0
    %851 = vmatpush.msra.mxu0 0.0
    %852 = vmatpush.msra.mxu0 0.0
    %853 = vmatpush.msra.mxu0 0.0
    %854 = vmatpush.msra.mxu0 0.0
    %855 = vmatpush.msra.mxu0 0.0
    %856 = vmatpush.msra.mxu0 0.0
    %857 = vmatpush.msra.mxu0 0.0
    %858 = vmatpush.msra.mxu0 0.0
    %859 = vmatpush.msra.mxu0 0.0
    %860 = vmatpush.msra.mxu0 0.0
    %861 = vmatpush.msra.mxu0 0.0
    %862 = vmatpush.msra.mxu0 %v842
    %863 = vmatmul.f32.gmra.mxu0 %v845
    %v864 = vpop.f32.mrf.mxu0
    %v865 = vadd.f32 0.0, %v864
    %866 = vdwg.mxu0
    %867 = vrot.lane.b32.xlu0 %v144, 96
    %v868 = vpop.permute.xlu0 %867
    %v871 = vsel %vm258, %v813, 0
    %873 = vmatpush.msra.mxu0 0.0
    %874 = vmatpush.msra.mxu0 0.0
    %875 = vmatpush.msra.mxu0 0.0
    %876 = vmatpush.msra.mxu0 0.0
    %877 = vmatpush.msra.mxu0 0.0
    %878 = vmatpush.msra.mxu0 0.0
    %879 = vmatpush.msra.mxu0 0.0
    %880 = vmatpush.msra.mxu0 0.0
    %881 = vmatpush.msra.mxu0 0.0
    %882 = vmatpush.msra.mxu0 0.0
    %883 = vmatpush.msra.mxu0 0.0
    %884 = vmatpush.msra.mxu0 0.0
    %885 = vmatpush.msra.mxu0 0.0
    %886 = vmatpush.msra.mxu0 0.0
    %887 = vmatpush.msra.mxu0 0.0
    %888 = vmatpush.msra.mxu0 %v868
    %889 = vmatmul.f32.gmra.mxu0 %v871
    %v890 = vpop.f32.mrf.mxu0
    %v891 = vadd.f32 0.0, %v890
    %892 = vdwg.mxu0
    %893 = vrot.lane.b32.xlu0 %v147, 96
    %v894 = vpop.permute.xlu0 %893
    %v897 = vsel %vm258, %v814, 0
    %899 = vmatpush.msra.mxu0 0.0
    %900 = vmatpush.msra.mxu0 0.0
    %901 = vmatpush.msra.mxu0 0.0
    %902 = vmatpush.msra.mxu0 0.0
    %903 = vmatpush.msra.mxu0 0.0
    %904 = vmatpush.msra.mxu0 0.0
    %905 = vmatpush.msra.mxu0 0.0
    %906 = vmatpush.msra.mxu0 0.0
    %907 = vmatpush.msra.mxu0 0.0
    %908 = vmatpush.msra.mxu0 0.0
    %909 = vmatpush.msra.mxu0 0.0
    %910 = vmatpush.msra.mxu0 0.0
    %911 = vmatpush.msra.mxu0 0.0
    %912 = vmatpush.msra.mxu0 0.0
    %913 = vmatpush.msra.mxu0 0.0
    %914 = vmatpush.msra.mxu0 %v894
    %915 = vmatmul.f32.gmra.mxu0 %v897
    %v916 = vpop.f32.mrf.mxu0
    %v917 = vadd.f32 0.0, %v916
    %918 = vdwg.mxu0
    %919 = vrot.lane.b32.xlu0 %v109, 80
    %v920 = vpop.permute.xlu0 %919
    %921 = vrot.lane.b32.xlu0 %v109, 16
    %v922 = vpop.permute.xlu0 %921
    %v923 = vsel %vm152, %v920, 0
    %v925 = vsel %vm152, %v922, 0
    %927 = vmatpush.xpose.msra.mxu0 0.0
    %928 = vmatpush.xpose.msra.mxu0 0.0
    %929 = vmatpush.xpose.msra.mxu0 0.0
    %930 = vmatpush.xpose.msra.mxu0 0.0
    %931 = vmatpush.xpose.msra.mxu0 0.0
    %932 = vmatpush.xpose.msra.mxu0 0.0
    %933 = vmatpush.xpose.msra.mxu0 0.0
    %934 = vmatpush.xpose.msra.mxu0 0.0
    %935 = vmatpush.xpose.msra.mxu0 0.0
    %936 = vmatpush.xpose.msra.mxu0 0.0
    %937 = vmatpush.xpose.msra.mxu0 0.0
    %938 = vmatpush.xpose.msra.mxu0 0.0
    %939 = vmatpush.xpose.msra.mxu0 0.0
    %940 = vmatpush.xpose.msra.mxu0 0.0
    %941 = vmatpush.xpose.msra.mxu0 0.0
    %942 = vmatpush.xpose.msra.mxu0 %v925
    %943 = vmatmul.f32.gmra.mxu0 %v923
    %v944 = vpop.f32.mrf.mxu0
    %v945 = vadd.f32 %v52, %v944
    %946 = vdwg.mxu0
    %947 = vrot.lane.b32.xlu0 %v112, 80
    %v948 = vpop.permute.xlu0 %947
    %949 = vrot.lane.b32.xlu0 %v112, 16
    %v950 = vpop.permute.xlu0 %949
    %v951 = vsel %vm152, %v948, 0
    %v953 = vsel %vm152, %v950, 0
    %955 = vmatpush.xpose.msra.mxu0 0.0
    %956 = vmatpush.xpose.msra.mxu0 0.0
    %957 = vmatpush.xpose.msra.mxu0 0.0
    %958 = vmatpush.xpose.msra.mxu0 0.0
    %959 = vmatpush.xpose.msra.mxu0 0.0
    %960 = vmatpush.xpose.msra.mxu0 0.0
    %961 = vmatpush.xpose.msra.mxu0 0.0
    %962 = vmatpush.xpose.msra.mxu0 0.0
    %963 = vmatpush.xpose.msra.mxu0 0.0
    %964 = vmatpush.xpose.msra.mxu0 0.0
    %965 = vmatpush.xpose.msra.mxu0 0.0
    %966 = vmatpush.xpose.msra.mxu0 0.0
    %967 = vmatpush.xpose.msra.mxu0 0.0
    %968 = vmatpush.xpose.msra.mxu0 0.0
    %969 = vmatpush.xpose.msra.mxu0 0.0
    %970 = vmatpush.xpose.msra.mxu0 %v953
    %971 = vmatmul.f32.gmra.mxu0 %v951
    %v972 = vpop.f32.mrf.mxu0
    %v973 = vadd.f32 %v53, %v972
    %974 = vdwg.mxu0
    %975 = vrot.lane.b32.xlu0 %v115, 80
    %v976 = vpop.permute.xlu0 %975
    %977 = vrot.lane.b32.xlu0 %v115, 16
    %v978 = vpop.permute.xlu0 %977
    %v979 = vsel %vm152, %v976, 0
    %v981 = vsel %vm152, %v978, 0
    %983 = vmatpush.xpose.msra.mxu0 0.0
    %984 = vmatpush.xpose.msra.mxu0 0.0
    %985 = vmatpush.xpose.msra.mxu0 0.0
    %986 = vmatpush.xpose.msra.mxu0 0.0
    %987 = vmatpush.xpose.msra.mxu0 0.0
    %988 = vmatpush.xpose.msra.mxu0 0.0
    %989 = vmatpush.xpose.msra.mxu0 0.0
    %990 = vmatpush.xpose.msra.mxu0 0.0
    %991 = vmatpush.xpose.msra.mxu0 0.0
    %992 = vmatpush.xpose.msra.mxu0 0.0
    %993 = vmatpush.xpose.msra.mxu0 0.0
    %994 = vmatpush.xpose.msra.mxu0 0.0
    %995 = vmatpush.xpose.msra.mxu0 0.0
    %996 = vmatpush.xpose.msra.mxu0 0.0
    %997 = vmatpush.xpose.msra.mxu0 0.0
    %998 = vmatpush.xpose.msra.mxu0 %v981
    %999 = vmatmul.f32.gmra.mxu0 %v979
    %v1000 = vpop.f32.mrf.mxu0
    %v1001 = vadd.f32 %v54, %v1000
    %1002 = vdwg.mxu0
    %1003 = vrot.lane.b32.xlu0 %v118, 80
    %v1004 = vpop.permute.xlu0 %1003
    %1005 = vrot.lane.b32.xlu0 %v118, 16
    %v1006 = vpop.permute.xlu0 %1005
    %v1007 = vsel %vm152, %v1004, 0
    %v1009 = vsel %vm152, %v1006, 0
    %1011 = vmatpush.xpose.msra.mxu0 0.0
    %1012 = vmatpush.xpose.msra.mxu0 0.0
    %1013 = vmatpush.xpose.msra.mxu0 0.0
    %1014 = vmatpush.xpose.msra.mxu0 0.0
    %1015 = vmatpush.xpose.msra.mxu0 0.0
    %1016 = vmatpush.xpose.msra.mxu0 0.0
    %1017 = vmatpush.xpose.msra.mxu0 0.0
    %1018 = vmatpush.xpose.msra.mxu0 0.0
    %1019 = vmatpush.xpose.msra.mxu0 0.0
    %1020 = vmatpush.xpose.msra.mxu0 0.0
    %1021 = vmatpush.xpose.msra.mxu0 0.0
    %1022 = vmatpush.xpose.msra.mxu0 0.0
    %1023 = vmatpush.xpose.msra.mxu0 0.0
    %1024 = vmatpush.xpose.msra.mxu0 0.0
    %1025 = vmatpush.xpose.msra.mxu0 0.0
    %1026 = vmatpush.xpose.msra.mxu0 %v1009
    %1027 = vmatmul.f32.gmra.mxu0 %v1007
    %v1028 = vpop.f32.mrf.mxu0
    %v1029 = vadd.f32 %v55, %v1028
    %1030 = vdwg.mxu0
    %v1031 = vsel %vm258, %v945, -inf
    %1032 = vmax.xlane.f32.xlu0 %v1031
    %v1033 = vpop.xlane.xlu0 %1032
    %v1034 = vsel %vm258, %v973, -inf
    %1035 = vmax.xlane.f32.xlu0 %v1034
    %v1036 = vpop.xlane.xlu0 %1035
    %v1037 = vsel %vm258, %v1001, -inf
    %1038 = vmax.xlane.f32.xlu0 %v1037
    %v1039 = vpop.xlane.xlu0 %1038
    %v1040 = vsel %vm258, %v1029, -inf
    %1041 = vmax.xlane.f32.xlu0 %v1040
    %v1042 = vpop.xlane.xlu0 %1041
    %v1043 = vsub.f32 %v945, %v1033
    %v1044 = vsub.f32 %v973, %v1036
    %v1045 = vsub.f32 %v1001, %v1039
    %v1046 = vsub.f32 %v1029, %v1042
    %v1047 = vmul.f32 %v1043, 1.442695
    %v1048 = vpow.pop %v1047
    %v1049 = vmul.f32 %v1044, 1.442695
    %v1050 = vpow.pop %v1049
    %v1051 = vmul.f32 %v1045, 1.442695
    %v1052 = vpow.pop %v1051
    %v1053 = vmul.f32 %v1046, 1.442695
    %v1054 = vpow.pop %v1053
    %v1055 = vsel %vm258, %v1048, 0.0
    %1056 = vadd.xlane.f32.xlu0 %v1055
    %v1057 = vpop.xlane.xlu0 %1056
    %v1058 = vsel %vm258, %v1050, 0.0
    %1059 = vadd.xlane.f32.xlu0 %v1058
    %v1060 = vpop.xlane.xlu0 %1059
    %v1061 = vsel %vm258, %v1052, 0.0
    %1062 = vadd.xlane.f32.xlu0 %v1061
    %v1063 = vpop.xlane.xlu0 %1062
    %v1064 = vsel %vm258, %v1054, 0.0
    %1065 = vadd.xlane.f32.xlu0 %v1064
    %v1066 = vpop.xlane.xlu0 %1065
    %v1067 = vrcp.pop %v1057
    %v1068 = vrcp.pop %v1060
    %v1069 = vrcp.pop %v1063
    %v1070 = vrcp.pop %v1066
    %v1071 = vmul.f32 %v1048, %v1067
    %v1072 = vmul.f32 %v1050, %v1068
    %v1073 = vmul.f32 %v1052, %v1069
    %v1074 = vmul.f32 %v1054, %v1070
    %1075 = vrot.lane.b32.xlu0 %v138, 80
    %v1076 = vpop.permute.xlu0 %1075
    %v1079 = vsel %vm258, %v1071, 0
    %1081 = vmatpush.msra.mxu0 0.0
    %1082 = vmatpush.msra.mxu0 0.0
    %1083 = vmatpush.msra.mxu0 0.0
    %1084 = vmatpush.msra.mxu0 0.0
    %1085 = vmatpush.msra.mxu0 0.0
    %1086 = vmatpush.msra.mxu0 0.0
    %1087 = vmatpush.msra.mxu0 0.0
    %1088 = vmatpush.msra.mxu0 0.0
    %1089 = vmatpush.msra.mxu0 0.0
    %1090 = vmatpush.msra.mxu0 0.0
    %1091 = vmatpush.msra.mxu0 0.0
    %1092 = vmatpush.msra.mxu0 0.0
    %1093 = vmatpush.msra.mxu0 0.0
    %1094 = vmatpush.msra.mxu0 0.0
    %1095 = vmatpush.msra.mxu0 0.0
    %1096 = vmatpush.msra.mxu0 %v1076
    %1097 = vmatmul.f32.gmra.mxu0 %v1079
    %v1098 = vpop.f32.mrf.mxu0
    %v1099 = vadd.f32 0.0, %v1098
    %1100 = vdwg.mxu0
    %1101 = vrot.lane.b32.xlu0 %v141, 80
    %v1102 = vpop.permute.xlu0 %1101
    %v1105 = vsel %vm258, %v1072, 0
    %1107 = vmatpush.msra.mxu0 0.0
    %1108 = vmatpush.msra.mxu0 0.0
    %1109 = vmatpush.msra.mxu0 0.0
    %1110 = vmatpush.msra.mxu0 0.0
    %1111 = vmatpush.msra.mxu0 0.0
    %1112 = vmatpush.msra.mxu0 0.0
    %1113 = vmatpush.msra.mxu0 0.0
    %1114 = vmatpush.msra.mxu0 0.0
    %1115 = vmatpush.msra.mxu0 0.0
    %1116 = vmatpush.msra.mxu0 0.0
    %1117 = vmatpush.msra.mxu0 0.0
    %1118 = vmatpush.msra.mxu0 0.0
    %1119 = vmatpush.msra.mxu0 0.0
    %1120 = vmatpush.msra.mxu0 0.0
    %1121 = vmatpush.msra.mxu0 0.0
    %1122 = vmatpush.msra.mxu0 %v1102
    %1123 = vmatmul.f32.gmra.mxu0 %v1105
    %v1124 = vpop.f32.mrf.mxu0
    %v1125 = vadd.f32 0.0, %v1124
    %1126 = vdwg.mxu0
    %1127 = vrot.lane.b32.xlu0 %v144, 80
    %v1128 = vpop.permute.xlu0 %1127
    %v1131 = vsel %vm258, %v1073, 0
    %1133 = vmatpush.msra.mxu0 0.0
    %1134 = vmatpush.msra.mxu0 0.0
    %1135 = vmatpush.msra.mxu0 0.0
    %1136 = vmatpush.msra.mxu0 0.0
    %1137 = vmatpush.msra.mxu0 0.0
    %1138 = vmatpush.msra.mxu0 0.0
    %1139 = vmatpush.msra.mxu0 0.0
    %1140 = vmatpush.msra.mxu0 0.0
    %1141 = vmatpush.msra.mxu0 0.0
    %1142 = vmatpush.msra.mxu0 0.0
    %1143 = vmatpush.msra.mxu0 0.0
    %1144 = vmatpush.msra.mxu0 0.0
    %1145 = vmatpush.msra.mxu0 0.0
    %1146 = vmatpush.msra.mxu0 0.0
    %1147 = vmatpush.msra.mxu0 0.0
    %1148 = vmatpush.msra.mxu0 %v1128
    %1149 = vmatmul.f32.gmra.mxu0 %v1131
    %v1150 = vpop.f32.mrf.mxu0
    %v1151 = vadd.f32 0.0, %v1150
    %1152 = vdwg.mxu0
    %1153 = vrot.lane.b32.xlu0 %v147, 80
    %v1154 = vpop.permute.xlu0 %1153
    %v1157 = vsel %vm258, %v1074, 0
    %1159 = vmatpush.msra.mxu0 0.0
    %1160 = vmatpush.msra.mxu0 0.0
    %1161 = vmatpush.msra.mxu0 0.0
    %1162 = vmatpush.msra.mxu0 0.0
    %1163 = vmatpush.msra.mxu0 0.0
    %1164 = vmatpush.msra.mxu0 0.0
    %1165 = vmatpush.msra.mxu0 0.0
    %1166 = vmatpush.msra.mxu0 0.0
    %1167 = vmatpush.msra.mxu0 0.0
    %1168 = vmatpush.msra.mxu0 0.0
    %1169 = vmatpush.msra.mxu0 0.0
    %1170 = vmatpush.msra.mxu0 0.0
    %1171 = vmatpush.msra.mxu0 0.0
    %1172 = vmatpush.msra.mxu0 0.0
    %1173 = vmatpush.msra.mxu0 0.0
    %1174 = vmatpush.msra.mxu0 %v1154
    %1175 = vmatmul.f32.gmra.mxu0 %v1157
    %v1176 = vpop.f32.mrf.mxu0
    %v1177 = vadd.f32 0.0, %v1176
    %1178 = vdwg.mxu0
    %1183 = vrot.lane.b32.xlu0 %v576, 16
    %v1184 = vpop.permute.xlu0 %1183
    %1185 = vrot.lane.b32.xlu0 %v603, 16
    %v1186 = vpop.permute.xlu0 %1185
    %1187 = vrot.lane.b32.xlu0 %v630, 16
    %v1188 = vpop.permute.xlu0 %1187
    %1189 = vrot.lane.b32.xlu0 %v657, 16
    %v1190 = vpop.permute.xlu0 %1189
    %1199 = vrot.lane.b32.xlu0 %v839, 32
    %v1200 = vpop.permute.xlu0 %1199
    %1201 = vrot.lane.b32.xlu0 %v865, 32
    %v1202 = vpop.permute.xlu0 %1201
    %1203 = vrot.lane.b32.xlu0 %v891, 32
    %v1204 = vpop.permute.xlu0 %1203
    %1205 = vrot.lane.b32.xlu0 %v917, 32
    %v1206 = vpop.permute.xlu0 %1205
    %1215 = vrot.lane.b32.xlu0 %v1099, 48
    %v1216 = vpop.permute.xlu0 %1215
    %1217 = vrot.lane.b32.xlu0 %v1125, 48
    %v1218 = vpop.permute.xlu0 %1217
    %1219 = vrot.lane.b32.xlu0 %v1151, 48
    %v1220 = vpop.permute.xlu0 %1219
    %1221 = vrot.lane.b32.xlu0 %v1177, 48
    %v1222 = vpop.permute.xlu0 %1221
    %v1227 = vsel %vm152, %v324, %v1184
    %v1228 = vsel %vm152, %v347, %v1186
    %v1229 = vsel %vm152, %v370, %v1188
    %v1230 = vsel %vm152, %v393, %v1190
    %vm1231 = vcmask 261120
    %v1232 = vsel %vm1231, %v1227, %v1200
    %v1233 = vsel %vm1231, %v1228, %v1202
    %v1234 = vsel %vm1231, %v1229, %v1204
    %v1235 = vsel %vm1231, %v1230, %v1206
    %vm1236 = vcmask 392192
    %v1237 = vsel %vm1236, %v1232, %v1216
    %v1238 = vsel %vm1236, %v1233, %v1218
    %v1239 = vsel %vm1236, %v1234, %v1220
    %v1240 = vsel %vm1236, %v1235, %v1222
    %v1241 = vld [vmem:[#allocation2 + $0x8] sm:$0xff]
    %v1242 = vld [vmem:[#allocation2 + $0x30] sm:$0xff]
    %v1243 = vld [vmem:[#allocation2 + $0x58] sm:$0xff]
    %v1244 = vld [vmem:[#allocation2 + $0x80] sm:$0xff]
    %v1245 = vld [vmem:[#allocation2 + $0xa8] sm:$0xff]
    %v1246 = vld [vmem:[#allocation2 + $0xd0] sm:$0xff]
    %v1247 = vld [vmem:[#allocation2 + $0xf8] sm:$0xff]
    %v1248 = vld [vmem:[#allocation2 + $0x120] sm:$0xff]
    %v1249 = vld [vmem:[%s5 + $0x1] sm:$0x1]
    %v1251 = vperm.slane %v1249, 0
    %1260 = vrot.lane.b32.xlu0 %v1241, 64
    %v1261 = vpop.permute.xlu0 %1260
    %1262 = vrot.lane.b32.xlu0 %v1242, 64
    %v1263 = vpop.permute.xlu0 %1262
    %1264 = vrot.lane.b32.xlu0 %v1243, 64
    %v1265 = vpop.permute.xlu0 %1264
    %1266 = vrot.lane.b32.xlu0 %v1244, 64
    %v1267 = vpop.permute.xlu0 %1266
    %1268 = vrot.lane.b32.xlu0 %v1245, 64
    %v1269 = vpop.permute.xlu0 %1268
    %1270 = vrot.lane.b32.xlu0 %v1246, 64
    %v1271 = vpop.permute.xlu0 %1270
    %1272 = vrot.lane.b32.xlu0 %v1247, 64
    %v1273 = vpop.permute.xlu0 %1272
    %1274 = vrot.lane.b32.xlu0 %v1248, 64
    %v1275 = vpop.permute.xlu0 %1274
    %1284 = vrot.lane.b32.xlu0 %v1251, 64
    %v1285 = vpop.permute.xlu0 %1284
    %v1288 = vsel %vm78, %v1237, 0
    %v1291 = vsel %vm78, %v1238, 0
    %v1294 = vsel %vm78, %v1239, 0
    %v1297 = vsel %vm78, %v1240, 0
    %1299 = vmatpush.msra.mxu0 0.0
    %1300 = vmatpush.msra.mxu0 0.0
    %1301 = vmatpush.msra.mxu0 0.0
    %1302 = vmatpush.msra.mxu0 0.0
    %1303 = vmatpush.msra.mxu0 0.0
    %1304 = vmatpush.msra.mxu0 0.0
    %1305 = vmatpush.msra.mxu0 0.0
    %1306 = vmatpush.msra.mxu0 0.0
    %1307 = vmatpush.msra.mxu0 %v1275
    %1308 = vmatpush.msra.mxu0 %v1273
    %1309 = vmatpush.msra.mxu0 %v1271
    %1310 = vmatpush.msra.mxu0 %v1269
    %1311 = vmatpush.msra.mxu0 %v1267
    %1312 = vmatpush.msra.mxu0 %v1265
    %1313 = vmatpush.msra.mxu0 %v1263
    %1314 = vmatpush.msra.mxu0 %v1261
    %1315 = vmatmul.f32.gmra.mxu0 %v1288
    %v1316 = vpop.f32.mrf.mxu0
    %v1317 = vadd.f32 %v1285, %v1316
    %1318 = vmatmul.f32.gmra.mxu0 %v1291
    %v1319 = vpop.f32.mrf.mxu0
    %v1320 = vadd.f32 %v1285, %v1319
    %1321 = vmatmul.f32.gmra.mxu0 %v1294
    %v1322 = vpop.f32.mrf.mxu0
    %v1323 = vadd.f32 %v1285, %v1322
    %1324 = vmatmul.f32.gmra.mxu0 %v1297
    %v1325 = vpop.f32.mrf.mxu0
    %v1326 = vadd.f32 %v1285, %v1325
    %1327 = vdwg.mxu0
    %v1328 = vadd.f32 %v40, %v1317
    %v1329 = vadd.f32 %v41, %v1320
    %v1330 = vadd.f32 %v42, %v1323
    %v1331 = vadd.f32 %v43, %v1326
    %v1332 = vld [vmem:[%s5 + $0x5] sm:$0x1]
    %v1333 = vld [vmem:[%s5 + $0x6] sm:$0x1]
    %v1334 = vsel %vm78, %v1328, 0.0
    %1335 = vadd.xlane.f32.xlu0 %v1334
    %v1336 = vpop.xlane.xlu0 %1335
    %v1337 = vsel %vm78, %v1329, 0.0
    %1338 = vadd.xlane.f32.xlu0 %v1337
    %v1339 = vpop.xlane.xlu0 %1338
    %v1340 = vsel %vm78, %v1330, 0.0
    %1341 = vadd.xlane.f32.xlu0 %v1340
    %v1342 = vpop.xlane.xlu0 %1341
    %v1343 = vsel %vm78, %v1331, 0.0
    %1344 = vadd.xlane.f32.xlu0 %v1343
    %v1345 = vpop.xlane.xlu0 %1344
    %v1346 = vrcp.pop 64.0
    %v1347 = vmul.f32 64.0, %v1346
    %v1348 = vsub.f32 1.0, %v1347
    %v1349 = vmul.f32 %v1346, %v1348
    %v1350 = vadd.f32 %v1346, %v1349
    %vm1351 = vweird.f32 %v1346
    %v1352 = vsel %vm1351, %v1346, %v1350
    %v1353 = vmul.f32 %v1336, %v1352
    %v1354 = vmul.f32 %v1339, %v1352
    %v1355 = vmul.f32 %v1342, %v1352
    %v1356 = vmul.f32 %v1345, %v1352
    %v1357 = vsub.f32 %v1328, %v1353
    %v1358 = vsub.f32 %v1329, %v1354
    %v1359 = vsub.f32 %v1330, %v1355
    %v1360 = vsub.f32 %v1331, %v1356
    %v1361 = vmul.f32 %v1357, %v1357
    %v1362 = vmul.f32 %v1358, %v1358
    %v1363 = vmul.f32 %v1359, %v1359
    %v1364 = vmul.f32 %v1360, %v1360
    %v1365 = vsel %vm78, %v1361, 0.0
    %1366 = vadd.xlane.f32.xlu0 %v1365
    %v1367 = vpop.xlane.xlu0 %1366
    %v1368 = vsel %vm78, %v1362, 0.0
    %1369 = vadd.xlane.f32.xlu0 %v1368
    %v1370 = vpop.xlane.xlu0 %1369
    %v1371 = vsel %vm78, %v1363, 0.0
    %1372 = vadd.xlane.f32.xlu0 %v1371
    %v1373 = vpop.xlane.xlu0 %1372
    %v1374 = vsel %vm78, %v1364, 0.0
    %1375 = vadd.xlane.f32.xlu0 %v1374
    %v1376 = vpop.xlane.xlu0 %1375
    %v1377 = vmul.f32 %v1367, %v1352
    %v1378 = vmul.f32 %v1370, %v1352
    %v1379 = vmul.f32 %v1373, %v1352
    %v1380 = vmul.f32 %v1376, %v1352
    %v1381 = vadd.f32 %v1377, 1e-05
    %v1382 = vadd.f32 %v1378, 1e-05
    %v1383 = vadd.f32 %v1379, 1e-05
    %v1384 = vadd.f32 %v1380, 1e-05
    %v1385 = vrsqrt.pop %v1381
    %v1386 = vmul.f32 %v1385, %v1381
    %v1387 = vmul.f32 %v1386, %v1385
    %v1388 = vmul.f32 0.5, %v1387
    %v1389 = vsub.f32 1.5, %v1388
    %v1390 = vmul.f32 %v1385, %v1389
    %vm1391 = vweird.f32 %v1381
    %vm1392 = vweird.f32 %v1385
    %vm1393 = vmor %vm1391, %vm1392
    %v1394 = vsel %vm1393, %v1385, %v1390
    %v1395 = vrsqrt.pop %v1382
    %v1396 = vmul.f32 %v1395, %v1382
    %v1397 = vmul.f32 %v1396, %v1395
    %v1398 = vmul.f32 0.5, %v1397
    %v1399 = vsub.f32 1.5, %v1398
    %v1400 = vmul.f32 %v1395, %v1399
    %vm1401 = vweird.f32 %v1382
    %vm1402 = vweird.f32 %v1395
    %vm1403 = vmor %vm1401, %vm1402
    %v1404 = vsel %vm1403, %v1395, %v1400
    %v1405 = vrsqrt.pop %v1383
    %v1406 = vmul.f32 %v1405, %v1383
    %v1407 = vmul.f32 %v1406, %v1405
    %v1408 = vmul.f32 0.5, %v1407
    %v1409 = vsub.f32 1.5, %v1408
    %v1410 = vmul.f32 %v1405, %v1409
    %vm1411 = vweird.f32 %v1383
    %vm1412 = vweird.f32 %v1405
    %vm1413 = vmor %vm1411, %vm1412
    %v1414 = vsel %vm1413, %v1405, %v1410
    %v1415 = vrsqrt.pop %v1384
    %v1416 = vmul.f32 %v1415, %v1384
    %v1417 = vmul.f32 %v1416, %v1415
    %v1418 = vmul.f32 0.5, %v1417
    %v1419 = vsub.f32 1.5, %v1418
    %v1420 = vmul.f32 %v1415, %v1419
    %vm1421 = vweird.f32 %v1384
    %vm1422 = vweird.f32 %v1415
    %vm1423 = vmor %vm1421, %vm1422
    %v1424 = vsel %vm1423, %v1415, %v1420
    %v1425 = vmul.f32 %v1357, %v1394
    %v1426 = vmul.f32 %v1358, %v1404
    %v1427 = vmul.f32 %v1359, %v1414
    %v1428 = vmul.f32 %v1360, %v1424
    %v1430 = vperm.slane %v1332, 0
    %1431 = vrot.lane.b32.xlu0 %v1430, 64
    %v1432 = vpop.permute.xlu0 %1431
    %v1434 = vmul.f32 %v1425, %v1432
    %v1435 = vmul.f32 %v1426, %v1432
    %v1436 = vmul.f32 %v1427, %v1432
    %v1437 = vmul.f32 %v1428, %v1432
    %v1439 = vperm.slane %v1333, 0
    %v1441 = vadd.f32 %v1434, %v1439
    %v1442 = vadd.f32 %v1435, %v1439
    %v1443 = vadd.f32 %v1436, %v1439
    %v1444 = vadd.f32 %v1437, %v1439
    %v1445 = vld [vmem:[#allocation2 + $0x10] sm:$0xff]
    %v1446 = vld [vmem:[#allocation2 + $0x38] sm:$0xff]
    %v1447 = vld [vmem:[#allocation2 + $0x60] sm:$0xff]
    %v1448 = vld [vmem:[#allocation2 + $0x88] sm:$0xff]
    %v1449 = vld [vmem:[#allocation2 + $0xb0] sm:$0xff]
    %v1450 = vld [vmem:[#allocation2 + $0xd8] sm:$0xff]
    %v1451 = vld [vmem:[#allocation2 + $0x100] sm:$0xff]
    %v1452 = vld [vmem:[#allocation2 + $0x128] sm:$0xff]
    %v1453 = vld [vmem:[%s5 + $0x2] sm:$0x1]
    %v1455 = vperm.slane %v1453, 0
    %v1458 = vsel %vm78, %v1441, 0
    %v1461 = vsel %vm78, %v1442, 0
    %v1464 = vsel %vm78, %v1443, 0
    %v1467 = vsel %vm78, %v1444, 0
    %1469 = vmatpush.msra.mxu0 0.0
    %1470 = vmatpush.msra.mxu0 0.0
    %1471 = vmatpush.msra.mxu0 0.0
    %1472 = vmatpush.msra.mxu0 0.0
    %1473 = vmatpush.msra.mxu0 0.0
    %1474 = vmatpush.msra.mxu0 0.0
    %1475 = vmatpush.msra.mxu0 0.0
    %1476 = vmatpush.msra.mxu0 0.0
    %1477 = vmatpush.msra.mxu0 %v1452
    %1478 = vmatpush.msra.mxu0 %v1451
    %1479 = vmatpush.msra.mxu0 %v1450
    %1480 = vmatpush.msra.mxu0 %v1449
    %1481 = vmatpush.msra.mxu0 %v1448
    %1482 = vmatpush.msra.mxu0 %v1447
    %1483 = vmatpush.msra.mxu0 %v1446
    %1484 = vmatpush.msra.mxu0 %v1445
    %1485 = vmatmul.f32.gmra.mxu0 %v1458
    %v1486 = vpop.f32.mrf.mxu0
    %v1487 = vadd.f32 %v1455, %v1486
    %1488 = vmatmul.f32.gmra.mxu0 %v1461
    %v1489 = vpop.f32.mrf.mxu0
    %v1490 = vadd.f32 %v1455, %v1489
    %1491 = vmatmul.f32.gmra.mxu0 %v1464
    %v1492 = vpop.f32.mrf.mxu0
    %v1493 = vadd.f32 %v1455, %v1492
    %1494 = vmatmul.f32.gmra.mxu0 %v1467
    %v1495 = vpop.f32.mrf.mxu0
    %v1496 = vadd.f32 %v1455, %v1495
    %1497 = vdwg.mxu0
    %v1498 = vld [vmem:[#allocation2 + $0x10] sm:$0xff]
    %v1499 = vld [vmem:[#allocation2 + $0x18] sm:$0xff]
    %v1500 = vld [vmem:[#allocation2 + $0x38] sm:$0xff]
    %v1501 = vld [vmem:[#allocation2 + $0x40] sm:$0xff]
    %v1502 = vld [vmem:[#allocation2 + $0x60] sm:$0xff]
    %v1503 = vld [vmem:[#allocation2 + $0x68] sm:$0xff]
    %v1504 = vld [vmem:[#allocation2 + $0x88] sm:$0xff]
    %v1505 = vld [vmem:[#allocation2 + $0x90] sm:$0xff]
    %v1506 = vld [vmem:[#allocation2 + $0xb0] sm:$0xff]
    %v1507 = vld [vmem:[#allocation2 + $0xb8] sm:$0xff]
    %v1508 = vld [vmem:[#allocation2 + $0xd8] sm:$0xff]
    %v1509 = vld [vmem:[#allocation2 + $0xe0] sm:$0xff]
    %v1510 = vld [vmem:[#allocation2 + $0x100] sm:$0xff]
    %v1511 = vld [vmem:[#allocation2 + $0x108] sm:$0xff]
    %v1512 = vld [vmem:[#allocation2 + $0x128] sm:$0xff]
    %v1513 = vld [vmem:[#allocation2 + $0x130] sm:$0xff]
    %v1514 = vld [vmem:[%s5 + $0x2] sm:$0x3]
    %v1516 = vperm.slane %v1514, 0
    %v1517 = vperm.slane %v1514, 1
    %1534 = vrot.lane.b32.xlu0 %v1498, 64
    %v1535 = vpop.permute.xlu0 %1534
    %1536 = vrot.lane.b32.xlu0 %v1499, 64
    %v1537 = vpop.permute.xlu0 %1536
    %1538 = vrot.lane.b32.xlu0 %v1500, 64
    %v1539 = vpop.permute.xlu0 %1538
    %1540 = vrot.lane.b32.xlu0 %v1501, 64
    %v1541 = vpop.permute.xlu0 %1540
    %1542 = vrot.lane.b32.xlu0 %v1502, 64
    %v1543 = vpop.permute.xlu0 %1542
    %1544 = vrot.lane.b32.xlu0 %v1503, 64
    %v1545 = vpop.permute.xlu0 %1544
    %1546 = vrot.lane.b32.xlu0 %v1504, 64
    %v1547 = vpop.permute.xlu0 %1546
    %1548 = vrot.lane.b32.xlu0 %v1505, 64
    %v1549 = vpop.permute.xlu0 %1548
    %1550 = vrot.lane.b32.xlu0 %v1506, 64
    %v1551 = vpop.permute.xlu0 %1550
    %1552 = vrot.lane.b32.xlu0 %v1507, 64
    %v1553 = vpop.permute.xlu0 %1552
    %1554 = vrot.lane.b32.xlu0 %v1508, 64
    %v1555 = vpop.permute.xlu0 %1554
    %1556 = vrot.lane.b32.xlu0 %v1509, 64
    %v1557 = vpop.permute.xlu0 %1556
    %1558 = vrot.lane.b32.xlu0 %v1510, 64
    %v1559 = vpop.permute.xlu0 %1558
    %1560 = vrot.lane.b32.xlu0 %v1511, 64
    %v1561 = vpop.permute.xlu0 %1560
    %1562 = vrot.lane.b32.xlu0 %v1512, 64
    %v1563 = vpop.permute.xlu0 %1562
    %1564 = vrot.lane.b32.xlu0 %v1513, 64
    %v1565 = vpop.permute.xlu0 %1564
    %v1566 = vsel %vm78, %v1535, %v1537
    %v1567 = vsel %vm78, %v1539, %v1541
    %v1568 = vsel %vm78, %v1543, %v1545
    %v1569 = vsel %vm78, %v1547, %v1549
    %v1570 = vsel %vm78, %v1551, %v1553
    %v1571 = vsel %vm78, %v1555, %v1557
    %v1572 = vsel %vm78, %v1559, %v1561
    %v1573 = vsel %vm78, %v1563, %v1565
    %1582 = vrot.lane.b32.xlu0 %v1516, 64
    %v1583 = vpop.permute.xlu0 %1582
    %1584 = vrot.lane.b32.xlu0 %v1517, 64
    %v1585 = vpop.permute.xlu0 %1584
    %v1586 = vsel %vm78, %v1583, %v1585
    %v1589 = vsel %vm78, %v44, 0
    %v1592 = vsel %vm78, %v45, 0
    %v1595 = vsel %vm78, %v46, 0
    %v1598 = vsel %vm78, %v47, 0
    %v1601 = vsel %vm78, %v48, 0
    %v1604 = vsel %vm78, %v49, 0
    %v1607 = vsel %vm78, %v50, 0
    %v1610 = vsel %vm78, %v51, 0
    %1612 = vmatpush.msra.mxu0 0.0
    %1613 = vmatpush.msra.mxu0 0.0
    %1614 = vmatpush.msra.mxu0 0.0
    %1615 = vmatpush.msra.mxu0 0.0
    %1616 = vmatpush.msra.mxu0 0.0
    %1617 = vmatpush.msra.mxu0 0.0
    %1618 = vmatpush.msra.mxu0 0.0
    %1619 = vmatpush.msra.mxu0 0.0
    %1620 = vmatpush.msra.mxu0 %v1573
    %1621 = vmatpush.msra.mxu0 %v1572
    %1622 = vmatpush.msra.mxu0 %v1571
    %1623 = vmatpush.msra.mxu0 %v1570
    %1624 = vmatpush.msra.mxu0 %v1569
    %1625 = vmatpush.msra.mxu0 %v1568
    %1626 = vmatpush.msra.mxu0 %v1567
    %1627 = vmatpush.msra.mxu0 %v1566
    %1628 = vmatmul.f32.gmra.mxu0 %v1589
    %v1629 = vpop.f32.mrf.mxu0
    %v1630 = vadd.f32 %v1586, %v1629
    %1631 = vmatmul.f32.gmra.mxu0 %v1592
    %v1632 = vpop.f32.mrf.mxu0
    %v1633 = vadd.f32 %v1586, %v1632
    %1634 = vmatmul.f32.gmra.mxu0 %v1595
    %v1635 = vpop.f32.mrf.mxu0
    %v1636 = vadd.f32 %v1586, %v1635
    %1637 = vmatmul.f32.gmra.mxu0 %v1598
    %v1638 = vpop.f32.mrf.mxu0
    %v1639 = vadd.f32 %v1586, %v1638
    %1640 = vmatmul.f32.gmra.mxu0 %v1601
    %v1641 = vpop.f32.mrf.mxu0
    %v1642 = vadd.f32 %v1586, %v1641
    %1643 = vmatmul.f32.gmra.mxu0 %v1604
    %v1644 = vpop.f32.mrf.mxu0
    %v1645 = vadd.f32 %v1586, %v1644
    %1646 = vmatmul.f32.gmra.mxu0 %v1607
    %v1647 = vpop.f32.mrf.mxu0
    %v1648 = vadd.f32 %v1586, %v1647
    %1649 = vmatmul.f32.gmra.mxu0 %v1610
    %v1650 = vpop.f32.mrf.mxu0
    %v1651 = vadd.f32 %v1586, %v1650
    %1652 = vdwg.mxu0
    %v1654 = vsel %vm152, %v1487, 0
    %v1657 = vsel %vm152, %v1630, 0
    %v1660 = vsel %vm152, %v1633, 0
    %1662 = vmatpush.xpose.msra.mxu0 0.0
    %1663 = vmatpush.xpose.msra.mxu0 0.0
    %1664 = vmatpush.xpose.msra.mxu0 0.0
    %1665 = vmatpush.xpose.msra.mxu0 0.0
    %1666 = vmatpush.xpose.msra.mxu0 0.0
    %1667 = vmatpush.xpose.msra.mxu0 0.0
    %1668 = vmatpush.xpose.msra.mxu0 0.0
    %1669 = vmatpush.xpose.msra.mxu0 0.0
    %1670 = vmatpush.xpose.msra.mxu0 0.0
    %1671 = vmatpush.xpose.msra.mxu0 0.0
    %1672 = vmatpush.xpose.msra.mxu0 0.0
    %1673 = vmatpush.xpose.msra.mxu0 0.0
    %1674 = vmatpush.xpose.msra.mxu0 0.0
    %1675 = vmatpush.xpose.msra.mxu0 0.0
    %1676 = vmatpush.xpose.msra.mxu0 %v1660
    %1677 = vmatpush.xpose.msra.mxu0 %v1657
    %1678 = vmatmul.f32.gmra.mxu0 %v1654
    %v1679 = vpop.f32.mrf.mxu0
    %v1680 = vadd.f32 0.0, %v1679
    %1681 = vdwg.mxu0
    %v1683 = vsel %vm152, %v1490, 0
    %v1686 = vsel %vm152, %v1636, 0
    %v1689 = vsel %vm152, %v1639, 0
    %1691 = vmatpush.xpose.msra.mxu0 0.0
    %1692 = vmatpush.xpose.msra.mxu0 0.0
    %1693 = vmatpush.xpose.msra.mxu0 0.0
    %1694 = vmatpush.xpose.msra.mxu0 0.0
    %1695 = vmatpush.xpose.msra.mxu0 0.0
    %1696 = vmatpush.xpose.msra.mxu0 0.0
    %1697 = vmatpush.xpose.msra.mxu0 0.0
    %1698 = vmatpush.xpose.msra.mxu0 0.0
    %1699 = vmatpush.xpose.msra.mxu0 0.0
    %1700 = vmatpush.xpose.msra.mxu0 0.0
    %1701 = vmatpush.xpose.msra.mxu0 0.0
    %1702 = vmatpush.xpose.msra.mxu0 0.0
    %1703 = vmatpush.xpose.msra.mxu0 0.0
    %1704 = vmatpush.xpose.msra.mxu0 0.0
    %1705 = vmatpush.xpose.msra.mxu0 %v1689
    %1706 = vmatpush.xpose.msra.mxu0 %v1686
    %1707 = vmatmul.f32.gmra.mxu0 %v1683
    %v1708 = vpop.f32.mrf.mxu0
    %v1709 = vadd.f32 0.0, %v1708
    %1710 = vdwg.mxu0
    %v1712 = vsel %vm152, %v1493, 0
    %v1715 = vsel %vm152, %v1642, 0
    %v1718 = vsel %vm152, %v1645, 0
    %1720 = vmatpush.xpose.msra.mxu0 0.0
    %1721 = vmatpush.xpose.msra.mxu0 0.0
    %1722 = vmatpush.xpose.msra.mxu0 0.0
    %1723 = vmatpush.xpose.msra.mxu0 0.0
    %1724 = vmatpush.xpose.msra.mxu0 0.0
    %1725 = vmatpush.xpose.msra.mxu0 0.0
    %1726 = vmatpush.xpose.msra.mxu0 0.0
    %1727 = vmatpush.xpose.msra.mxu0 0.0
    %1728 = vmatpush.xpose.msra.mxu0 0.0
    %1729 = vmatpush.xpose.msra.mxu0 0.0
    %1730 = vmatpush.xpose.msra.mxu0 0.0
    %1731 = vmatpush.xpose.msra.mxu0 0.0
    %1732 = vmatpush.xpose.msra.mxu0 0.0
    %1733 = vmatpush.xpose.msra.mxu0 0.0
    %1734 = vmatpush.xpose.msra.mxu0 %v1718
    %1735 = vmatpush.xpose.msra.mxu0 %v1715
    %1736 = vmatmul.f32.gmra.mxu0 %v1712
    %v1737 = vpop.f32.mrf.mxu0
    %v1738 = vadd.f32 0.0, %v1737
    %1739 = vdwg.mxu0
    %v1741 = vsel %vm152, %v1496, 0
    %v1744 = vsel %vm152, %v1648, 0
    %v1747 = vsel %vm152, %v1651, 0
    %1749 = vmatpush.xpose.msra.mxu0 0.0
    %1750 = vmatpush.xpose.msra.mxu0 0.0
    %1751 = vmatpush.xpose.msra.mxu0 0.0
    %1752 = vmatpush.xpose.msra.mxu0 0.0
    %1753 = vmatpush.xpose.msra.mxu0 0.0
    %1754 = vmatpush.xpose.msra.mxu0 0.0
    %1755 = vmatpush.xpose.msra.mxu0 0.0
    %1756 = vmatpush.xpose.msra.mxu0 0.0
    %1757 = vmatpush.xpose.msra.mxu0 0.0
    %1758 = vmatpush.xpose.msra.mxu0 0.0
    %1759 = vmatpush.xpose.msra.mxu0 0.0
    %1760 = vmatpush.xpose.msra.mxu0 0.0
    %1761 = vmatpush.xpose.msra.mxu0 0.0
    %1762 = vmatpush.xpose.msra.mxu0 0.0
    %1763 = vmatpush.xpose.msra.mxu0 %v1747
    %1764 = vmatpush.xpose.msra.mxu0 %v1744
    %1765 = vmatmul.f32.gmra.mxu0 %v1741
    %v1766 = vpop.f32.mrf.mxu0
    %v1767 = vadd.f32 0.0, %v1766
    %1768 = vdwg.mxu0
    %v1769 = vsel %vm152, %v1680, -inf
    %1770 = vmax.xlane.f32.xlu0 %v1769
    %v1771 = vpop.xlane.xlu0 %1770
    %v1772 = vsel %vm152, %v1709, -inf
    %1773 = vmax.xlane.f32.xlu0 %v1772
    %v1774 = vpop.xlane.xlu0 %1773
    %v1775 = vsel %vm152, %v1738, -inf
    %1776 = vmax.xlane.f32.xlu0 %v1775
    %v1777 = vpop.xlane.xlu0 %1776
    %v1778 = vsel %vm152, %v1767, -inf
    %1779 = vmax.xlane.f32.xlu0 %v1778
    %v1780 = vpop.xlane.xlu0 %1779
    %v1781 = vsub.f32 %v1680, %v1771
    %v1782 = vsub.f32 %v1709, %v1774
    %v1783 = vsub.f32 %v1738, %v1777
    %v1784 = vsub.f32 %v1767, %v1780
    %v1785 = vmul.f32 %v1781, 1.442695
    %v1786 = vpow.pop %v1785
    %v1787 = vmul.f32 %v1782, 1.442695
    %v1788 = vpow.pop %v1787
    %v1789 = vmul.f32 %v1783, 1.442695
    %v1790 = vpow.pop %v1789
    %v1791 = vmul.f32 %v1784, 1.442695
    %v1792 = vpow.pop %v1791
    %v1793 = vsel %vm152, %v1786, 0.0
    %1794 = vadd.xlane.f32.xlu0 %v1793
    %v1795 = vpop.xlane.xlu0 %1794
    %v1796 = vsel %vm152, %v1788, 0.0
    %1797 = vadd.xlane.f32.xlu0 %v1796
    %v1798 = vpop.xlane.xlu0 %1797
    %v1799 = vsel %vm152, %v1790, 0.0
    %1800 = vadd.xlane.f32.xlu0 %v1799
    %v1801 = vpop.xlane.xlu0 %1800
    %v1802 = vsel %vm152, %v1792, 0.0
    %1803 = vadd.xlane.f32.xlu0 %v1802
    %v1804 = vpop.xlane.xlu0 %1803
    %v1805 = vrcp.pop %v1795
    %v1806 = vrcp.pop %v1798
    %v1807 = vrcp.pop %v1801
    %v1808 = vrcp.pop %v1804
    %v1809 = vmul.f32 %v1786, %v1805
    %v1810 = vmul.f32 %v1788, %v1806
    %v1811 = vmul.f32 %v1790, %v1807
    %v1812 = vmul.f32 %v1792, %v1808
    %1813 = vrot.lane.b32.xlu0 %v1630, 64
    %v1814 = vpop.permute.xlu0 %1813
    %1815 = vrot.lane.b32.xlu0 %v1633, 64
    %v1816 = vpop.permute.xlu0 %1815
    %v1820 = vsel %vm152, %v1809, 0
    %1822 = vmatpush.msra.mxu0 0.0
    %1823 = vmatpush.msra.mxu0 0.0
    %1824 = vmatpush.msra.mxu0 0.0
    %1825 = vmatpush.msra.mxu0 0.0
    %1826 = vmatpush.msra.mxu0 0.0
    %1827 = vmatpush.msra.mxu0 0.0
    %1828 = vmatpush.msra.mxu0 0.0
    %1829 = vmatpush.msra.mxu0 0.0
    %1830 = vmatpush.msra.mxu0 0.0
    %1831 = vmatpush.msra.mxu0 0.0
    %1832 = vmatpush.msra.mxu0 0.0
    %1833 = vmatpush.msra.mxu0 0.0
    %1834 = vmatpush.msra.mxu0 0.0
    %1835 = vmatpush.msra.mxu0 0.0
    %1836 = vmatpush.msra.mxu0 %v1816
    %1837 = vmatpush.msra.mxu0 %v1814
    %1838 = vmatmul.f32.gmra.mxu0 %v1820
    %v1839 = vpop.f32.mrf.mxu0
    %v1840 = vadd.f32 0.0, %v1839
    %1841 = vdwg.mxu0
    %1842 = vrot.lane.b32.xlu0 %v1636, 64
    %v1843 = vpop.permute.xlu0 %1842
    %1844 = vrot.lane.b32.xlu0 %v1639, 64
    %v1845 = vpop.permute.xlu0 %1844
    %v1849 = vsel %vm152, %v1810, 0
    %1851 = vmatpush.msra.mxu0 0.0
    %1852 = vmatpush.msra.mxu0 0.0
    %1853 = vmatpush.msra.mxu0 0.0
    %1854 = vmatpush.msra.mxu0 0.0
    %1855 = vmatpush.msra.mxu0 0.0
    %1856 = vmatpush.msra.mxu0 0.0
    %1857 = vmatpush.msra.mxu0 0.0
    %1858 = vmatpush.msra.mxu0 0.0
    %1859 = vmatpush.msra.mxu0 0.0
    %1860 = vmatpush.msra.mxu0 0.0
    %1861 = vmatpush.msra.mxu0 0.0
    %1862 = vmatpush.msra.mxu0 0.0
    %1863 = vmatpush.msra.mxu0 0.0
    %1864 = vmatpush.msra.mxu0 0.0
    %1865 = vmatpush.msra.mxu0 %v1845
    %1866 = vmatpush.msra.mxu0 %v1843
    %1867 = vmatmul.f32.gmra.mxu0 %v1849
    %v1868 = vpop.f32.mrf.mxu0
    %v1869 = vadd.f32 0.0, %v1868
    %1870 = vdwg.mxu0
    %1871 = vrot.lane.b32.xlu0 %v1642, 64
    %v1872 = vpop.permute.xlu0 %1871
    %1873 = vrot.lane.b32.xlu0 %v1645, 64
    %v1874 = vpop.permute.xlu0 %1873
    %v1878 = vsel %vm152, %v1811, 0
    %1880 = vmatpush.msra.mxu0 0.0
    %1881 = vmatpush.msra.mxu0 0.0
    %1882 = vmatpush.msra.mxu0 0.0
    %1883 = vmatpush.msra.mxu0 0.0
    %1884 = vmatpush.msra.mxu0 0.0
    %1885 = vmatpush.msra.mxu0 0.0
    %1886 = vmatpush.msra.mxu0 0.0
    %1887 = vmatpush.msra.mxu0 0.0
    %1888 = vmatpush.msra.mxu0 0.0
    %1889 = vmatpush.msra.mxu0 0.0
    %1890 = vmatpush.msra.mxu0 0.0
    %1891 = vmatpush.msra.mxu0 0.0
    %1892 = vmatpush.msra.mxu0 0.0
    %1893 = vmatpush.msra.mxu0 0.0
    %1894 = vmatpush.msra.mxu0 %v1874
    %1895 = vmatpush.msra.mxu0 %v1872
    %1896 = vmatmul.f32.gmra.mxu0 %v1878
    %v1897 = vpop.f32.mrf.mxu0
    %v1898 = vadd.f32 0.0, %v1897
    %1899 = vdwg.mxu0
    %1900 = vrot.lane.b32.xlu0 %v1648, 64
    %v1901 = vpop.permute.xlu0 %1900
    %1902 = vrot.lane.b32.xlu0 %v1651, 64
    %v1903 = vpop.permute.xlu0 %1902
    %v1907 = vsel %vm152, %v1812, 0
    %1909 = vmatpush.msra.mxu0 0.0
    %1910 = vmatpush.msra.mxu0 0.0
    %1911 = vmatpush.msra.mxu0 0.0
    %1912 = vmatpush.msra.mxu0 0.0
    %1913 = vmatpush.msra.mxu0 0.0
    %1914 = vmatpush.msra.mxu0 0.0
    %1915 = vmatpush.msra.mxu0 0.0
    %1916 = vmatpush.msra.mxu0 0.0
    %1917 = vmatpush.msra.mxu0 0.0
    %1918 = vmatpush.msra.mxu0 0.0
    %1919 = vmatpush.msra.mxu0 0.0
    %1920 = vmatpush.msra.mxu0 0.0
    %1921 = vmatpush.msra.mxu0 0.0
    %1922 = vmatpush.msra.mxu0 0.0
    %1923 = vmatpush.msra.mxu0 %v1903
    %1924 = vmatpush.msra.mxu0 %v1901
    %1925 = vmatmul.f32.gmra.mxu0 %v1907
    %v1926 = vpop.f32.mrf.mxu0
    %v1927 = vadd.f32 0.0, %v1926
    %1928 = vdwg.mxu0
    %1929 = vrot.lane.b32.xlu0 %v1487, 112
    %v1930 = vpop.permute.xlu0 %1929
    %1931 = vrot.lane.b32.xlu0 %v1630, 112
    %v1932 = vpop.permute.xlu0 %1931
    %1933 = vrot.lane.b32.xlu0 %v1633, 112
    %v1934 = vpop.permute.xlu0 %1933
    %v1935 = vsel %vm152, %v1930, 0
    %v1937 = vsel %vm152, %v1932, 0
    %v1939 = vsel %vm152, %v1934, 0
    %1941 = vmatpush.xpose.msra.mxu0 0.0
    %1942 = vmatpush.xpose.msra.mxu0 0.0
    %1943 = vmatpush.xpose.msra.mxu0 0.0
    %1944 = vmatpush.xpose.msra.mxu0 0.0
    %1945 = vmatpush.xpose.msra.mxu0 0.0
    %1946 = vmatpush.xpose.msra.mxu0 0.0
    %1947 = vmatpush.xpose.msra.mxu0 0.0
    %1948 = vmatpush.xpose.msra.mxu0 0.0
    %1949 = vmatpush.xpose.msra.mxu0 0.0
    %1950 = vmatpush.xpose.msra.mxu0 0.0
    %1951 = vmatpush.xpose.msra.mxu0 0.0
    %1952 = vmatpush.xpose.msra.mxu0 0.0
    %1953 = vmatpush.xpose.msra.mxu0 0.0
    %1954 = vmatpush.xpose.msra.mxu0 0.0
    %1955 = vmatpush.xpose.msra.mxu0 %v1939
    %1956 = vmatpush.xpose.msra.mxu0 %v1937
    %1957 = vmatmul.f32.gmra.mxu0 %v1935
    %v1958 = vpop.f32.mrf.mxu0
    %v1959 = vadd.f32 0.0, %v1958
    %1960 = vdwg.mxu0
    %1961 = vrot.lane.b32.xlu0 %v1490, 112
    %v1962 = vpop.permute.xlu0 %1961
    %1963 = vrot.lane.b32.xlu0 %v1636, 112
    %v1964 = vpop.permute.xlu0 %1963
    %1965 = vrot.lane.b32.xlu0 %v1639, 112
    %v1966 = vpop.permute.xlu0 %1965
    %v1967 = vsel %vm152, %v1962, 0
    %v1969 = vsel %vm152, %v1964, 0
    %v1971 = vsel %vm152, %v1966, 0
    %1973 = vmatpush.xpose.msra.mxu0 0.0
    %1974 = vmatpush.xpose.msra.mxu0 0.0
    %1975 = vmatpush.xpose.msra.mxu0 0.0
    %1976 = vmatpush.xpose.msra.mxu0 0.0
    %1977 = vmatpush.xpose.msra.mxu0 0.0
    %1978 = vmatpush.xpose.msra.mxu0 0.0
    %1979 = vmatpush.xpose.msra.mxu0 0.0
    %1980 = vmatpush.xpose.msra.mxu0 0.0
    %1981 = vmatpush.xpose.msra.mxu0 0.0
    %1982 = vmatpush.xpose.msra.mxu0 0.0
    %1983 = vmatpush.xpose.msra.mxu0 0.0
    %1984 = vmatpush.xpose.msra.mxu0 0.0
    %1985 = vmatpush.xpose.msra.mxu0 0.0
    %1986 = vmatpush.xpose.msra.mxu0 0.0
    %1987 = vmatpush.xpose.msra.mxu0 %v1971
    %1988 = vmatpush.xpose.msra.mxu0 %v1969
    %1989 = vmatmul.f32.gmra.mxu0 %v1967
    %v1990 = vpop.f32.mrf.mxu0
    %v1991 = vadd.f32 0.0, %v1990
    %1992 = vdwg.mxu0
    %1993 = vrot.lane.b32.xlu0 %v1493, 112
    %v1994 = vpop.permute.xlu0 %1993
    %1995 = vrot.lane.b32.xlu0 %v1642, 112
    %v1996 = vpop.permute.xlu0 %1995
    %1997 = vrot.lane.b32.xlu0 %v1645, 112
    %v1998 = vpop.permute.xlu0 %1997
    %v1999 = vsel %vm152, %v1994, 0
    %v2001 = vsel %vm152, %v1996, 0
    %v2003 = vsel %vm152, %v1998, 0
    %2005 = vmatpush.xpose.msra.mxu0 0.0
    %2006 = vmatpush.xpose.msra.mxu0 0.0
    %2007 = vmatpush.xpose.msra.mxu0 0.0
    %2008 = vmatpush.xpose.msra.mxu0 0.0
    %2009 = vmatpush.xpose.msra.mxu0 0.0
    %2010 = vmatpush.xpose.msra.mxu0 0.0
    %2011 = vmatpush.xpose.msra.mxu0 0.0
    %2012 = vmatpush.xpose.msra.mxu0 0.0
    %2013 = vmatpush.xpose.msra.mxu0 0.0
    %2014 = vmatpush.xpose.msra.mxu0 0.0
    %2015 = vmatpush.xpose.msra.mxu0 0.0
    %2016 = vmatpush.xpose.msra.mxu0 0.0
    %2017 = vmatpush.xpose.msra.mxu0 0.0
    %2018 = vmatpush.xpose.msra.mxu0 0.0
    %2019 = vmatpush.xpose.msra.mxu0 %v2003
    %2020 = vmatpush.xpose.msra.mxu0 %v2001
    %2021 = vmatmul.f32.gmra.mxu0 %v1999
    %v2022 = vpop.f32.mrf.mxu0
    %v2023 = vadd.f32 0.0, %v2022
    %2024 = vdwg.mxu0
    %2025 = vrot.lane.b32.xlu0 %v1496, 112
    %v2026 = vpop.permute.xlu0 %2025
    %2027 = vrot.lane.b32.xlu0 %v1648, 112
    %v2028 = vpop.permute.xlu0 %2027
    %2029 = vrot.lane.b32.xlu0 %v1651, 112
    %v2030 = vpop.permute.xlu0 %2029
    %v2031 = vsel %vm152, %v2026, 0
    %v2033 = vsel %vm152, %v2028, 0
    %v2035 = vsel %vm152, %v2030, 0
    %2037 = vmatpush.xpose.msra.mxu0 0.0
    %2038 = vmatpush.xpose.msra.mxu0 0.0
    %2039 = vmatpush.xpose.msra.mxu0 0.0
    %2040 = vmatpush.xpose.msra.mxu0 0.0
    %2041 = vmatpush.xpose.msra.mxu0 0.0
    %2042 = vmatpush.xpose.msra.mxu0 0.0
    %2043 = vmatpush.xpose.msra.mxu0 0.0
    %2044 = vmatpush.xpose.msra.mxu0 0.0
    %2045 = vmatpush.xpose.msra.mxu0 0.0
    %2046 = vmatpush.xpose.msra.mxu0 0.0
    %2047 = vmatpush.xpose.msra.mxu0 0.0
    %2048 = vmatpush.xpose.msra.mxu0 0.0
    %2049 = vmatpush.xpose.msra.mxu0 0.0
    %2050 = vmatpush.xpose.msra.mxu0 0.0
    %2051 = vmatpush.xpose.msra.mxu0 %v2035
    %2052 = vmatpush.xpose.msra.mxu0 %v2033
    %2053 = vmatmul.f32.gmra.mxu0 %v2031
    %v2054 = vpop.f32.mrf.mxu0
    %v2055 = vadd.f32 0.0, %v2054
    %2056 = vdwg.mxu0
    %v2057 = vsel %vm152, %v1959, -inf
    %2058 = vmax.xlane.f32.xlu0 %v2057
    %v2059 = vpop.xlane.xlu0 %2058
    %v2060 = vsel %vm152, %v1991, -inf
    %2061 = vmax.xlane.f32.xlu0 %v2060
    %v2062 = vpop.xlane.xlu0 %2061
    %v2063 = vsel %vm152, %v2023, -inf
    %2064 = vmax.xlane.f32.xlu0 %v2063
    %v2065 = vpop.xlane.xlu0 %2064
    %v2066 = vsel %vm152, %v2055, -inf
    %2067 = vmax.xlane.f32.xlu0 %v2066
    %v2068 = vpop.xlane.xlu0 %2067
    %v2069 = vsub.f32 %v1959, %v2059
    %v2070 = vsub.f32 %v1991, %v2062
    %v2071 = vsub.f32 %v2023, %v2065
    %v2072 = vsub.f32 %v2055, %v2068
    %v2073 = vmul.f32 %v2069, 1.442695
    %v2074 = vpow.pop %v2073
    %v2075 = vmul.f32 %v2070, 1.442695
    %v2076 = vpow.pop %v2075
    %v2077 = vmul.f32 %v2071, 1.442695
    %v2078 = vpow.pop %v2077
    %v2079 = vmul.f32 %v2072, 1.442695
    %v2080 = vpow.pop %v2079
    %v2081 = vsel %vm152, %v2074, 0.0
    %2082 = vadd.xlane.f32.xlu0 %v2081
    %v2083 = vpop.xlane.xlu0 %2082
    %v2084 = vsel %vm152, %v2076, 0.0
    %2085 = vadd.xlane.f32.xlu0 %v2084
    %v2086 = vpop.xlane.xlu0 %2085
    %v2087 = vsel %vm152, %v2078, 0.0
    %2088 = vadd.xlane.f32.xlu0 %v2087
    %v2089 = vpop.xlane.xlu0 %2088
    %v2090 = vsel %vm152, %v2080, 0.0
    %2091 = vadd.xlane.f32.xlu0 %v2090
    %v2092 = vpop.xlane.xlu0 %2091
    %v2093 = vrcp.pop %v2083
    %v2094 = vrcp.pop %v2086
    %v2095 = vrcp.pop %v2089
    %v2096 = vrcp.pop %v2092
    %v2097 = vmul.f32 %v2074, %v2093
    %v2098 = vmul.f32 %v2076, %v2094
    %v2099 = vmul.f32 %v2078, %v2095
    %v2100 = vmul.f32 %v2080, %v2096
    %2101 = vrot.lane.b32.xlu0 %v1630, 48
    %v2102 = vpop.permute.xlu0 %2101
    %2103 = vrot.lane.b32.xlu0 %v1633, 48
    %v2104 = vpop.permute.xlu0 %2103
    %v2108 = vsel %vm152, %v2097, 0
    %2110 = vmatpush.msra.mxu0 0.0
    %2111 = vmatpush.msra.mxu0 0.0
    %2112 = vmatpush.msra.mxu0 0.0
    %2113 = vmatpush.msra.mxu0 0.0
    %2114 = vmatpush.msra.mxu0 0.0
    %2115 = vmatpush.msra.mxu0 0.0
    %2116 = vmatpush.msra.mxu0 0.0
    %2117 = vmatpush.msra.mxu0 0.0
    %2118 = vmatpush.msra.mxu0 0.0
    %2119 = vmatpush.msra.mxu0 0.0
    %2120 = vmatpush.msra.mxu0 0.0
    %2121 = vmatpush.msra.mxu0 0.0
    %2122 = vmatpush.msra.mxu0 0.0
    %2123 = vmatpush.msra.mxu0 0.0
    %2124 = vmatpush.msra.mxu0 %v2104
    %2125 = vmatpush.msra.mxu0 %v2102
    %2126 = vmatmul.f32.gmra.mxu0 %v2108
    %v2127 = vpop.f32.mrf.mxu0
    %v2128 = vadd.f32 0.0, %v2127
    %2129 = vdwg.mxu0
    %2130 = vrot.lane.b32.xlu0 %v1636, 48
    %v2131 = vpop.permute.xlu0 %2130
    %2132 = vrot.lane.b32.xlu0 %v1639, 48
    %v2133 = vpop.permute.xlu0 %2132
    %v2137 = vsel %vm152, %v2098, 0
    %2139 = vmatpush.msra.mxu0 0.0
    %2140 = vmatpush.msra.mxu0 0.0
    %2141 = vmatpush.msra.mxu0 0.0
    %2142 = vmatpush.msra.mxu0 0.0
    %2143 = vmatpush.msra.mxu0 0.0
    %2144 = vmatpush.msra.mxu0 0.0
    %2145 = vmatpush.msra.mxu0 0.0
    %2146 = vmatpush.msra.mxu0 0.0
    %2147 = vmatpush.msra.mxu0 0.0
    %2148 = vmatpush.msra.mxu0 0.0
    %2149 = vmatpush.msra.mxu0 0.0
    %2150 = vmatpush.msra.mxu0 0.0
    %2151 = vmatpush.msra.mxu0 0.0
    %2152 = vmatpush.msra.mxu0 0.0
    %2153 = vmatpush.msra.mxu0 %v2133
    %2154 = vmatpush.msra.mxu0 %v2131
    %2155 = vmatmul.f32.gmra.mxu0 %v2137
    %v2156 = vpop.f32.mrf.mxu0
    %v2157 = vadd.f32 0.0, %v2156
    %2158 = vdwg.mxu0
    %2159 = vrot.lane.b32.xlu0 %v1642, 48
    %v2160 = vpop.permute.xlu0 %2159
    %2161 = vrot.lane.b32.xlu0 %v1645, 48
    %v2162 = vpop.permute.xlu0 %2161
    %v2166 = vsel %vm152, %v2099, 0
    %2168 = vmatpush.msra.mxu0 0.0
    %2169 = vmatpush.msra.mxu0 0.0
    %2170 = vmatpush.msra.mxu0 0.0
    %2171 = vmatpush.msra.mxu0 0.0
    %2172 = vmatpush.msra.mxu0 0.0
    %2173 = vmatpush.msra.mxu0 0.0
    %2174 = vmatpush.msra.mxu0 0.0
    %2175 = vmatpush.msra.mxu0 0.0
    %2176 = vmatpush.msra.mxu0 0.0
    %2177 = vmatpush.msra.mxu0 0.0
    %2178 = vmatpush.msra.mxu0 0.0
    %2179 = vmatpush.msra.mxu0 0.0
    %2180 = vmatpush.msra.mxu0 0.0
    %2181 = vmatpush.msra.mxu0 0.0
    %2182 = vmatpush.msra.mxu0 %v2162
    %2183 = vmatpush.msra.mxu0 %v2160
    %2184 = vmatmul.f32.gmra.mxu0 %v2166
    %v2185 = vpop.f32.mrf.mxu0
    %v2186 = vadd.f32 0.0, %v2185
    %2187 = vdwg.mxu0
    %2188 = vrot.lane.b32.xlu0 %v1648, 48
    %v2189 = vpop.permute.xlu0 %2188
    %2190 = vrot.lane.b32.xlu0 %v1651, 48
    %v2191 = vpop.permute.xlu0 %2190
    %v2195 = vsel %vm152, %v2100, 0
    %2197 = vmatpush.msra.mxu0 0.0
    %2198 = vmatpush.msra.mxu0 0.0
    %2199 = vmatpush.msra.mxu0 0.0
    %2200 = vmatpush.msra.mxu0 0.0
    %2201 = vmatpush.msra.mxu0 0.0
    %2202 = vmatpush.msra.mxu0 0.0
    %2203 = vmatpush.msra.mxu0 0.0
    %2204 = vmatpush.msra.mxu0 0.0
    %2205 = vmatpush.msra.mxu0 0.0
    %2206 = vmatpush.msra.mxu0 0.0
    %2207 = vmatpush.msra.mxu0 0.0
    %2208 = vmatpush.msra.mxu0 0.0
    %2209 = vmatpush.msra.mxu0 0.0
    %2210 = vmatpush.msra.mxu0 0.0
    %2211 = vmatpush.msra.mxu0 %v2191
    %2212 = vmatpush.msra.mxu0 %v2189
    %2213 = vmatmul.f32.gmra.mxu0 %v2195
    %v2214 = vpop.f32.mrf.mxu0
    %v2215 = vadd.f32 0.0, %v2214
    %2216 = vdwg.mxu0
    %2217 = vrot.lane.b32.xlu0 %v1487, 96
    %v2218 = vpop.permute.xlu0 %2217
    %2219 = vrot.lane.b32.xlu0 %v1630, 96
    %v2220 = vpop.permute.xlu0 %2219
    %2221 = vrot.lane.b32.xlu0 %v1633, 96
    %v2222 = vpop.permute.xlu0 %2221
    %v2223 = vsel %vm152, %v2218, 0
    %v2225 = vsel %vm152, %v2220, 0
    %v2227 = vsel %vm152, %v2222, 0
    %2229 = vmatpush.xpose.msra.mxu0 0.0
    %2230 = vmatpush.xpose.msra.mxu0 0.0
    %2231 = vmatpush.xpose.msra.mxu0 0.0
    %2232 = vmatpush.xpose.msra.mxu0 0.0
    %2233 = vmatpush.xpose.msra.mxu0 0.0
    %2234 = vmatpush.xpose.msra.mxu0 0.0
    %2235 = vmatpush.xpose.msra.mxu0 0.0
    %2236 = vmatpush.xpose.msra.mxu0 0.0
    %2237 = vmatpush.xpose.msra.mxu0 0.0
    %2238 = vmatpush.xpose.msra.mxu0 0.0
    %2239 = vmatpush.xpose.msra.mxu0 0.0
    %2240 = vmatpush.xpose.msra.mxu0 0.0
    %2241 = vmatpush.xpose.msra.mxu0 0.0
    %2242 = vmatpush.xpose.msra.mxu0 0.0
    %2243 = vmatpush.xpose.msra.mxu0 %v2227
    %2244 = vmatpush.xpose.msra.mxu0 %v2225
    %2245 = vmatmul.f32.gmra.mxu0 %v2223
    %v2246 = vpop.f32.mrf.mxu0
    %v2247 = vadd.f32 0.0, %v2246
    %2248 = vdwg.mxu0
    %2249 = vrot.lane.b32.xlu0 %v1490, 96
    %v2250 = vpop.permute.xlu0 %2249
    %2251 = vrot.lane.b32.xlu0 %v1636, 96
    %v2252 = vpop.permute.xlu0 %2251
    %2253 = vrot.lane.b32.xlu0 %v1639, 96
    %v2254 = vpop.permute.xlu0 %2253
    %v2255 = vsel %vm152, %v2250, 0
    %v2257 = vsel %vm152, %v2252, 0
    %v2259 = vsel %vm152, %v2254, 0
    %2261 = vmatpush.xpose.msra.mxu0 0.0
    %2262 = vmatpush.xpose.msra.mxu0 0.0
    %2263 = vmatpush.xpose.msra.mxu0 0.0
    %2264 = vmatpush.xpose.msra.mxu0 0.0
    %2265 = vmatpush.xpose.msra.mxu0 0.0
    %2266 = vmatpush.xpose.msra.mxu0 0.0
    %2267 = vmatpush.xpose.msra.mxu0 0.0
    %2268 = vmatpush.xpose.msra.mxu0 0.0
    %2269 = vmatpush.xpose.msra.mxu0 0.0
    %2270 = vmatpush.xpose.msra.mxu0 0.0
    %2271 = vmatpush.xpose.msra.mxu0 0.0
    %2272 = vmatpush.xpose.msra.mxu0 0.0
    %2273 = vmatpush.xpose.msra.mxu0 0.0
    %2274 = vmatpush.xpose.msra.mxu0 0.0
    %2275 = vmatpush.xpose.msra.mxu0 %v2259
    %2276 = vmatpush.xpose.msra.mxu0 %v2257
    %2277 = vmatmul.f32.gmra.mxu0 %v2255
    %v2278 = vpop.f32.mrf.mxu0
    %v2279 = vadd.f32 0.0, %v2278
    %2280 = vdwg.mxu0
    %2281 = vrot.lane.b32.xlu0 %v1493, 96
    %v2282 = vpop.permute.xlu0 %2281
    %2283 = vrot.lane.b32.xlu0 %v1642, 96
    %v2284 = vpop.permute.xlu0 %2283
    %2285 = vrot.lane.b32.xlu0 %v1645, 96
    %v2286 = vpop.permute.xlu0 %2285
    %v2287 = vsel %vm152, %v2282, 0
    %v2289 = vsel %vm152, %v2284, 0
    %v2291 = vsel %vm152, %v2286, 0
    %2293 = vmatpush.xpose.msra.mxu0 0.0
    %2294 = vmatpush.xpose.msra.mxu0 0.0
    %2295 = vmatpush.xpose.msra.mxu0 0.0
    %2296 = vmatpush.xpose.msra.mxu0 0.0
    %2297 = vmatpush.xpose.msra.mxu0 0.0
    %2298 = vmatpush.xpose.msra.mxu0 0.0
    %2299 = vmatpush.xpose.msra.mxu0 0.0
    %2300 = vmatpush.xpose.msra.mxu0 0.0
    %2301 = vmatpush.xpose.msra.mxu0 0.0
    %2302 = vmatpush.xpose.msra.mxu0 0.0
    %2303 = vmatpush.xpose.msra.mxu0 0.0
    %2304 = vmatpush.xpose.msra.mxu0 0.0
    %2305 = vmatpush.xpose.msra.mxu0 0.0
    %2306 = vmatpush.xpose.msra.mxu0 0.0
    %2307 = vmatpush.xpose.msra.mxu0 %v2291
    %2308 = vmatpush.xpose.msra.mxu0 %v2289
    %2309 = vmatmul.f32.gmra.mxu0 %v2287
    %v2310 = vpop.f32.mrf.mxu0
    %v2311 = vadd.f32 0.0, %v2310
    %2312 = vdwg.mxu0
    %2313 = vrot.lane.b32.xlu0 %v1496, 96
    %v2314 = vpop.permute.xlu0 %2313
    %2315 = vrot.lane.b32.xlu0 %v1648, 96
    %v2316 = vpop.permute.xlu0 %2315
    %2317 = vrot.lane.b32.xlu0 %v1651, 96
    %v2318 = vpop.permute.xlu0 %2317
    %v2319 = vsel %vm152, %v2314, 0
    %v2321 = vsel %vm152, %v2316, 0
    %v2323 = vsel %vm152, %v2318, 0
    %2325 = vmatpush.xpose.msra.mxu0 0.0
    %2326 = vmatpush.xpose.msra.mxu0 0.0
    %2327 = vmatpush.xpose.msra.mxu0 0.0
    %2328 = vmatpush.xpose.msra.mxu0 0.0
    %2329 = vmatpush.xpose.msra.mxu0 0.0
    %2330 = vmatpush.xpose.msra.mxu0 0.0
    %2331 = vmatpush.xpose.msra.mxu0 0.0
    %2332 = vmatpush.xpose.msra.mxu0 0.0
    %2333 = vmatpush.xpose.msra.mxu0 0.0
    %2334 = vmatpush.xpose.msra.mxu0 0.0
    %2335 = vmatpush.xpose.msra.mxu0 0.0
    %2336 = vmatpush.xpose.msra.mxu0 0.0
    %2337 = vmatpush.xpose.msra.mxu0 0.0
    %2338 = vmatpush.xpose.msra.mxu0 0.0
    %2339 = vmatpush.xpose.msra.mxu0 %v2323
    %2340 = vmatpush.xpose.msra.mxu0 %v2321
    %2341 = vmatmul.f32.gmra.mxu0 %v2319
    %v2342 = vpop.f32.mrf.mxu0
    %v2343 = vadd.f32 0.0, %v2342
    %2344 = vdwg.mxu0
    %v2345 = vsel %vm152, %v2247, -inf
    %2346 = vmax.xlane.f32.xlu0 %v2345
    %v2347 = vpop.xlane.xlu0 %2346
    %v2348 = vsel %vm152, %v2279, -inf
    %2349 = vmax.xlane.f32.xlu0 %v2348
    %v2350 = vpop.xlane.xlu0 %2349
    %v2351 = vsel %vm152, %v2311, -inf
    %2352 = vmax.xlane.f32.xlu0 %v2351
    %v2353 = vpop.xlane.xlu0 %2352
    %v2354 = vsel %vm152, %v2343, -inf
    %2355 = vmax.xlane.f32.xlu0 %v2354
    %v2356 = vpop.xlane.xlu0 %2355
    %v2357 = vsub.f32 %v2247, %v2347
    %v2358 = vsub.f32 %v2279, %v2350
    %v2359 = vsub.f32 %v2311, %v2353
    %v2360 = vsub.f32 %v2343, %v2356
    %v2361 = vmul.f32 %v2357, 1.442695
    %v2362 = vpow.pop %v2361
    %v2363 = vmul.f32 %v2358, 1.442695
    %v2364 = vpow.pop %v2363
    %v2365 = vmul.f32 %v2359, 1.442695
    %v2366 = vpow.pop %v2365
    %v2367 = vmul.f32 %v2360, 1.442695
    %v2368 = vpow.pop %v2367
    %v2369 = vsel %vm152, %v2362, 0.0
    %2370 = vadd.xlane.f32.xlu0 %v2369
    %v2371 = vpop.xlane.xlu0 %2370
    %v2372 = vsel %vm152, %v2364, 0.0
    %2373 = vadd.xlane.f32.xlu0 %v2372
    %v2374 = vpop.xlane.xlu0 %2373
    %v2375 = vsel %vm152, %v2366, 0.0
    %2376 = vadd.xlane.f32.xlu0 %v2375
    %v2377 = vpop.xlane.xlu0 %2376
    %v2378 = vsel %vm152, %v2368, 0.0
    %2379 = vadd.xlane.f32.xlu0 %v2378
    %v2380 = vpop.xlane.xlu0 %2379
    %v2381 = vrcp.pop %v2371
    %v2382 = vrcp.pop %v2374
    %v2383 = vrcp.pop %v2377
    %v2384 = vrcp.pop %v2380
    %v2385 = vmul.f32 %v2362, %v2381
    %v2386 = vmul.f32 %v2364, %v2382
    %v2387 = vmul.f32 %v2366, %v2383
    %v2388 = vmul.f32 %v2368, %v2384
    %2389 = vrot.lane.b32.xlu0 %v1630, 32
    %v2390 = vpop.permute.xlu0 %2389
    %2391 = vrot.lane.b32.xlu0 %v1633, 32
    %v2392 = vpop.permute.xlu0 %2391
    %v2396 = vsel %vm152, %v2385, 0
    %2398 = vmatpush.msra.mxu0 0.0
    %2399 = vmatpush.msra.mxu0 0.0
    %2400 = vmatpush.msra.mxu0 0.0
    %2401 = vmatpush.msra.mxu0 0.0
    %2402 = vmatpush.msra.mxu0 0.0
    %2403 = vmatpush.msra.mxu0 0.0
    %2404 = vmatpush.msra.mxu0 0.0
    %2405 = vmatpush.msra.mxu0 0.0
    %2406 = vmatpush.msra.mxu0 0.0
    %2407 = vmatpush.msra.mxu0 0.0
    %2408 = vmatpush.msra.mxu0 0.0
    %2409 = vmatpush.msra.mxu0 0.0
    %2410 = vmatpush.msra.mxu0 0.0
    %2411 = vmatpush.msra.mxu0 0.0
    %2412 = vmatpush.msra.mxu0 %v2392
    %2413 = vmatpush.msra.mxu0 %v2390
    %2414 = vmatmul.f32.gmra.mxu0 %v2396
    %v2415 = vpop.f32.mrf.mxu0
    %v2416 = vadd.f32 0.0, %v2415
    %2417 = vdwg.mxu0
    %2418 = vrot.lane.b32.xlu0 %v1636, 32
    %v2419 = vpop.permute.xlu0 %2418
    %2420 = vrot.lane.b32.xlu0 %v1639, 32
    %v2421 = vpop.permute.xlu0 %2420
    %v2425 = vsel %vm152, %v2386, 0
    %2427 = vmatpush.msra.mxu0 0.0
    %2428 = vmatpush.msra.mxu0 0.0
    %2429 = vmatpush.msra.mxu0 0.0
    %2430 = vmatpush.msra.mxu0 0.0
    %2431 = vmatpush.msra.mxu0 0.0
    %2432 = vmatpush.msra.mxu0 0.0
    %2433 = vmatpush.msra.mxu0 0.0
    %2434 = vmatpush.msra.mxu0 0.0
    %2435 = vmatpush.msra.mxu0 0.0
    %2436 = vmatpush.msra.mxu0 0.0
    %2437 = vmatpush.msra.mxu0 0.0
    %2438 = vmatpush.msra.mxu0 0.0
    %2439 = vmatpush.msra.mxu0 0.0
    %2440 = vmatpush.msra.mxu0 0.0
    %2441 = vmatpush.msra.mxu0 %v2421
    %2442 = vmatpush.msra.mxu0 %v2419
    %2443 = vmatmul.f32.gmra.mxu0 %v2425
    %v2444 = vpop.f32.mrf.mxu0
    %v2445 = vadd.f32 0.0, %v2444
    %2446 = vdwg.mxu0
    %2447 = vrot.lane.b32.xlu0 %v1642, 32
    %v2448 = vpop.permute.xlu0 %2447
    %2449 = vrot.lane.b32.xlu0 %v1645, 32
    %v2450 = vpop.permute.xlu0 %2449
    %v2454 = vsel %vm152, %v2387, 0
    %2456 = vmatpush.msra.mxu0 0.0
    %2457 = vmatpush.msra.mxu0 0.0
    %2458 = vmatpush.msra.mxu0 0.0
    %2459 = vmatpush.msra.mxu0 0.0
    %2460 = vmatpush.msra.mxu0 0.0
    %2461 = vmatpush.msra.mxu0 0.0
    %2462 = vmatpush.msra.mxu0 0.0
    %2463 = vmatpush.msra.mxu0 0.0
    %2464 = vmatpush.msra.mxu0 0.0
    %2465 = vmatpush.msra.mxu0 0.0
    %2466 = vmatpush.msra.mxu0 0.0
    %2467 = vmatpush.msra.mxu0 0.0
    %2468 = vmatpush.msra.mxu0 0.0
    %2469 = vmatpush.msra.mxu0 0.0
    %2470 = vmatpush.msra.mxu0 %v2450
    %2471 = vmatpush.msra.mxu0 %v2448
    %2472 = vmatmul.f32.gmra.mxu0 %v2454
    %v2473 = vpop.f32.mrf.mxu0
    %v2474 = vadd.f32 0.0, %v2473
    %2475 = vdwg.mxu0
    %2476 = vrot.lane.b32.xlu0 %v1648, 32
    %v2477 = vpop.permute.xlu0 %2476
    %2478 = vrot.lane.b32.xlu0 %v1651, 32
    %v2479 = vpop.permute.xlu0 %2478
    %v2483 = vsel %vm152, %v2388, 0
    %2485 = vmatpush.msra.mxu0 0.0
    %2486 = vmatpush.msra.mxu0 0.0
    %2487 = vmatpush.msra.mxu0 0.0
    %2488 = vmatpush.msra.mxu0 0.0
    %2489 = vmatpush.msra.mxu0 0.0
    %2490 = vmatpush.msra.mxu0 0.0
    %2491 = vmatpush.msra.mxu0 0.0
    %2492 = vmatpush.msra.mxu0 0.0
    %2493 = vmatpush.msra.mxu0 0.0
    %2494 = vmatpush.msra.mxu0 0.0
    %2495 = vmatpush.msra.mxu0 0.0
    %2496 = vmatpush.msra.mxu0 0.0
    %2497 = vmatpush.msra.mxu0 0.0
    %2498 = vmatpush.msra.mxu0 0.0
    %2499 = vmatpush.msra.mxu0 %v2479
    %2500 = vmatpush.msra.mxu0 %v2477
    %2501 = vmatmul.f32.gmra.mxu0 %v2483
    %v2502 = vpop.f32.mrf.mxu0
    %v2503 = vadd.f32 0.0, %v2502
    %2504 = vdwg.mxu0
    %2505 = vrot.lane.b32.xlu0 %v1487, 80
    %v2506 = vpop.permute.xlu0 %2505
    %2507 = vrot.lane.b32.xlu0 %v1630, 80
    %v2508 = vpop.permute.xlu0 %2507
    %2509 = vrot.lane.b32.xlu0 %v1633, 80
    %v2510 = vpop.permute.xlu0 %2509
    %v2511 = vsel %vm152, %v2506, 0
    %v2513 = vsel %vm152, %v2508, 0
    %v2515 = vsel %vm152, %v2510, 0
    %2517 = vmatpush.xpose.msra.mxu0 0.0
    %2518 = vmatpush.xpose.msra.mxu0 0.0
    %2519 = vmatpush.xpose.msra.mxu0 0.0
    %2520 = vmatpush.xpose.msra.mxu0 0.0
    %2521 = vmatpush.xpose.msra.mxu0 0.0
    %2522 = vmatpush.xpose.msra.mxu0 0.0
    %2523 = vmatpush.xpose.msra.mxu0 0.0
    %2524 = vmatpush.xpose.msra.mxu0 0.0
    %2525 = vmatpush.xpose.msra.mxu0 0.0
    %2526 = vmatpush.xpose.msra.mxu0 0.0
    %2527 = vmatpush.xpose.msra.mxu0 0.0
    %2528 = vmatpush.xpose.msra.mxu0 0.0
    %2529 = vmatpush.xpose.msra.mxu0 0.0
    %2530 = vmatpush.xpose.msra.mxu0 0.0
    %2531 = vmatpush.xpose.msra.mxu0 %v2515
    %2532 = vmatpush.xpose.msra.mxu0 %v2513
    %2533 = vmatmul.f32.gmra.mxu0 %v2511
    %v2534 = vpop.f32.mrf.mxu0
    %v2535 = vadd.f32 0.0, %v2534
    %2536 = vdwg.mxu0
    %2537 = vrot.lane.b32.xlu0 %v1490, 80
    %v2538 = vpop.permute.xlu0 %2537
    %2539 = vrot.lane.b32.xlu0 %v1636, 80
    %v2540 = vpop.permute.xlu0 %2539
    %2541 = vrot.lane.b32.xlu0 %v1639, 80
    %v2542 = vpop.permute.xlu0 %2541
    %v2543 = vsel %vm152, %v2538, 0
    %v2545 = vsel %vm152, %v2540, 0
    %v2547 = vsel %vm152, %v2542, 0
    %2549 = vmatpush.xpose.msra.mxu0 0.0
    %2550 = vmatpush.xpose.msra.mxu0 0.0
    %2551 = vmatpush.xpose.msra.mxu0 0.0
    %2552 = vmatpush.xpose.msra.mxu0 0.0
    %2553 = vmatpush.xpose.msra.mxu0 0.0
    %2554 = vmatpush.xpose.msra.mxu0 0.0
    %2555 = vmatpush.xpose.msra.mxu0 0.0
    %2556 = vmatpush.xpose.msra.mxu0 0.0
    %2557 = vmatpush.xpose.msra.mxu0 0.0
    %2558 = vmatpush.xpose.msra.mxu0 0.0
    %2559 = vmatpush.xpose.msra.mxu0 0.0
    %2560 = vmatpush.xpose.msra.mxu0 0.0
    %2561 = vmatpush.xpose.msra.mxu0 0.0
    %2562 = vmatpush.xpose.msra.mxu0 0.0
    %2563 = vmatpush.xpose.msra.mxu0 %v2547
    %2564 = vmatpush.xpose.msra.mxu0 %v2545
    %2565 = vmatmul.f32.gmra.mxu0 %v2543
    %v2566 = vpop.f32.mrf.mxu0
    %v2567 = vadd.f32 0.0, %v2566
    %2568 = vdwg.mxu0
    %2569 = vrot.lane.b32.xlu0 %v1493, 80
    %v2570 = vpop.permute.xlu0 %2569
    %2571 = vrot.lane.b32.xlu0 %v1642, 80
    %v2572 = vpop.permute.xlu0 %2571
    %2573 = vrot.lane.b32.xlu0 %v1645, 80
    %v2574 = vpop.permute.xlu0 %2573
    %v2575 = vsel %vm152, %v2570, 0
    %v2577 = vsel %vm152, %v2572, 0
    %v2579 = vsel %vm152, %v2574, 0
    %2581 = vmatpush.xpose.msra.mxu0 0.0
    %2582 = vmatpush.xpose.msra.mxu0 0.0
    %2583 = vmatpush.xpose.msra.mxu0 0.0
    %2584 = vmatpush.xpose.msra.mxu0 0.0
    %2585 = vmatpush.xpose.msra.mxu0 0.0
    %2586 = vmatpush.xpose.msra.mxu0 0.0
    %2587 = vmatpush.xpose.msra.mxu0 0.0
    %2588 = vmatpush.xpose.msra.mxu0 0.0
    %2589 = vmatpush.xpose.msra.mxu0 0.0
    %2590 = vmatpush.xpose.msra.mxu0 0.0
    %2591 = vmatpush.xpose.msra.mxu0 0.0
    %2592 = vmatpush.xpose.msra.mxu0 0.0
    %2593 = vmatpush.xpose.msra.mxu0 0.0
    %2594 = vmatpush.xpose.msra.mxu0 0.0
    %2595 = vmatpush.xpose.msra.mxu0 %v2579
    %2596 = vmatpush.xpose.msra.mxu0 %v2577
    %2597 = vmatmul.f32.gmra.mxu0 %v2575
    %v2598 = vpop.f32.mrf.mxu0
    %v2599 = vadd.f32 0.0, %v2598
    %2600 = vdwg.mxu0
    %2601 = vrot.lane.b32.xlu0 %v1496, 80
    %v2602 = vpop.permute.xlu0 %2601
    %2603 = vrot.lane.b32.xlu0 %v1648, 80
    %v2604 = vpop.permute.xlu0 %2603
    %2605 = vrot.lane.b32.xlu0 %v1651, 80
    %v2606 = vpop.permute.xlu0 %2605
    %v2607 = vsel %vm152, %v2602, 0
    %v2609 = vsel %vm152, %v2604, 0
    %v2611 = vsel %vm152, %v2606, 0
    %2613 = vmatpush.xpose.msra.mxu0 0.0
    %2614 = vmatpush.xpose.msra.mxu0 0.0
    %2615 = vmatpush.xpose.msra.mxu0 0.0
    %2616 = vmatpush.xpose.msra.mxu0 0.0
    %2617 = vmatpush.xpose.msra.mxu0 0.0
    %2618 = vmatpush.xpose.msra.mxu0 0.0
    %2619 = vmatpush.xpose.msra.mxu0 0.0
    %2620 = vmatpush.xpose.msra.mxu0 0.0
    %2621 = vmatpush.xpose.msra.mxu0 0.0
    %2622 = vmatpush.xpose.msra.mxu0 0.0
    %2623 = vmatpush.xpose.msra.mxu0 0.0
    %2624 = vmatpush.xpose.msra.mxu0 0.0
    %2625 = vmatpush.xpose.msra.mxu0 0.0
    %2626 = vmatpush.xpose.msra.mxu0 0.0
    %2627 = vmatpush.xpose.msra.mxu0 %v2611
    %2628 = vmatpush.xpose.msra.mxu0 %v2609
    %2629 = vmatmul.f32.gmra.mxu0 %v2607
    %v2630 = vpop.f32.mrf.mxu0
    %v2631 = vadd.f32 0.0, %v2630
    %2632 = vdwg.mxu0
    %v2633 = vsel %vm152, %v2535, -inf
    %2634 = vmax.xlane.f32.xlu0 %v2633
    %v2635 = vpop.xlane.xlu0 %2634
    %v2636 = vsel %vm152, %v2567, -inf
    %2637 = vmax.xlane.f32.xlu0 %v2636
    %v2638 = vpop.xlane.xlu0 %2637
    %v2639 = vsel %vm152, %v2599, -inf
    %2640 = vmax.xlane.f32.xlu0 %v2639
    %v2641 = vpop.xlane.xlu0 %2640
    %v2642 = vsel %vm152, %v2631, -inf
    %2643 = vmax.xlane.f32.xlu0 %v2642
    %v2644 = vpop.xlane.xlu0 %2643
    %v2645 = vsub.f32 %v2535, %v2635
    %v2646 = vsub.f32 %v2567, %v2638
    %v2647 = vsub.f32 %v2599, %v2641
    %v2648 = vsub.f32 %v2631, %v2644
    %v2649 = vmul.f32 %v2645, 1.442695
    %v2650 = vpow.pop %v2649
    %v2651 = vmul.f32 %v2646, 1.442695
    %v2652 = vpow.pop %v2651
    %v2653 = vmul.f32 %v2647, 1.442695
    %v2654 = vpow.pop %v2653
    %v2655 = vmul.f32 %v2648, 1.442695
    %v2656 = vpow.pop %v2655
    %v2657 = vsel %vm152, %v2650, 0.0
    %2658 = vadd.xlane.f32.xlu0 %v2657
    %v2659 = vpop.xlane.xlu0 %2658
    %v2660 = vsel %vm152, %v2652, 0.0
    %2661 = vadd.xlane.f32.xlu0 %v2660
    %v2662 = vpop.xlane.xlu0 %2661
    %v2663 = vsel %vm152, %v2654, 0.0
    %2664 = vadd.xlane.f32.xlu0 %v2663
    %v2665 = vpop.xlane.xlu0 %2664
    %v2666 = vsel %vm152, %v2656, 0.0
    %2667 = vadd.xlane.f32.xlu0 %v2666
    %v2668 = vpop.xlane.xlu0 %2667
    %v2669 = vrcp.pop %v2659
    %v2670 = vrcp.pop %v2662
    %v2671 = vrcp.pop %v2665
    %v2672 = vrcp.pop %v2668
    %v2673 = vmul.f32 %v2650, %v2669
    %v2674 = vmul.f32 %v2652, %v2670
    %v2675 = vmul.f32 %v2654, %v2671
    %v2676 = vmul.f32 %v2656, %v2672
    %2677 = vrot.lane.b32.xlu0 %v1630, 16
    %v2678 = vpop.permute.xlu0 %2677
    %2679 = vrot.lane.b32.xlu0 %v1633, 16
    %v2680 = vpop.permute.xlu0 %2679
    %v2684 = vsel %vm152, %v2673, 0
    %2686 = vmatpush.msra.mxu0 0.0
    %2687 = vmatpush.msra.mxu0 0.0
    %2688 = vmatpush.msra.mxu0 0.0
    %2689 = vmatpush.msra.mxu0 0.0
    %2690 = vmatpush.msra.mxu0 0.0
    %2691 = vmatpush.msra.mxu0 0.0
    %2692 = vmatpush.msra.mxu0 0.0
    %2693 = vmatpush.msra.mxu0 0.0
    %2694 = vmatpush.msra.mxu0 0.0
    %2695 = vmatpush.msra.mxu0 0.0
    %2696 = vmatpush.msra.mxu0 0.0
    %2697 = vmatpush.msra.mxu0 0.0
    %2698 = vmatpush.msra.mxu0 0.0
    %2699 = vmatpush.msra.mxu0 0.0
    %2700 = vmatpush.msra.mxu0 %v2680
    %2701 = vmatpush.msra.mxu0 %v2678
    %2702 = vmatmul.f32.gmra.mxu0 %v2684
    %v2703 = vpop.f32.mrf.mxu0
    %v2704 = vadd.f32 0.0, %v2703
    %2705 = vdwg.mxu0
    %2706 = vrot.lane.b32.xlu0 %v1636, 16
    %v2707 = vpop.permute.xlu0 %2706
    %2708 = vrot.lane.b32.xlu0 %v1639, 16
    %v2709 = vpop.permute.xlu0 %2708
    %v2713 = vsel %vm152, %v2674, 0
    %2715 = vmatpush.msra.mxu0 0.0
    %2716 = vmatpush.msra.mxu0 0.0
    %2717 = vmatpush.msra.mxu0 0.0
    %2718 = vmatpush.msra.mxu0 0.0
    %2719 = vmatpush.msra.mxu0 0.0
    %2720 = vmatpush.msra.mxu0 0.0
    %2721 = vmatpush.msra.mxu0 0.0
    %2722 = vmatpush.msra.mxu0 0.0
    %2723 = vmatpush.msra.mxu0 0.0
    %2724 = vmatpush.msra.mxu0 0.0
    %2725 = vmatpush.msra.mxu0 0.0
    %2726 = vmatpush.msra.mxu0 0.0
    %2727 = vmatpush.msra.mxu0 0.0
    %2728 = vmatpush.msra.mxu0 0.0
    %2729 = vmatpush.msra.mxu0 %v2709
    %2730 = vmatpush.msra.mxu0 %v2707
    %2731 = vmatmul.f32.gmra.mxu0 %v2713
    %v2732 = vpop.f32.mrf.mxu0
    %v2733 = vadd.f32 0.0, %v2732
    %2734 = vdwg.mxu0
    %2735 = vrot.lane.b32.xlu0 %v1642, 16
    %v2736 = vpop.permute.xlu0 %2735
    %2737 = vrot.lane.b32.xlu0 %v1645, 16
    %v2738 = vpop.permute.xlu0 %2737
    %v2742 = vsel %vm152, %v2675, 0
    %2744 = vmatpush.msra.mxu0 0.0
    %2745 = vmatpush.msra.mxu0 0.0
    %2746 = vmatpush.msra.mxu0 0.0
    %2747 = vmatpush.msra.mxu0 0.0
    %2748 = vmatpush.msra.mxu0 0.0
    %2749 = vmatpush.msra.mxu0 0.0
    %2750 = vmatpush.msra.mxu0 0.0
    %2751 = vmatpush.msra.mxu0 0.0
    %2752 = vmatpush.msra.mxu0 0.0
    %2753 = vmatpush.msra.mxu0 0.0
    %2754 = vmatpush.msra.mxu0 0.0
    %2755 = vmatpush.msra.mxu0 0.0
    %2756 = vmatpush.msra.mxu0 0.0
    %2757 = vmatpush.msra.mxu0 0.0
    %2758 = vmatpush.msra.mxu0 %v2738
    %2759 = vmatpush.msra.mxu0 %v2736
    %2760 = vmatmul.f32.gmra.mxu0 %v2742
    %v2761 = vpop.f32.mrf.mxu0
    %v2762 = vadd.f32 0.0, %v2761
    %2763 = vdwg.mxu0
    %2764 = vrot.lane.b32.xlu0 %v1648, 16
    %v2765 = vpop.permute.xlu0 %2764
    %2766 = vrot.lane.b32.xlu0 %v1651, 16
    %v2767 = vpop.permute.xlu0 %2766
    %v2771 = vsel %vm152, %v2676, 0
    %2773 = vmatpush.msra.mxu0 0.0
    %2774 = vmatpush.msra.mxu0 0.0
    %2775 = vmatpush.msra.mxu0 0.0
    %2776 = vmatpush.msra.mxu0 0.0
    %2777 = vmatpush.msra.mxu0 0.0
    %2778 = vmatpush.msra.mxu0 0.0
    %2779 = vmatpush.msra.mxu0 0.0
    %2780 = vmatpush.msra.mxu0 0.0
    %2781 = vmatpush.msra.mxu0 0.0
    %2782 = vmatpush.msra.mxu0 0.0
    %2783 = vmatpush.msra.mxu0 0.0
    %2784 = vmatpush.msra.mxu0 0.0
    %2785 = vmatpush.msra.mxu0 0.0
    %2786 = vmatpush.msra.mxu0 0.0
    %2787 = vmatpush.msra.mxu0 %v2767
    %2788 = vmatpush.msra.mxu0 %v2765
    %2789 = vmatmul.f32.gmra.mxu0 %v2771
    %v2790 = vpop.f32.mrf.mxu0
    %v2791 = vadd.f32 0.0, %v2790
    %2792 = vdwg.mxu0
    %2797 = vrot.lane.b32.xlu0 %v2128, 16
    %v2798 = vpop.permute.xlu0 %2797
    %2799 = vrot.lane.b32.xlu0 %v2157, 16
    %v2800 = vpop.permute.xlu0 %2799
    %2801 = vrot.lane.b32.xlu0 %v2186, 16
    %v2802 = vpop.permute.xlu0 %2801
    %2803 = vrot.lane.b32.xlu0 %v2215, 16
    %v2804 = vpop.permute.xlu0 %2803
    %2813 = vrot.lane.b32.xlu0 %v2416, 32
    %v2814 = vpop.permute.xlu0 %2813
    %2815 = vrot.lane.b32.xlu0 %v2445, 32
    %v2816 = vpop.permute.xlu0 %2815
    %2817 = vrot.lane.b32.xlu0 %v2474, 32
    %v2818 = vpop.permute.xlu0 %2817
    %2819 = vrot.lane.b32.xlu0 %v2503, 32
    %v2820 = vpop.permute.xlu0 %2819
    %2829 = vrot.lane.b32.xlu0 %v2704, 48
    %v2830 = vpop.permute.xlu0 %2829
    %2831 = vrot.lane.b32.xlu0 %v2733, 48
    %v2832 = vpop.permute.xlu0 %2831
    %2833 = vrot.lane.b32.xlu0 %v2762, 48
    %v2834 = vpop.permute.xlu0 %2833
    %2835 = vrot.lane.b32.xlu0 %v2791, 48
    %v2836 = vpop.permute.xlu0 %2835
    %v2841 = vsel %vm152, %v1840, %v2798
    %v2842 = vsel %vm152, %v1869, %v2800
    %v2843 = vsel %vm152, %v1898, %v2802
    %v2844 = vsel %vm152, %v1927, %v2804
    %v2845 = vsel %vm1231, %v2841, %v2814
    %v2846 = vsel %vm1231, %v2842, %v2816
    %v2847 = vsel %vm1231, %v2843, %v2818
    %v2848 = vsel %vm1231, %v2844, %v2820
    %v2849 = vsel %vm1236, %v2845, %v2830
    %v2850 = vsel %vm1236, %v2846, %v2832
    %v2851 = vsel %vm1236, %v2847, %v2834
    %v2852 = vsel %vm1236, %v2848, %v2836
    %v2853 = vld [vmem:[#allocation2 + $0x18] sm:$0xff]
    %v2854 = vld [vmem:[#allocation2 + $0x40] sm:$0xff]
    %v2855 = vld [vmem:[#allocation2 + $0x68] sm:$0xff]
    %v2856 = vld [vmem:[#allocation2 + $0x90] sm:$0xff]
    %v2857 = vld [vmem:[#allocation2 + $0xb8] sm:$0xff]
    %v2858 = vld [vmem:[#allocation2 + $0xe0] sm:$0xff]
    %v2859 = vld [vmem:[#allocation2 + $0x108] sm:$0xff]
    %v2860 = vld [vmem:[#allocation2 + $0x130] sm:$0xff]
    %v2861 = vld [vmem:[%s5 + $0x3] sm:$0x1]
    %v2863 = vperm.slane %v2861, 0
    %2872 = vrot.lane.b32.xlu0 %v2853, 64
    %v2873 = vpop.permute.xlu0 %2872
    %2874 = vrot.lane.b32.xlu0 %v2854, 64
    %v2875 = vpop.permute.xlu0 %2874
    %2876 = vrot.lane.b32.xlu0 %v2855, 64
    %v2877 = vpop.permute.xlu0 %2876
    %2878 = vrot.lane.b32.xlu0 %v2856, 64
    %v2879 = vpop.permute.xlu0 %2878
    %2880 = vrot.lane.b32.xlu0 %v2857, 64
    %v2881 = vpop.permute.xlu0 %2880
    %2882 = vrot.lane.b32.xlu0 %v2858, 64
    %v2883 = vpop.permute.xlu0 %2882
    %2884 = vrot.lane.b32.xlu0 %v2859, 64
    %v2885 = vpop.permute.xlu0 %2884
    %2886 = vrot.lane.b32.xlu0 %v2860, 64
    %v2887 = vpop.permute.xlu0 %2886
    %2896 = vrot.lane.b32.xlu0 %v2863, 64
    %v2897 = vpop.permute.xlu0 %2896
    %v2900 = vsel %vm78, %v2849, 0
    %v2903 = vsel %vm78, %v2850, 0
    %v2906 = vsel %vm78, %v2851, 0
    %v2909 = vsel %vm78, %v2852, 0
    %2911 = vmatpush.msra.mxu0 0.0
    %2912 = vmatpush.msra.mxu0 0.0
    %2913 = vmatpush.msra.mxu0 0.0
    %2914 = vmatpush.msra.mxu0 0.0
    %2915 = vmatpush.msra.mxu0 0.0
    %2916 = vmatpush.msra.mxu0 0.0
    %2917 = vmatpush.msra.mxu0 0.0
    %2918 = vmatpush.msra.mxu0 0.0
    %2919 = vmatpush.msra.mxu0 %v2887
    %2920 = vmatpush.msra.mxu0 %v2885
    %2921 = vmatpush.msra.mxu0 %v2883
    %2922 = vmatpush.msra.mxu0 %v2881
    %2923 = vmatpush.msra.mxu0 %v2879
    %2924 = vmatpush.msra.mxu0 %v2877
    %2925 = vmatpush.msra.mxu0 %v2875
    %2926 = vmatpush.msra.mxu0 %v2873
    %2927 = vmatmul.f32.gmra.mxu0 %v2900
    %v2928 = vpop.f32.mrf.mxu0
    %v2929 = vadd.f32 %v2897, %v2928
    %2930 = vmatmul.f32.gmra.mxu0 %v2903
    %v2931 = vpop.f32.mrf.mxu0
    %v2932 = vadd.f32 %v2897, %v2931
    %2933 = vmatmul.f32.gmra.mxu0 %v2906
    %v2934 = vpop.f32.mrf.mxu0
    %v2935 = vadd.f32 %v2897, %v2934
    %2936 = vmatmul.f32.gmra.mxu0 %v2909
    %v2937 = vpop.f32.mrf.mxu0
    %v2938 = vadd.f32 %v2897, %v2937
    %2939 = vdwg.mxu0
    %v2940 = vadd.f32 %v1441, %v2929
    %v2941 = vadd.f32 %v1442, %v2932
    %v2942 = vadd.f32 %v1443, %v2935
    %v2943 = vadd.f32 %v1444, %v2938
    %v2944 = vld [vmem:[%s5 + $0x6] sm:$0x1]
    %v2945 = vld [vmem:[%s5 + $0x7] sm:$0x1]
    %v2946 = vsel %vm78, %v2940, 0.0
    %2947 = vadd.xlane.f32.xlu0 %v2946
    %v2948 = vpop.xlane.xlu0 %2947
    %v2949 = vsel %vm78, %v2941, 0.0
    %2950 = vadd.xlane.f32.xlu0 %v2949
    %v2951 = vpop.xlane.xlu0 %2950
    %v2952 = vsel %vm78, %v2942, 0.0
    %2953 = vadd.xlane.f32.xlu0 %v2952
    %v2954 = vpop.xlane.xlu0 %2953
    %v2955 = vsel %vm78, %v2943, 0.0
    %2956 = vadd.xlane.f32.xlu0 %v2955
    %v2957 = vpop.xlane.xlu0 %2956
    %v2958 = vmul.f32 %v2948, %v1352
    %v2959 = vmul.f32 %v2951, %v1352
    %v2960 = vmul.f32 %v2954, %v1352
    %v2961 = vmul.f32 %v2957, %v1352
    %v2962 = vsub.f32 %v2940, %v2958
    %v2963 = vsub.f32 %v2941, %v2959
    %v2964 = vsub.f32 %v2942, %v2960
    %v2965 = vsub.f32 %v2943, %v2961
    %v2966 = vmul.f32 %v2962, %v2962
    %v2967 = vmul.f32 %v2963, %v2963
    %v2968 = vmul.f32 %v2964, %v2964
    %v2969 = vmul.f32 %v2965, %v2965
    %v2970 = vsel %vm78, %v2966, 0.0
    %2971 = vadd.xlane.f32.xlu0 %v2970
    %v2972 = vpop.xlane.xlu0 %2971
    %v2973 = vsel %vm78, %v2967, 0.0
    %2974 = vadd.xlane.f32.xlu0 %v2973
    %v2975 = vpop.xlane.xlu0 %2974
    %v2976 = vsel %vm78, %v2968, 0.0
    %2977 = vadd.xlane.f32.xlu0 %v2976
    %v2978 = vpop.xlane.xlu0 %2977
    %v2979 = vsel %vm78, %v2969, 0.0
    %2980 = vadd.xlane.f32.xlu0 %v2979
    %v2981 = vpop.xlane.xlu0 %2980
    %v2982 = vmul.f32 %v2972, %v1352
    %v2983 = vmul.f32 %v2975, %v1352
    %v2984 = vmul.f32 %v2978, %v1352
    %v2985 = vmul.f32 %v2981, %v1352
    %v2986 = vadd.f32 %v2982, 1e-05
    %v2987 = vadd.f32 %v2983, 1e-05
    %v2988 = vadd.f32 %v2984, 1e-05
    %v2989 = vadd.f32 %v2985, 1e-05
    %v2990 = vrsqrt.pop %v2986
    %v2991 = vmul.f32 %v2990, %v2986
    %v2992 = vmul.f32 %v2991, %v2990
    %v2993 = vmul.f32 0.5, %v2992
    %v2994 = vsub.f32 1.5, %v2993
    %v2995 = vmul.f32 %v2990, %v2994
    %vm2996 = vweird.f32 %v2986
    %vm2997 = vweird.f32 %v2990
    %vm2998 = vmor %vm2996, %vm2997
    %v2999 = vsel %vm2998, %v2990, %v2995
    %v3000 = vrsqrt.pop %v2987
    %v3001 = vmul.f32 %v3000, %v2987
    %v3002 = vmul.f32 %v3001, %v3000
    %v3003 = vmul.f32 0.5, %v3002
    %v3004 = vsub.f32 1.5, %v3003
    %v3005 = vmul.f32 %v3000, %v3004
    %vm3006 = vweird.f32 %v2987
    %vm3007 = vweird.f32 %v3000
    %vm3008 = vmor %vm3006, %vm3007
    %v3009 = vsel %vm3008, %v3000, %v3005
    %v3010 = vrsqrt.pop %v2988
    %v3011 = vmul.f32 %v3010, %v2988
    %v3012 = vmul.f32 %v3011, %v3010
    %v3013 = vmul.f32 0.5, %v3012
    %v3014 = vsub.f32 1.5, %v3013
    %v3015 = vmul.f32 %v3010, %v3014
    %vm3016 = vweird.f32 %v2988
    %vm3017 = vweird.f32 %v3010
    %vm3018 = vmor %vm3016, %vm3017
    %v3019 = vsel %vm3018, %v3010, %v3015
    %v3020 = vrsqrt.pop %v2989
    %v3021 = vmul.f32 %v3020, %v2989
    %v3022 = vmul.f32 %v3021, %v3020
    %v3023 = vmul.f32 0.5, %v3022
    %v3024 = vsub.f32 1.5, %v3023
    %v3025 = vmul.f32 %v3020, %v3024
    %vm3026 = vweird.f32 %v2989
    %vm3027 = vweird.f32 %v3020
    %vm3028 = vmor %vm3026, %vm3027
    %v3029 = vsel %vm3028, %v3020, %v3025
    %v3030 = vmul.f32 %v2962, %v2999
    %v3031 = vmul.f32 %v2963, %v3009
    %v3032 = vmul.f32 %v2964, %v3019
    %v3033 = vmul.f32 %v2965, %v3029
    %v3035 = vperm.slane %v2944, 0
    %3036 = vrot.lane.b32.xlu0 %v3035, 64
    %v3037 = vpop.permute.xlu0 %3036
    %v3039 = vmul.f32 %v3030, %v3037
    %v3040 = vmul.f32 %v3031, %v3037
    %v3041 = vmul.f32 %v3032, %v3037
    %v3042 = vmul.f32 %v3033, %v3037
    %v3044 = vperm.slane %v2945, 0
    %v3046 = vadd.f32 %v3039, %v3044
    %v3047 = vadd.f32 %v3040, %v3044
    %v3048 = vadd.f32 %v3041, %v3044
    %v3049 = vadd.f32 %v3042, %v3044
    %v3050 = vld [vmem:[#allocation2 + $0x20] sm:$0xff]
    %v3051 = vld [vmem:[#allocation2 + $0x48] sm:$0xff]
    %v3052 = vld [vmem:[#allocation2 + $0x70] sm:$0xff]
    %v3053 = vld [vmem:[#allocation2 + $0x98] sm:$0xff]
    %v3054 = vld [vmem:[#allocation2 + $0xc0] sm:$0xff]
    %v3055 = vld [vmem:[#allocation2 + $0xe8] sm:$0xff]
    %v3056 = vld [vmem:[#allocation2 + $0x110] sm:$0xff]
    %v3057 = vld [vmem:[#allocation2 + $0x138] sm:$0xff]
    %v3058 = vld [vmem:[%s5 + $0x4] sm:$0x1]
    %v3060 = vperm.slane %v3058, 0
    %v3063 = vsel %vm78, %v3046, 0
    %v3066 = vsel %vm78, %v3047, 0
    %v3069 = vsel %vm78, %v3048, 0
    %v3072 = vsel %vm78, %v3049, 0
    %3074 = vmatpush.msra.mxu0 0.0
    %3075 = vmatpush.msra.mxu0 0.0
    %3076 = vmatpush.msra.mxu0 0.0
    %3077 = vmatpush.msra.mxu0 0.0
    %3078 = vmatpush.msra.mxu0 0.0
    %3079 = vmatpush.msra.mxu0 0.0
    %3080 = vmatpush.msra.mxu0 0.0
    %3081 = vmatpush.msra.mxu0 0.0
    %3082 = vmatpush.msra.mxu0 %v3057
    %3083 = vmatpush.msra.mxu0 %v3056
    %3084 = vmatpush.msra.mxu0 %v3055
    %3085 = vmatpush.msra.mxu0 %v3054
    %3086 = vmatpush.msra.mxu0 %v3053
    %3087 = vmatpush.msra.mxu0 %v3052
    %3088 = vmatpush.msra.mxu0 %v3051
    %3089 = vmatpush.msra.mxu0 %v3050
    %3090 = vmatmul.f32.gmra.mxu0 %v3063
    %v3091 = vpop.f32.mrf.mxu0
    %v3092 = vadd.f32 %v3060, %v3091
    %3093 = vmatmul.f32.gmra.mxu0 %v3066
    %v3094 = vpop.f32.mrf.mxu0
    %v3095 = vadd.f32 %v3060, %v3094
    %3096 = vmatmul.f32.gmra.mxu0 %v3069
    %v3097 = vpop.f32.mrf.mxu0
    %v3098 = vadd.f32 %v3060, %v3097
    %3099 = vmatmul.f32.gmra.mxu0 %v3072
    %v3100 = vpop.f32.mrf.mxu0
    %v3101 = vadd.f32 %v3060, %v3100
    %3102 = vdwg.mxu0
    %v3103 = vmax.f32 %v3092, 0.0
    %v3104 = vmax.f32 %v3095, 0.0
    %v3105 = vmax.f32 %v3098, 0.0
    %v3106 = vmax.f32 %v3101, 0.0
    %v3107 = vld [vmem:[%s4] sm:$0xff]
    %v3108 = vld [vmem:[%s4 + $0x8] sm:$0xff]
    %v3109 = vld [vmem:[%s4 + $0x10] sm:$0xff]
    %v3110 = vld [vmem:[%s4 + $0x18] sm:$0xff]
    %v3111 = vld [vmem:[%s4 + $0x20] sm:$0xff]
    %v3112 = vld [vmem:[%s4 + $0x28] sm:$0xff]
    %v3113 = vld [vmem:[%s4 + $0x30] sm:$0xff]
    %v3114 = vld [vmem:[%s4 + $0x38] sm:$0xff]
    %v3115 = vld [vmem:[%s4 + $0x40] sm:$0xff]
    %v3116 = vld [vmem:[%s4 + $0x48] sm:$0xff]
    %v3117 = vld [vmem:[%s4 + $0x50] sm:$0xff]
    %v3118 = vld [vmem:[%s4 + $0x58] sm:$0xff]
    %v3119 = vld [vmem:[%s4 + $0x60] sm:$0xff]
    %v3120 = vld [vmem:[%s4 + $0x68] sm:$0xff]
    %v3121 = vld [vmem:[%s4 + $0x70] sm:$0xff]
    %v3122 = vld [vmem:[%s4 + $0x78] sm:$0xff]
    %v3123 = vld [vmem:[%s5 + $0x5] sm:$0x1]
    %v3125 = vperm.slane %v3123, 0
    %3127 = vmatpush.msra.mxu0 %v3122
    %3128 = vmatpush.msra.mxu0 %v3121
    %3129 = vmatpush.msra.mxu0 %v3120
    %3130 = vmatpush.msra.mxu0 %v3119
    %3131 = vmatpush.msra.mxu0 %v3118
    %3132 = vmatpush.msra.mxu0 %v3117
    %3133 = vmatpush.msra.mxu0 %v3116
    %3134 = vmatpush.msra.mxu0 %v3115
    %3135 = vmatpush.msra.mxu0 %v3114
    %3136 = vmatpush.msra.mxu0 %v3113
    %3137 = vmatpush.msra.mxu0 %v3112
    %3138 = vmatpush.msra.mxu0 %v3111
    %3139 = vmatpush.msra.mxu0 %v3110
    %3140 = vmatpush.msra.mxu0 %v3109
    %3141 = vmatpush.msra.mxu0 %v3108
    %3142 = vmatpush.msra.mxu0 %v3107
    %3143 = vmatmul.f32.gmra.mxu0 %v3103
    %v3144 = vpop.f32.mrf.mxu0
    %v3145 = vadd.f32 %v3125, %v3144
    %3146 = vmatmul.f32.gmra.mxu0 %v3104
    %v3147 = vpop.f32.mrf.mxu0
    %v3148 = vadd.f32 %v3125, %v3147
    %3149 = vmatmul.f32.gmra.mxu0 %v3105
    %v3150 = vpop.f32.mrf.mxu0
    %v3151 = vadd.f32 %v3125, %v3150
    %3152 = vmatmul.f32.gmra.mxu0 %v3106
    %v3153 = vpop.f32.mrf.mxu0
    %v3154 = vadd.f32 %v3125, %v3153
    %3155 = vdwg.mxu0
    %v3156 = vadd.f32 %v3046, %v3145
    %v3157 = vadd.f32 %v3047, %v3148
    %v3158 = vadd.f32 %v3048, %v3151
    %v3159 = vadd.f32 %v3049, %v3154
    %v3160 = vld [vmem:[%s5 + $0x8] sm:$0x1]
    %v3161 = vsel %vm78, %v3156, 0.0
    %3162 = vadd.xlane.f32.xlu0 %v3161
    %v3163 = vpop.xlane.xlu0 %3162
    %v3164 = vsel %vm78, %v3157, 0.0
    %3165 = vadd.xlane.f32.xlu0 %v3164
    %v3166 = vpop.xlane.xlu0 %3165
    %v3167 = vsel %vm78, %v3158, 0.0
    %3168 = vadd.xlane.f32.xlu0 %v3167
    %v3169 = vpop.xlane.xlu0 %3168
    %v3170 = vsel %vm78, %v3159, 0.0
    %3171 = vadd.xlane.f32.xlu0 %v3170
    %v3172 = vpop.xlane.xlu0 %3171
    %v3173 = vmul.f32 %v3163, %v1352
    %v3174 = vmul.f32 %v3166, %v1352
    %v3175 = vmul.f32 %v3169, %v1352
    %v3176 = vmul.f32 %v3172, %v1352
    %v3177 = vsub.f32 %v3156, %v3173
    %v3178 = vsub.f32 %v3157, %v3174
    %v3179 = vsub.f32 %v3158, %v3175
    %v3180 = vsub.f32 %v3159, %v3176
    %v3181 = vmul.f32 %v3177, %v3177
    %v3182 = vmul.f32 %v3178, %v3178
    %v3183 = vmul.f32 %v3179, %v3179
    %v3184 = vmul.f32 %v3180, %v3180
    %v3185 = vsel %vm78, %v3181, 0.0
    %3186 = vadd.xlane.f32.xlu0 %v3185
    %v3187 = vpop.xlane.xlu0 %3186
    %v3188 = vsel %vm78, %v3182, 0.0
    %3189 = vadd.xlane.f32.xlu0 %v3188
    %v3190 = vpop.xlane.xlu0 %3189
    %v3191 = vsel %vm78, %v3183, 0.0
    %3192 = vadd.xlane.f32.xlu0 %v3191
    %v3193 = vpop.xlane.xlu0 %3192
    %v3194 = vsel %vm78, %v3184, 0.0
    %3195 = vadd.xlane.f32.xlu0 %v3194
    %v3196 = vpop.xlane.xlu0 %3195
    %v3197 = vmul.f32 %v3187, %v1352
    %v3198 = vmul.f32 %v3190, %v1352
    %v3199 = vmul.f32 %v3193, %v1352
    %v3200 = vmul.f32 %v3196, %v1352
    %v3201 = vadd.f32 %v3197, 1e-05
    %v3202 = vadd.f32 %v3198, 1e-05
    %v3203 = vadd.f32 %v3199, 1e-05
    %v3204 = vadd.f32 %v3200, 1e-05
    %v3205 = vrsqrt.pop %v3201
    %v3206 = vmul.f32 %v3205, %v3201
    %v3207 = vmul.f32 %v3206, %v3205
    %v3208 = vmul.f32 0.5, %v3207
    %v3209 = vsub.f32 1.5, %v3208
    %v3210 = vmul.f32 %v3205, %v3209
    %vm3211 = vweird.f32 %v3201
    %vm3212 = vweird.f32 %v3205
    %vm3213 = vmor %vm3211, %vm3212
    %v3214 = vsel %vm3213, %v3205, %v3210
    %v3215 = vrsqrt.pop %v3202
    %v3216 = vmul.f32 %v3215, %v3202
    %v3217 = vmul.f32 %v3216, %v3215
    %v3218 = vmul.f32 0.5, %v3217
    %v3219 = vsub.f32 1.5, %v3218
    %v3220 = vmul.f32 %v3215, %v3219
    %vm3221 = vweird.f32 %v3202
    %vm3222 = vweird.f32 %v3215
    %vm3223 = vmor %vm3221, %vm3222
    %v3224 = vsel %vm3223, %v3215, %v3220
    %v3225 = vrsqrt.pop %v3203
    %v3226 = vmul.f32 %v3225, %v3203
    %v3227 = vmul.f32 %v3226, %v3225
    %v3228 = vmul.f32 0.5, %v3227
    %v3229 = vsub.f32 1.5, %v3228
    %v3230 = vmul.f32 %v3225, %v3229
    %vm3231 = vweird.f32 %v3203
    %vm3232 = vweird.f32 %v3225
    %vm3233 = vmor %vm3231, %vm3232
    %v3234 = vsel %vm3233, %v3225, %v3230
    %v3235 = vrsqrt.pop %v3204
    %v3236 = vmul.f32 %v3235, %v3204
    %v3237 = vmul.f32 %v3236, %v3235
    %v3238 = vmul.f32 0.5, %v3237
    %v3239 = vsub.f32 1.5, %v3238
    %v3240 = vmul.f32 %v3235, %v3239
    %vm3241 = vweird.f32 %v3204
    %vm3242 = vweird.f32 %v3235
    %vm3243 = vmor %vm3241, %vm3242
    %v3244 = vsel %vm3243, %v3235, %v3240
    %v3245 = vmul.f32 %v3177, %v3214
    %v3246 = vmul.f32 %v3178, %v3224
    %v3247 = vmul.f32 %v3179, %v3234
    %v3248 = vmul.f32 %v3180, %v3244
    %3249 = vrot.lane.b32.xlu0 %v3044, 64
    %v3250 = vpop.permute.xlu0 %3249
    %v3252 = vmul.f32 %v3245, %v3250
    %v3253 = vmul.f32 %v3246, %v3250
    %v3254 = vmul.f32 %v3247, %v3250
    %v3255 = vmul.f32 %v3248, %v3250
    %v3257 = vperm.slane %v3160, 0
    %v3259 = vadd.f32 %v3252, %v3257
    %v3260 = vadd.f32 %v3253, %v3257
    %v3261 = vadd.f32 %v3254, %v3257
    %v3262 = vadd.f32 %v3255, %v3257
    %s3263 = scalar_lea.vmem [#allocation2], 320
    %v3264 = vld [vmem:[%s3263] sm:$0xff]
    %v3265 = vld [vmem:[%s3263 + $0x8] sm:$0xff]
    %v3266 = vld [vmem:[%s3263 + $0x28] sm:$0xff]
    %v3267 = vld [vmem:[%s3263 + $0x30] sm:$0xff]
    %v3268 = vld [vmem:[%s3263 + $0x50] sm:$0xff]
    %v3269 = vld [vmem:[%s3263 + $0x58] sm:$0xff]
    %v3270 = vld [vmem:[%s3263 + $0x78] sm:$0xff]
    %v3271 = vld [vmem:[%s3263 + $0x80] sm:$0xff]
    %v3272 = vld [vmem:[%s3263 + $0xa0] sm:$0xff]
    %v3273 = vld [vmem:[%s3263 + $0xa8] sm:$0xff]
    %v3274 = vld [vmem:[%s3263 + $0xc8] sm:$0xff]
    %v3275 = vld [vmem:[%s3263 + $0xd0] sm:$0xff]
    %v3276 = vld [vmem:[%s3263 + $0xf0] sm:$0xff]
    %v3277 = vld [vmem:[%s3263 + $0xf8] sm:$0xff]
    %v3278 = vld [vmem:[%s3263 + $0x118] sm:$0xff]
    %v3279 = vld [vmem:[%s3263 + $0x120] sm:$0xff]
    %s3280 = scalar_lea.vmem %s5, 9
    %v3281 = vld [vmem:[%s3280] sm:$0x3]
    %v3283 = vperm.slane %v3281, 0
    %v3284 = vperm.slane %v3281, 1
    %v3288 = vsel %vm78, %v3259, 0
    %v3291 = vsel %vm78, %v3260, 0
    %v3294 = vsel %vm78, %v3261, 0
    %v3297 = vsel %vm78, %v3262, 0
    %3299 = vmatpush.msra.mxu0 0.0
    %3300 = vmatpush.msra.mxu0 0.0
    %3301 = vmatpush.msra.mxu0 0.0
    %3302 = vmatpush.msra.mxu0 0.0
    %3303 = vmatpush.msra.mxu0 0.0
    %3304 = vmatpush.msra.mxu0 0.0
    %3305 = vmatpush.msra.mxu0 0.0
    %3306 = vmatpush.msra.mxu0 0.0
    %3307 = vmatpush.msra.mxu0 %v3278
    %3308 = vmatpush.msra.mxu0 %v3276
    %3309 = vmatpush.msra.mxu0 %v3274
    %3310 = vmatpush.msra.mxu0 %v3272
    %3311 = vmatpush.msra.mxu0 %v3270
    %3312 = vmatpush.msra.mxu0 %v3268
    %3313 = vmatpush.msra.mxu0 %v3266
    %3314 = vmatpush.msra.mxu0 %v3264
    %3315 = vmatmul.f32.gmra.mxu0 %v3288
    %v3316 = vpop.f32.mrf.mxu0
    %v3317 = vadd.f32 %v3283, %v3316
    %3318 = vmatmul.f32.gmra.mxu0 %v3291
    %v3319 = vpop.f32.mrf.mxu0
    %v3320 = vadd.f32 %v3283, %v3319
    %3321 = vmatmul.f32.gmra.mxu0 %v3294
    %v3322 = vpop.f32.mrf.mxu0
    %v3323 = vadd.f32 %v3283, %v3322
    %3324 = vmatmul.f32.gmra.mxu0 %v3297
    %v3325 = vpop.f32.mrf.mxu0
    %v3326 = vadd.f32 %v3283, %v3325
    %3327 = vdwg.mxu0
    %3328 = vmatpush.msra.mxu0 0.0
    %3329 = vmatpush.msra.mxu0 0.0
    %3330 = vmatpush.msra.mxu0 0.0
    %3331 = vmatpush.msra.mxu0 0.0
    %3332 = vmatpush.msra.mxu0 0.0
    %3333 = vmatpush.msra.mxu0 0.0
    %3334 = vmatpush.msra.mxu0 0.0
    %3335 = vmatpush.msra.mxu0 0.0
    %3336 = vmatpush.msra.mxu0 %v3279
    %3337 = vmatpush.msra.mxu0 %v3277
    %3338 = vmatpush.msra.mxu0 %v3275
    %3339 = vmatpush.msra.mxu0 %v3273
    %3340 = vmatpush.msra.mxu0 %v3271
    %3341 = vmatpush.msra.mxu0 %v3269
    %3342 = vmatpush.msra.mxu0 %v3267
    %3343 = vmatpush.msra.mxu0 %v3265
    %3344 = vmatmul.f32.gmra.mxu0 %v3288
    %v3345 = vpop.f32.mrf.mxu0
    %v3346 = vadd.f32 %v3284, %v3345
    %3347 = vmatmul.f32.gmra.mxu0 %v3291
    %v3348 = vpop.f32.mrf.mxu0
    %v3349 = vadd.f32 %v3284, %v3348
    %3350 = vmatmul.f32.gmra.mxu0 %v3294
    %v3351 = vpop.f32.mrf.mxu0
    %v3352 = vadd.f32 %v3284, %v3351
    %3353 = vmatmul.f32.gmra.mxu0 %v3297
    %v3354 = vpop.f32.mrf.mxu0
    %v3355 = vadd.f32 %v3284, %v3354
    %3356 = vdwg.mxu0
    %3358 = vrot.lane.b32.xlu0 %v3317, 64
    %v3359 = vpop.permute.xlu0 %3358
    %v3360 = vsel %vm152, %v3317, 0
    %v3362 = vsel %vm152, %v3359, 0
    %3364 = vmatpush.xpose.msra.mxu0 0.0
    %3365 = vmatpush.xpose.msra.mxu0 0.0
    %3366 = vmatpush.xpose.msra.mxu0 0.0
    %3367 = vmatpush.xpose.msra.mxu0 0.0
    %3368 = vmatpush.xpose.msra.mxu0 0.0
    %3369 = vmatpush.xpose.msra.mxu0 0.0
    %3370 = vmatpush.xpose.msra.mxu0 0.0
    %3371 = vmatpush.xpose.msra.mxu0 0.0
    %3372 = vmatpush.xpose.msra.mxu0 0.0
    %3373 = vmatpush.xpose.msra.mxu0 0.0
    %3374 = vmatpush.xpose.msra.mxu0 0.0
    %3375 = vmatpush.xpose.msra.mxu0 0.0
    %3376 = vmatpush.xpose.msra.mxu0 0.0
    %3377 = vmatpush.xpose.msra.mxu0 0.0
    %3378 = vmatpush.xpose.msra.mxu0 0.0
    %3379 = vmatpush.xpose.msra.mxu0 %v3362
    %3380 = vmatmul.f32.gmra.mxu0 %v3360
    %v3381 = vpop.f32.mrf.mxu0
    %v3382 = vadd.f32 %v52, %v3381
    %3383 = vdwg.mxu0
    %3385 = vrot.lane.b32.xlu0 %v3320, 64
    %v3386 = vpop.permute.xlu0 %3385
    %v3387 = vsel %vm152, %v3320, 0
    %v3389 = vsel %vm152, %v3386, 0
    %3391 = vmatpush.xpose.msra.mxu0 0.0
    %3392 = vmatpush.xpose.msra.mxu0 0.0
    %3393 = vmatpush.xpose.msra.mxu0 0.0
    %3394 = vmatpush.xpose.msra.mxu0 0.0
    %3395 = vmatpush.xpose.msra.mxu0 0.0
    %3396 = vmatpush.xpose.msra.mxu0 0.0
    %3397 = vmatpush.xpose.msra.mxu0 0.0
    %3398 = vmatpush.xpose.msra.mxu0 0.0
    %3399 = vmatpush.xpose.msra.mxu0 0.0
    %3400 = vmatpush.xpose.msra.mxu0 0.0
    %3401 = vmatpush.xpose.msra.mxu0 0.0
    %3402 = vmatpush.xpose.msra.mxu0 0.0
    %3403 = vmatpush.xpose.msra.mxu0 0.0
    %3404 = vmatpush.xpose.msra.mxu0 0.0
    %3405 = vmatpush.xpose.msra.mxu0 0.0
    %3406 = vmatpush.xpose.msra.mxu0 %v3389
    %3407 = vmatmul.f32.gmra.mxu0 %v3387
    %v3408 = vpop.f32.mrf.mxu0
    %v3409 = vadd.f32 %v53, %v3408
    %3410 = vdwg.mxu0
    %3412 = vrot.lane.b32.xlu0 %v3323, 64
    %v3413 = vpop.permute.xlu0 %3412
    %v3414 = vsel %vm152, %v3323, 0
    %v3416 = vsel %vm152, %v3413, 0
    %3418 = vmatpush.xpose.msra.mxu0 0.0
    %3419 = vmatpush.xpose.msra.mxu0 0.0
    %3420 = vmatpush.xpose.msra.mxu0 0.0
    %3421 = vmatpush.xpose.msra.mxu0 0.0
    %3422 = vmatpush.xpose.msra.mxu0 0.0
    %3423 = vmatpush.xpose.msra.mxu0 0.0
    %3424 = vmatpush.xpose.msra.mxu0 0.0
    %3425 = vmatpush.xpose.msra.mxu0 0.0
    %3426 = vmatpush.xpose.msra.mxu0 0.0
    %3427 = vmatpush.xpose.msra.mxu0 0.0
    %3428 = vmatpush.xpose.msra.mxu0 0.0
    %3429 = vmatpush.xpose.msra.mxu0 0.0
    %3430 = vmatpush.xpose.msra.mxu0 0.0
    %3431 = vmatpush.xpose.msra.mxu0 0.0
    %3432 = vmatpush.xpose.msra.mxu0 0.0
    %3433 = vmatpush.xpose.msra.mxu0 %v3416
    %3434 = vmatmul.f32.gmra.mxu0 %v3414
    %v3435 = vpop.f32.mrf.mxu0
    %v3436 = vadd.f32 %v54, %v3435
    %3437 = vdwg.mxu0
    %3439 = vrot.lane.b32.xlu0 %v3326, 64
    %v3440 = vpop.permute.xlu0 %3439
    %v3441 = vsel %vm152, %v3326, 0
    %v3443 = vsel %vm152, %v3440, 0
    %3445 = vmatpush.xpose.msra.mxu0 0.0
    %3446 = vmatpush.xpose.msra.mxu0 0.0
    %3447 = vmatpush.xpose.msra.mxu0 0.0
    %3448 = vmatpush.xpose.msra.mxu0 0.0
    %3449 = vmatpush.xpose.msra.mxu0 0.0
    %3450 = vmatpush.xpose.msra.mxu0 0.0
    %3451 = vmatpush.xpose.msra.mxu0 0.0
    %3452 = vmatpush.xpose.msra.mxu0 0.0
    %3453 = vmatpush.xpose.msra.mxu0 0.0
    %3454 = vmatpush.xpose.msra.mxu0 0.0
    %3455 = vmatpush.xpose.msra.mxu0 0.0
    %3456 = vmatpush.xpose.msra.mxu0 0.0
    %3457 = vmatpush.xpose.msra.mxu0 0.0
    %3458 = vmatpush.xpose.msra.mxu0 0.0
    %3459 = vmatpush.xpose.msra.mxu0 0.0
    %3460 = vmatpush.xpose.msra.mxu0 %v3443
    %3461 = vmatmul.f32.gmra.mxu0 %v3441
    %v3462 = vpop.f32.mrf.mxu0
    %v3463 = vadd.f32 %v55, %v3462
    %3464 = vdwg.mxu0
    %v3465 = vsel %vm258, %v3382, -inf
    %3466 = vmax.xlane.f32.xlu0 %v3465
    %v3467 = vpop.xlane.xlu0 %3466
    %v3468 = vsel %vm258, %v3409, -inf
    %3469 = vmax.xlane.f32.xlu0 %v3468
    %v3470 = vpop.xlane.xlu0 %3469
    %v3471 = vsel %vm258, %v3436, -inf
    %3472 = vmax.xlane.f32.xlu0 %v3471
    %v3473 = vpop.xlane.xlu0 %3472
    %v3474 = vsel %vm258, %v3463, -inf
    %3475 = vmax.xlane.f32.xlu0 %v3474
    %v3476 = vpop.xlane.xlu0 %3475
    %v3477 = vsub.f32 %v3382, %v3467
    %v3478 = vsub.f32 %v3409, %v3470
    %v3479 = vsub.f32 %v3436, %v3473
    %v3480 = vsub.f32 %v3463, %v3476
    %v3481 = vmul.f32 %v3477, 1.442695
    %v3482 = vpow.pop %v3481
    %v3483 = vmul.f32 %v3478, 1.442695
    %v3484 = vpow.pop %v3483
    %v3485 = vmul.f32 %v3479, 1.442695
    %v3486 = vpow.pop %v3485
    %v3487 = vmul.f32 %v3480, 1.442695
    %v3488 = vpow.pop %v3487
    %v3489 = vsel %vm258, %v3482, 0.0
    %3490 = vadd.xlane.f32.xlu0 %v3489
    %v3491 = vpop.xlane.xlu0 %3490
    %v3492 = vsel %vm258, %v3484, 0.0
    %3493 = vadd.xlane.f32.xlu0 %v3492
    %v3494 = vpop.xlane.xlu0 %3493
    %v3495 = vsel %vm258, %v3486, 0.0
    %3496 = vadd.xlane.f32.xlu0 %v3495
    %v3497 = vpop.xlane.xlu0 %3496
    %v3498 = vsel %vm258, %v3488, 0.0
    %3499 = vadd.xlane.f32.xlu0 %v3498
    %v3500 = vpop.xlane.xlu0 %3499
    %v3501 = vrcp.pop %v3491
    %v3502 = vrcp.pop %v3494
    %v3503 = vrcp.pop %v3497
    %v3504 = vrcp.pop %v3500
    %v3505 = vmul.f32 %v3482, %v3501
    %v3506 = vmul.f32 %v3484, %v3502
    %v3507 = vmul.f32 %v3486, %v3503
    %v3508 = vmul.f32 %v3488, %v3504
    %v3510 = vsel %vm258, %v3505, 0
    %3512 = vmatpush.msra.mxu0 0.0
    %3513 = vmatpush.msra.mxu0 0.0
    %3514 = vmatpush.msra.mxu0 0.0
    %3515 = vmatpush.msra.mxu0 0.0
    %3516 = vmatpush.msra.mxu0 0.0
    %3517 = vmatpush.msra.mxu0 0.0
    %3518 = vmatpush.msra.mxu0 0.0
    %3519 = vmatpush.msra.mxu0 0.0
    %3520 = vmatpush.msra.mxu0 0.0
    %3521 = vmatpush.msra.mxu0 0.0
    %3522 = vmatpush.msra.mxu0 0.0
    %3523 = vmatpush.msra.mxu0 0.0
    %3524 = vmatpush.msra.mxu0 0.0
    %3525 = vmatpush.msra.mxu0 0.0
    %3526 = vmatpush.msra.mxu0 0.0
    %3527 = vmatpush.msra.mxu0 %v3346
    %3528 = vmatmul.f32.gmra.mxu0 %v3510
    %v3529 = vpop.f32.mrf.mxu0
    %v3530 = vadd.f32 0.0, %v3529
    %3531 = vdwg.mxu0
    %v3533 = vsel %vm258, %v3506, 0
    %3535 = vmatpush.msra.mxu0 0.0
    %3536 = vmatpush.msra.mxu0 0.0
    %3537 = vmatpush.msra.mxu0 0.0
    %3538 = vmatpush.msra.mxu0 0.0
    %3539 = vmatpush.msra.mxu0 0.0
    %3540 = vmatpush.msra.mxu0 0.0
    %3541 = vmatpush.msra.mxu0 0.0
    %3542 = vmatpush.msra.mxu0 0.0
    %3543 = vmatpush.msra.mxu0 0.0
    %3544 = vmatpush.msra.mxu0 0.0
    %3545 = vmatpush.msra.mxu0 0.0
    %3546 = vmatpush.msra.mxu0 0.0
    %3547 = vmatpush.msra.mxu0 0.0
    %3548 = vmatpush.msra.mxu0 0.0
    %3549 = vmatpush.msra.mxu0 0.0
    %3550 = vmatpush.msra.mxu0 %v3349
    %3551 = vmatmul.f32.gmra.mxu0 %v3533
    %v3552 = vpop.f32.mrf.mxu0
    %v3553 = vadd.f32 0.0, %v3552
    %3554 = vdwg.mxu0
    %v3556 = vsel %vm258, %v3507, 0
    %3558 = vmatpush.msra.mxu0 0.0
    %3559 = vmatpush.msra.mxu0 0.0
    %3560 = vmatpush.msra.mxu0 0.0
    %3561 = vmatpush.msra.mxu0 0.0
    %3562 = vmatpush.msra.mxu0 0.0
    %3563 = vmatpush.msra.mxu0 0.0
    %3564 = vmatpush.msra.mxu0 0.0
    %3565 = vmatpush.msra.mxu0 0.0
    %3566 = vmatpush.msra.mxu0 0.0
    %3567 = vmatpush.msra.mxu0 0.0
    %3568 = vmatpush.msra.mxu0 0.0
    %3569 = vmatpush.msra.mxu0 0.0
    %3570 = vmatpush.msra.mxu0 0.0
    %3571 = vmatpush.msra.mxu0 0.0
    %3572 = vmatpush.msra.mxu0 0.0
    %3573 = vmatpush.msra.mxu0 %v3352
    %3574 = vmatmul.f32.gmra.mxu0 %v3556
    %v3575 = vpop.f32.mrf.mxu0
    %v3576 = vadd.f32 0.0, %v3575
    %3577 = vdwg.mxu0
    %v3579 = vsel %vm258, %v3508, 0
    %3581 = vmatpush.msra.mxu0 0.0
    %3582 = vmatpush.msra.mxu0 0.0
    %3583 = vmatpush.msra.mxu0 0.0
    %3584 = vmatpush.msra.mxu0 0.0
    %3585 = vmatpush.msra.mxu0 0.0
    %3586 = vmatpush.msra.mxu0 0.0
    %3587 = vmatpush.msra.mxu0 0.0
    %3588 = vmatpush.msra.mxu0 0.0
    %3589 = vmatpush.msra.mxu0 0.0
    %3590 = vmatpush.msra.mxu0 0.0
    %3591 = vmatpush.msra.mxu0 0.0
    %3592 = vmatpush.msra.mxu0 0.0
    %3593 = vmatpush.msra.mxu0 0.0
    %3594 = vmatpush.msra.mxu0 0.0
    %3595 = vmatpush.msra.mxu0 0.0
    %3596 = vmatpush.msra.mxu0 %v3355
    %3597 = vmatmul.f32.gmra.mxu0 %v3579
    %v3598 = vpop.f32.mrf.mxu0
    %v3599 = vadd.f32 0.0, %v3598
    %3600 = vdwg.mxu0
    %3601 = vrot.lane.b32.xlu0 %v3317, 112
    %v3602 = vpop.permute.xlu0 %3601
    %3603 = vrot.lane.b32.xlu0 %v3317, 48
    %v3604 = vpop.permute.xlu0 %3603
    %v3605 = vsel %vm152, %v3602, 0
    %v3607 = vsel %vm152, %v3604, 0
    %3609 = vmatpush.xpose.msra.mxu0 0.0
    %3610 = vmatpush.xpose.msra.mxu0 0.0
    %3611 = vmatpush.xpose.msra.mxu0 0.0
    %3612 = vmatpush.xpose.msra.mxu0 0.0
    %3613 = vmatpush.xpose.msra.mxu0 0.0
    %3614 = vmatpush.xpose.msra.mxu0 0.0
    %3615 = vmatpush.xpose.msra.mxu0 0.0
    %3616 = vmatpush.xpose.msra.mxu0 0.0
    %3617 = vmatpush.xpose.msra.mxu0 0.0
    %3618 = vmatpush.xpose.msra.mxu0 0.0
    %3619 = vmatpush.xpose.msra.mxu0 0.0
    %3620 = vmatpush.xpose.msra.mxu0 0.0
    %3621 = vmatpush.xpose.msra.mxu0 0.0
    %3622 = vmatpush.xpose.msra.mxu0 0.0
    %3623 = vmatpush.xpose.msra.mxu0 0.0
    %3624 = vmatpush.xpose.msra.mxu0 %v3607
    %3625 = vmatmul.f32.gmra.mxu0 %v3605
    %v3626 = vpop.f32.mrf.mxu0
    %v3627 = vadd.f32 %v52, %v3626
    %3628 = vdwg.mxu0
    %3629 = vrot.lane.b32.xlu0 %v3320, 112
    %v3630 = vpop.permute.xlu0 %3629
    %3631 = vrot.lane.b32.xlu0 %v3320, 48
    %v3632 = vpop.permute.xlu0 %3631
    %v3633 = vsel %vm152, %v3630, 0
    %v3635 = vsel %vm152, %v3632, 0
    %3637 = vmatpush.xpose.msra.mxu0 0.0
    %3638 = vmatpush.xpose.msra.mxu0 0.0
    %3639 = vmatpush.xpose.msra.mxu0 0.0
    %3640 = vmatpush.xpose.msra.mxu0 0.0
    %3641 = vmatpush.xpose.msra.mxu0 0.0
    %3642 = vmatpush.xpose.msra.mxu0 0.0
    %3643 = vmatpush.xpose.msra.mxu0 0.0
    %3644 = vmatpush.xpose.msra.mxu0 0.0
    %3645 = vmatpush.xpose.msra.mxu0 0.0
    %3646 = vmatpush.xpose.msra.mxu0 0.0
    %3647 = vmatpush.xpose.msra.mxu0 0.0
    %3648 = vmatpush.xpose.msra.mxu0 0.0
    %3649 = vmatpush.xpose.msra.mxu0 0.0
    %3650 = vmatpush.xpose.msra.mxu0 0.0
    %3651 = vmatpush.xpose.msra.mxu0 0.0
    %3652 = vmatpush.xpose.msra.mxu0 %v3635
    %3653 = vmatmul.f32.gmra.mxu0 %v3633
    %v3654 = vpop.f32.mrf.mxu0
    %v3655 = vadd.f32 %v53, %v3654
    %3656 = vdwg.mxu0
    %3657 = vrot.lane.b32.xlu0 %v3323, 112
    %v3658 = vpop.permute.xlu0 %3657
    %3659 = vrot.lane.b32.xlu0 %v3323, 48
    %v3660 = vpop.permute.xlu0 %3659
    %v3661 = vsel %vm152, %v3658, 0
    %v3663 = vsel %vm152, %v3660, 0
    %3665 = vmatpush.xpose.msra.mxu0 0.0
    %3666 = vmatpush.xpose.msra.mxu0 0.0
    %3667 = vmatpush.xpose.msra.mxu0 0.0
    %3668 = vmatpush.xpose.msra.mxu0 0.0
    %3669 = vmatpush.xpose.msra.mxu0 0.0
    %3670 = vmatpush.xpose.msra.mxu0 0.0
    %3671 = vmatpush.xpose.msra.mxu0 0.0
    %3672 = vmatpush.xpose.msra.mxu0 0.0
    %3673 = vmatpush.xpose.msra.mxu0 0.0
    %3674 = vmatpush.xpose.msra.mxu0 0.0
    %3675 = vmatpush.xpose.msra.mxu0 0.0
    %3676 = vmatpush.xpose.msra.mxu0 0.0
    %3677 = vmatpush.xpose.msra.mxu0 0.0
    %3678 = vmatpush.xpose.msra.mxu0 0.0
    %3679 = vmatpush.xpose.msra.mxu0 0.0
    %3680 = vmatpush.xpose.msra.mxu0 %v3663
    %3681 = vmatmul.f32.gmra.mxu0 %v3661
    %v3682 = vpop.f32.mrf.mxu0
    %v3683 = vadd.f32 %v54, %v3682
    %3684 = vdwg.mxu0
    %3685 = vrot.lane.b32.xlu0 %v3326, 112
    %v3686 = vpop.permute.xlu0 %3685
    %3687 = vrot.lane.b32.xlu0 %v3326, 48
    %v3688 = vpop.permute.xlu0 %3687
    %v3689 = vsel %vm152, %v3686, 0
    %v3691 = vsel %vm152, %v3688, 0
    %3693 = vmatpush.xpose.msra.mxu0 0.0
    %3694 = vmatpush.xpose.msra.mxu0 0.0
    %3695 = vmatpush.xpose.msra.mxu0 0.0
    %3696 = vmatpush.xpose.msra.mxu0 0.0
    %3697 = vmatpush.xpose.msra.mxu0 0.0
    %3698 = vmatpush.xpose.msra.mxu0 0.0
    %3699 = vmatpush.xpose.msra.mxu0 0.0
    %3700 = vmatpush.xpose.msra.mxu0 0.0
    %3701 = vmatpush.xpose.msra.mxu0 0.0
    %3702 = vmatpush.xpose.msra.mxu0 0.0
    %3703 = vmatpush.xpose.msra.mxu0 0.0
    %3704 = vmatpush.xpose.msra.mxu0 0.0
    %3705 = vmatpush.xpose.msra.mxu0 0.0
    %3706 = vmatpush.xpose.msra.mxu0 0.0
    %3707 = vmatpush.xpose.msra.mxu0 0.0
    %3708 = vmatpush.xpose.msra.mxu0 %v3691
    %3709 = vmatmul.f32.gmra.mxu0 %v3689
    %v3710 = vpop.f32.mrf.mxu0
    %v3711 = vadd.f32 %v55, %v3710
    %3712 = vdwg.mxu0
    %v3713 = vsel %vm258, %v3627, -inf
    %3714 = vmax.xlane.f32.xlu0 %v3713
    %v3715 = vpop.xlane.xlu0 %3714
    %v3716 = vsel %vm258, %v3655, -inf
    %3717 = vmax.xlane.f32.xlu0 %v3716
    %v3718 = vpop.xlane.xlu0 %3717
    %v3719 = vsel %vm258, %v3683, -inf
    %3720 = vmax.xlane.f32.xlu0 %v3719
    %v3721 = vpop.xlane.xlu0 %3720
    %v3722 = vsel %vm258, %v3711, -inf
    %3723 = vmax.xlane.f32.xlu0 %v3722
    %v3724 = vpop.xlane.xlu0 %3723
    %v3725 = vsub.f32 %v3627, %v3715
    %v3726 = vsub.f32 %v3655, %v3718
    %v3727 = vsub.f32 %v3683, %v3721
    %v3728 = vsub.f32 %v3711, %v3724
    %v3729 = vmul.f32 %v3725, 1.442695
    %v3730 = vpow.pop %v3729
    %v3731 = vmul.f32 %v3726, 1.442695
    %v3732 = vpow.pop %v3731
    %v3733 = vmul.f32 %v3727, 1.442695
    %v3734 = vpow.pop %v3733
    %v3735 = vmul.f32 %v3728, 1.442695
    %v3736 = vpow.pop %v3735
    %v3737 = vsel %vm258, %v3730, 0.0
    %3738 = vadd.xlane.f32.xlu0 %v3737
    %v3739 = vpop.xlane.xlu0 %3738
    %v3740 = vsel %vm258, %v3732, 0.0
    %3741 = vadd.xlane.f32.xlu0 %v3740
    %v3742 = vpop.xlane.xlu0 %3741
    %v3743 = vsel %vm258, %v3734, 0.0
    %3744 = vadd.xlane.f32.xlu0 %v3743
    %v3745 = vpop.xlane.xlu0 %3744
    %v3746 = vsel %vm258, %v3736, 0.0
    %3747 = vadd.xlane.f32.xlu0 %v3746
    %v3748 = vpop.xlane.xlu0 %3747
    %v3749 = vrcp.pop %v3739
    %v3750 = vrcp.pop %v3742
    %v3751 = vrcp.pop %v3745
    %v3752 = vrcp.pop %v3748
    %v3753 = vmul.f32 %v3730, %v3749
    %v3754 = vmul.f32 %v3732, %v3750
    %v3755 = vmul.f32 %v3734, %v3751
    %v3756 = vmul.f32 %v3736, %v3752
    %3758 = vrot.lane.b32.xlu0 %v3346, 112
    %v3759 = vpop.permute.xlu0 %3758
    %v3762 = vsel %vm258, %v3753, 0
    %3764 = vmatpush.msra.mxu0 0.0
    %3765 = vmatpush.msra.mxu0 0.0
    %3766 = vmatpush.msra.mxu0 0.0
    %3767 = vmatpush.msra.mxu0 0.0
    %3768 = vmatpush.msra.mxu0 0.0
    %3769 = vmatpush.msra.mxu0 0.0
    %3770 = vmatpush.msra.mxu0 0.0
    %3771 = vmatpush.msra.mxu0 0.0
    %3772 = vmatpush.msra.mxu0 0.0
    %3773 = vmatpush.msra.mxu0 0.0
    %3774 = vmatpush.msra.mxu0 0.0
    %3775 = vmatpush.msra.mxu0 0.0
    %3776 = vmatpush.msra.mxu0 0.0
    %3777 = vmatpush.msra.mxu0 0.0
    %3778 = vmatpush.msra.mxu0 0.0
    %3779 = vmatpush.msra.mxu0 %v3759
    %3780 = vmatmul.f32.gmra.mxu0 %v3762
    %v3781 = vpop.f32.mrf.mxu0
    %v3782 = vadd.f32 0.0, %v3781
    %3783 = vdwg.mxu0
    %3785 = vrot.lane.b32.xlu0 %v3349, 112
    %v3786 = vpop.permute.xlu0 %3785
    %v3789 = vsel %vm258, %v3754, 0
    %3791 = vmatpush.msra.mxu0 0.0
    %3792 = vmatpush.msra.mxu0 0.0
    %3793 = vmatpush.msra.mxu0 0.0
    %3794 = vmatpush.msra.mxu0 0.0
    %3795 = vmatpush.msra.mxu0 0.0
    %3796 = vmatpush.msra.mxu0 0.0
    %3797 = vmatpush.msra.mxu0 0.0
    %3798 = vmatpush.msra.mxu0 0.0
    %3799 = vmatpush.msra.mxu0 0.0
    %3800 = vmatpush.msra.mxu0 0.0
    %3801 = vmatpush.msra.mxu0 0.0
    %3802 = vmatpush.msra.mxu0 0.0
    %3803 = vmatpush.msra.mxu0 0.0
    %3804 = vmatpush.msra.mxu0 0.0
    %3805 = vmatpush.msra.mxu0 0.0
    %3806 = vmatpush.msra.mxu0 %v3786
    %3807 = vmatmul.f32.gmra.mxu0 %v3789
    %v3808 = vpop.f32.mrf.mxu0
    %v3809 = vadd.f32 0.0, %v3808
    %3810 = vdwg.mxu0
    %3812 = vrot.lane.b32.xlu0 %v3352, 112
    %v3813 = vpop.permute.xlu0 %3812
    %v3816 = vsel %vm258, %v3755, 0
    %3818 = vmatpush.msra.mxu0 0.0
    %3819 = vmatpush.msra.mxu0 0.0
    %3820 = vmatpush.msra.mxu0 0.0
    %3821 = vmatpush.msra.mxu0 0.0
    %3822 = vmatpush.msra.mxu0 0.0
    %3823 = vmatpush.msra.mxu0 0.0
    %3824 = vmatpush.msra.mxu0 0.0
    %3825 = vmatpush.msra.mxu0 0.0
    %3826 = vmatpush.msra.mxu0 0.0
    %3827 = vmatpush.msra.mxu0 0.0
    %3828 = vmatpush.msra.mxu0 0.0
    %3829 = vmatpush.msra.mxu0 0.0
    %3830 = vmatpush.msra.mxu0 0.0
    %3831 = vmatpush.msra.mxu0 0.0
    %3832 = vmatpush.msra.mxu0 0.0
    %3833 = vmatpush.msra.mxu0 %v3813
    %3834 = vmatmul.f32.gmra.mxu0 %v3816
    %v3835 = vpop.f32.mrf.mxu0
    %v3836 = vadd.f32 0.0, %v3835
    %3837 = vdwg.mxu0
    %3839 = vrot.lane.b32.xlu0 %v3355, 112
    %v3840 = vpop.permute.xlu0 %3839
    %v3843 = vsel %vm258, %v3756, 0
    %3845 = vmatpush.msra.mxu0 0.0
    %3846 = vmatpush.msra.mxu0 0.0
    %3847 = vmatpush.msra.mxu0 0.0
    %3848 = vmatpush.msra.mxu0 0.0
    %3849 = vmatpush.msra.mxu0 0.0
    %3850 = vmatpush.msra.mxu0 0.0
    %3851 = vmatpush.msra.mxu0 0.0
    %3852 = vmatpush.msra.mxu0 0.0
    %3853 = vmatpush.msra.mxu0 0.0
    %3854 = vmatpush.msra.mxu0 0.0
    %3855 = vmatpush.msra.mxu0 0.0
    %3856 = vmatpush.msra.mxu0 0.0
    %3857 = vmatpush.msra.mxu0 0.0
    %3858 = vmatpush.msra.mxu0 0.0
    %3859 = vmatpush.msra.mxu0 0.0
    %3860 = vmatpush.msra.mxu0 %v3840
    %3861 = vmatmul.f32.gmra.mxu0 %v3843
    %v3862 = vpop.f32.mrf.mxu0
    %v3863 = vadd.f32 0.0, %v3862
    %3864 = vdwg.mxu0
    %3865 = vrot.lane.b32.xlu0 %v3317, 96
    %v3866 = vpop.permute.xlu0 %3865
    %3867 = vrot.lane.b32.xlu0 %v3317, 32
    %v3868 = vpop.permute.xlu0 %3867
    %v3869 = vsel %vm152, %v3866, 0
    %v3871 = vsel %vm152, %v3868, 0
    %3873 = vmatpush.xpose.msra.mxu0 0.0
    %3874 = vmatpush.xpose.msra.mxu0 0.0
    %3875 = vmatpush.xpose.msra.mxu0 0.0
    %3876 = vmatpush.xpose.msra.mxu0 0.0
    %3877 = vmatpush.xpose.msra.mxu0 0.0
    %3878 = vmatpush.xpose.msra.mxu0 0.0
    %3879 = vmatpush.xpose.msra.mxu0 0.0
    %3880 = vmatpush.xpose.msra.mxu0 0.0
    %3881 = vmatpush.xpose.msra.mxu0 0.0
    %3882 = vmatpush.xpose.msra.mxu0 0.0
    %3883 = vmatpush.xpose.msra.mxu0 0.0
    %3884 = vmatpush.xpose.msra.mxu0 0.0
    %3885 = vmatpush.xpose.msra.mxu0 0.0
    %3886 = vmatpush.xpose.msra.mxu0 0.0
    %3887 = vmatpush.xpose.msra.mxu0 0.0
    %3888 = vmatpush.xpose.msra.mxu0 %v3871
    %3889 = vmatmul.f32.gmra.mxu0 %v3869
    %v3890 = vpop.f32.mrf.mxu0
    %v3891 = vadd.f32 %v52, %v3890
    %3892 = vdwg.mxu0
    %3893 = vrot.lane.b32.xlu0 %v3320, 96
    %v3894 = vpop.permute.xlu0 %3893
    %3895 = vrot.lane.b32.xlu0 %v3320, 32
    %v3896 = vpop.permute.xlu0 %3895
    %v3897 = vsel %vm152, %v3894, 0
    %v3899 = vsel %vm152, %v3896, 0
    %3901 = vmatpush.xpose.msra.mxu0 0.0
    %3902 = vmatpush.xpose.msra.mxu0 0.0
    %3903 = vmatpush.xpose.msra.mxu0 0.0
    %3904 = vmatpush.xpose.msra.mxu0 0.0
    %3905 = vmatpush.xpose.msra.mxu0 0.0
    %3906 = vmatpush.xpose.msra.mxu0 0.0
    %3907 = vmatpush.xpose.msra.mxu0 0.0
    %3908 = vmatpush.xpose.msra.mxu0 0.0
    %3909 = vmatpush.xpose.msra.mxu0 0.0
    %3910 = vmatpush.xpose.msra.mxu0 0.0
    %3911 = vmatpush.xpose.msra.mxu0 0.0
    %3912 = vmatpush.xpose.msra.mxu0 0.0
    %3913 = vmatpush.xpose.msra.mxu0 0.0
    %3914 = vmatpush.xpose.msra.mxu0 0.0
    %3915 = vmatpush.xpose.msra.mxu0 0.0
    %3916 = vmatpush.xpose.msra.mxu0 %v3899
    %3917 = vmatmul.f32.gmra.mxu0 %v3897
    %v3918 = vpop.f32.mrf.mxu0
    %v3919 = vadd.f32 %v53, %v3918
    %3920 = vdwg.mxu0
    %3921 = vrot.lane.b32.xlu0 %v3323, 96
    %v3922 = vpop.permute.xlu0 %3921
    %3923 = vrot.lane.b32.xlu0 %v3323, 32
    %v3924 = vpop.permute.xlu0 %3923
    %v3925 = vsel %vm152, %v3922, 0
    %v3927 = vsel %vm152, %v3924, 0
    %3929 = vmatpush.xpose.msra.mxu0 0.0
    %3930 = vmatpush.xpose.msra.mxu0 0.0
    %3931 = vmatpush.xpose.msra.mxu0 0.0
    %3932 = vmatpush.xpose.msra.mxu0 0.0
    %3933 = vmatpush.xpose.msra.mxu0 0.0
    %3934 = vmatpush.xpose.msra.mxu0 0.0
    %3935 = vmatpush.xpose.msra.mxu0 0.0
    %3936 = vmatpush.xpose.msra.mxu0 0.0
    %3937 = vmatpush.xpose.msra.mxu0 0.0
    %3938 = vmatpush.xpose.msra.mxu0 0.0
    %3939 = vmatpush.xpose.msra.mxu0 0.0
    %3940 = vmatpush.xpose.msra.mxu0 0.0
    %3941 = vmatpush.xpose.msra.mxu0 0.0
    %3942 = vmatpush.xpose.msra.mxu0 0.0
    %3943 = vmatpush.xpose.msra.mxu0 0.0
    %3944 = vmatpush.xpose.msra.mxu0 %v3927
    %3945 = vmatmul.f32.gmra.mxu0 %v3925
    %v3946 = vpop.f32.mrf.mxu0
    %v3947 = vadd.f32 %v54, %v3946
    %3948 = vdwg.mxu0
    %3949 = vrot.lane.b32.xlu0 %v3326, 96
    %v3950 = vpop.permute.xlu0 %3949
    %3951 = vrot.lane.b32.xlu0 %v3326, 32
    %v3952 = vpop.permute.xlu0 %3951
    %v3953 = vsel %vm152, %v3950, 0
    %v3955 = vsel %vm152, %v3952, 0
    %3957 = vmatpush.xpose.msra.mxu0 0.0
    %3958 = vmatpush.xpose.msra.mxu0 0.0
    %3959 = vmatpush.xpose.msra.mxu0 0.0
    %3960 = vmatpush.xpose.msra.mxu0 0.0
    %3961 = vmatpush.xpose.msra.mxu0 0.0
    %3962 = vmatpush.xpose.msra.mxu0 0.0
    %3963 = vmatpush.xpose.msra.mxu0 0.0
    %3964 = vmatpush.xpose.msra.mxu0 0.0
    %3965 = vmatpush.xpose.msra.mxu0 0.0
    %3966 = vmatpush.xpose.msra.mxu0 0.0
    %3967 = vmatpush.xpose.msra.mxu0 0.0
    %3968 = vmatpush.xpose.msra.mxu0 0.0
    %3969 = vmatpush.xpose.msra.mxu0 0.0
    %3970 = vmatpush.xpose.msra.mxu0 0.0
    %3971 = vmatpush.xpose.msra.mxu0 0.0
    %3972 = vmatpush.xpose.msra.mxu0 %v3955
    %3973 = vmatmul.f32.gmra.mxu0 %v3953
    %v3974 = vpop.f32.mrf.mxu0
    %v3975 = vadd.f32 %v55, %v3974
    %3976 = vdwg.mxu0
    %v3977 = vsel %vm258, %v3891, -inf
    %3978 = vmax.xlane.f32.xlu0 %v3977
    %v3979 = vpop.xlane.xlu0 %3978
    %v3980 = vsel %vm258, %v3919, -inf
    %3981 = vmax.xlane.f32.xlu0 %v3980
    %v3982 = vpop.xlane.xlu0 %3981
    %v3983 = vsel %vm258, %v3947, -inf
    %3984 = vmax.xlane.f32.xlu0 %v3983
    %v3985 = vpop.xlane.xlu0 %3984
    %v3986 = vsel %vm258, %v3975, -inf
    %3987 = vmax.xlane.f32.xlu0 %v3986
    %v3988 = vpop.xlane.xlu0 %3987
    %v3989 = vsub.f32 %v3891, %v3979
    %v3990 = vsub.f32 %v3919, %v3982
    %v3991 = vsub.f32 %v3947, %v3985
    %v3992 = vsub.f32 %v3975, %v3988
    %v3993 = vmul.f32 %v3989, 1.442695
    %v3994 = vpow.pop %v3993
    %v3995 = vmul.f32 %v3990, 1.442695
    %v3996 = vpow.pop %v3995
    %v3997 = vmul.f32 %v3991, 1.442695
    %v3998 = vpow.pop %v3997
    %v3999 = vmul.f32 %v3992, 1.442695
    %v4000 = vpow.pop %v3999
    %v4001 = vsel %vm258, %v3994, 0.0
    %4002 = vadd.xlane.f32.xlu0 %v4001
    %v4003 = vpop.xlane.xlu0 %4002
    %v4004 = vsel %vm258, %v3996, 0.0
    %4005 = vadd.xlane.f32.xlu0 %v4004
    %v4006 = vpop.xlane.xlu0 %4005
    %v4007 = vsel %vm258, %v3998, 0.0
    %4008 = vadd.xlane.f32.xlu0 %v4007
    %v4009 = vpop.xlane.xlu0 %4008
    %v4010 = vsel %vm258, %v4000, 0.0
    %4011 = vadd.xlane.f32.xlu0 %v4010
    %v4012 = vpop.xlane.xlu0 %4011
    %v4013 = vrcp.pop %v4003
    %v4014 = vrcp.pop %v4006
    %v4015 = vrcp.pop %v4009
    %v4016 = vrcp.pop %v4012
    %v4017 = vmul.f32 %v3994, %v4013
    %v4018 = vmul.f32 %v3996, %v4014
    %v4019 = vmul.f32 %v3998, %v4015
    %v4020 = vmul.f32 %v4000, %v4016
    %4021 = vrot.lane.b32.xlu0 %v3346, 96
    %v4022 = vpop.permute.xlu0 %4021
    %v4025 = vsel %vm258, %v4017, 0
    %4027 = vmatpush.msra.mxu0 0.0
    %4028 = vmatpush.msra.mxu0 0.0
    %4029 = vmatpush.msra.mxu0 0.0
    %4030 = vmatpush.msra.mxu0 0.0
    %4031 = vmatpush.msra.mxu0 0.0
    %4032 = vmatpush.msra.mxu0 0.0
    %4033 = vmatpush.msra.mxu0 0.0
    %4034 = vmatpush.msra.mxu0 0.0
    %4035 = vmatpush.msra.mxu0 0.0
    %4036 = vmatpush.msra.mxu0 0.0
    %4037 = vmatpush.msra.mxu0 0.0
    %4038 = vmatpush.msra.mxu0 0.0
    %4039 = vmatpush.msra.mxu0 0.0
    %4040 = vmatpush.msra.mxu0 0.0
    %4041 = vmatpush.msra.mxu0 0.0
    %4042 = vmatpush.msra.mxu0 %v4022
    %4043 = vmatmul.f32.gmra.mxu0 %v4025
    %v4044 = vpop.f32.mrf.mxu0
    %v4045 = vadd.f32 0.0, %v4044
    %4046 = vdwg.mxu0
    %4047 = vrot.lane.b32.xlu0 %v3349, 96
    %v4048 = vpop.permute.xlu0 %4047
    %v4051 = vsel %vm258, %v4018, 0
    %4053 = vmatpush.msra.mxu0 0.0
    %4054 = vmatpush.msra.mxu0 0.0
    %4055 = vmatpush.msra.mxu0 0.0
    %4056 = vmatpush.msra.mxu0 0.0
    %4057 = vmatpush.msra.mxu0 0.0
    %4058 = vmatpush.msra.mxu0 0.0
    %4059 = vmatpush.msra.mxu0 0.0
    %4060 = vmatpush.msra.mxu0 0.0
    %4061 = vmatpush.msra.mxu0 0.0
    %4062 = vmatpush.msra.mxu0 0.0
    %4063 = vmatpush.msra.mxu0 0.0
    %4064 = vmatpush.msra.mxu0 0.0
    %4065 = vmatpush.msra.mxu0 0.0
    %4066 = vmatpush.msra.mxu0 0.0
    %4067 = vmatpush.msra.mxu0 0.0
    %4068 = vmatpush.msra.mxu0 %v4048
    %4069 = vmatmul.f32.gmra.mxu0 %v4051
    %v4070 = vpop.f32.mrf.mxu0
    %v4071 = vadd.f32 0.0, %v4070
    %4072 = vdwg.mxu0
    %4073 = vrot.lane.b32.xlu0 %v3352, 96
    %v4074 = vpop.permute.xlu0 %4073
    %v4077 = vsel %vm258, %v4019, 0
    %4079 = vmatpush.msra.mxu0 0.0
    %4080 = vmatpush.msra.mxu0 0.0
    %4081 = vmatpush.msra.mxu0 0.0
    %4082 = vmatpush.msra.mxu0 0.0
    %4083 = vmatpush.msra.mxu0 0.0
    %4084 = vmatpush.msra.mxu0 0.0
    %4085 = vmatpush.msra.mxu0 0.0
    %4086 = vmatpush.msra.mxu0 0.0
    %4087 = vmatpush.msra.mxu0 0.0
    %4088 = vmatpush.msra.mxu0 0.0
    %4089 = vmatpush.msra.mxu0 0.0
    %4090 = vmatpush.msra.mxu0 0.0
    %4091 = vmatpush.msra.mxu0 0.0
    %4092 = vmatpush.msra.mxu0 0.0
    %4093 = vmatpush.msra.mxu0 0.0
    %4094 = vmatpush.msra.mxu0 %v4074
    %4095 = vmatmul.f32.gmra.mxu0 %v4077
    %v4096 = vpop.f32.mrf.mxu0
    %v4097 = vadd.f32 0.0, %v4096
    %4098 = vdwg.mxu0
    %4099 = vrot.lane.b32.xlu0 %v3355, 96
    %v4100 = vpop.permute.xlu0 %4099
    %v4103 = vsel %vm258, %v4020, 0
    %4105 = vmatpush.msra.mxu0 0.0
    %4106 = vmatpush.msra.mxu0 0.0
    %4107 = vmatpush.msra.mxu0 0.0
    %4108 = vmatpush.msra.mxu0 0.0
    %4109 = vmatpush.msra.mxu0 0.0
    %4110 = vmatpush.msra.mxu0 0.0
    %4111 = vmatpush.msra.mxu0 0.0
    %4112 = vmatpush.msra.mxu0 0.0
    %4113 = vmatpush.msra.mxu0 0.0
    %4114 = vmatpush.msra.mxu0 0.0
    %4115 = vmatpush.msra.mxu0 0.0
    %4116 = vmatpush.msra.mxu0 0.0
    %4117 = vmatpush.msra.mxu0 0.0
    %4118 = vmatpush.msra.mxu0 0.0
    %4119 = vmatpush.msra.mxu0 0.0
    %4120 = vmatpush.msra.mxu0 %v4100
    %4121 = vmatmul.f32.gmra.mxu0 %v4103
    %v4122 = vpop.f32.mrf.mxu0
    %v4123 = vadd.f32 0.0, %v4122
    %4124 = vdwg.mxu0
    %4125 = vrot.lane.b32.xlu0 %v3317, 80
    %v4126 = vpop.permute.xlu0 %4125
    %4127 = vrot.lane.b32.xlu0 %v3317, 16
    %v4128 = vpop.permute.xlu0 %4127
    %v4129 = vsel %vm152, %v4126, 0
    %v4131 = vsel %vm152, %v4128, 0
    %4133 = vmatpush.xpose.msra.mxu0 0.0
    %4134 = vmatpush.xpose.msra.mxu0 0.0
    %4135 = vmatpush.xpose.msra.mxu0 0.0
    %4136 = vmatpush.xpose.msra.mxu0 0.0
    %4137 = vmatpush.xpose.msra.mxu0 0.0
    %4138 = vmatpush.xpose.msra.mxu0 0.0
    %4139 = vmatpush.xpose.msra.mxu0 0.0
    %4140 = vmatpush.xpose.msra.mxu0 0.0
    %4141 = vmatpush.xpose.msra.mxu0 0.0
    %4142 = vmatpush.xpose.msra.mxu0 0.0
    %4143 = vmatpush.xpose.msra.mxu0 0.0
    %4144 = vmatpush.xpose.msra.mxu0 0.0
    %4145 = vmatpush.xpose.msra.mxu0 0.0
    %4146 = vmatpush.xpose.msra.mxu0 0.0
    %4147 = vmatpush.xpose.msra.mxu0 0.0
    %4148 = vmatpush.xpose.msra.mxu0 %v4131
    %4149 = vmatmul.f32.gmra.mxu0 %v4129
    %v4150 = vpop.f32.mrf.mxu0
    %v4151 = vadd.f32 %v52, %v4150
    %4152 = vdwg.mxu0
    %4153 = vrot.lane.b32.xlu0 %v3320, 80
    %v4154 = vpop.permute.xlu0 %4153
    %4155 = vrot.lane.b32.xlu0 %v3320, 16
    %v4156 = vpop.permute.xlu0 %4155
    %v4157 = vsel %vm152, %v4154, 0
    %v4159 = vsel %vm152, %v4156, 0
    %4161 = vmatpush.xpose.msra.mxu0 0.0
    %4162 = vmatpush.xpose.msra.mxu0 0.0
    %4163 = vmatpush.xpose.msra.mxu0 0.0
    %4164 = vmatpush.xpose.msra.mxu0 0.0
    %4165 = vmatpush.xpose.msra.mxu0 0.0
    %4166 = vmatpush.xpose.msra.mxu0 0.0
    %4167 = vmatpush.xpose.msra.mxu0 0.0
    %4168 = vmatpush.xpose.msra.mxu0 0.0
    %4169 = vmatpush.xpose.msra.mxu0 0.0
    %4170 = vmatpush.xpose.msra.mxu0 0.0
    %4171 = vmatpush.xpose.msra.mxu0 0.0
    %4172 = vmatpush.xpose.msra.mxu0 0.0
    %4173 = vmatpush.xpose.msra.mxu0 0.0
    %4174 = vmatpush.xpose.msra.mxu0 0.0
    %4175 = vmatpush.xpose.msra.mxu0 0.0
    %4176 = vmatpush.xpose.msra.mxu0 %v4159
    %4177 = vmatmul.f32.gmra.mxu0 %v4157
    %v4178 = vpop.f32.mrf.mxu0
    %v4179 = vadd.f32 %v53, %v4178
    %4180 = vdwg.mxu0
    %4181 = vrot.lane.b32.xlu0 %v3323, 80
    %v4182 = vpop.permute.xlu0 %4181
    %4183 = vrot.lane.b32.xlu0 %v3323, 16
    %v4184 = vpop.permute.xlu0 %4183
    %v4185 = vsel %vm152, %v4182, 0
    %v4187 = vsel %vm152, %v4184, 0
    %4189 = vmatpush.xpose.msra.mxu0 0.0
    %4190 = vmatpush.xpose.msra.mxu0 0.0
    %4191 = vmatpush.xpose.msra.mxu0 0.0
    %4192 = vmatpush.xpose.msra.mxu0 0.0
    %4193 = vmatpush.xpose.msra.mxu0 0.0
    %4194 = vmatpush.xpose.msra.mxu0 0.0
    %4195 = vmatpush.xpose.msra.mxu0 0.0
    %4196 = vmatpush.xpose.msra.mxu0 0.0
    %4197 = vmatpush.xpose.msra.mxu0 0.0
    %4198 = vmatpush.xpose.msra.mxu0 0.0
    %4199 = vmatpush.xpose.msra.mxu0 0.0
    %4200 = vmatpush.xpose.msra.mxu0 0.0
    %4201 = vmatpush.xpose.msra.mxu0 0.0
    %4202 = vmatpush.xpose.msra.mxu0 0.0
    %4203 = vmatpush.xpose.msra.mxu0 0.0
    %4204 = vmatpush.xpose.msra.mxu0 %v4187
    %4205 = vmatmul.f32.gmra.mxu0 %v4185
    %v4206 = vpop.f32.mrf.mxu0
    %v4207 = vadd.f32 %v54, %v4206
    %4208 = vdwg.mxu0
    %4209 = vrot.lane.b32.xlu0 %v3326, 80
    %v4210 = vpop.permute.xlu0 %4209
    %4211 = vrot.lane.b32.xlu0 %v3326, 16
    %v4212 = vpop.permute.xlu0 %4211
    %v4213 = vsel %vm152, %v4210, 0
    %v4215 = vsel %vm152, %v4212, 0
    %4217 = vmatpush.xpose.msra.mxu0 0.0
    %4218 = vmatpush.xpose.msra.mxu0 0.0
    %4219 = vmatpush.xpose.msra.mxu0 0.0
    %4220 = vmatpush.xpose.msra.mxu0 0.0
    %4221 = vmatpush.xpose.msra.mxu0 0.0
    %4222 = vmatpush.xpose.msra.mxu0 0.0
    %4223 = vmatpush.xpose.msra.mxu0 0.0
    %4224 = vmatpush.xpose.msra.mxu0 0.0
    %4225 = vmatpush.xpose.msra.mxu0 0.0
    %4226 = vmatpush.xpose.msra.mxu0 0.0
    %4227 = vmatpush.xpose.msra.mxu0 0.0
    %4228 = vmatpush.xpose.msra.mxu0 0.0
    %4229 = vmatpush.xpose.msra.mxu0 0.0
    %4230 = vmatpush.xpose.msra.mxu0 0.0
    %4231 = vmatpush.xpose.msra.mxu0 0.0
    %4232 = vmatpush.xpose.msra.mxu0 %v4215
    %4233 = vmatmul.f32.gmra.mxu0 %v4213
    %v4234 = vpop.f32.mrf.mxu0
    %v4235 = vadd.f32 %v55, %v4234
    %4236 = vdwg.mxu0
    %v4237 = vsel %vm258, %v4151, -inf
    %4238 = vmax.xlane.f32.xlu0 %v4237
    %v4239 = vpop.xlane.xlu0 %4238
    %v4240 = vsel %vm258, %v4179, -inf
    %4241 = vmax.xlane.f32.xlu0 %v4240
    %v4242 = vpop.xlane.xlu0 %4241
    %v4243 = vsel %vm258, %v4207, -inf
    %4244 = vmax.xlane.f32.xlu0 %v4243
    %v4245 = vpop.xlane.xlu0 %4244
    %v4246 = vsel %vm258, %v4235, -inf
    %4247 = vmax.xlane.f32.xlu0 %v4246
    %v4248 = vpop.xlane.xlu0 %4247
    %v4249 = vsub.f32 %v4151, %v4239
    %v4250 = vsub.f32 %v4179, %v4242
    %v4251 = vsub.f32 %v4207, %v4245
    %v4252 = vsub.f32 %v4235, %v4248
    %v4253 = vmul.f32 %v4249, 1.442695
    %v4254 = vpow.pop %v4253
    %v4255 = vmul.f32 %v4250, 1.442695
    %v4256 = vpow.pop %v4255
    %v4257 = vmul.f32 %v4251, 1.442695
    %v4258 = vpow.pop %v4257
    %v4259 = vmul.f32 %v4252, 1.442695
    %v4260 = vpow.pop %v4259
    %v4261 = vsel %vm258, %v4254, 0.0
    %4262 = vadd.xlane.f32.xlu0 %v4261
    %v4263 = vpop.xlane.xlu0 %4262
    %v4264 = vsel %vm258, %v4256, 0.0
    %4265 = vadd.xlane.f32.xlu0 %v4264
    %v4266 = vpop.xlane.xlu0 %4265
    %v4267 = vsel %vm258, %v4258, 0.0
    %4268 = vadd.xlane.f32.xlu0 %v4267
    %v4269 = vpop.xlane.xlu0 %4268
    %v4270 = vsel %vm258, %v4260, 0.0
    %4271 = vadd.xlane.f32.xlu0 %v4270
    %v4272 = vpop.xlane.xlu0 %4271
    %v4273 = vrcp.pop %v4263
    %v4274 = vrcp.pop %v4266
    %v4275 = vrcp.pop %v4269
    %v4276 = vrcp.pop %v4272
    %v4277 = vmul.f32 %v4254, %v4273
    %v4278 = vmul.f32 %v4256, %v4274
    %v4279 = vmul.f32 %v4258, %v4275
    %v4280 = vmul.f32 %v4260, %v4276
    %4281 = vrot.lane.b32.xlu0 %v3346, 80
    %v4282 = vpop.permute.xlu0 %4281
    %v4285 = vsel %vm258, %v4277, 0
    %4287 = vmatpush.msra.mxu0 0.0
    %4288 = vmatpush.msra.mxu0 0.0
    %4289 = vmatpush.msra.mxu0 0.0
    %4290 = vmatpush.msra.mxu0 0.0
    %4291 = vmatpush.msra.mxu0 0.0
    %4292 = vmatpush.msra.mxu0 0.0
    %4293 = vmatpush.msra.mxu0 0.0
    %4294 = vmatpush.msra.mxu0 0.0
    %4295 = vmatpush.msra.mxu0 0.0
    %4296 = vmatpush.msra.mxu0 0.0
    %4297 = vmatpush.msra.mxu0 0.0
    %4298 = vmatpush.msra.mxu0 0.0
    %4299 = vmatpush.msra.mxu0 0.0
    %4300 = vmatpush.msra.mxu0 0.0
    %4301 = vmatpush.msra.mxu0 0.0
    %4302 = vmatpush.msra.mxu0 %v4282
    %4303 = vmatmul.f32.gmra.mxu0 %v4285
    %v4304 = vpop.f32.mrf.mxu0
    %v4305 = vadd.f32 0.0, %v4304
    %4306 = vdwg.mxu0
    %4307 = vrot.lane.b32.xlu0 %v3349, 80
    %v4308 = vpop.permute.xlu0 %4307
    %v4311 = vsel %vm258, %v4278, 0
    %4313 = vmatpush.msra.mxu0 0.0
    %4314 = vmatpush.msra.mxu0 0.0
    %4315 = vmatpush.msra.mxu0 0.0
    %4316 = vmatpush.msra.mxu0 0.0
    %4317 = vmatpush.msra.mxu0 0.0
    %4318 = vmatpush.msra.mxu0 0.0
    %4319 = vmatpush.msra.mxu0 0.0
    %4320 = vmatpush.msra.mxu0 0.0
    %4321 = vmatpush.msra.mxu0 0.0
    %4322 = vmatpush.msra.mxu0 0.0
    %4323 = vmatpush.msra.mxu0 0.0
    %4324 = vmatpush.msra.mxu0 0.0
    %4325 = vmatpush.msra.mxu0 0.0
    %4326 = vmatpush.msra.mxu0 0.0
    %4327 = vmatpush.msra.mxu0 0.0
    %4328 = vmatpush.msra.mxu0 %v4308
    %4329 = vmatmul.f32.gmra.mxu0 %v4311
    %v4330 = vpop.f32.mrf.mxu0
    %v4331 = vadd.f32 0.0, %v4330
    %4332 = vdwg.mxu0
    %4333 = vrot.lane.b32.xlu0 %v3352, 80
    %v4334 = vpop.permute.xlu0 %4333
    %v4337 = vsel %vm258, %v4279, 0
    %4339 = vmatpush.msra.mxu0 0.0
    %4340 = vmatpush.msra.mxu0 0.0
    %4341 = vmatpush.msra.mxu0 0.0
    %4342 = vmatpush.msra.mxu0 0.0
    %4343 = vmatpush.msra.mxu0 0.0
    %4344 = vmatpush.msra.mxu0 0.0
    %4345 = vmatpush.msra.mxu0 0.0
    %4346 = vmatpush.msra.mxu0 0.0
    %4347 = vmatpush.msra.mxu0 0.0
    %4348 = vmatpush.msra.mxu0 0.0
    %4349 = vmatpush.msra.mxu0 0.0
    %4350 = vmatpush.msra.mxu0 0.0
    %4351 = vmatpush.msra.mxu0 0.0
    %4352 = vmatpush.msra.mxu0 0.0
    %4353 = vmatpush.msra.mxu0 0.0
    %4354 = vmatpush.msra.mxu0 %v4334
    %4355 = vmatmul.f32.gmra.mxu0 %v4337
    %v4356 = vpop.f32.mrf.mxu0
    %v4357 = vadd.f32 0.0, %v4356
    %4358 = vdwg.mxu0
    %4359 = vrot.lane.b32.xlu0 %v3355, 80
    %v4360 = vpop.permute.xlu0 %4359
    %v4363 = vsel %vm258, %v4280, 0
    %4365 = vmatpush.msra.mxu0 0.0
    %4366 = vmatpush.msra.mxu0 0.0
    %4367 = vmatpush.msra.mxu0 0.0
    %4368 = vmatpush.msra.mxu0 0.0
    %4369 = vmatpush.msra.mxu0 0.0
    %4370 = vmatpush.msra.mxu0 0.0
    %4371 = vmatpush.msra.mxu0 0.0
    %4372 = vmatpush.msra.mxu0 0.0
    %4373 = vmatpush.msra.mxu0 0.0
    %4374 = vmatpush.msra.mxu0 0.0
    %4375 = vmatpush.msra.mxu0 0.0
    %4376 = vmatpush.msra.mxu0 0.0
    %4377 = vmatpush.msra.mxu0 0.0
    %4378 = vmatpush.msra.mxu0 0.0
    %4379 = vmatpush.msra.mxu0 0.0
    %4380 = vmatpush.msra.mxu0 %v4360
    %4381 = vmatmul.f32.gmra.mxu0 %v4363
    %v4382 = vpop.f32.mrf.mxu0
    %v4383 = vadd.f32 0.0, %v4382
    %4384 = vdwg.mxu0
    %4389 = vrot.lane.b32.xlu0 %v3782, 16
    %v4390 = vpop.permute.xlu0 %4389
    %4391 = vrot.lane.b32.xlu0 %v3809, 16
    %v4392 = vpop.permute.xlu0 %4391
    %4393 = vrot.lane.b32.xlu0 %v3836, 16
    %v4394 = vpop.permute.xlu0 %4393
    %4395 = vrot.lane.b32.xlu0 %v3863, 16
    %v4396 = vpop.permute.xlu0 %4395
    %4405 = vrot.lane.b32.xlu0 %v4045, 32
    %v4406 = vpop.permute.xlu0 %4405
    %4407 = vrot.lane.b32.xlu0 %v4071, 32
    %v4408 = vpop.permute.xlu0 %4407
    %4409 = vrot.lane.b32.xlu0 %v4097, 32
    %v4410 = vpop.permute.xlu0 %4409
    %4411 = vrot.lane.b32.xlu0 %v4123, 32
    %v4412 = vpop.permute.xlu0 %4411
    %4421 = vrot.lane.b32.xlu0 %v4305, 48
    %v4422 = vpop.permute.xlu0 %4421
    %4423 = vrot.lane.b32.xlu0 %v4331, 48
    %v4424 = vpop.permute.xlu0 %4423
    %4425 = vrot.lane.b32.xlu0 %v4357, 48
    %v4426 = vpop.permute.xlu0 %4425
    %4427 = vrot.lane.b32.xlu0 %v4383, 48
    %v4428 = vpop.permute.xlu0 %4427
    %v4433 = vsel %vm152, %v3530, %v4390
    %v4434 = vsel %vm152, %v3553, %v4392
    %v4435 = vsel %vm152, %v3576, %v4394
    %v4436 = vsel %vm152, %v3599, %v4396
    %v4437 = vsel %vm1231, %v4433, %v4406
    %v4438 = vsel %vm1231, %v4434, %v4408
    %v4439 = vsel %vm1231, %v4435, %v4410
    %v4440 = vsel %vm1231, %v4436, %v4412
    %v4441 = vsel %vm1236, %v4437, %v4422
    %v4442 = vsel %vm1236, %v4438, %v4424
    %v4443 = vsel %vm1236, %v4439, %v4426
    %v4444 = vsel %vm1236, %v4440, %v4428
    %v4445 = vld [vmem:[%s3263 + $0x8] sm:$0xff]
    %v4446 = vld [vmem:[%s3263 + $0x30] sm:$0xff]
    %v4447 = vld [vmem:[%s3263 + $0x58] sm:$0xff]
    %v4448 = vld [vmem:[%s3263 + $0x80] sm:$0xff]
    %v4449 = vld [vmem:[%s3263 + $0xa8] sm:$0xff]
    %v4450 = vld [vmem:[%s3263 + $0xd0] sm:$0xff]
    %v4451 = vld [vmem:[%s3263 + $0xf8] sm:$0xff]
    %v4452 = vld [vmem:[%s3263 + $0x120] sm:$0xff]
    %v4453 = vld [vmem:[%s3280 + $0x1] sm:$0x1]
    %v4455 = vperm.slane %v4453, 0
    %4464 = vrot.lane.b32.xlu0 %v4445, 64
    %v4465 = vpop.permute.xlu0 %4464
    %4466 = vrot.lane.b32.xlu0 %v4446, 64
    %v4467 = vpop.permute.xlu0 %4466
    %4468 = vrot.lane.b32.xlu0 %v4447, 64
    %v4469 = vpop.permute.xlu0 %4468
    %4470 = vrot.lane.b32.xlu0 %v4448, 64
    %v4471 = vpop.permute.xlu0 %4470
    %4472 = vrot.lane.b32.xlu0 %v4449, 64
    %v4473 = vpop.permute.xlu0 %4472
    %4474 = vrot.lane.b32.xlu0 %v4450, 64
    %v4475 = vpop.permute.xlu0 %4474
    %4476 = vrot.lane.b32.xlu0 %v4451, 64
    %v4477 = vpop.permute.xlu0 %4476
    %4478 = vrot.lane.b32.xlu0 %v4452, 64
    %v4479 = vpop.permute.xlu0 %4478
    %4488 = vrot.lane.b32.xlu0 %v4455, 64
    %v4489 = vpop.permute.xlu0 %4488
    %v4492 = vsel %vm78, %v4441, 0
    %v4495 = vsel %vm78, %v4442, 0
    %v4498 = vsel %vm78, %v4443, 0
    %v4501 = vsel %vm78, %v4444, 0
    %4503 = vmatpush.msra.mxu0 0.0
    %4504 = vmatpush.msra.mxu0 0.0
    %4505 = vmatpush.msra.mxu0 0.0
    %4506 = vmatpush.msra.mxu0 0.0
    %4507 = vmatpush.msra.mxu0 0.0
    %4508 = vmatpush.msra.mxu0 0.0
    %4509 = vmatpush.msra.mxu0 0.0
    %4510 = vmatpush.msra.mxu0 0.0
    %4511 = vmatpush.msra.mxu0 %v4479
    %4512 = vmatpush.msra.mxu0 %v4477
    %4513 = vmatpush.msra.mxu0 %v4475
    %4514 = vmatpush.msra.mxu0 %v4473
    %4515 = vmatpush.msra.mxu0 %v4471
    %4516 = vmatpush.msra.mxu0 %v4469
    %4517 = vmatpush.msra.mxu0 %v4467
    %4518 = vmatpush.msra.mxu0 %v4465
    %4519 = vmatmul.f32.gmra.mxu0 %v4492
    %v4520 = vpop.f32.mrf.mxu0
    %v4521 = vadd.f32 %v4489, %v4520
    %4522 = vmatmul.f32.gmra.mxu0 %v4495
    %v4523 = vpop.f32.mrf.mxu0
    %v4524 = vadd.f32 %v4489, %v4523
    %4525 = vmatmul.f32.gmra.mxu0 %v4498
    %v4526 = vpop.f32.mrf.mxu0
    %v4527 = vadd.f32 %v4489, %v4526
    %4528 = vmatmul.f32.gmra.mxu0 %v4501
    %v4529 = vpop.f32.mrf.mxu0
    %v4530 = vadd.f32 %v4489, %v4529
    %4531 = vdwg.mxu0
    %v4532 = vadd.f32 %v3259, %v4521
    %v4533 = vadd.f32 %v3260, %v4524
    %v4534 = vadd.f32 %v3261, %v4527
    %v4535 = vadd.f32 %v3262, %v4530
    %v4536 = vld [vmem:[%s3280 + $0x5] sm:$0x1]
    %v4537 = vld [vmem:[%s3280 + $0x6] sm:$0x1]
    %v4538 = vsel %vm78, %v4532, 0.0
    %4539 = vadd.xlane.f32.xlu0 %v4538
    %v4540 = vpop.xlane.xlu0 %4539
    %v4541 = vsel %vm78, %v4533, 0.0
    %4542 = vadd.xlane.f32.xlu0 %v4541
    %v4543 = vpop.xlane.xlu0 %4542
    %v4544 = vsel %vm78, %v4534, 0.0
    %4545 = vadd.xlane.f32.xlu0 %v4544
    %v4546 = vpop.xlane.xlu0 %4545
    %v4547 = vsel %vm78, %v4535, 0.0
    %4548 = vadd.xlane.f32.xlu0 %v4547
    %v4549 = vpop.xlane.xlu0 %4548
    %v4550 = vmul.f32 %v4540, %v1352
    %v4551 = vmul.f32 %v4543, %v1352
    %v4552 = vmul.f32 %v4546, %v1352
    %v4553 = vmul.f32 %v4549, %v1352
    %v4554 = vsub.f32 %v4532, %v4550
    %v4555 = vsub.f32 %v4533, %v4551
    %v4556 = vsub.f32 %v4534, %v4552
    %v4557 = vsub.f32 %v4535, %v4553
    %v4558 = vmul.f32 %v4554, %v4554
    %v4559 = vmul.f32 %v4555, %v4555
    %v4560 = vmul.f32 %v4556, %v4556
    %v4561 = vmul.f32 %v4557, %v4557
    %v4562 = vsel %vm78, %v4558, 0.0
    %4563 = vadd.xlane.f32.xlu0 %v4562
    %v4564 = vpop.xlane.xlu0 %4563
    %v4565 = vsel %vm78, %v4559, 0.0
    %4566 = vadd.xlane.f32.xlu0 %v4565
    %v4567 = vpop.xlane.xlu0 %4566
    %v4568 = vsel %vm78, %v4560, 0.0
    %4569 = vadd.xlane.f32.xlu0 %v4568
    %v4570 = vpop.xlane.xlu0 %4569
    %v4571 = vsel %vm78, %v4561, 0.0
    %4572 = vadd.xlane.f32.xlu0 %v4571
    %v4573 = vpop.xlane.xlu0 %4572
    %v4574 = vmul.f32 %v4564, %v1352
    %v4575 = vmul.f32 %v4567, %v1352
    %v4576 = vmul.f32 %v4570, %v1352
    %v4577 = vmul.f32 %v4573, %v1352
    %v4578 = vadd.f32 %v4574, 1e-05
    %v4579 = vadd.f32 %v4575, 1e-05
    %v4580 = vadd.f32 %v4576, 1e-05
    %v4581 = vadd.f32 %v4577, 1e-05
    %v4582 = vrsqrt.pop %v4578
    %v4583 = vmul.f32 %v4582, %v4578
    %v4584 = vmul.f32 %v4583, %v4582
    %v4585 = vmul.f32 0.5, %v4584
    %v4586 = vsub.f32 1.5, %v4585
    %v4587 = vmul.f32 %v4582, %v4586
    %vm4588 = vweird.f32 %v4578
    %vm4589 = vweird.f32 %v4582
    %vm4590 = vmor %vm4588, %vm4589
    %v4591 = vsel %vm4590, %v4582, %v4587
    %v4592 = vrsqrt.pop %v4579
    %v4593 = vmul.f32 %v4592, %v4579
    %v4594 = vmul.f32 %v4593, %v4592
    %v4595 = vmul.f32 0.5, %v4594
    %v4596 = vsub.f32 1.5, %v4595
    %v4597 = vmul.f32 %v4592, %v4596
    %vm4598 = vweird.f32 %v4579
    %vm4599 = vweird.f32 %v4592
    %vm4600 = vmor %vm4598, %vm4599
    %v4601 = vsel %vm4600, %v4592, %v4597
    %v4602 = vrsqrt.pop %v4580
    %v4603 = vmul.f32 %v4602, %v4580
    %v4604 = vmul.f32 %v4603, %v4602
    %v4605 = vmul.f32 0.5, %v4604
    %v4606 = vsub.f32 1.5, %v4605
    %v4607 = vmul.f32 %v4602, %v4606
    %vm4608 = vweird.f32 %v4580
    %vm4609 = vweird.f32 %v4602
    %vm4610 = vmor %vm4608, %vm4609
    %v4611 = vsel %vm4610, %v4602, %v4607
    %v4612 = vrsqrt.pop %v4581
    %v4613 = vmul.f32 %v4612, %v4581
    %v4614 = vmul.f32 %v4613, %v4612
    %v4615 = vmul.f32 0.5, %v4614
    %v4616 = vsub.f32 1.5, %v4615
    %v4617 = vmul.f32 %v4612, %v4616
    %vm4618 = vweird.f32 %v4581
    %vm4619 = vweird.f32 %v4612
    %vm4620 = vmor %vm4618, %vm4619
    %v4621 = vsel %vm4620, %v4612, %v4617
    %v4622 = vmul.f32 %v4554, %v4591
    %v4623 = vmul.f32 %v4555, %v4601
    %v4624 = vmul.f32 %v4556, %v4611
    %v4625 = vmul.f32 %v4557, %v4621
    %v4627 = vperm.slane %v4536, 0
    %4628 = vrot.lane.b32.xlu0 %v4627, 64
    %v4629 = vpop.permute.xlu0 %4628
    %v4631 = vmul.f32 %v4622, %v4629
    %v4632 = vmul.f32 %v4623, %v4629
    %v4633 = vmul.f32 %v4624, %v4629
    %v4634 = vmul.f32 %v4625, %v4629
    %v4636 = vperm.slane %v4537, 0
    %v4638 = vadd.f32 %v4631, %v4636
    %v4639 = vadd.f32 %v4632, %v4636
    %v4640 = vadd.f32 %v4633, %v4636
    %v4641 = vadd.f32 %v4634, %v4636
    %v4642 = vld [vmem:[%s3263 + $0x10] sm:$0xff]
    %v4643 = vld [vmem:[%s3263 + $0x38] sm:$0xff]
    %v4644 = vld [vmem:[%s3263 + $0x60] sm:$0xff]
    %v4645 = vld [vmem:[%s3263 + $0x88] sm:$0xff]
    %v4646 = vld [vmem:[%s3263 + $0xb0] sm:$0xff]
    %v4647 = vld [vmem:[%s3263 + $0xd8] sm:$0xff]
    %v4648 = vld [vmem:[%s3263 + $0x100] sm:$0xff]
    %v4649 = vld [vmem:[%s3263 + $0x128] sm:$0xff]
    %v4650 = vld [vmem:[%s3280 + $0x2] sm:$0x1]
    %v4652 = vperm.slane %v4650, 0
    %v4655 = vsel %vm78, %v4638, 0
    %v4658 = vsel %vm78, %v4639, 0
    %v4661 = vsel %vm78, %v4640, 0
    %v4664 = vsel %vm78, %v4641, 0
    %4666 = vmatpush.msra.mxu0 0.0
    %4667 = vmatpush.msra.mxu0 0.0
    %4668 = vmatpush.msra.mxu0 0.0
    %4669 = vmatpush.msra.mxu0 0.0
    %4670 = vmatpush.msra.mxu0 0.0
    %4671 = vmatpush.msra.mxu0 0.0
    %4672 = vmatpush.msra.mxu0 0.0
    %4673 = vmatpush.msra.mxu0 0.0
    %4674 = vmatpush.msra.mxu0 %v4649
    %4675 = vmatpush.msra.mxu0 %v4648
    %4676 = vmatpush.msra.mxu0 %v4647
    %4677 = vmatpush.msra.mxu0 %v4646
    %4678 = vmatpush.msra.mxu0 %v4645
    %4679 = vmatpush.msra.mxu0 %v4644
    %4680 = vmatpush.msra.mxu0 %v4643
    %4681 = vmatpush.msra.mxu0 %v4642
    %4682 = vmatmul.f32.gmra.mxu0 %v4655
    %v4683 = vpop.f32.mrf.mxu0
    %v4684 = vadd.f32 %v4652, %v4683
    %4685 = vmatmul.f32.gmra.mxu0 %v4658
    %v4686 = vpop.f32.mrf.mxu0
    %v4687 = vadd.f32 %v4652, %v4686
    %4688 = vmatmul.f32.gmra.mxu0 %v4661
    %v4689 = vpop.f32.mrf.mxu0
    %v4690 = vadd.f32 %v4652, %v4689
    %4691 = vmatmul.f32.gmra.mxu0 %v4664
    %v4692 = vpop.f32.mrf.mxu0
    %v4693 = vadd.f32 %v4652, %v4692
    %4694 = vdwg.mxu0
    %v4695 = vld [vmem:[%s3263 + $0x10] sm:$0xff]
    %v4696 = vld [vmem:[%s3263 + $0x18] sm:$0xff]
    %v4697 = vld [vmem:[%s3263 + $0x38] sm:$0xff]
    %v4698 = vld [vmem:[%s3263 + $0x40] sm:$0xff]
    %v4699 = vld [vmem:[%s3263 + $0x60] sm:$0xff]
    %v4700 = vld [vmem:[%s3263 + $0x68] sm:$0xff]
    %v4701 = vld [vmem:[%s3263 + $0x88] sm:$0xff]
    %v4702 = vld [vmem:[%s3263 + $0x90] sm:$0xff]
    %v4703 = vld [vmem:[%s3263 + $0xb0] sm:$0xff]
    %v4704 = vld [vmem:[%s3263 + $0xb8] sm:$0xff]
    %v4705 = vld [vmem:[%s3263 + $0xd8] sm:$0xff]
    %v4706 = vld [vmem:[%s3263 + $0xe0] sm:$0xff]
    %v4707 = vld [vmem:[%s3263 + $0x100] sm:$0xff]
    %v4708 = vld [vmem:[%s3263 + $0x108] sm:$0xff]
    %v4709 = vld [vmem:[%s3263 + $0x128] sm:$0xff]
    %v4710 = vld [vmem:[%s3263 + $0x130] sm:$0xff]
    %v4711 = vld [vmem:[%s3280 + $0x2] sm:$0x3]
    %v4713 = vperm.slane %v4711, 0
    %v4714 = vperm.slane %v4711, 1
    %4731 = vrot.lane.b32.xlu0 %v4695, 64
    %v4732 = vpop.permute.xlu0 %4731
    %4733 = vrot.lane.b32.xlu0 %v4696, 64
    %v4734 = vpop.permute.xlu0 %4733
    %4735 = vrot.lane.b32.xlu0 %v4697, 64
    %v4736 = vpop.permute.xlu0 %4735
    %4737 = vrot.lane.b32.xlu0 %v4698, 64
    %v4738 = vpop.permute.xlu0 %4737
    %4739 = vrot.lane.b32.xlu0 %v4699, 64
    %v4740 = vpop.permute.xlu0 %4739
    %4741 = vrot.lane.b32.xlu0 %v4700, 64
    %v4742 = vpop.permute.xlu0 %4741
    %4743 = vrot.lane.b32.xlu0 %v4701, 64
    %v4744 = vpop.permute.xlu0 %4743
    %4745 = vrot.lane.b32.xlu0 %v4702, 64
    %v4746 = vpop.permute.xlu0 %4745
    %4747 = vrot.lane.b32.xlu0 %v4703, 64
    %v4748 = vpop.permute.xlu0 %4747
    %4749 = vrot.lane.b32.xlu0 %v4704, 64
    %v4750 = vpop.permute.xlu0 %4749
    %4751 = vrot.lane.b32.xlu0 %v4705, 64
    %v4752 = vpop.permute.xlu0 %4751
    %4753 = vrot.lane.b32.xlu0 %v4706, 64
    %v4754 = vpop.permute.xlu0 %4753
    %4755 = vrot.lane.b32.xlu0 %v4707, 64
    %v4756 = vpop.permute.xlu0 %4755
    %4757 = vrot.lane.b32.xlu0 %v4708, 64
    %v4758 = vpop.permute.xlu0 %4757
    %4759 = vrot.lane.b32.xlu0 %v4709, 64
    %v4760 = vpop.permute.xlu0 %4759
    %4761 = vrot.lane.b32.xlu0 %v4710, 64
    %v4762 = vpop.permute.xlu0 %4761
    %v4763 = vsel %vm78, %v4732, %v4734
    %v4764 = vsel %vm78, %v4736, %v4738
    %v4765 = vsel %vm78, %v4740, %v4742
    %v4766 = vsel %vm78, %v4744, %v4746
    %v4767 = vsel %vm78, %v4748, %v4750
    %v4768 = vsel %vm78, %v4752, %v4754
    %v4769 = vsel %vm78, %v4756, %v4758
    %v4770 = vsel %vm78, %v4760, %v4762
    %4779 = vrot.lane.b32.xlu0 %v4713, 64
    %v4780 = vpop.permute.xlu0 %4779
    %4781 = vrot.lane.b32.xlu0 %v4714, 64
    %v4782 = vpop.permute.xlu0 %4781
    %v4783 = vsel %vm78, %v4780, %v4782
    %4785 = vmatpush.msra.mxu0 0.0
    %4786 = vmatpush.msra.mxu0 0.0
    %4787 = vmatpush.msra.mxu0 0.0
    %4788 = vmatpush.msra.mxu0 0.0
    %4789 = vmatpush.msra.mxu0 0.0
    %4790 = vmatpush.msra.mxu0 0.0
    %4791 = vmatpush.msra.mxu0 0.0
    %4792 = vmatpush.msra.mxu0 0.0
    %4793 = vmatpush.msra.mxu0 %v4770
    %4794 = vmatpush.msra.mxu0 %v4769
    %4795 = vmatpush.msra.mxu0 %v4768
    %4796 = vmatpush.msra.mxu0 %v4767
    %4797 = vmatpush.msra.mxu0 %v4766
    %4798 = vmatpush.msra.mxu0 %v4765
    %4799 = vmatpush.msra.mxu0 %v4764
    %4800 = vmatpush.msra.mxu0 %v4763
    %4801 = vmatmul.f32.gmra.mxu0 %v1589
    %v4802 = vpop.f32.mrf.mxu0
    %v4803 = vadd.f32 %v4783, %v4802
    %4804 = vmatmul.f32.gmra.mxu0 %v1592
    %v4805 = vpop.f32.mrf.mxu0
    %v4806 = vadd.f32 %v4783, %v4805
    %4807 = vmatmul.f32.gmra.mxu0 %v1595
    %v4808 = vpop.f32.mrf.mxu0
    %v4809 = vadd.f32 %v4783, %v4808
    %4810 = vmatmul.f32.gmra.mxu0 %v1598
    %v4811 = vpop.f32.mrf.mxu0
    %v4812 = vadd.f32 %v4783, %v4811
    %4813 = vmatmul.f32.gmra.mxu0 %v1601
    %v4814 = vpop.f32.mrf.mxu0
    %v4815 = vadd.f32 %v4783, %v4814
    %4816 = vmatmul.f32.gmra.mxu0 %v1604
    %v4817 = vpop.f32.mrf.mxu0
    %v4818 = vadd.f32 %v4783, %v4817
    %4819 = vmatmul.f32.gmra.mxu0 %v1607
    %v4820 = vpop.f32.mrf.mxu0
    %v4821 = vadd.f32 %v4783, %v4820
    %4822 = vmatmul.f32.gmra.mxu0 %v1610
    %v4823 = vpop.f32.mrf.mxu0
    %v4824 = vadd.f32 %v4783, %v4823
    %4825 = vdwg.mxu0
    %v4827 = vsel %vm152, %v4684, 0
    %v4830 = vsel %vm152, %v4803, 0
    %v4833 = vsel %vm152, %v4806, 0
    %4835 = vmatpush.xpose.msra.mxu0 0.0
    %4836 = vmatpush.xpose.msra.mxu0 0.0
    %4837 = vmatpush.xpose.msra.mxu0 0.0
    %4838 = vmatpush.xpose.msra.mxu0 0.0
    %4839 = vmatpush.xpose.msra.mxu0 0.0
    %4840 = vmatpush.xpose.msra.mxu0 0.0
    %4841 = vmatpush.xpose.msra.mxu0 0.0
    %4842 = vmatpush.xpose.msra.mxu0 0.0
    %4843 = vmatpush.xpose.msra.mxu0 0.0
    %4844 = vmatpush.xpose.msra.mxu0 0.0
    %4845 = vmatpush.xpose.msra.mxu0 0.0
    %4846 = vmatpush.xpose.msra.mxu0 0.0
    %4847 = vmatpush.xpose.msra.mxu0 0.0
    %4848 = vmatpush.xpose.msra.mxu0 0.0
    %4849 = vmatpush.xpose.msra.mxu0 %v4833
    %4850 = vmatpush.xpose.msra.mxu0 %v4830
    %4851 = vmatmul.f32.gmra.mxu0 %v4827
    %v4852 = vpop.f32.mrf.mxu0
    %v4853 = vadd.f32 0.0, %v4852
    %4854 = vdwg.mxu0
    %v4856 = vsel %vm152, %v4687, 0
    %v4859 = vsel %vm152, %v4809, 0
    %v4862 = vsel %vm152, %v4812, 0
    %4864 = vmatpush.xpose.msra.mxu0 0.0
    %4865 = vmatpush.xpose.msra.mxu0 0.0
    %4866 = vmatpush.xpose.msra.mxu0 0.0
    %4867 = vmatpush.xpose.msra.mxu0 0.0
    %4868 = vmatpush.xpose.msra.mxu0 0.0
    %4869 = vmatpush.xpose.msra.mxu0 0.0
    %4870 = vmatpush.xpose.msra.mxu0 0.0
    %4871 = vmatpush.xpose.msra.mxu0 0.0
    %4872 = vmatpush.xpose.msra.mxu0 0.0
    %4873 = vmatpush.xpose.msra.mxu0 0.0
    %4874 = vmatpush.xpose.msra.mxu0 0.0
    %4875 = vmatpush.xpose.msra.mxu0 0.0
    %4876 = vmatpush.xpose.msra.mxu0 0.0
    %4877 = vmatpush.xpose.msra.mxu0 0.0
    %4878 = vmatpush.xpose.msra.mxu0 %v4862
    %4879 = vmatpush.xpose.msra.mxu0 %v4859
    %4880 = vmatmul.f32.gmra.mxu0 %v4856
    %v4881 = vpop.f32.mrf.mxu0
    %v4882 = vadd.f32 0.0, %v4881
    %4883 = vdwg.mxu0
    %v4885 = vsel %vm152, %v4690, 0
    %v4888 = vsel %vm152, %v4815, 0
    %v4891 = vsel %vm152, %v4818, 0
    %4893 = vmatpush.xpose.msra.mxu0 0.0
    %4894 = vmatpush.xpose.msra.mxu0 0.0
    %4895 = vmatpush.xpose.msra.mxu0 0.0
    %4896 = vmatpush.xpose.msra.mxu0 0.0
    %4897 = vmatpush.xpose.msra.mxu0 0.0
    %4898 = vmatpush.xpose.msra.mxu0 0.0
    %4899 = vmatpush.xpose.msra.mxu0 0.0
    %4900 = vmatpush.xpose.msra.mxu0 0.0
    %4901 = vmatpush.xpose.msra.mxu0 0.0
    %4902 = vmatpush.xpose.msra.mxu0 0.0
    %4903 = vmatpush.xpose.msra.mxu0 0.0
    %4904 = vmatpush.xpose.msra.mxu0 0.0
    %4905 = vmatpush.xpose.msra.mxu0 0.0
    %4906 = vmatpush.xpose.msra.mxu0 0.0
    %4907 = vmatpush.xpose.msra.mxu0 %v4891
    %4908 = vmatpush.xpose.msra.mxu0 %v4888
    %4909 = vmatmul.f32.gmra.mxu0 %v4885
    %v4910 = vpop.f32.mrf.mxu0
    %v4911 = vadd.f32 0.0, %v4910
    %4912 = vdwg.mxu0
    %v4914 = vsel %vm152, %v4693, 0
    %v4917 = vsel %vm152, %v4821, 0
    %v4920 = vsel %vm152, %v4824, 0
    %4922 = vmatpush.xpose.msra.mxu0 0.0
    %4923 = vmatpush.xpose.msra.mxu0 0.0
    %4924 = vmatpush.xpose.msra.mxu0 0.0
    %4925 = vmatpush.xpose.msra.mxu0 0.0
    %4926 = vmatpush.xpose.msra.mxu0 0.0
    %4927 = vmatpush.xpose.msra.mxu0 0.0
    %4928 = vmatpush.xpose.msra.mxu0 0.0
    %4929 = vmatpush.xpose.msra.mxu0 0.0
    %4930 = vmatpush.xpose.msra.mxu0 0.0
    %4931 = vmatpush.xpose.msra.mxu0 0.0
    %4932 = vmatpush.xpose.msra.mxu0 0.0
    %4933 = vmatpush.xpose.msra.mxu0 0.0
    %4934 = vmatpush.xpose.msra.mxu0 0.0
    %4935 = vmatpush.xpose.msra.mxu0 0.0
    %4936 = vmatpush.xpose.msra.mxu0 %v4920
    %4937 = vmatpush.xpose.msra.mxu0 %v4917
    %4938 = vmatmul.f32.gmra.mxu0 %v4914
    %v4939 = vpop.f32.mrf.mxu0
    %v4940 = vadd.f32 0.0, %v4939
    %4941 = vdwg.mxu0
    %v4942 = vsel %vm152, %v4853, -inf
    %4943 = vmax.xlane.f32.xlu0 %v4942
    %v4944 = vpop.xlane.xlu0 %4943
    %v4945 = vsel %vm152, %v4882, -inf
    %4946 = vmax.xlane.f32.xlu0 %v4945
    %v4947 = vpop.xlane.xlu0 %4946
    %v4948 = vsel %vm152, %v4911, -inf
    %4949 = vmax.xlane.f32.xlu0 %v4948
    %v4950 = vpop.xlane.xlu0 %4949
    %v4951 = vsel %vm152, %v4940, -inf
    %4952 = vmax.xlane.f32.xlu0 %v4951
    %v4953 = vpop.xlane.xlu0 %4952
    %v4954 = vsub.f32 %v4853, %v4944
    %v4955 = vsub.f32 %v4882, %v4947
    %v4956 = vsub.f32 %v4911, %v4950
    %v4957 = vsub.f32 %v4940, %v4953
    %v4958 = vmul.f32 %v4954, 1.442695
    %v4959 = vpow.pop %v4958
    %v4960 = vmul.f32 %v4955, 1.442695
    %v4961 = vpow.pop %v4960
    %v4962 = vmul.f32 %v4956, 1.442695
    %v4963 = vpow.pop %v4962
    %v4964 = vmul.f32 %v4957, 1.442695
    %v4965 = vpow.pop %v4964
    %v4966 = vsel %vm152, %v4959, 0.0
    %4967 = vadd.xlane.f32.xlu0 %v4966
    %v4968 = vpop.xlane.xlu0 %4967
    %v4969 = vsel %vm152, %v4961, 0.0
    %4970 = vadd.xlane.f32.xlu0 %v4969
    %v4971 = vpop.xlane.xlu0 %4970
    %v4972 = vsel %vm152, %v4963, 0.0
    %4973 = vadd.xlane.f32.xlu0 %v4972
    %v4974 = vpop.xlane.xlu0 %4973
    %v4975 = vsel %vm152, %v4965, 0.0
    %4976 = vadd.xlane.f32.xlu0 %v4975
    %v4977 = vpop.xlane.xlu0 %4976
    %v4978 = vrcp.pop %v4968
    %v4979 = vrcp.pop %v4971
    %v4980 = vrcp.pop %v4974
    %v4981 = vrcp.pop %v4977
    %v4982 = vmul.f32 %v4959, %v4978
    %v4983 = vmul.f32 %v4961, %v4979
    %v4984 = vmul.f32 %v4963, %v4980
    %v4985 = vmul.f32 %v4965, %v4981
    %4986 = vrot.lane.b32.xlu0 %v4803, 64
    %v4987 = vpop.permute.xlu0 %4986
    %4988 = vrot.lane.b32.xlu0 %v4806, 64
    %v4989 = vpop.permute.xlu0 %4988
    %v4993 = vsel %vm152, %v4982, 0
    %4995 = vmatpush.msra.mxu0 0.0
    %4996 = vmatpush.msra.mxu0 0.0
    %4997 = vmatpush.msra.mxu0 0.0
    %4998 = vmatpush.msra.mxu0 0.0
    %4999 = vmatpush.msra.mxu0 0.0
    %5000 = vmatpush.msra.mxu0 0.0
    %5001 = vmatpush.msra.mxu0 0.0
    %5002 = vmatpush.msra.mxu0 0.0
    %5003 = vmatpush.msra.mxu0 0.0
    %5004 = vmatpush.msra.mxu0 0.0
    %5005 = vmatpush.msra.mxu0 0.0
    %5006 = vmatpush.msra.mxu0 0.0
    %5007 = vmatpush.msra.mxu0 0.0
    %5008 = vmatpush.msra.mxu0 0.0
    %5009 = vmatpush.msra.mxu0 %v4989
    %5010 = vmatpush.msra.mxu0 %v4987
    %5011 = vmatmul.f32.gmra.mxu0 %v4993
    %v5012 = vpop.f32.mrf.mxu0
    %v5013 = vadd.f32 0.0, %v5012
    %5014 = vdwg.mxu0
    %5015 = vrot.lane.b32.xlu0 %v4809, 64
    %v5016 = vpop.permute.xlu0 %5015
    %5017 = vrot.lane.b32.xlu0 %v4812, 64
    %v5018 = vpop.permute.xlu0 %5017
    %v5022 = vsel %vm152, %v4983, 0
    %5024 = vmatpush.msra.mxu0 0.0
    %5025 = vmatpush.msra.mxu0 0.0
    %5026 = vmatpush.msra.mxu0 0.0
    %5027 = vmatpush.msra.mxu0 0.0
    %5028 = vmatpush.msra.mxu0 0.0
    %5029 = vmatpush.msra.mxu0 0.0
    %5030 = vmatpush.msra.mxu0 0.0
    %5031 = vmatpush.msra.mxu0 0.0
    %5032 = vmatpush.msra.mxu0 0.0
    %5033 = vmatpush.msra.mxu0 0.0
    %5034 = vmatpush.msra.mxu0 0.0
    %5035 = vmatpush.msra.mxu0 0.0
    %5036 = vmatpush.msra.mxu0 0.0
    %5037 = vmatpush.msra.mxu0 0.0
    %5038 = vmatpush.msra.mxu0 %v5018
    %5039 = vmatpush.msra.mxu0 %v5016
    %5040 = vmatmul.f32.gmra.mxu0 %v5022
    %v5041 = vpop.f32.mrf.mxu0
    %v5042 = vadd.f32 0.0, %v5041
    %5043 = vdwg.mxu0
    %5044 = vrot.lane.b32.xlu0 %v4815, 64
    %v5045 = vpop.permute.xlu0 %5044
    %5046 = vrot.lane.b32.xlu0 %v4818, 64
    %v5047 = vpop.permute.xlu0 %5046
    %v5051 = vsel %vm152, %v4984, 0
    %5053 = vmatpush.msra.mxu0 0.0
    %5054 = vmatpush.msra.mxu0 0.0
    %5055 = vmatpush.msra.mxu0 0.0
    %5056 = vmatpush.msra.mxu0 0.0
    %5057 = vmatpush.msra.mxu0 0.0
    %5058 = vmatpush.msra.mxu0 0.0
    %5059 = vmatpush.msra.mxu0 0.0
    %5060 = vmatpush.msra.mxu0 0.0
    %5061 = vmatpush.msra.mxu0 0.0
    %5062 = vmatpush.msra.mxu0 0.0
    %5063 = vmatpush.msra.mxu0 0.0
    %5064 = vmatpush.msra.mxu0 0.0
    %5065 = vmatpush.msra.mxu0 0.0
    %5066 = vmatpush.msra.mxu0 0.0
    %5067 = vmatpush.msra.mxu0 %v5047
    %5068 = vmatpush.msra.mxu0 %v5045
    %5069 = vmatmul.f32.gmra.mxu0 %v5051
    %v5070 = vpop.f32.mrf.mxu0
    %v5071 = vadd.f32 0.0, %v5070
    %5072 = vdwg.mxu0
    %5073 = vrot.lane.b32.xlu0 %v4821, 64
    %v5074 = vpop.permute.xlu0 %5073
    %5075 = vrot.lane.b32.xlu0 %v4824, 64
    %v5076 = vpop.permute.xlu0 %5075
    %v5080 = vsel %vm152, %v4985, 0
    %5082 = vmatpush.msra.mxu0 0.0
    %5083 = vmatpush.msra.mxu0 0.0
    %5084 = vmatpush.msra.mxu0 0.0
    %5085 = vmatpush.msra.mxu0 0.0
    %5086 = vmatpush.msra.mxu0 0.0
    %5087 = vmatpush.msra.mxu0 0.0
    %5088 = vmatpush.msra.mxu0 0.0
    %5089 = vmatpush.msra.mxu0 0.0
    %5090 = vmatpush.msra.mxu0 0.0
    %5091 = vmatpush.msra.mxu0 0.0
    %5092 = vmatpush.msra.mxu0 0.0
    %5093 = vmatpush.msra.mxu0 0.0
    %5094 = vmatpush.msra.mxu0 0.0
    %5095 = vmatpush.msra.mxu0 0.0
    %5096 = vmatpush.msra.mxu0 %v5076
    %5097 = vmatpush.msra.mxu0 %v5074
    %5098 = vmatmul.f32.gmra.mxu0 %v5080
    %v5099 = vpop.f32.mrf.mxu0
    %v5100 = vadd.f32 0.0, %v5099
    %5101 = vdwg.mxu0
    %5102 = vrot.lane.b32.xlu0 %v4684, 112
    %v5103 = vpop.permute.xlu0 %5102
    %5104 = vrot.lane.b32.xlu0 %v4803, 112
    %v5105 = vpop.permute.xlu0 %5104
    %5106 = vrot.lane.b32.xlu0 %v4806, 112
    %v5107 = vpop.permute.xlu0 %5106
    %v5108 = vsel %vm152, %v5103, 0
    %v5110 = vsel %vm152, %v5105, 0
    %v5112 = vsel %vm152, %v5107, 0
    %5114 = vmatpush.xpose.msra.mxu0 0.0
    %5115 = vmatpush.xpose.msra.mxu0 0.0
    %5116 = vmatpush.xpose.msra.mxu0 0.0
    %5117 = vmatpush.xpose.msra.mxu0 0.0
    %5118 = vmatpush.xpose.msra.mxu0 0.0
    %5119 = vmatpush.xpose.msra.mxu0 0.0
    %5120 = vmatpush.xpose.msra.mxu0 0.0
    %5121 = vmatpush.xpose.msra.mxu0 0.0
    %5122 = vmatpush.xpose.msra.mxu0 0.0
    %5123 = vmatpush.xpose.msra.mxu0 0.0
    %5124 = vmatpush.xpose.msra.mxu0 0.0
    %5125 = vmatpush.xpose.msra.mxu0 0.0
    %5126 = vmatpush.xpose.msra.mxu0 0.0
    %5127 = vmatpush.xpose.msra.mxu0 0.0
    %5128 = vmatpush.xpose.msra.mxu0 %v5112
    %5129 = vmatpush.xpose.msra.mxu0 %v5110
    %5130 = vmatmul.f32.gmra.mxu0 %v5108
    %v5131 = vpop.f32.mrf.mxu0
    %v5132 = vadd.f32 0.0, %v5131
    %5133 = vdwg.mxu0
    %5134 = vrot.lane.b32.xlu0 %v4687, 112
    %v5135 = vpop.permute.xlu0 %5134
    %5136 = vrot.lane.b32.xlu0 %v4809, 112
    %v5137 = vpop.permute.xlu0 %5136
    %5138 = vrot.lane.b32.xlu0 %v4812, 112
    %v5139 = vpop.permute.xlu0 %5138
    %v5140 = vsel %vm152, %v5135, 0
    %v5142 = vsel %vm152, %v5137, 0
    %v5144 = vsel %vm152, %v5139, 0
    %5146 = vmatpush.xpose.msra.mxu0 0.0
    %5147 = vmatpush.xpose.msra.mxu0 0.0
    %5148 = vmatpush.xpose.msra.mxu0 0.0
    %5149 = vmatpush.xpose.msra.mxu0 0.0
    %5150 = vmatpush.xpose.msra.mxu0 0.0
    %5151 = vmatpush.xpose.msra.mxu0 0.0
    %5152 = vmatpush.xpose.msra.mxu0 0.0
    %5153 = vmatpush.xpose.msra.mxu0 0.0
    %5154 = vmatpush.xpose.msra.mxu0 0.0
    %5155 = vmatpush.xpose.msra.mxu0 0.0
    %5156 = vmatpush.xpose.msra.mxu0 0.0
    %5157 = vmatpush.xpose.msra.mxu0 0.0
    %5158 = vmatpush.xpose.msra.mxu0 0.0
    %5159 = vmatpush.xpose.msra.mxu0 0.0
    %5160 = vmatpush.xpose.msra.mxu0 %v5144
    %5161 = vmatpush.xpose.msra.mxu0 %v5142
    %5162 = vmatmul.f32.gmra.mxu0 %v5140
    %v5163 = vpop.f32.mrf.mxu0
    %v5164 = vadd.f32 0.0, %v5163
    %5165 = vdwg.mxu0
    %5166 = vrot.lane.b32.xlu0 %v4690, 112
    %v5167 = vpop.permute.xlu0 %5166
    %5168 = vrot.lane.b32.xlu0 %v4815, 112
    %v5169 = vpop.permute.xlu0 %5168
    %5170 = vrot.lane.b32.xlu0 %v4818, 112
    %v5171 = vpop.permute.xlu0 %5170
    %v5172 = vsel %vm152, %v5167, 0
    %v5174 = vsel %vm152, %v5169, 0
    %v5176 = vsel %vm152, %v5171, 0
    %5178 = vmatpush.xpose.msra.mxu0 0.0
    %5179 = vmatpush.xpose.msra.mxu0 0.0
    %5180 = vmatpush.xpose.msra.mxu0 0.0
    %5181 = vmatpush.xpose.msra.mxu0 0.0
    %5182 = vmatpush.xpose.msra.mxu0 0.0
    %5183 = vmatpush.xpose.msra.mxu0 0.0
    %5184 = vmatpush.xpose.msra.mxu0 0.0
    %5185 = vmatpush.xpose.msra.mxu0 0.0
    %5186 = vmatpush.xpose.msra.mxu0 0.0
    %5187 = vmatpush.xpose.msra.mxu0 0.0
    %5188 = vmatpush.xpose.msra.mxu0 0.0
    %5189 = vmatpush.xpose.msra.mxu0 0.0
    %5190 = vmatpush.xpose.msra.mxu0 0.0
    %5191 = vmatpush.xpose.msra.mxu0 0.0
    %5192 = vmatpush.xpose.msra.mxu0 %v5176
    %5193 = vmatpush.xpose.msra.mxu0 %v5174
    %5194 = vmatmul.f32.gmra.mxu0 %v5172
    %v5195 = vpop.f32.mrf.mxu0
    %v5196 = vadd.f32 0.0, %v5195
    %5197 = vdwg.mxu0
    %5198 = vrot.lane.b32.xlu0 %v4693, 112
    %v5199 = vpop.permute.xlu0 %5198
    %5200 = vrot.lane.b32.xlu0 %v4821, 112
    %v5201 = vpop.permute.xlu0 %5200
    %5202 = vrot.lane.b32.xlu0 %v4824, 112
    %v5203 = vpop.permute.xlu0 %5202
    %v5204 = vsel %vm152, %v5199, 0
    %v5206 = vsel %vm152, %v5201, 0
    %v5208 = vsel %vm152, %v5203, 0
    %5210 = vmatpush.xpose.msra.mxu0 0.0
    %5211 = vmatpush.xpose.msra.mxu0 0.0
    %5212 = vmatpush.xpose.msra.mxu0 0.0
    %5213 = vmatpush.xpose.msra.mxu0 0.0
    %5214 = vmatpush.xpose.msra.mxu0 0.0
    %5215 = vmatpush.xpose.msra.mxu0 0.0
    %5216 = vmatpush.xpose.msra.mxu0 0.0
    %5217 = vmatpush.xpose.msra.mxu0 0.0
    %5218 = vmatpush.xpose.msra.mxu0 0.0
    %5219 = vmatpush.xpose.msra.mxu0 0.0
    %5220 = vmatpush.xpose.msra.mxu0 0.0
    %5221 = vmatpush.xpose.msra.mxu0 0.0
    %5222 = vmatpush.xpose.msra.mxu0 0.0
    %5223 = vmatpush.xpose.msra.mxu0 0.0
    %5224 = vmatpush.xpose.msra.mxu0 %v5208
    %5225 = vmatpush.xpose.msra.mxu0 %v5206
    %5226 = vmatmul.f32.gmra.mxu0 %v5204
    %v5227 = vpop.f32.mrf.mxu0
    %v5228 = vadd.f32 0.0, %v5227
    %5229 = vdwg.mxu0
    %v5230 = vsel %vm152, %v5132, -inf
    %5231 = vmax.xlane.f32.xlu0 %v5230
    %v5232 = vpop.xlane.xlu0 %5231
    %v5233 = vsel %vm152, %v5164, -inf
    %5234 = vmax.xlane.f32.xlu0 %v5233
    %v5235 = vpop.xlane.xlu0 %5234
    %v5236 = vsel %vm152, %v5196, -inf
    %5237 = vmax.xlane.f32.xlu0 %v5236
    %v5238 = vpop.xlane.xlu0 %5237
    %v5239 = vsel %vm152, %v5228, -inf
    %5240 = vmax.xlane.f32.xlu0 %v5239
    %v5241 = vpop.xlane.xlu0 %5240
    %v5242 = vsub.f32 %v5132, %v5232
    %v5243 = vsub.f32 %v5164, %v5235
    %v5244 = vsub.f32 %v5196, %v5238
    %v5245 = vsub.f32 %v5228, %v5241
    %v5246 = vmul.f32 %v5242, 1.442695
    %v5247 = vpow.pop %v5246
    %v5248 = vmul.f32 %v5243, 1.442695
    %v5249 = vpow.pop %v5248
    %v5250 = vmul.f32 %v5244, 1.442695
    %v5251 = vpow.pop %v5250
    %v5252 = vmul.f32 %v5245, 1.442695
    %v5253 = vpow.pop %v5252
    %v5254 = vsel %vm152, %v5247, 0.0
    %5255 = vadd.xlane.f32.xlu0 %v5254
    %v5256 = vpop.xlane.xlu0 %5255
    %v5257 = vsel %vm152, %v5249, 0.0
    %5258 = vadd.xlane.f32.xlu0 %v5257
    %v5259 = vpop.xlane.xlu0 %5258
    %v5260 = vsel %vm152, %v5251, 0.0
    %5261 = vadd.xlane.f32.xlu0 %v5260
    %v5262 = vpop.xlane.xlu0 %5261
    %v5263 = vsel %vm152, %v5253, 0.0
    %5264 = vadd.xlane.f32.xlu0 %v5263
    %v5265 = vpop.xlane.xlu0 %5264
    %v5266 = vrcp.pop %v5256
    %v5267 = vrcp.pop %v5259
    %v5268 = vrcp.pop %v5262
    %v5269 = vrcp.pop %v5265
    %v5270 = vmul.f32 %v5247, %v5266
    %v5271 = vmul.f32 %v5249, %v5267
    %v5272 = vmul.f32 %v5251, %v5268
    %v5273 = vmul.f32 %v5253, %v5269
    %5274 = vrot.lane.b32.xlu0 %v4803, 48
    %v5275 = vpop.permute.xlu0 %5274
    %5276 = vrot.lane.b32.xlu0 %v4806, 48
    %v5277 = vpop.permute.xlu0 %5276
    %v5281 = vsel %vm152, %v5270, 0
    %5283 = vmatpush.msra.mxu0 0.0
    %5284 = vmatpush.msra.mxu0 0.0
    %5285 = vmatpush.msra.mxu0 0.0
    %5286 = vmatpush.msra.mxu0 0.0
    %5287 = vmatpush.msra.mxu0 0.0
    %5288 = vmatpush.msra.mxu0 0.0
    %5289 = vmatpush.msra.mxu0 0.0
    %5290 = vmatpush.msra.mxu0 0.0
    %5291 = vmatpush.msra.mxu0 0.0
    %5292 = vmatpush.msra.mxu0 0.0
    %5293 = vmatpush.msra.mxu0 0.0
    %5294 = vmatpush.msra.mxu0 0.0
    %5295 = vmatpush.msra.mxu0 0.0
    %5296 = vmatpush.msra.mxu0 0.0
    %5297 = vmatpush.msra.mxu0 %v5277
    %5298 = vmatpush.msra.mxu0 %v5275
    %5299 = vmatmul.f32.gmra.mxu0 %v5281
    %v5300 = vpop.f32.mrf.mxu0
    %v5301 = vadd.f32 0.0, %v5300
    %5302 = vdwg.mxu0
    %5303 = vrot.lane.b32.xlu0 %v4809, 48
    %v5304 = vpop.permute.xlu0 %5303
    %5305 = vrot.lane.b32.xlu0 %v4812, 48
    %v5306 = vpop.permute.xlu0 %5305
    %v5310 = vsel %vm152, %v5271, 0
    %5312 = vmatpush.msra.mxu0 0.0
    %5313 = vmatpush.msra.mxu0 0.0
    %5314 = vmatpush.msra.mxu0 0.0
    %5315 = vmatpush.msra.mxu0 0.0
    %5316 = vmatpush.msra.mxu0 0.0
    %5317 = vmatpush.msra.mxu0 0.0
    %5318 = vmatpush.msra.mxu0 0.0
    %5319 = vmatpush.msra.mxu0 0.0
    %5320 = vmatpush.msra.mxu0 0.0
    %5321 = vmatpush.msra.mxu0 0.0
    %5322 = vmatpush.msra.mxu0 0.0
    %5323 = vmatpush.msra.mxu0 0.0
    %5324 = vmatpush.msra.mxu0 0.0
    %5325 = vmatpush.msra.mxu0 0.0
    %5326 = vmatpush.msra.mxu0 %v5306
    %5327 = vmatpush.msra.mxu0 %v5304
    %5328 = vmatmul.f32.gmra.mxu0 %v5310
    %v5329 = vpop.f32.mrf.mxu0
    %v5330 = vadd.f32 0.0, %v5329
    %5331 = vdwg.mxu0
    %5332 = vrot.lane.b32.xlu0 %v4815, 48
    %v5333 = vpop.permute.xlu0 %5332
    %5334 = vrot.lane.b32.xlu0 %v4818, 48
    %v5335 = vpop.permute.xlu0 %5334
    %v5339 = vsel %vm152, %v5272, 0
    %5341 = vmatpush.msra.mxu0 0.0
    %5342 = vmatpush.msra.mxu0 0.0
    %5343 = vmatpush.msra.mxu0 0.0
    %5344 = vmatpush.msra.mxu0 0.0
    %5345 = vmatpush.msra.mxu0 0.0
    %5346 = vmatpush.msra.mxu0 0.0
    %5347 = vmatpush.msra.mxu0 0.0
    %5348 = vmatpush.msra.mxu0 0.0
    %5349 = vmatpush.msra.mxu0 0.0
    %5350 = vmatpush.msra.mxu0 0.0
    %5351 = vmatpush.msra.mxu0 0.0
    %5352 = vmatpush.msra.mxu0 0.0
    %5353 = vmatpush.msra.mxu0 0.0
    %5354 = vmatpush.msra.mxu0 0.0
    %5355 = vmatpush.msra.mxu0 %v5335
    %5356 = vmatpush.msra.mxu0 %v5333
    %5357 = vmatmul.f32.gmra.mxu0 %v5339
    %v5358 = vpop.f32.mrf.mxu0
    %v5359 = vadd.f32 0.0, %v5358
    %5360 = vdwg.mxu0
    %5361 = vrot.lane.b32.xlu0 %v4821, 48
    %v5362 = vpop.permute.xlu0 %5361
    %5363 = vrot.lane.b32.xlu0 %v4824, 48
    %v5364 = vpop.permute.xlu0 %5363
    %v5368 = vsel %vm152, %v5273, 0
    %5370 = vmatpush.msra.mxu0 0.0
    %5371 = vmatpush.msra.mxu0 0.0
    %5372 = vmatpush.msra.mxu0 0.0
    %5373 = vmatpush.msra.mxu0 0.0
    %5374 = vmatpush.msra.mxu0 0.0
    %5375 = vmatpush.msra.mxu0 0.0
    %5376 = vmatpush.msra.mxu0 0.0
    %5377 = vmatpush.msra.mxu0 0.0
    %5378 = vmatpush.msra.mxu0 0.0
    %5379 = vmatpush.msra.mxu0 0.0
    %5380 = vmatpush.msra.mxu0 0.0
    %5381 = vmatpush.msra.mxu0 0.0
    %5382 = vmatpush.msra.mxu0 0.0
    %5383 = vmatpush.msra.mxu0 0.0
    %5384 = vmatpush.msra.mxu0 %v5364
    %5385 = vmatpush.msra.mxu0 %v5362
    %5386 = vmatmul.f32.gmra.mxu0 %v5368
    %v5387 = vpop.f32.mrf.mxu0
    %v5388 = vadd.f32 0.0, %v5387
    %5389 = vdwg.mxu0
    %5390 = vrot.lane.b32.xlu0 %v4684, 96
    %v5391 = vpop.permute.xlu0 %5390
    %5392 = vrot.lane.b32.xlu0 %v4803, 96
    %v5393 = vpop.permute.xlu0 %5392
    %5394 = vrot.lane.b32.xlu0 %v4806, 96
    %v5395 = vpop.permute.xlu0 %5394
    %v5396 = vsel %vm152, %v5391, 0
    %v5398 = vsel %vm152, %v5393, 0
    %v5400 = vsel %vm152, %v5395, 0
    %5402 = vmatpush.xpose.msra.mxu0 0.0
    %5403 = vmatpush.xpose.msra.mxu0 0.0
    %5404 = vmatpush.xpose.msra.mxu0 0.0
    %5405 = vmatpush.xpose.msra.mxu0 0.0
    %5406 = vmatpush.xpose.msra.mxu0 0.0
    %5407 = vmatpush.xpose.msra.mxu0 0.0
    %5408 = vmatpush.xpose.msra.mxu0 0.0
    %5409 = vmatpush.xpose.msra.mxu0 0.0
    %5410 = vmatpush.xpose.msra.mxu0 0.0
    %5411 = vmatpush.xpose.msra.mxu0 0.0
    %5412 = vmatpush.xpose.msra.mxu0 0.0
    %5413 = vmatpush.xpose.msra.mxu0 0.0
    %5414 = vmatpush.xpose.msra.mxu0 0.0
    %5415 = vmatpush.xpose.msra.mxu0 0.0
    %5416 = vmatpush.xpose.msra.mxu0 %v5400
    %5417 = vmatpush.xpose.msra.mxu0 %v5398
    %5418 = vmatmul.f32.gmra.mxu0 %v5396
    %v5419 = vpop.f32.mrf.mxu0
    %v5420 = vadd.f32 0.0, %v5419
    %5421 = vdwg.mxu0
    %5422 = vrot.lane.b32.xlu0 %v4687, 96
    %v5423 = vpop.permute.xlu0 %5422
    %5424 = vrot.lane.b32.xlu0 %v4809, 96
    %v5425 = vpop.permute.xlu0 %5424
    %5426 = vrot.lane.b32.xlu0 %v4812, 96
    %v5427 = vpop.permute.xlu0 %5426
    %v5428 = vsel %vm152, %v5423, 0
    %v5430 = vsel %vm152, %v5425, 0
    %v5432 = vsel %vm152, %v5427, 0
    %5434 = vmatpush.xpose.msra.mxu0 0.0
    %5435 = vmatpush.xpose.msra.mxu0 0.0
    %5436 = vmatpush.xpose.msra.mxu0 0.0
    %5437 = vmatpush.xpose.msra.mxu0 0.0
    %5438 = vmatpush.xpose.msra.mxu0 0.0
    %5439 = vmatpush.xpose.msra.mxu0 0.0
    %5440 = vmatpush.xpose.msra.mxu0 0.0
    %5441 = vmatpush.xpose.msra.mxu0 0.0
    %5442 = vmatpush.xpose.msra.mxu0 0.0
    %5443 = vmatpush.xpose.msra.mxu0 0.0
    %5444 = vmatpush.xpose.msra.mxu0 0.0
    %5445 = vmatpush.xpose.msra.mxu0 0.0
    %5446 = vmatpush.xpose.msra.mxu0 0.0
    %5447 = vmatpush.xpose.msra.mxu0 0.0
    %5448 = vmatpush.xpose.msra.mxu0 %v5432
    %5449 = vmatpush.xpose.msra.mxu0 %v5430
    %5450 = vmatmul.f32.gmra.mxu0 %v5428
    %v5451 = vpop.f32.mrf.mxu0
    %v5452 = vadd.f32 0.0, %v5451
    %5453 = vdwg.mxu0
    %5454 = vrot.lane.b32.xlu0 %v4690, 96
    %v5455 = vpop.permute.xlu0 %5454
    %5456 = vrot.lane.b32.xlu0 %v4815, 96
    %v5457 = vpop.permute.xlu0 %5456
    %5458 = vrot.lane.b32.xlu0 %v4818, 96
    %v5459 = vpop.permute.xlu0 %5458
    %v5460 = vsel %vm152, %v5455, 0
    %v5462 = vsel %vm152, %v5457, 0
    %v5464 = vsel %vm152, %v5459, 0
    %5466 = vmatpush.xpose.msra.mxu0 0.0
    %5467 = vmatpush.xpose.msra.mxu0 0.0
    %5468 = vmatpush.xpose.msra.mxu0 0.0
    %5469 = vmatpush.xpose.msra.mxu0 0.0
    %5470 = vmatpush.xpose.msra.mxu0 0.0
    %5471 = vmatpush.xpose.msra.mxu0 0.0
    %5472 = vmatpush.xpose.msra.mxu0 0.0
    %5473 = vmatpush.xpose.msra.mxu0 0.0
    %5474 = vmatpush.xpose.msra.mxu0 0.0
    %5475 = vmatpush.xpose.msra.mxu0 0.0
    %5476 = vmatpush.xpose.msra.mxu0 0.0
    %5477 = vmatpush.xpose.msra.mxu0 0.0
    %5478 = vmatpush.xpose.msra.mxu0 0.0
    %5479 = vmatpush.xpose.msra.mxu0 0.0
    %5480 = vmatpush.xpose.msra.mxu0 %v5464
    %5481 = vmatpush.xpose.msra.mxu0 %v5462
    %5482 = vmatmul.f32.gmra.mxu0 %v5460
    %v5483 = vpop.f32.mrf.mxu0
    %v5484 = vadd.f32 0.0, %v5483
    %5485 = vdwg.mxu0
    %5486 = vrot.lane.b32.xlu0 %v4693, 96
    %v5487 = vpop.permute.xlu0 %5486
    %5488 = vrot.lane.b32.xlu0 %v4821, 96
    %v5489 = vpop.permute.xlu0 %5488
    %5490 = vrot.lane.b32.xlu0 %v4824, 96
    %v5491 = vpop.permute.xlu0 %5490
    %v5492 = vsel %vm152, %v5487, 0
    %v5494 = vsel %vm152, %v5489, 0
    %v5496 = vsel %vm152, %v5491, 0
    %5498 = vmatpush.xpose.msra.mxu0 0.0
    %5499 = vmatpush.xpose.msra.mxu0 0.0
    %5500 = vmatpush.xpose.msra.mxu0 0.0
    %5501 = vmatpush.xpose.msra.mxu0 0.0
    %5502 = vmatpush.xpose.msra.mxu0 0.0
    %5503 = vmatpush.xpose.msra.mxu0 0.0
    %5504 = vmatpush.xpose.msra.mxu0 0.0
    %5505 = vmatpush.xpose.msra.mxu0 0.0
    %5506 = vmatpush.xpose.msra.mxu0 0.0
    %5507 = vmatpush.xpose.msra.mxu0 0.0
    %5508 = vmatpush.xpose.msra.mxu0 0.0
    %5509 = vmatpush.xpose.msra.mxu0 0.0
    %5510 = vmatpush.xpose.msra.mxu0 0.0
    %5511 = vmatpush.xpose.msra.mxu0 0.0
    %5512 = vmatpush.xpose.msra.mxu0 %v5496
    %5513 = vmatpush.xpose.msra.mxu0 %v5494
    %5514 = vmatmul.f32.gmra.mxu0 %v5492
    %v5515 = vpop.f32.mrf.mxu0
    %v5516 = vadd.f32 0.0, %v5515
    %5517 = vdwg.mxu0
    %v5518 = vsel %vm152, %v5420, -inf
    %5519 = vmax.xlane.f32.xlu0 %v5518
    %v5520 = vpop.xlane.xlu0 %5519
    %v5521 = vsel %vm152, %v5452, -inf
    %5522 = vmax.xlane.f32.xlu0 %v5521
    %v5523 = vpop.xlane.xlu0 %5522
    %v5524 = vsel %vm152, %v5484, -inf
    %5525 = vmax.xlane.f32.xlu0 %v5524
    %v5526 = vpop.xlane.xlu0 %5525
    %v5527 = vsel %vm152, %v5516, -inf
    %5528 = vmax.xlane.f32.xlu0 %v5527
    %v5529 = vpop.xlane.xlu0 %5528
    %v5530 = vsub.f32 %v5420, %v5520
    %v5531 = vsub.f32 %v5452, %v5523
    %v5532 = vsub.f32 %v5484, %v5526
    %v5533 = vsub.f32 %v5516, %v5529
    %v5534 = vmul.f32 %v5530, 1.442695
    %v5535 = vpow.pop %v5534
    %v5536 = vmul.f32 %v5531, 1.442695
    %v5537 = vpow.pop %v5536
    %v5538 = vmul.f32 %v5532, 1.442695
    %v5539 = vpow.pop %v5538
    %v5540 = vmul.f32 %v5533, 1.442695
    %v5541 = vpow.pop %v5540
    %v5542 = vsel %vm152, %v5535, 0.0
    %5543 = vadd.xlane.f32.xlu0 %v5542
    %v5544 = vpop.xlane.xlu0 %5543
    %v5545 = vsel %vm152, %v5537, 0.0
    %5546 = vadd.xlane.f32.xlu0 %v5545
    %v5547 = vpop.xlane.xlu0 %5546
    %v5548 = vsel %vm152, %v5539, 0.0
    %5549 = vadd.xlane.f32.xlu0 %v5548
    %v5550 = vpop.xlane.xlu0 %5549
    %v5551 = vsel %vm152, %v5541, 0.0
    %5552 = vadd.xlane.f32.xlu0 %v5551
    %v5553 = vpop.xlane.xlu0 %5552
    %v5554 = vrcp.pop %v5544
    %v5555 = vrcp.pop %v5547
    %v5556 = vrcp.pop %v5550
    %v5557 = vrcp.pop %v5553
    %v5558 = vmul.f32 %v5535, %v5554
    %v5559 = vmul.f32 %v5537, %v5555
    %v5560 = vmul.f32 %v5539, %v5556
    %v5561 = vmul.f32 %v5541, %v5557
    %5562 = vrot.lane.b32.xlu0 %v4803, 32
    %v5563 = vpop.permute.xlu0 %5562
    %5564 = vrot.lane.b32.xlu0 %v4806, 32
    %v5565 = vpop.permute.xlu0 %5564
    %v5569 = vsel %vm152, %v5558, 0
    %5571 = vmatpush.msra.mxu0 0.0
    %5572 = vmatpush.msra.mxu0 0.0
    %5573 = vmatpush.msra.mxu0 0.0
    %5574 = vmatpush.msra.mxu0 0.0
    %5575 = vmatpush.msra.mxu0 0.0
    %5576 = vmatpush.msra.mxu0 0.0
    %5577 = vmatpush.msra.mxu0 0.0
    %5578 = vmatpush.msra.mxu0 0.0
    %5579 = vmatpush.msra.mxu0 0.0
    %5580 = vmatpush.msra.mxu0 0.0
    %5581 = vmatpush.msra.mxu0 0.0
    %5582 = vmatpush.msra.mxu0 0.0
    %5583 = vmatpush.msra.mxu0 0.0
    %5584 = vmatpush.msra.mxu0 0.0
    %5585 = vmatpush.msra.mxu0 %v5565
    %5586 = vmatpush.msra.mxu0 %v5563
    %5587 = vmatmul.f32.gmra.mxu0 %v5569
    %v5588 = vpop.f32.mrf.mxu0
    %v5589 = vadd.f32 0.0, %v5588
    %5590 = vdwg.mxu0
    %5591 = vrot.lane.b32.xlu0 %v4809, 32
    %v5592 = vpop.permute.xlu0 %5591
    %5593 = vrot.lane.b32.xlu0 %v4812, 32
    %v5594 = vpop.permute.xlu0 %5593
    %v5598 = vsel %vm152, %v5559, 0
    %5600 = vmatpush.msra.mxu0 0.0
    %5601 = vmatpush.msra.mxu0 0.0
    %5602 = vmatpush.msra.mxu0 0.0
    %5603 = vmatpush.msra.mxu0 0.0
    %5604 = vmatpush.msra.mxu0 0.0
    %5605 = vmatpush.msra.mxu0 0.0
    %5606 = vmatpush.msra.mxu0 0.0
    %5607 = vmatpush.msra.mxu0 0.0
    %5608 = vmatpush.msra.mxu0 0.0
    %5609 = vmatpush.msra.mxu0 0.0
    %5610 = vmatpush.msra.mxu0 0.0
    %5611 = vmatpush.msra.mxu0 0.0
    %5612 = vmatpush.msra.mxu0 0.0
    %5613 = vmatpush.msra.mxu0 0.0
    %5614 = vmatpush.msra.mxu0 %v5594
    %5615 = vmatpush.msra.mxu0 %v5592
    %5616 = vmatmul.f32.gmra.mxu0 %v5598
    %v5617 = vpop.f32.mrf.mxu0
    %v5618 = vadd.f32 0.0, %v5617
    %5619 = vdwg.mxu0
    %5620 = vrot.lane.b32.xlu0 %v4815, 32
    %v5621 = vpop.permute.xlu0 %5620
    %5622 = vrot.lane.b32.xlu0 %v4818, 32
    %v5623 = vpop.permute.xlu0 %5622
    %v5627 = vsel %vm152, %v5560, 0
    %5629 = vmatpush.msra.mxu0 0.0
    %5630 = vmatpush.msra.mxu0 0.0
    %5631 = vmatpush.msra.mxu0 0.0
    %5632 = vmatpush.msra.mxu0 0.0
    %5633 = vmatpush.msra.mxu0 0.0
    %5634 = vmatpush.msra.mxu0 0.0
    %5635 = vmatpush.msra.mxu0 0.0
    %5636 = vmatpush.msra.mxu0 0.0
    %5637 = vmatpush.msra.mxu0 0.0
    %5638 = vmatpush.msra.mxu0 0.0
    %5639 = vmatpush.msra.mxu0 0.0
    %5640 = vmatpush.msra.mxu0 0.0
    %5641 = vmatpush.msra.mxu0 0.0
    %5642 = vmatpush.msra.mxu0 0.0
    %5643 = vmatpush.msra.mxu0 %v5623
    %5644 = vmatpush.msra.mxu0 %v5621
    %5645 = vmatmul.f32.gmra.mxu0 %v5627
    %v5646 = vpop.f32.mrf.mxu0
    %v5647 = vadd.f32 0.0, %v5646
    %5648 = vdwg.mxu0
    %5649 = vrot.lane.b32.xlu0 %v4821, 32
    %v5650 = vpop.permute.xlu0 %5649
    %5651 = vrot.lane.b32.xlu0 %v4824, 32
    %v5652 = vpop.permute.xlu0 %5651
    %v5656 = vsel %vm152, %v5561, 0
    %5658 = vmatpush.msra.mxu0 0.0
    %5659 = vmatpush.msra.mxu0 0.0
    %5660 = vmatpush.msra.mxu0 0.0
    %5661 = vmatpush.msra.mxu0 0.0
    %5662 = vmatpush.msra.mxu0 0.0
    %5663 = vmatpush.msra.mxu0 0.0
    %5664 = vmatpush.msra.mxu0 0.0
    %5665 = vmatpush.msra.mxu0 0.0
    %5666 = vmatpush.msra.mxu0 0.0
    %5667 = vmatpush.msra.mxu0 0.0
    %5668 = vmatpush.msra.mxu0 0.0
    %5669 = vmatpush.msra.mxu0 0.0
    %5670 = vmatpush.msra.mxu0 0.0
    %5671 = vmatpush.msra.mxu0 0.0
    %5672 = vmatpush.msra.mxu0 %v5652
    %5673 = vmatpush.msra.mxu0 %v5650
    %5674 = vmatmul.f32.gmra.mxu0 %v5656
    %v5675 = vpop.f32.mrf.mxu0
    %v5676 = vadd.f32 0.0, %v5675
    %5677 = vdwg.mxu0
    %5678 = vrot.lane.b32.xlu0 %v4684, 80
    %v5679 = vpop.permute.xlu0 %5678
    %5680 = vrot.lane.b32.xlu0 %v4803, 80
    %v5681 = vpop.permute.xlu0 %5680
    %5682 = vrot.lane.b32.xlu0 %v4806, 80
    %v5683 = vpop.permute.xlu0 %5682
    %v5684 = vsel %vm152, %v5679, 0
    %v5686 = vsel %vm152, %v5681, 0
    %v5688 = vsel %vm152, %v5683, 0
    %5690 = vmatpush.xpose.msra.mxu0 0.0
    %5691 = vmatpush.xpose.msra.mxu0 0.0
    %5692 = vmatpush.xpose.msra.mxu0 0.0
    %5693 = vmatpush.xpose.msra.mxu0 0.0
    %5694 = vmatpush.xpose.msra.mxu0 0.0
    %5695 = vmatpush.xpose.msra.mxu0 0.0
    %5696 = vmatpush.xpose.msra.mxu0 0.0
    %5697 = vmatpush.xpose.msra.mxu0 0.0
    %5698 = vmatpush.xpose.msra.mxu0 0.0
    %5699 = vmatpush.xpose.msra.mxu0 0.0
    %5700 = vmatpush.xpose.msra.mxu0 0.0
    %5701 = vmatpush.xpose.msra.mxu0 0.0
    %5702 = vmatpush.xpose.msra.mxu0 0.0
    %5703 = vmatpush.xpose.msra.mxu0 0.0
    %5704 = vmatpush.xpose.msra.mxu0 %v5688
    %5705 = vmatpush.xpose.msra.mxu0 %v5686
    %5706 = vmatmul.f32.gmra.mxu0 %v5684
    %v5707 = vpop.f32.mrf.mxu0
    %v5708 = vadd.f32 0.0, %v5707
    %5709 = vdwg.mxu0
    %5710 = vrot.lane.b32.xlu0 %v4687, 80
    %v5711 = vpop.permute.xlu0 %5710
    %5712 = vrot.lane.b32.xlu0 %v4809, 80
    %v5713 = vpop.permute.xlu0 %5712
    %5714 = vrot.lane.b32.xlu0 %v4812, 80
    %v5715 = vpop.permute.xlu0 %5714
    %v5716 = vsel %vm152, %v5711, 0
    %v5718 = vsel %vm152, %v5713, 0
    %v5720 = vsel %vm152, %v5715, 0
    %5722 = vmatpush.xpose.msra.mxu0 0.0
    %5723 = vmatpush.xpose.msra.mxu0 0.0
    %5724 = vmatpush.xpose.msra.mxu0 0.0
    %5725 = vmatpush.xpose.msra.mxu0 0.0
    %5726 = vmatpush.xpose.msra.mxu0 0.0
    %5727 = vmatpush.xpose.msra.mxu0 0.0
    %5728 = vmatpush.xpose.msra.mxu0 0.0
    %5729 = vmatpush.xpose.msra.mxu0 0.0
    %5730 = vmatpush.xpose.msra.mxu0 0.0
    %5731 = vmatpush.xpose.msra.mxu0 0.0
    %5732 = vmatpush.xpose.msra.mxu0 0.0
    %5733 = vmatpush.xpose.msra.mxu0 0.0
    %5734 = vmatpush.xpose.msra.mxu0 0.0
    %5735 = vmatpush.xpose.msra.mxu0 0.0
    %5736 = vmatpush.xpose.msra.mxu0 %v5720
    %5737 = vmatpush.xpose.msra.mxu0 %v5718
    %5738 = vmatmul.f32.gmra.mxu0 %v5716
    %v5739 = vpop.f32.mrf.mxu0
    %v5740 = vadd.f32 0.0, %v5739
    %5741 = vdwg.mxu0
    %5742 = vrot.lane.b32.xlu0 %v4690, 80
    %v5743 = vpop.permute.xlu0 %5742
    %5744 = vrot.lane.b32.xlu0 %v4815, 80
    %v5745 = vpop.permute.xlu0 %5744
    %5746 = vrot.lane.b32.xlu0 %v4818, 80
    %v5747 = vpop.permute.xlu0 %5746
    %v5748 = vsel %vm152, %v5743, 0
    %v5750 = vsel %vm152, %v5745, 0
    %v5752 = vsel %vm152, %v5747, 0
    %5754 = vmatpush.xpose.msra.mxu0 0.0
    %5755 = vmatpush.xpose.msra.mxu0 0.0
    %5756 = vmatpush.xpose.msra.mxu0 0.0
    %5757 = vmatpush.xpose.msra.mxu0 0.0
    %5758 = vmatpush.xpose.msra.mxu0 0.0
    %5759 = vmatpush.xpose.msra.mxu0 0.0
    %5760 = vmatpush.xpose.msra.mxu0 0.0
    %5761 = vmatpush.xpose.msra.mxu0 0.0
    %5762 = vmatpush.xpose.msra.mxu0 0.0
    %5763 = vmatpush.xpose.msra.mxu0 0.0
    %5764 = vmatpush.xpose.msra.mxu0 0.0
    %5765 = vmatpush.xpose.msra.mxu0 0.0
    %5766 = vmatpush.xpose.msra.mxu0 0.0
    %5767 = vmatpush.xpose.msra.mxu0 0.0
    %5768 = vmatpush.xpose.msra.mxu0 %v5752
    %5769 = vmatpush.xpose.msra.mxu0 %v5750
    %5770 = vmatmul.f32.gmra.mxu0 %v5748
    %v5771 = vpop.f32.mrf.mxu0
    %v5772 = vadd.f32 0.0, %v5771
    %5773 = vdwg.mxu0
    %5774 = vrot.lane.b32.xlu0 %v4693, 80
    %v5775 = vpop.permute.xlu0 %5774
    %5776 = vrot.lane.b32.xlu0 %v4821, 80
    %v5777 = vpop.permute.xlu0 %5776
    %5778 = vrot.lane.b32.xlu0 %v4824, 80
    %v5779 = vpop.permute.xlu0 %5778
    %v5780 = vsel %vm152, %v5775, 0
    %v5782 = vsel %vm152, %v5777, 0
    %v5784 = vsel %vm152, %v5779, 0
    %5786 = vmatpush.xpose.msra.mxu0 0.0
    %5787 = vmatpush.xpose.msra.mxu0 0.0
    %5788 = vmatpush.xpose.msra.mxu0 0.0
    %5789 = vmatpush.xpose.msra.mxu0 0.0
    %5790 = vmatpush.xpose.msra.mxu0 0.0
    %5791 = vmatpush.xpose.msra.mxu0 0.0
    %5792 = vmatpush.xpose.msra.mxu0 0.0
    %5793 = vmatpush.xpose.msra.mxu0 0.0
    %5794 = vmatpush.xpose.msra.mxu0 0.0
    %5795 = vmatpush.xpose.msra.mxu0 0.0
    %5796 = vmatpush.xpose.msra.mxu0 0.0
    %5797 = vmatpush.xpose.msra.mxu0 0.0
    %5798 = vmatpush.xpose.msra.mxu0 0.0
    %5799 = vmatpush.xpose.msra.mxu0 0.0
    %5800 = vmatpush.xpose.msra.mxu0 %v5784
    %5801 = vmatpush.xpose.msra.mxu0 %v5782
    %5802 = vmatmul.f32.gmra.mxu0 %v5780
    %v5803 = vpop.f32.mrf.mxu0
    %v5804 = vadd.f32 0.0, %v5803
    %5805 = vdwg.mxu0
    %v5806 = vsel %vm152, %v5708, -inf
    %5807 = vmax.xlane.f32.xlu0 %v5806
    %v5808 = vpop.xlane.xlu0 %5807
    %v5809 = vsel %vm152, %v5740, -inf
    %5810 = vmax.xlane.f32.xlu0 %v5809
    %v5811 = vpop.xlane.xlu0 %5810
    %v5812 = vsel %vm152, %v5772, -inf
    %5813 = vmax.xlane.f32.xlu0 %v5812
    %v5814 = vpop.xlane.xlu0 %5813
    %v5815 = vsel %vm152, %v5804, -inf
    %5816 = vmax.xlane.f32.xlu0 %v5815
    %v5817 = vpop.xlane.xlu0 %5816
    %v5818 = vsub.f32 %v5708, %v5808
    %v5819 = vsub.f32 %v5740, %v5811
    %v5820 = vsub.f32 %v5772, %v5814
    %v5821 = vsub.f32 %v5804, %v5817
    %v5822 = vmul.f32 %v5818, 1.442695
    %v5823 = vpow.pop %v5822
    %v5824 = vmul.f32 %v5819, 1.442695
    %v5825 = vpow.pop %v5824
    %v5826 = vmul.f32 %v5820, 1.442695
    %v5827 = vpow.pop %v5826
    %v5828 = vmul.f32 %v5821, 1.442695
    %v5829 = vpow.pop %v5828
    %v5830 = vsel %vm152, %v5823, 0.0
    %5831 = vadd.xlane.f32.xlu0 %v5830
    %v5832 = vpop.xlane.xlu0 %5831
    %v5833 = vsel %vm152, %v5825, 0.0
    %5834 = vadd.xlane.f32.xlu0 %v5833
    %v5835 = vpop.xlane.xlu0 %5834
    %v5836 = vsel %vm152, %v5827, 0.0
    %5837 = vadd.xlane.f32.xlu0 %v5836
    %v5838 = vpop.xlane.xlu0 %5837
    %v5839 = vsel %vm152, %v5829, 0.0
    %5840 = vadd.xlane.f32.xlu0 %v5839
    %v5841 = vpop.xlane.xlu0 %5840
    %v5842 = vrcp.pop %v5832
    %v5843 = vrcp.pop %v5835
    %v5844 = vrcp.pop %v5838
    %v5845 = vrcp.pop %v5841
    %v5846 = vmul.f32 %v5823, %v5842
    %v5847 = vmul.f32 %v5825, %v5843
    %v5848 = vmul.f32 %v5827, %v5844
    %v5849 = vmul.f32 %v5829, %v5845
    %5850 = vrot.lane.b32.xlu0 %v4803, 16
    %v5851 = vpop.permute.xlu0 %5850
    %5852 = vrot.lane.b32.xlu0 %v4806, 16
    %v5853 = vpop.permute.xlu0 %5852
    %v5857 = vsel %vm152, %v5846, 0
    %5859 = vmatpush.msra.mxu0 0.0
    %5860 = vmatpush.msra.mxu0 0.0
    %5861 = vmatpush.msra.mxu0 0.0
    %5862 = vmatpush.msra.mxu0 0.0
    %5863 = vmatpush.msra.mxu0 0.0
    %5864 = vmatpush.msra.mxu0 0.0
    %5865 = vmatpush.msra.mxu0 0.0
    %5866 = vmatpush.msra.mxu0 0.0
    %5867 = vmatpush.msra.mxu0 0.0
    %5868 = vmatpush.msra.mxu0 0.0
    %5869 = vmatpush.msra.mxu0 0.0
    %5870 = vmatpush.msra.mxu0 0.0
    %5871 = vmatpush.msra.mxu0 0.0
    %5872 = vmatpush.msra.mxu0 0.0
    %5873 = vmatpush.msra.mxu0 %v5853
    %5874 = vmatpush.msra.mxu0 %v5851
    %5875 = vmatmul.f32.gmra.mxu0 %v5857
    %v5876 = vpop.f32.mrf.mxu0
    %v5877 = vadd.f32 0.0, %v5876
    %5878 = vdwg.mxu0
    %5879 = vrot.lane.b32.xlu0 %v4809, 16
    %v5880 = vpop.permute.xlu0 %5879
    %5881 = vrot.lane.b32.xlu0 %v4812, 16
    %v5882 = vpop.permute.xlu0 %5881
    %v5886 = vsel %vm152, %v5847, 0
    %5888 = vmatpush.msra.mxu0 0.0
    %5889 = vmatpush.msra.mxu0 0.0
    %5890 = vmatpush.msra.mxu0 0.0
    %5891 = vmatpush.msra.mxu0 0.0
    %5892 = vmatpush.msra.mxu0 0.0
    %5893 = vmatpush.msra.mxu0 0.0
    %5894 = vmatpush.msra.mxu0 0.0
    %5895 = vmatpush.msra.mxu0 0.0
    %5896 = vmatpush.msra.mxu0 0.0
    %5897 = vmatpush.msra.mxu0 0.0
    %5898 = vmatpush.msra.mxu0 0.0
    %5899 = vmatpush.msra.mxu0 0.0
    %5900 = vmatpush.msra.mxu0 0.0
    %5901 = vmatpush.msra.mxu0 0.0
    %5902 = vmatpush.msra.mxu0 %v5882
    %5903 = vmatpush.msra.mxu0 %v5880
    %5904 = vmatmul.f32.gmra.mxu0 %v5886
    %v5905 = vpop.f32.mrf.mxu0
    %v5906 = vadd.f32 0.0, %v5905
    %5907 = vdwg.mxu0
    %5908 = vrot.lane.b32.xlu0 %v4815, 16
    %v5909 = vpop.permute.xlu0 %5908
    %5910 = vrot.lane.b32.xlu0 %v4818, 16
    %v5911 = vpop.permute.xlu0 %5910
    %v5915 = vsel %vm152, %v5848, 0
    %5917 = vmatpush.msra.mxu0 0.0
    %5918 = vmatpush.msra.mxu0 0.0
    %5919 = vmatpush.msra.mxu0 0.0
    %5920 = vmatpush.msra.mxu0 0.0
    %5921 = vmatpush.msra.mxu0 0.0
    %5922 = vmatpush.msra.mxu0 0.0
    %5923 = vmatpush.msra.mxu0 0.0
    %5924 = vmatpush.msra.mxu0 0.0
    %5925 = vmatpush.msra.mxu0 0.0
    %5926 = vmatpush.msra.mxu0 0.0
    %5927 = vmatpush.msra.mxu0 0.0
    %5928 = vmatpush.msra.mxu0 0.0
    %5929 = vmatpush.msra.mxu0 0.0
    %5930 = vmatpush.msra.mxu0 0.0
    %5931 = vmatpush.msra.mxu0 %v5911
    %5932 = vmatpush.msra.mxu0 %v5909
    %5933 = vmatmul.f32.gmra.mxu0 %v5915
    %v5934 = vpop.f32.mrf.mxu0
    %v5935 = vadd.f32 0.0, %v5934
    %5936 = vdwg.mxu0
    %5937 = vrot.lane.b32.xlu0 %v4821, 16
    %v5938 = vpop.permute.xlu0 %5937
    %5939 = vrot.lane.b32.xlu0 %v4824, 16
    %v5940 = vpop.permute.xlu0 %5939
    %v5944 = vsel %vm152, %v5849, 0
    %5946 = vmatpush.msra.mxu0 0.0
    %5947 = vmatpush.msra.mxu0 0.0
    %5948 = vmatpush.msra.mxu0 0.0
    %5949 = vmatpush.msra.mxu0 0.0
    %5950 = vmatpush.msra.mxu0 0.0
    %5951 = vmatpush.msra.mxu0 0.0
    %5952 = vmatpush.msra.mxu0 0.0
    %5953 = vmatpush.msra.mxu0 0.0
    %5954 = vmatpush.msra.mxu0 0.0
    %5955 = vmatpush.msra.mxu0 0.0
    %5956 = vmatpush.msra.mxu0 0.0
    %5957 = vmatpush.msra.mxu0 0.0
    %5958 = vmatpush.msra.mxu0 0.0
    %5959 = vmatpush.msra.mxu0 0.0
    %5960 = vmatpush.msra.mxu0 %v5940
    %5961 = vmatpush.msra.mxu0 %v5938
    %5962 = vmatmul.f32.gmra.mxu0 %v5944
    %v5963 = vpop.f32.mrf.mxu0
    %v5964 = vadd.f32 0.0, %v5963
    %5965 = vdwg.mxu0
    %5970 = vrot.lane.b32.xlu0 %v5301, 16
    %v5971 = vpop.permute.xlu0 %5970
    %5972 = vrot.lane.b32.xlu0 %v5330, 16
    %v5973 = vpop.permute.xlu0 %5972
    %5974 = vrot.lane.b32.xlu0 %v5359, 16
    %v5975 = vpop.permute.xlu0 %5974
    %5976 = vrot.lane.b32.xlu0 %v5388, 16
    %v5977 = vpop.permute.xlu0 %5976
    %5986 = vrot.lane.b32.xlu0 %v5589, 32
    %v5987 = vpop.permute.xlu0 %5986
    %5988 = vrot.lane.b32.xlu0 %v5618, 32
    %v5989 = vpop.permute.xlu0 %5988
    %5990 = vrot.lane.b32.xlu0 %v5647, 32
    %v5991 = vpop.permute.xlu0 %5990
    %5992 = vrot.lane.b32.xlu0 %v5676, 32
    %v5993 = vpop.permute.xlu0 %5992
    %6002 = vrot.lane.b32.xlu0 %v5877, 48
    %v6003 = vpop.permute.xlu0 %6002
    %6004 = vrot.lane.b32.xlu0 %v5906, 48
    %v6005 = vpop.permute.xlu0 %6004
    %6006 = vrot.lane.b32.xlu0 %v5935, 48
    %v6007 = vpop.permute.xlu0 %6006
    %6008 = vrot.lane.b32.xlu0 %v5964, 48
    %v6009 = vpop.permute.xlu0 %6008
    %v6014 = vsel %vm152, %v5013, %v5971
    %v6015 = vsel %vm152, %v5042, %v5973
    %v6016 = vsel %vm152, %v5071, %v5975
    %v6017 = vsel %vm152, %v5100, %v5977
    %v6018 = vsel %vm1231, %v6014, %v5987
    %v6019 = vsel %vm1231, %v6015, %v5989
    %v6020 = vsel %vm1231, %v6016, %v5991
    %v6021 = vsel %vm1231, %v6017, %v5993
    %v6022 = vsel %vm1236, %v6018, %v6003
    %v6023 = vsel %vm1236, %v6019, %v6005
    %v6024 = vsel %vm1236, %v6020, %v6007
    %v6025 = vsel %vm1236, %v6021, %v6009
    %v6026 = vld [vmem:[%s3263 + $0x18] sm:$0xff]
    %v6027 = vld [vmem:[%s3263 + $0x40] sm:$0xff]
    %v6028 = vld [vmem:[%s3263 + $0x68] sm:$0xff]
    %v6029 = vld [vmem:[%s3263 + $0x90] sm:$0xff]
    %v6030 = vld [vmem:[%s3263 + $0xb8] sm:$0xff]
    %v6031 = vld [vmem:[%s3263 + $0xe0] sm:$0xff]
    %v6032 = vld [vmem:[%s3263 + $0x108] sm:$0xff]
    %v6033 = vld [vmem:[%s3263 + $0x130] sm:$0xff]
    %v6034 = vld [vmem:[%s3280 + $0x3] sm:$0x1]
    %v6036 = vperm.slane %v6034, 0
    %6045 = vrot.lane.b32.xlu0 %v6026, 64
    %v6046 = vpop.permute.xlu0 %6045
    %6047 = vrot.lane.b32.xlu0 %v6027, 64
    %v6048 = vpop.permute.xlu0 %6047
    %6049 = vrot.lane.b32.xlu0 %v6028, 64
    %v6050 = vpop.permute.xlu0 %6049
    %6051 = vrot.lane.b32.xlu0 %v6029, 64
    %v6052 = vpop.permute.xlu0 %6051
    %6053 = vrot.lane.b32.xlu0 %v6030, 64
    %v6054 = vpop.permute.xlu0 %6053
    %6055 = vrot.lane.b32.xlu0 %v6031, 64
    %v6056 = vpop.permute.xlu0 %6055
    %6057 = vrot.lane.b32.xlu0 %v6032, 64
    %v6058 = vpop.permute.xlu0 %6057
    %6059 = vrot.lane.b32.xlu0 %v6033, 64
    %v6060 = vpop.permute.xlu0 %6059
    %6069 = vrot.lane.b32.xlu0 %v6036, 64
    %v6070 = vpop.permute.xlu0 %6069
    %v6073 = vsel %vm78, %v6022, 0
    %v6076 = vsel %vm78, %v6023, 0
    %v6079 = vsel %vm78, %v6024, 0
    %v6082 = vsel %vm78, %v6025, 0
    %6084 = vmatpush.msra.mxu0 0.0
    %6085 = vmatpush.msra.mxu0 0.0
    %6086 = vmatpush.msra.mxu0 0.0
    %6087 = vmatpush.msra.mxu0 0.0
    %6088 = vmatpush.msra.mxu0 0.0
    %6089 = vmatpush.msra.mxu0 0.0
    %6090 = vmatpush.msra.mxu0 0.0
    %6091 = vmatpush.msra.mxu0 0.0
    %6092 = vmatpush.msra.mxu0 %v6060
    %6093 = vmatpush.msra.mxu0 %v6058
    %6094 = vmatpush.msra.mxu0 %v6056
    %6095 = vmatpush.msra.mxu0 %v6054
    %6096 = vmatpush.msra.mxu0 %v6052
    %6097 = vmatpush.msra.mxu0 %v6050
    %6098 = vmatpush.msra.mxu0 %v6048
    %6099 = vmatpush.msra.mxu0 %v6046
    %6100 = vmatmul.f32.gmra.mxu0 %v6073
    %v6101 = vpop.f32.mrf.mxu0
    %v6102 = vadd.f32 %v6070, %v6101
    %6103 = vmatmul.f32.gmra.mxu0 %v6076
    %v6104 = vpop.f32.mrf.mxu0
    %v6105 = vadd.f32 %v6070, %v6104
    %6106 = vmatmul.f32.gmra.mxu0 %v6079
    %v6107 = vpop.f32.mrf.mxu0
    %v6108 = vadd.f32 %v6070, %v6107
    %6109 = vmatmul.f32.gmra.mxu0 %v6082
    %v6110 = vpop.f32.mrf.mxu0
    %v6111 = vadd.f32 %v6070, %v6110
    %6112 = vdwg.mxu0
    %v6113 = vadd.f32 %v4638, %v6102
    %v6114 = vadd.f32 %v4639, %v6105
    %v6115 = vadd.f32 %v4640, %v6108
    %v6116 = vadd.f32 %v4641, %v6111
    %v6117 = vld [vmem:[%s3280 + $0x6] sm:$0x1]
    %v6118 = vld [vmem:[%s3280 + $0x7] sm:$0x1]
    %v6119 = vsel %vm78, %v6113, 0.0
    %6120 = vadd.xlane.f32.xlu0 %v6119
    %v6121 = vpop.xlane.xlu0 %6120
    %v6122 = vsel %vm78, %v6114, 0.0
    %6123 = vadd.xlane.f32.xlu0 %v6122
    %v6124 = vpop.xlane.xlu0 %6123
    %v6125 = vsel %vm78, %v6115, 0.0
    %6126 = vadd.xlane.f32.xlu0 %v6125
    %v6127 = vpop.xlane.xlu0 %6126
    %v6128 = vsel %vm78, %v6116, 0.0
    %6129 = vadd.xlane.f32.xlu0 %v6128
    %v6130 = vpop.xlane.xlu0 %6129
    %v6131 = vmul.f32 %v6121, %v1352
    %v6132 = vmul.f32 %v6124, %v1352
    %v6133 = vmul.f32 %v6127, %v1352
    %v6134 = vmul.f32 %v6130, %v1352
    %v6135 = vsub.f32 %v6113, %v6131
    %v6136 = vsub.f32 %v6114, %v6132
    %v6137 = vsub.f32 %v6115, %v6133
    %v6138 = vsub.f32 %v6116, %v6134
    %v6139 = vmul.f32 %v6135, %v6135
    %v6140 = vmul.f32 %v6136, %v6136
    %v6141 = vmul.f32 %v6137, %v6137
    %v6142 = vmul.f32 %v6138, %v6138
    %v6143 = vsel %vm78, %v6139, 0.0
    %6144 = vadd.xlane.f32.xlu0 %v6143
    %v6145 = vpop.xlane.xlu0 %6144
    %v6146 = vsel %vm78, %v6140, 0.0
    %6147 = vadd.xlane.f32.xlu0 %v6146
    %v6148 = vpop.xlane.xlu0 %6147
    %v6149 = vsel %vm78, %v6141, 0.0
    %6150 = vadd.xlane.f32.xlu0 %v6149
    %v6151 = vpop.xlane.xlu0 %6150
    %v6152 = vsel %vm78, %v6142, 0.0
    %6153 = vadd.xlane.f32.xlu0 %v6152
    %v6154 = vpop.xlane.xlu0 %6153
    %v6155 = vmul.f32 %v6145, %v1352
    %v6156 = vmul.f32 %v6148, %v1352
    %v6157 = vmul.f32 %v6151, %v1352
    %v6158 = vmul.f32 %v6154, %v1352
    %v6159 = vadd.f32 %v6155, 1e-05
    %v6160 = vadd.f32 %v6156, 1e-05
    %v6161 = vadd.f32 %v6157, 1e-05
    %v6162 = vadd.f32 %v6158, 1e-05
    %v6163 = vrsqrt.pop %v6159
    %v6164 = vmul.f32 %v6163, %v6159
    %v6165 = vmul.f32 %v6164, %v6163
    %v6166 = vmul.f32 0.5, %v6165
    %v6167 = vsub.f32 1.5, %v6166
    %v6168 = vmul.f32 %v6163, %v6167
    %vm6169 = vweird.f32 %v6159
    %vm6170 = vweird.f32 %v6163
    %vm6171 = vmor %vm6169, %vm6170
    %v6172 = vsel %vm6171, %v6163, %v6168
    %v6173 = vrsqrt.pop %v6160
    %v6174 = vmul.f32 %v6173, %v6160
    %v6175 = vmul.f32 %v6174, %v6173
    %v6176 = vmul.f32 0.5, %v6175
    %v6177 = vsub.f32 1.5, %v6176
    %v6178 = vmul.f32 %v6173, %v6177
    %vm6179 = vweird.f32 %v6160
    %vm6180 = vweird.f32 %v6173
    %vm6181 = vmor %vm6179, %vm6180
    %v6182 = vsel %vm6181, %v6173, %v6178
    %v6183 = vrsqrt.pop %v6161
    %v6184 = vmul.f32 %v6183, %v6161
    %v6185 = vmul.f32 %v6184, %v6183
    %v6186 = vmul.f32 0.5, %v6185
    %v6187 = vsub.f32 1.5, %v6186
    %v6188 = vmul.f32 %v6183, %v6187
    %vm6189 = vweird.f32 %v6161
    %vm6190 = vweird.f32 %v6183
    %vm6191 = vmor %vm6189, %vm6190
    %v6192 = vsel %vm6191, %v6183, %v6188
    %v6193 = vrsqrt.pop %v6162
    %v6194 = vmul.f32 %v6193, %v6162
    %v6195 = vmul.f32 %v6194, %v6193
    %v6196 = vmul.f32 0.5, %v6195
    %v6197 = vsub.f32 1.5, %v6196
    %v6198 = vmul.f32 %v6193, %v6197
    %vm6199 = vweird.f32 %v6162
    %vm6200 = vweird.f32 %v6193
    %vm6201 = vmor %vm6199, %vm6200
    %v6202 = vsel %vm6201, %v6193, %v6198
    %v6203 = vmul.f32 %v6135, %v6172
    %v6204 = vmul.f32 %v6136, %v6182
    %v6205 = vmul.f32 %v6137, %v6192
    %v6206 = vmul.f32 %v6138, %v6202
    %v6208 = vperm.slane %v6117, 0
    %6209 = vrot.lane.b32.xlu0 %v6208, 64
    %v6210 = vpop.permute.xlu0 %6209
    %v6212 = vmul.f32 %v6203, %v6210
    %v6213 = vmul.f32 %v6204, %v6210
    %v6214 = vmul.f32 %v6205, %v6210
    %v6215 = vmul.f32 %v6206, %v6210
    %v6217 = vperm.slane %v6118, 0
    %v6219 = vadd.f32 %v6212, %v6217
    %v6220 = vadd.f32 %v6213, %v6217
    %v6221 = vadd.f32 %v6214, %v6217
    %v6222 = vadd.f32 %v6215, %v6217
    %v6223 = vld [vmem:[%s3263 + $0x20] sm:$0xff]
    %v6224 = vld [vmem:[%s3263 + $0x48] sm:$0xff]
    %v6225 = vld [vmem:[%s3263 + $0x70] sm:$0xff]
    %v6226 = vld [vmem:[%s3263 + $0x98] sm:$0xff]
    %v6227 = vld [vmem:[%s3263 + $0xc0] sm:$0xff]
    %v6228 = vld [vmem:[%s3263 + $0xe8] sm:$0xff]
    %v6229 = vld [vmem:[%s3263 + $0x110] sm:$0xff]
    %v6230 = vld [vmem:[%s3263 + $0x138] sm:$0xff]
    %v6231 = vld [vmem:[%s3280 + $0x4] sm:$0x1]
    %v6233 = vperm.slane %v6231, 0
    %v6236 = vsel %vm78, %v6219, 0
    %v6239 = vsel %vm78, %v6220, 0
    %v6242 = vsel %vm78, %v6221, 0
    %v6245 = vsel %vm78, %v6222, 0
    %6247 = vmatpush.msra.mxu0 0.0
    %6248 = vmatpush.msra.mxu0 0.0
    %6249 = vmatpush.msra.mxu0 0.0
    %6250 = vmatpush.msra.mxu0 0.0
    %6251 = vmatpush.msra.mxu0 0.0
    %6252 = vmatpush.msra.mxu0 0.0
    %6253 = vmatpush.msra.mxu0 0.0
    %6254 = vmatpush.msra.mxu0 0.0
    %6255 = vmatpush.msra.mxu0 %v6230
    %6256 = vmatpush.msra.mxu0 %v6229
    %6257 = vmatpush.msra.mxu0 %v6228
    %6258 = vmatpush.msra.mxu0 %v6227
    %6259 = vmatpush.msra.mxu0 %v6226
    %6260 = vmatpush.msra.mxu0 %v6225
    %6261 = vmatpush.msra.mxu0 %v6224
    %6262 = vmatpush.msra.mxu0 %v6223
    %6263 = vmatmul.f32.gmra.mxu0 %v6236
    %v6264 = vpop.f32.mrf.mxu0
    %v6265 = vadd.f32 %v6233, %v6264
    %6266 = vmatmul.f32.gmra.mxu0 %v6239
    %v6267 = vpop.f32.mrf.mxu0
    %v6268 = vadd.f32 %v6233, %v6267
    %6269 = vmatmul.f32.gmra.mxu0 %v6242
    %v6270 = vpop.f32.mrf.mxu0
    %v6271 = vadd.f32 %v6233, %v6270
    %6272 = vmatmul.f32.gmra.mxu0 %v6245
    %v6273 = vpop.f32.mrf.mxu0
    %v6274 = vadd.f32 %v6233, %v6273
    %6275 = vdwg.mxu0
    %v6276 = vmax.f32 %v6265, 0.0
    %v6277 = vmax.f32 %v6268, 0.0
    %v6278 = vmax.f32 %v6271, 0.0
    %v6279 = vmax.f32 %v6274, 0.0
    %s6280 = scalar_lea.vmem %s4, 128
    %v6281 = vld [vmem:[%s6280] sm:$0xff]
    %v6282 = vld [vmem:[%s6280 + $0x8] sm:$0xff]
    %v6283 = vld [vmem:[%s6280 + $0x10] sm:$0xff]
    %v6284 = vld [vmem:[%s6280 + $0x18] sm:$0xff]
    %v6285 = vld [vmem:[%s6280 + $0x20] sm:$0xff]
    %v6286 = vld [vmem:[%s6280 + $0x28] sm:$0xff]
    %v6287 = vld [vmem:[%s6280 + $0x30] sm:$0xff]
    %v6288 = vld [vmem:[%s6280 + $0x38] sm:$0xff]
    %v6289 = vld [vmem:[%s6280 + $0x40] sm:$0xff]
    %v6290 = vld [vmem:[%s6280 + $0x48] sm:$0xff]
    %v6291 = vld [vmem:[%s6280 + $0x50] sm:$0xff]
    %v6292 = vld [vmem:[%s6280 + $0x58] sm:$0xff]
    %v6293 = vld [vmem:[%s6280 + $0x60] sm:$0xff]
    %v6294 = vld [vmem:[%s6280 + $0x68] sm:$0xff]
    %v6295 = vld [vmem:[%s6280 + $0x70] sm:$0xff]
    %v6296 = vld [vmem:[%s6280 + $0x78] sm:$0xff]
    %v6297 = vld [vmem:[%s3280 + $0x5] sm:$0x1]
    %v6299 = vperm.slane %v6297, 0
    %6301 = vmatpush.msra.mxu0 %v6296
    %6302 = vmatpush.msra.mxu0 %v6295
    %6303 = vmatpush.msra.mxu0 %v6294
    %6304 = vmatpush.msra.mxu0 %v6293
    %6305 = vmatpush.msra.mxu0 %v6292
    %6306 = vmatpush.msra.mxu0 %v6291
    %6307 = vmatpush.msra.mxu0 %v6290
    %6308 = vmatpush.msra.mxu0 %v6289
    %6309 = vmatpush.msra.mxu0 %v6288
    %6310 = vmatpush.msra.mxu0 %v6287
    %6311 = vmatpush.msra.mxu0 %v6286
    %6312 = vmatpush.msra.mxu0 %v6285
    %6313 = vmatpush.msra.mxu0 %v6284
    %6314 = vmatpush.msra.mxu0 %v6283
    %6315 = vmatpush.msra.mxu0 %v6282
    %6316 = vmatpush.msra.mxu0 %v6281
    %6317 = vmatmul.f32.gmra.mxu0 %v6276
    %v6318 = vpop.f32.mrf.mxu0
    %v6319 = vadd.f32 %v6299, %v6318
    %6320 = vmatmul.f32.gmra.mxu0 %v6277
    %v6321 = vpop.f32.mrf.mxu0
    %v6322 = vadd.f32 %v6299, %v6321
    %6323 = vmatmul.f32.gmra.mxu0 %v6278
    %v6324 = vpop.f32.mrf.mxu0
    %v6325 = vadd.f32 %v6299, %v6324
    %6326 = vmatmul.f32.gmra.mxu0 %v6279
    %v6327 = vpop.f32.mrf.mxu0
    %v6328 = vadd.f32 %v6299, %v6327
    %6329 = vdwg.mxu0
    %v6330 = vadd.f32 %v6219, %v6319
    %v6331 = vadd.f32 %v6220, %v6322
    %v6332 = vadd.f32 %v6221, %v6325
    %v6333 = vadd.f32 %v6222, %v6328
    %v6334 = vld [vmem:[%s3280 + $0x8] sm:$0x1]
    %v6335 = vsel %vm78, %v6330, 0.0
    %6336 = vadd.xlane.f32.xlu0 %v6335
    %v6337 = vpop.xlane.xlu0 %6336
    %v6338 = vsel %vm78, %v6331, 0.0
    %6339 = vadd.xlane.f32.xlu0 %v6338
    %v6340 = vpop.xlane.xlu0 %6339
    %v6341 = vsel %vm78, %v6332, 0.0
    %6342 = vadd.xlane.f32.xlu0 %v6341
    %v6343 = vpop.xlane.xlu0 %6342
    %v6344 = vsel %vm78, %v6333, 0.0
    %6345 = vadd.xlane.f32.xlu0 %v6344
    %v6346 = vpop.xlane.xlu0 %6345
    %v6347 = vmul.f32 %v6337, %v1352
    %v6348 = vmul.f32 %v6340, %v1352
    %v6349 = vmul.f32 %v6343, %v1352
    %v6350 = vmul.f32 %v6346, %v1352
    %v6351 = vsub.f32 %v6330, %v6347
    %v6352 = vsub.f32 %v6331, %v6348
    %v6353 = vsub.f32 %v6332, %v6349
    %v6354 = vsub.f32 %v6333, %v6350
    %v6355 = vmul.f32 %v6351, %v6351
    %v6356 = vmul.f32 %v6352, %v6352
    %v6357 = vmul.f32 %v6353, %v6353
    %v6358 = vmul.f32 %v6354, %v6354
    %v6359 = vsel %vm78, %v6355, 0.0
    %6360 = vadd.xlane.f32.xlu0 %v6359
    %v6361 = vpop.xlane.xlu0 %6360
    %v6362 = vsel %vm78, %v6356, 0.0
    %6363 = vadd.xlane.f32.xlu0 %v6362
    %v6364 = vpop.xlane.xlu0 %6363
    %v6365 = vsel %vm78, %v6357, 0.0
    %6366 = vadd.xlane.f32.xlu0 %v6365
    %v6367 = vpop.xlane.xlu0 %6366
    %v6368 = vsel %vm78, %v6358, 0.0
    %6369 = vadd.xlane.f32.xlu0 %v6368
    %v6370 = vpop.xlane.xlu0 %6369
    %v6371 = vmul.f32 %v6361, %v1352
    %v6372 = vmul.f32 %v6364, %v1352
    %v6373 = vmul.f32 %v6367, %v1352
    %v6374 = vmul.f32 %v6370, %v1352
    %v6375 = vadd.f32 %v6371, 1e-05
    %v6376 = vadd.f32 %v6372, 1e-05
    %v6377 = vadd.f32 %v6373, 1e-05
    %v6378 = vadd.f32 %v6374, 1e-05
    %v6379 = vrsqrt.pop %v6375
    %v6380 = vmul.f32 %v6379, %v6375
    %v6381 = vmul.f32 %v6380, %v6379
    %v6382 = vmul.f32 0.5, %v6381
    %v6383 = vsub.f32 1.5, %v6382
    %v6384 = vmul.f32 %v6379, %v6383
    %vm6385 = vweird.f32 %v6375
    %vm6386 = vweird.f32 %v6379
    %vm6387 = vmor %vm6385, %vm6386
    %v6388 = vsel %vm6387, %v6379, %v6384
    %v6389 = vrsqrt.pop %v6376
    %v6390 = vmul.f32 %v6389, %v6376
    %v6391 = vmul.f32 %v6390, %v6389
    %v6392 = vmul.f32 0.5, %v6391
    %v6393 = vsub.f32 1.5, %v6392
    %v6394 = vmul.f32 %v6389, %v6393
    %vm6395 = vweird.f32 %v6376
    %vm6396 = vweird.f32 %v6389
    %vm6397 = vmor %vm6395, %vm6396
    %v6398 = vsel %vm6397, %v6389, %v6394
    %v6399 = vrsqrt.pop %v6377
    %v6400 = vmul.f32 %v6399, %v6377
    %v6401 = vmul.f32 %v6400, %v6399
    %v6402 = vmul.f32 0.5, %v6401
    %v6403 = vsub.f32 1.5, %v6402
    %v6404 = vmul.f32 %v6399, %v6403
    %vm6405 = vweird.f32 %v6377
    %vm6406 = vweird.f32 %v6399
    %vm6407 = vmor %vm6405, %vm6406
    %v6408 = vsel %vm6407, %v6399, %v6404
    %v6409 = vrsqrt.pop %v6378
    %v6410 = vmul.f32 %v6409, %v6378
    %v6411 = vmul.f32 %v6410, %v6409
    %v6412 = vmul.f32 0.5, %v6411
    %v6413 = vsub.f32 1.5, %v6412
    %v6414 = vmul.f32 %v6409, %v6413
    %vm6415 = vweird.f32 %v6378
    %vm6416 = vweird.f32 %v6409
    %vm6417 = vmor %vm6415, %vm6416
    %v6418 = vsel %vm6417, %v6409, %v6414
    %v6419 = vmul.f32 %v6351, %v6388
    %v6420 = vmul.f32 %v6352, %v6398
    %v6421 = vmul.f32 %v6353, %v6408
    %v6422 = vmul.f32 %v6354, %v6418
    %6423 = vrot.lane.b32.xlu0 %v6217, 64
    %v6424 = vpop.permute.xlu0 %6423
    %v6426 = vmul.f32 %v6419, %v6424
    %v6427 = vmul.f32 %v6420, %v6424
    %v6428 = vmul.f32 %v6421, %v6424
    %v6429 = vmul.f32 %v6422, %v6424
    %v6431 = vperm.slane %v6334, 0
    %v6433 = vadd.f32 %v6426, %v6431
    %v6434 = vadd.f32 %v6427, %v6431
    %v6435 = vadd.f32 %v6428, %v6431
    %v6436 = vadd.f32 %v6429, %v6431
    %6437 = vst.msk [vmem:[#allocation5] sm:$0xff] %vm78, %v6433
    %6438 = vst.msk [vmem:[#allocation5 + $0x8] sm:$0xff] %vm78, %v6434
    %6439 = vst.msk [vmem:[#allocation5 + $0x10] sm:$0xff] %vm78, %v6435
    %6440 = vst.msk [vmem:[#allocation5 + $0x18] sm:$0xff] %vm78, %v6436
    // Predicated region
    $region30: #{tpu_custom_call.1} parent=1 // pred_check
      _
    $region31: #{tpu_custom_call.1} parent=1 // pred_check_branch
      %6442 = sbr.rel (0) target = $region33
    $region32: #{tpu_custom_call.1} parent=1 // pred_region
      %6444 = vsyncadd [#allocation4], 0
      %s6445 = sshll.u32 [#allocation5], 4
      %s6446 = int_to_ptr.vmem [resolvable:$true] %s6445
      %s6447 = sshll.u32 %s6, 4
      %s6448 = int_to_ptr.hbm [resolvable:$true] %s6447
      %6453 = dma.vmem_to_hbm [thread:$0]  %s6446, 512, %s6448, [#allocation4], 128, 128, 8
    $region33: #{tpu_custom_call.1} parent=1 // pred_fallthru
      _
    // Predicated region
    $region34: #{tpu_custom_call.1} parent=1 // pred_check
      _
    $region35: #{tpu_custom_call.1} parent=1 // pred_check_branch
      %6455 = sbr.rel (0) target = $region37
    $region36: #{tpu_custom_call.1} parent=1 // pred_region
      %6457 = dma.done [#allocation4], 512
    $region37: #{tpu_custom_call.1} parent=1 // pred_fallthru
      _
    %6458 = vsyncpa [#allocation3], 1
    %6459 = vsyncpa [#allocation4], 1

</llo_original>
